<compile_context>
chip_gen: v5e
topology: v5e:2x2
jax: 0.10.0
libtpu: 0.0.40
codegen_flags: <defaults>
</compile_context>

<pallas_src>
import jax
import jax.numpy as jnp
import numpy as np
from jax.experimental import pallas as pl
from jax.experimental.pallas import tpu as pltpu

# ---------------- penn-style constants --------------------------------------
HOPSIZE = 32
KERNEL_SIZE = 3
PADDING_SIZE = 1
PITCH_BINS = 32
PITCH_CATS = 4
BN_EPS = 1e-5
N_MAIN = 6          # main_sequence depth
LANE = 128          # TPU lane width


# ---------------- fused kernel body ------------------------------------------
def _fused_kernel(x_ref, *refs):
    """refs = 6*(w,b,scale,shift) + (w_pitch,b_pitch) + (w,b,scale,shift)_silblk
              + (w_silhead,b_silhead) + (logits_ref, silence_ref)."""
    n_in = 4 * N_MAIN + 2 + 4 + 2
    in_refs = refs[:n_in]
    logits_ref, sil_ref = refs[n_in:]

    Bt, L, C0 = x_ref.shape
    M = Bt * L

    # Within-batch frame index of every row of the (Bt*L, C) activation slab.
    # Rows with frame index 0 / L-1 are exactly the rows that receive wrapped
    # (or cross-batch-element) data from the +/-1 sublane rolls, and exactly
    # the rows where "same" padding wants a zero tap -> 0/1 multiplicative mask.
    frame = jax.lax.broadcasted_iota(jnp.int32, (M, 1), 0) % L
    not_first = (frame != 0).astype(jnp.float32)          # (M, 1)
    not_last = (frame != (L - 1)).astype(jnp.float32)     # (M, 1)

    def conv3(x, w_ref, b_ref, s_ref, t_ref):
        # x: (M, Cin) f32. One im2col matmul replaces 3 accumulated tap dots;
        # shifted views come from XLU rolls (no unaligned slices / pad concats).
        xm = pltpu.roll(x, shift=1, axis=0) * not_first        # x[l-1], 0 at l=0
        xp = pltpu.roll(x, shift=M - 1, axis=0) * not_last     # x[l+1], 0 at l=L-1
        xi = jnp.concatenate([xm, x, xp], axis=-1)             # (M, 3*Cin)
        xi = xi.astype(jnp.bfloat16)                           # one cast per layer
        acc = jnp.dot(xi, w_ref[...], preferred_element_type=jnp.float32)
        acc = jnp.maximum(acc + b_ref[...], 0.0)               # bias + ReLU in f32
        return acc * s_ref[...] + t_ref[...]                   # eval-mode BN affine

    def conv1(x, w_ref, b_ref):                                # 1x1 conv head
        acc = jnp.dot(x.astype(jnp.bfloat16), w_ref[...],
                      preferred_element_type=jnp.float32)
        return acc + b_ref[...]

    x = x_ref[...].reshape(M, C0)                              # (M, 128) f32

    i = 0
    for _ in range(N_MAIN):                                    # main_sequence
        w, b, s, t = in_refs[i:i + 4]; i += 4
        x = conv3(x, w, b, s, t)
    main = x                                                   # (M, 512) f32

    # pitch head: 1x1 conv, Cout = PITCH_CATS*PITCH_BINS = 128 (lane-dense)
    w_p, b_p = in_refs[i:i + 2]; i += 2
    logits = conv1(main, w_p, b_p)
    logits_ref[...] = logits.reshape(logits_ref.shape).astype(logits_ref.dtype)

    # silence head: Block(512 -> 1024) then 1x1 conv (padded to 128 lanes)
    w_sb, b_sb, s_sb, t_sb = in_refs[i:i + 4]; i += 4
    s_act = conv3(main, w_sb, b_sb, s_sb, t_sb)                # (M, 1024) f32
    w_sh, b_sh = in_refs[i:i + 2]; i += 2
    sil = conv1(s_act, w_sh, b_sh)
    sil_ref[...] = sil.reshape(sil_ref.shape).astype(sil_ref.dtype)


# ---------------- wrapper helpers --------------------------------------------
def _pad_to_lane(n):
    return int(pl.cdiv(n, LANE) * LANE)


def _const_spec(arr):
    # Whole array resident in VMEM, constant block index across the grid.
    return pl.BlockSpec(arr.shape, lambda b, _n=arr.ndim: (0,) * _n)


def _vmem_limit_bytes():
    # Generation-aware scoped-VMEM limit: ~3/4 of physical VMEM (64 MiB on v7x,
    # 128 MiB on v5e/v6e), with a conservative fallback if the query fails.
    try:
        cap = int(pltpu.get_tpu_info().vmem_capacity_bytes)
    except Exception:
        cap = 64 * 1024 * 1024
    return int(min((cap * 3) // 4, 96 * 1024 * 1024))


def _pick_batch_block(B, L):
    """Batch elements per grid step: target >=256 MXU rows per dot, no
    megacore reservation, capped by a VMEM activation-row guard."""
    target_rows = 256                      # fill the 256-wide MXU M dim
    max_rows = 1024                        # ~rows * ~12 KiB live acts, v7x-safe
    want = max(1, -(-target_rows // L))    # ceil(target / L)
    cap = max(1, max_rows // L)
    bt = max(1, min(B, want, cap))
    while B % bt:
        bt -= 1
    return bt


def pack_params(params):
    """One-time parameter packing (outside the hot path):
       - zero-pad every channel dim to a multiple of 128 (lane-dense),
       - fold the K conv taps into a single (K*Cin, Cout) matmul weight,
       - cast matmul weights to bf16, keep bias/scale/shift in f32."""
    packed = []

    def add_conv3(w, b, s, t):
        K, cin, cout = w.shape
        cin_p, cout_p = _pad_to_lane(cin), _pad_to_lane(cout)
        wp = jnp.pad(w, ((0, 0), (0, cin_p - cin), (0, cout_p - cout)))
        packed.append(wp.reshape(K * cin_p, cout_p).astype(jnp.bfloat16))
        for v in (b, s, t):
            packed.append(jnp.pad(v, (0, cout_p - cout))
                          .reshape(1, cout_p).astype(jnp.float32))

    def add_conv1(w, b):
        _, cin, cout = w.shape
        assert cin % LANE == 0
        cout_p = _pad_to_lane(cout)
        wp = jnp.pad(w, ((0, 0), (0, 0), (0, cout_p - cout)))
        packed.append(wp.reshape(cin, cout_p).astype(jnp.bfloat16))
        packed.append(jnp.pad(b, (0, cout_p - cout))
                      .reshape(1, cout_p).astype(jnp.float32))

    for blk in params["main"]:
        add_conv3(*blk)
    add_conv1(*params["pitch"])
    add_conv3(*params["sil_block"])
    add_conv1(*params["sil_head"])
    return tuple(packed)


def poly_penn_fcn_forward(frames, packed_params, *, batch_block=None):
    """frames: (B, 1, T) float32, T a multiple of HOPSIZE.
    Returns {'logits': (B, PITCH_CATS, PITCH_BINS, L), 'silence': (B, PITCH_CATS, L)}."""
    B = frames.shape[0]
    x = frames.reshape(B, -1)                        # squeeze(dim=1)
    T = x.shape[-1]
    assert T % HOPSIZE == 0
    L = T // HOPSIZE
    x = x.reshape(B, L, HOPSIZE)                     # chunk + stack -> NLC

    c0 = _pad_to_lane(HOPSIZE)
    x = jnp.pad(x, ((0, 0), (0, 0), (0, c0 - HOPSIZE)))   # lane-dense input

    Bt = _pick_batch_block(B, L) if batch_block is None else batch_block
    assert B % Bt == 0

    n_pitch = PITCH_BINS * PITCH_CATS
    n_pitch_p = _pad_to_lane(n_pitch)                # 128
    sil_cout_p = _pad_to_lane(PITCH_CATS)            # 128

    in_specs = [pl.BlockSpec((Bt, L, c0), lambda b: (b, 0, 0))]
    in_specs += [_const_spec(a) for a in packed_params]

    out_shape = (jax.ShapeDtypeStruct((B, L, n_pitch_p), jnp.float32),
                 jax.ShapeDtypeStruct((B, L, sil_cout_p), jnp.float32))
    out_specs = (pl.BlockSpec((Bt, L, n_pitch_p), lambda b: (b, 0, 0)),
                 pl.BlockSpec((Bt, L, sil_cout_p), lambda b: (b, 0, 0)))

    logits_nlc, sil_nlc = pl.pallas_call(
        _fused_kernel,
        out_shape=out_shape,
        grid=(B // Bt,),
        in_specs=in_specs,
        out_specs=out_specs,
        compiler_params=pltpu.CompilerParams(
            dimension_semantics=("parallel",),       # v7x: batch blocks split over TCs
            vmem_limit_bytes=_vmem_limit_bytes()),
    )(x, *packed_params)

    # torch: chunk over channels (category-major) then stack -> (B, CATS, BINS, L)
    logits = logits_nlc[:, :, :n_pitch].reshape(B, L, PITCH_CATS, PITCH_BINS)
    logits = jnp.transpose(logits, (0, 2, 3, 1))
    silence = jnp.transpose(sil_nlc[:, :, :PITCH_CATS], (0, 2, 1))   # (B, CATS, L)
    return {"logits": logits, "silence": silence}


# ---------------- deterministic parameter construction -----------------------
def init_block_params(key, cin, cout, k):
    """Conv1d weight (K, Cin, Cout) + bias + BatchNorm1d (eval) folded scale/shift."""
    kw, kb, kg, kbt, km, kv = jax.random.split(key, 6)
    w = jax.random.normal(kw, (k, cin, cout), jnp.float32) / jnp.sqrt(cin * k)
    b = 0.01 * jax.random.normal(kb, (cout,), jnp.float32)
    gamma = 1.0 + 0.1 * jax.random.normal(kg, (cout,), jnp.float32)
    beta = 0.1 * jax.random.normal(kbt, (cout,), jnp.float32)
    mean = 0.1 * jax.random.normal(km, (cout,), jnp.float32)
    var = jnp.abs(1.0 + 0.1 * jax.random.normal(kv, (cout,), jnp.float32))
    scale = gamma / jnp.sqrt(var + BN_EPS)
    shift = beta - mean * scale
    return (w, b, scale, shift)


def init_conv_params(key, cin, cout, k):
    kw, kb = jax.random.split(key, 2)
    w = jax.random.normal(kw, (k, cin, cout), jnp.float32) / jnp.sqrt(cin * k)
    b = 0.01 * jax.random.normal(kb, (cout,), jnp.float32)
    return (w, b)


def init_params(key):
    keys = jax.random.split(key, 9)
    main_channels = [(HOPSIZE, 256), (256, 32), (32, 32),
                     (32, 128), (128, 256), (256, 512)]
    main = [init_block_params(keys[i], ci, co, KERNEL_SIZE)
            for i, (ci, co) in enumerate(main_channels)]
    pitch = init_conv_params(keys[6], 512, PITCH_BINS * PITCH_CATS, 1)
    sil_block = init_block_params(keys[7], 512, 1024, KERNEL_SIZE)
    sil_head = init_conv_params(keys[8], 1024, PITCH_CATS, 1)
    return {"main": main, "pitch": pitch,
            "sil_block": sil_block, "sil_head": sil_head}


# ---------------- bf16-simulated pure-JAX (XLA) reference --------------------
def _ref_forward(frames, params):
    """Mirrors the PyTorch module (NCL layout).  Conv operands are cast to bf16
    with f32 accumulation to match the kernel's MXU numerics -> tight tolerance."""
    B = frames.shape[0]
    x = frames.reshape(B, -1)
    L = x.shape[-1] // HOPSIZE
    x = jnp.transpose(x.reshape(B, L, HOPSIZE), (0, 2, 1))     # (B, C, L)

    def conv1d(x, w_kio, b, pad):
        w = jnp.transpose(w_kio, (2, 1, 0)).astype(jnp.bfloat16)   # (Cout, Cin, K)
        y = jax.lax.conv_general_dilated(
            x.astype(jnp.bfloat16), w, window_strides=(1,), padding=[(pad, pad)],
            dimension_numbers=("NCH", "OIH", "NCH"),
            preferred_element_type=jnp.float32)
        return y + b[None, :, None]

    for (w, b, s, t) in params["main"]:
        x = jnp.maximum(conv1d(x, w, b, PADDING_SIZE), 0.0)
        x = x * s[None, :, None] + t[None, :, None]
    main = x

    w_p, b_p = params["pitch"]
    logits = conv1d(main, w_p, b_p, 0)                                   # (B, 128, L)
    logits = jnp.stack(jnp.split(logits, PITCH_CATS, axis=1), axis=1)    # (B, 4, 32, L)

    w_sb, b_sb, s_sb, t_sb = params["sil_block"]
    s_act = jnp.maximum(conv1d(main, w_sb, b_sb, PADDING_SIZE), 0.0)
    s_act = s_act * s_sb[None, :, None] + t_sb[None, :, None]
    w_sh, b_sh = params["sil_head"]
    silence = conv1d(s_act, w_sh, b_sh, 0)                               # (B, 4, L)
    return logits, silence


if __name__ == "__main__":
    B = 2
    NUM_FRAMES = 16
    T = NUM_FRAMES * HOPSIZE                                   # 512

    key = jax.random.PRNGKey(0)
    k_in, k_par = jax.random.split(key)
    frames = jax.random.normal(k_in, (B, 1, T), jnp.float32)
    params = init_params(k_par)
    packed = pack_params(params)                               # one-time packing

    fwd = jax.jit(poly_penn_fcn_forward)
    out = fwd(frames, packed)
    jax.block_until_ready(out)

    assert out["logits"].shape == (B, PITCH_CATS, PITCH_BINS, NUM_FRAMES)
    assert out["silence"].shape == (B, PITCH_CATS, NUM_FRAMES)
    assert bool(jnp.all(jnp.isfinite(out["logits"])))
    assert bool(jnp.all(jnp.isfinite(out["silence"])))

    # Reference uses the same bf16-operand / f32-accumulate numerics as the
    # kernel, so the tolerance can be tight.
    ref_logits, ref_sil = _ref_forward(frames, params)
    np.testing.assert_allclose(np.asarray(out["logits"]), np.asarray(ref_logits),
                               rtol=2e-2, atol=2e-2)
    np.testing.assert_allclose(np.asarray(out["silence"]), np.asarray(ref_sil),
                               rtol=2e-2, atol=2e-2)
    print("KERNEL_OK")
</pallas_src>

<mosaic_0001>
module attributes {stable_mosaic.version = 11 : i64} {
  func.func @_fused_kernel(%arg0: i32, %arg1: memref<2x16x128xf32, #tpu.memory_space<vmem>>, %arg2: memref<384x256xbf16, #tpu.memory_space<vmem>>, %arg3: memref<1x256xf32, #tpu.memory_space<vmem>>, %arg4: memref<1x256xf32, #tpu.memory_space<vmem>>, %arg5: memref<1x256xf32, #tpu.memory_space<vmem>>, %arg6: memref<768x128xbf16, #tpu.memory_space<vmem>>, %arg7: memref<1x128xf32, #tpu.memory_space<vmem>>, %arg8: memref<1x128xf32, #tpu.memory_space<vmem>>, %arg9: memref<1x128xf32, #tpu.memory_space<vmem>>, %arg10: memref<384x128xbf16, #tpu.memory_space<vmem>>, %arg11: memref<1x128xf32, #tpu.memory_space<vmem>>, %arg12: memref<1x128xf32, #tpu.memory_space<vmem>>, %arg13: memref<1x128xf32, #tpu.memory_space<vmem>>, %arg14: memref<384x128xbf16, #tpu.memory_space<vmem>>, %arg15: memref<1x128xf32, #tpu.memory_space<vmem>>, %arg16: memref<1x128xf32, #tpu.memory_space<vmem>>, %arg17: memref<1x128xf32, #tpu.memory_space<vmem>>, %arg18: memref<384x256xbf16, #tpu.memory_space<vmem>>, %arg19: memref<1x256xf32, #tpu.memory_space<vmem>>, %arg20: memref<1x256xf32, #tpu.memory_space<vmem>>, %arg21: memref<1x256xf32, #tpu.memory_space<vmem>>, %arg22: memref<768x512xbf16, #tpu.memory_space<vmem>>, %arg23: memref<1x512xf32, #tpu.memory_space<vmem>>, %arg24: memref<1x512xf32, #tpu.memory_space<vmem>>, %arg25: memref<1x512xf32, #tpu.memory_space<vmem>>, %arg26: memref<512x128xbf16, #tpu.memory_space<vmem>>, %arg27: memref<1x128xf32, #tpu.memory_space<vmem>>, %arg28: memref<1536x1024xbf16, #tpu.memory_space<vmem>>, %arg29: memref<1x1024xf32, #tpu.memory_space<vmem>>, %arg30: memref<1x1024xf32, #tpu.memory_space<vmem>>, %arg31: memref<1x1024xf32, #tpu.memory_space<vmem>>, %arg32: memref<1024x128xbf16, #tpu.memory_space<vmem>>, %arg33: memref<1x128xf32, #tpu.memory_space<vmem>>, %arg34: memref<2x16x128xf32, #tpu.memory_space<vmem>>, %arg35: memref<2x16x128xf32, #tpu.memory_space<vmem>>) attributes {dimension_semantics = [#tpu.dimension_semantics<parallel>], iteration_bounds = array<i64: 1>, scalar_prefetch = 0 : i64, scratch_operands = 0 : i64, tpu.core_type = #tpu.core_type<tc>, window_params = [{transform_indices = @transform_0, window_bounds = array<i64: 2, 16, 128>}, {pipeline_mode = #tpu.pipeline_mode<synchronous>, transform_indices = @transform_1, window_bounds = array<i64: 384, 256>}, {pipeline_mode = #tpu.pipeline_mode<synchronous>, transform_indices = @transform_2, window_bounds = array<i64: 1, 256>}, {pipeline_mode = #tpu.pipeline_mode<synchronous>, transform_indices = @transform_3, window_bounds = array<i64: 1, 256>}, {pipeline_mode = #tpu.pipeline_mode<synchronous>, transform_indices = @transform_4, window_bounds = array<i64: 1, 256>}, {pipeline_mode = #tpu.pipeline_mode<synchronous>, transform_indices = @transform_5, window_bounds = array<i64: 768, 128>}, {pipeline_mode = #tpu.pipeline_mode<synchronous>, transform_indices = @transform_6, window_bounds = array<i64: 1, 128>}, {pipeline_mode = #tpu.pipeline_mode<synchronous>, transform_indices = @transform_7, window_bounds = array<i64: 1, 128>}, {pipeline_mode = #tpu.pipeline_mode<synchronous>, transform_indices = @transform_8, window_bounds = array<i64: 1, 128>}, {pipeline_mode = #tpu.pipeline_mode<synchronous>, transform_indices = @transform_9, window_bounds = array<i64: 384, 128>}, {pipeline_mode = #tpu.pipeline_mode<synchronous>, transform_indices = @transform_10, window_bounds = array<i64: 1, 128>}, {pipeline_mode = #tpu.pipeline_mode<synchronous>, transform_indices = @transform_11, window_bounds = array<i64: 1, 128>}, {pipeline_mode = #tpu.pipeline_mode<synchronous>, transform_indices = @transform_12, window_bounds = array<i64: 1, 128>}, {pipeline_mode = #tpu.pipeline_mode<synchronous>, transform_indices = @transform_13, window_bounds = array<i64: 384, 128>}, {pipeline_mode = #tpu.pipeline_mode<synchronous>, transform_indices = @transform_14, window_bounds = array<i64: 1, 128>}, {pipeline_mode = #tpu.pipeline_mode<synchronous>, transform_indices = @transform_15, window_bounds = array<i64: 1, 128>}, {pipeline_mode = #tpu.pipeline_mode<synchronous>, transform_indices = @transform_16, window_bounds = array<i64: 1, 128>}, {pipeline_mode = #tpu.pipeline_mode<synchronous>, transform_indices = @transform_17, window_bounds = array<i64: 384, 256>}, {pipeline_mode = #tpu.pipeline_mode<synchronous>, transform_indices = @transform_18, window_bounds = array<i64: 1, 256>}, {pipeline_mode = #tpu.pipeline_mode<synchronous>, transform_indices = @transform_19, window_bounds = array<i64: 1, 256>}, {pipeline_mode = #tpu.pipeline_mode<synchronous>, transform_indices = @transform_20, window_bounds = array<i64: 1, 256>}, {pipeline_mode = #tpu.pipeline_mode<synchronous>, transform_indices = @transform_21, window_bounds = array<i64: 768, 512>}, {pipeline_mode = #tpu.pipeline_mode<synchronous>, transform_indices = @transform_22, window_bounds = array<i64: 1, 512>}, {pipeline_mode = #tpu.pipeline_mode<synchronous>, transform_indices = @transform_23, window_bounds = array<i64: 1, 512>}, {pipeline_mode = #tpu.pipeline_mode<synchronous>, transform_indices = @transform_24, window_bounds = array<i64: 1, 512>}, {pipeline_mode = #tpu.pipeline_mode<synchronous>, transform_indices = @transform_25, window_bounds = array<i64: 512, 128>}, {pipeline_mode = #tpu.pipeline_mode<synchronous>, transform_indices = @transform_26, window_bounds = array<i64: 1, 128>}, {pipeline_mode = #tpu.pipeline_mode<synchronous>, transform_indices = @transform_27, window_bounds = array<i64: 1536, 1024>}, {pipeline_mode = #tpu.pipeline_mode<synchronous>, transform_indices = @transform_28, window_bounds = array<i64: 1, 1024>}, {pipeline_mode = #tpu.pipeline_mode<synchronous>, transform_indices = @transform_29, window_bounds = array<i64: 1, 1024>}, {pipeline_mode = #tpu.pipeline_mode<synchronous>, transform_indices = @transform_30, window_bounds = array<i64: 1, 1024>}, {pipeline_mode = #tpu.pipeline_mode<synchronous>, transform_indices = @transform_31, window_bounds = array<i64: 1024, 128>}, {pipeline_mode = #tpu.pipeline_mode<synchronous>, transform_indices = @transform_32, window_bounds = array<i64: 1, 128>}, {transform_indices = @transform_33, window_bounds = array<i64: 2, 16, 128>}, {transform_indices = @transform_34, window_bounds = array<i64: 2, 16, 128>}]} {
    %0 = tpu.iota {dimensions = array<i32: 0>} : vector<32x1xi32>
    %c16_i32 = arith.constant 16 : i32
    %c0_i32 = arith.constant 0 : i32
    %1 = arith.cmpi eq, %c16_i32, %c0_i32 : i32
    %c1_i32 = arith.constant 1 : i32
    %2 = arith.select %1, %c1_i32, %c16_i32 : i32
    %3 = vector.broadcast %2 : i32 to vector<32x1xi32>
    %4 = arith.remsi %0, %3 : vector<32x1xi32>
    %c0_i32_0 = arith.constant 0 : i32
    %5 = vector.broadcast %c0_i32_0 : i32 to vector<32x1xi32>
    %6 = arith.cmpi ne, %4, %5 : vector<32x1xi32>
    %c0_i32_1 = arith.constant 0 : i32
    %7 = vector.broadcast %c0_i32_1 : i32 to vector<32x1xi32>
    %8 = arith.cmpi slt, %4, %7 : vector<32x1xi32>
    %c0_i32_2 = arith.constant 0 : i32
    %9 = arith.cmpi slt, %2, %c0_i32_2 : i32
    %10 = vector.broadcast %9 : i1 to vector<32x1xi1>
    %11 = vector.broadcast %10 : vector<32x1xi1> to vector<32x1xi1>
    %12 = arith.xori %8, %11 : vector<32x1xi1>
    %13 = arith.andi %12, %6 : vector<32x1xi1>
    %14 = vector.broadcast %2 : i32 to vector<32x1xi32>
    %15 = arith.addi %4, %14 : vector<32x1xi32>
    %16 = arith.select %13, %15, %4 : vector<32x1xi1>, vector<32x1xi32>
    %c0_i32_3 = arith.constant 0 : i32
    %17 = vector.broadcast %c0_i32_3 : i32 to vector<32x1xi32>
    %18 = arith.cmpi ne, %16, %17 : vector<32x1xi32>
    %19 = arith.extui %18 : vector<32x1xi1> to vector<32x1xi32>
    %20 = arith.sitofp %19 : vector<32x1xi32> to vector<32x1xf32>
    %c15_i32 = arith.constant 15 : i32
    %21 = vector.broadcast %c15_i32 : i32 to vector<32x1xi32>
    %22 = arith.cmpi ne, %16, %21 : vector<32x1xi32>
    %23 = arith.extui %22 : vector<32x1xi1> to vector<32x1xi32>
    %24 = arith.sitofp %23 : vector<32x1xi32> to vector<32x1xf32>
    %c0 = arith.constant 0 : index
    %c0_4 = arith.constant 0 : index
    %c0_5 = arith.constant 0 : index
    %25 = vector.load %arg1[%c0, %c0_4, %c0_5] : memref<2x16x128xf32, #tpu.memory_space<vmem>>, vector<2x16x128xf32>
    %26 = vector.shape_cast %25 : vector<2x16x128xf32> to vector<32x128xf32>
    %c1_i32_6 = arith.constant 1 : i32
    %27 = tpu.dynamic_rotate %26 by %c1_i32_6 dim 0 : vector<32x128xf32>, i32 -> vector<32x128xf32>
    %28 = vector.broadcast %20 : vector<32x1xf32> to vector<32x128xf32>
    %29 = arith.mulf %27, %28 : vector<32x128xf32>
    %c31_i32 = arith.constant 31 : i32
    %30 = tpu.dynamic_rotate %26 by %c31_i32 dim 0 : vector<32x128xf32>, i32 -> vector<32x128xf32>
    %31 = vector.broadcast %24 : vector<32x1xf32> to vector<32x128xf32>
    %32 = arith.mulf %30, %31 : vector<32x128xf32>
    %33 = tpu.concatenate %29, %26, %32 in 1 : vector<32x128xf32>, vector<32x128xf32>, vector<32x128xf32> -> vector<32x384xf32>
    %34 = arith.truncf %33 : vector<32x384xf32> to vector<32x384xbf16>
    %c0_7 = arith.constant 0 : index
    %c0_8 = arith.constant 0 : index
    %35 = vector.load %arg2[%c0_7, %c0_8] : memref<384x256xbf16, #tpu.memory_space<vmem>>, vector<384x256xbf16>
    %cst = arith.constant dense<0.000000e+00> : vector<32x256xf32>
    %36 = tpu.matmul %34, %35, %cst {dimension_numbers = #tpu.dot_dimension_numbers<[1], [0], [0], [1], [0, 0, 1, 1], [], []>} : vector<32x384xbf16>, vector<384x256xbf16>, vector<32x256xf32> -> vector<32x256xf32>
    %c0_9 = arith.constant 0 : index
    %c0_10 = arith.constant 0 : index
    %37 = vector.load %arg3[%c0_9, %c0_10] : memref<1x256xf32, #tpu.memory_space<vmem>>, vector<1x256xf32>
    %38 = vector.broadcast %37 : vector<1x256xf32> to vector<32x256xf32>
    %39 = arith.addf %36, %38 : vector<32x256xf32>
    %cst_11 = arith.constant 0.000000e+00 : f32
    %40 = vector.broadcast %cst_11 : f32 to vector<32x256xf32>
    %41 = arith.maximumf %39, %40 : vector<32x256xf32>
    %c0_12 = arith.constant 0 : index
    %c0_13 = arith.constant 0 : index
    %42 = vector.load %arg4[%c0_12, %c0_13] : memref<1x256xf32, #tpu.memory_space<vmem>>, vector<1x256xf32>
    %43 = vector.broadcast %42 : vector<1x256xf32> to vector<32x256xf32>
    %44 = arith.mulf %41, %43 : vector<32x256xf32>
    %c0_14 = arith.constant 0 : index
    %c0_15 = arith.constant 0 : index
    %45 = vector.load %arg5[%c0_14, %c0_15] : memref<1x256xf32, #tpu.memory_space<vmem>>, vector<1x256xf32>
    %46 = vector.broadcast %45 : vector<1x256xf32> to vector<32x256xf32>
    %47 = arith.addf %44, %46 : vector<32x256xf32>
    %c1_i32_16 = arith.constant 1 : i32
    %48 = tpu.dynamic_rotate %47 by %c1_i32_16 dim 0 : vector<32x256xf32>, i32 -> vector<32x256xf32>
    %49 = vector.broadcast %20 : vector<32x1xf32> to vector<32x256xf32>
    %50 = arith.mulf %48, %49 : vector<32x256xf32>
    %c31_i32_17 = arith.constant 31 : i32
    %51 = tpu.dynamic_rotate %47 by %c31_i32_17 dim 0 : vector<32x256xf32>, i32 -> vector<32x256xf32>
    %52 = vector.broadcast %24 : vector<32x1xf32> to vector<32x256xf32>
    %53 = arith.mulf %51, %52 : vector<32x256xf32>
    %54 = tpu.concatenate %50, %47, %53 in 1 : vector<32x256xf32>, vector<32x256xf32>, vector<32x256xf32> -> vector<32x768xf32>
    %55 = arith.truncf %54 : vector<32x768xf32> to vector<32x768xbf16>
    %c0_18 = arith.constant 0 : index
    %c0_19 = arith.constant 0 : index
    %56 = vector.load %arg6[%c0_18, %c0_19] : memref<768x128xbf16, #tpu.memory_space<vmem>>, vector<768x128xbf16>
    %cst_20 = arith.constant dense<0.000000e+00> : vector<32x128xf32>
    %57 = tpu.matmul %55, %56, %cst_20 {dimension_numbers = #tpu.dot_dimension_numbers<[1], [0], [0], [1], [0, 0, 1, 1], [], []>} : vector<32x768xbf16>, vector<768x128xbf16>, vector<32x128xf32> -> vector<32x128xf32>
    %c0_21 = arith.constant 0 : index
    %c0_22 = arith.constant 0 : index
    %58 = vector.load %arg7[%c0_21, %c0_22] : memref<1x128xf32, #tpu.memory_space<vmem>>, vector<1x128xf32>
    %59 = vector.broadcast %58 : vector<1x128xf32> to vector<32x128xf32>
    %60 = arith.addf %57, %59 : vector<32x128xf32>
    %cst_23 = arith.constant 0.000000e+00 : f32
    %61 = vector.broadcast %cst_23 : f32 to vector<32x128xf32>
    %62 = arith.maximumf %60, %61 : vector<32x128xf32>
    %c0_24 = arith.constant 0 : index
    %c0_25 = arith.constant 0 : index
    %63 = vector.load %arg8[%c0_24, %c0_25] : memref<1x128xf32, #tpu.memory_space<vmem>>, vector<1x128xf32>
    %64 = vector.broadcast %63 : vector<1x128xf32> to vector<32x128xf32>
    %65 = arith.mulf %62, %64 : vector<32x128xf32>
    %c0_26 = arith.constant 0 : index
    %c0_27 = arith.constant 0 : index
    %66 = vector.load %arg9[%c0_26, %c0_27] : memref<1x128xf32, #tpu.memory_space<vmem>>, vector<1x128xf32>
    %67 = vector.broadcast %66 : vector<1x128xf32> to vector<32x128xf32>
    %68 = arith.addf %65, %67 : vector<32x128xf32>
    %c1_i32_28 = arith.constant 1 : i32
    %69 = tpu.dynamic_rotate %68 by %c1_i32_28 dim 0 : vector<32x128xf32>, i32 -> vector<32x128xf32>
    %70 = vector.broadcast %20 : vector<32x1xf32> to vector<32x128xf32>
    %71 = arith.mulf %69, %70 : vector<32x128xf32>
    %c31_i32_29 = arith.constant 31 : i32
    %72 = tpu.dynamic_rotate %68 by %c31_i32_29 dim 0 : vector<32x128xf32>, i32 -> vector<32x128xf32>
    %73 = vector.broadcast %24 : vector<32x1xf32> to vector<32x128xf32>
    %74 = arith.mulf %72, %73 : vector<32x128xf32>
    %75 = tpu.concatenate %71, %68, %74 in 1 : vector<32x128xf32>, vector<32x128xf32>, vector<32x128xf32> -> vector<32x384xf32>
    %76 = arith.truncf %75 : vector<32x384xf32> to vector<32x384xbf16>
    %c0_30 = arith.constant 0 : index
    %c0_31 = arith.constant 0 : index
    %77 = vector.load %arg10[%c0_30, %c0_31] : memref<384x128xbf16, #tpu.memory_space<vmem>>, vector<384x128xbf16>
    %cst_32 = arith.constant dense<0.000000e+00> : vector<32x128xf32>
    %78 = tpu.matmul %76, %77, %cst_32 {dimension_numbers = #tpu.dot_dimension_numbers<[1], [0], [0], [1], [0, 0, 1, 1], [], []>} : vector<32x384xbf16>, vector<384x128xbf16>, vector<32x128xf32> -> vector<32x128xf32>
    %c0_33 = arith.constant 0 : index
    %c0_34 = arith.constant 0 : index
    %79 = vector.load %arg11[%c0_33, %c0_34] : memref<1x128xf32, #tpu.memory_space<vmem>>, vector<1x128xf32>
    %80 = vector.broadcast %79 : vector<1x128xf32> to vector<32x128xf32>
    %81 = arith.addf %78, %80 : vector<32x128xf32>
    %cst_35 = arith.constant 0.000000e+00 : f32
    %82 = vector.broadcast %cst_35 : f32 to vector<32x128xf32>
    %83 = arith.maximumf %81, %82 : vector<32x128xf32>
    %c0_36 = arith.constant 0 : index
    %c0_37 = arith.constant 0 : index
    %84 = vector.load %arg12[%c0_36, %c0_37] : memref<1x128xf32, #tpu.memory_space<vmem>>, vector<1x128xf32>
    %85 = vector.broadcast %84 : vector<1x128xf32> to vector<32x128xf32>
    %86 = arith.mulf %83, %85 : vector<32x128xf32>
    %c0_38 = arith.constant 0 : index
    %c0_39 = arith.constant 0 : index
    %87 = vector.load %arg13[%c0_38, %c0_39] : memref<1x128xf32, #tpu.memory_space<vmem>>, vector<1x128xf32>
    %88 = vector.broadcast %87 : vector<1x128xf32> to vector<32x128xf32>
    %89 = arith.addf %86, %88 : vector<32x128xf32>
    %c1_i32_40 = arith.constant 1 : i32
    %90 = tpu.dynamic_rotate %89 by %c1_i32_40 dim 0 : vector<32x128xf32>, i32 -> vector<32x128xf32>
    %91 = vector.broadcast %20 : vector<32x1xf32> to vector<32x128xf32>
    %92 = arith.mulf %90, %91 : vector<32x128xf32>
    %c31_i32_41 = arith.constant 31 : i32
    %93 = tpu.dynamic_rotate %89 by %c31_i32_41 dim 0 : vector<32x128xf32>, i32 -> vector<32x128xf32>
    %94 = vector.broadcast %24 : vector<32x1xf32> to vector<32x128xf32>
    %95 = arith.mulf %93, %94 : vector<32x128xf32>
    %96 = tpu.concatenate %92, %89, %95 in 1 : vector<32x128xf32>, vector<32x128xf32>, vector<32x128xf32> -> vector<32x384xf32>
    %97 = arith.truncf %96 : vector<32x384xf32> to vector<32x384xbf16>
    %c0_42 = arith.constant 0 : index
    %c0_43 = arith.constant 0 : index
    %98 = vector.load %arg14[%c0_42, %c0_43] : memref<384x128xbf16, #tpu.memory_space<vmem>>, vector<384x128xbf16>
    %cst_44 = arith.constant dense<0.000000e+00> : vector<32x128xf32>
    %99 = tpu.matmul %97, %98, %cst_44 {dimension_numbers = #tpu.dot_dimension_numbers<[1], [0], [0], [1], [0, 0, 1, 1], [], []>} : vector<32x384xbf16>, vector<384x128xbf16>, vector<32x128xf32> -> vector<32x128xf32>
    %c0_45 = arith.constant 0 : index
    %c0_46 = arith.constant 0 : index
    %100 = vector.load %arg15[%c0_45, %c0_46] : memref<1x128xf32, #tpu.memory_space<vmem>>, vector<1x128xf32>
    %101 = vector.broadcast %100 : vector<1x128xf32> to vector<32x128xf32>
    %102 = arith.addf %99, %101 : vector<32x128xf32>
    %cst_47 = arith.constant 0.000000e+00 : f32
    %103 = vector.broadcast %cst_47 : f32 to vector<32x128xf32>
    %104 = arith.maximumf %102, %103 : vector<32x128xf32>
    %c0_48 = arith.constant 0 : index
    %c0_49 = arith.constant 0 : index
    %105 = vector.load %arg16[%c0_48, %c0_49] : memref<1x128xf32, #tpu.memory_space<vmem>>, vector<1x128xf32>
    %106 = vector.broadcast %105 : vector<1x128xf32> to vector<32x128xf32>
    %107 = arith.mulf %104, %106 : vector<32x128xf32>
    %c0_50 = arith.constant 0 : index
    %c0_51 = arith.constant 0 : index
    %108 = vector.load %arg17[%c0_50, %c0_51] : memref<1x128xf32, #tpu.memory_space<vmem>>, vector<1x128xf32>
    %109 = vector.broadcast %108 : vector<1x128xf32> to vector<32x128xf32>
    %110 = arith.addf %107, %109 : vector<32x128xf32>
    %c1_i32_52 = arith.constant 1 : i32
    %111 = tpu.dynamic_rotate %110 by %c1_i32_52 dim 0 : vector<32x128xf32>, i32 -> vector<32x128xf32>
    %112 = vector.broadcast %20 : vector<32x1xf32> to vector<32x128xf32>
    %113 = arith.mulf %111, %112 : vector<32x128xf32>
    %c31_i32_53 = arith.constant 31 : i32
    %114 = tpu.dynamic_rotate %110 by %c31_i32_53 dim 0 : vector<32x128xf32>, i32 -> vector<32x128xf32>
    %115 = vector.broadcast %24 : vector<32x1xf32> to vector<32x128xf32>
    %116 = arith.mulf %114, %115 : vector<32x128xf32>
    %117 = tpu.concatenate %113, %110, %116 in 1 : vector<32x128xf32>, vector<32x128xf32>, vector<32x128xf32> -> vector<32x384xf32>
    %118 = arith.truncf %117 : vector<32x384xf32> to vector<32x384xbf16>
    %c0_54 = arith.constant 0 : index
    %c0_55 = arith.constant 0 : index
    %119 = vector.load %arg18[%c0_54, %c0_55] : memref<384x256xbf16, #tpu.memory_space<vmem>>, vector<384x256xbf16>
    %cst_56 = arith.constant dense<0.000000e+00> : vector<32x256xf32>
    %120 = tpu.matmul %118, %119, %cst_56 {dimension_numbers = #tpu.dot_dimension_numbers<[1], [0], [0], [1], [0, 0, 1, 1], [], []>} : vector<32x384xbf16>, vector<384x256xbf16>, vector<32x256xf32> -> vector<32x256xf32>
    %c0_57 = arith.constant 0 : index
    %c0_58 = arith.constant 0 : index
    %121 = vector.load %arg19[%c0_57, %c0_58] : memref<1x256xf32, #tpu.memory_space<vmem>>, vector<1x256xf32>
    %122 = vector.broadcast %121 : vector<1x256xf32> to vector<32x256xf32>
    %123 = arith.addf %120, %122 : vector<32x256xf32>
    %cst_59 = arith.constant 0.000000e+00 : f32
    %124 = vector.broadcast %cst_59 : f32 to vector<32x256xf32>
    %125 = arith.maximumf %123, %124 : vector<32x256xf32>
    %c0_60 = arith.constant 0 : index
    %c0_61 = arith.constant 0 : index
    %126 = vector.load %arg20[%c0_60, %c0_61] : memref<1x256xf32, #tpu.memory_space<vmem>>, vector<1x256xf32>
    %127 = vector.broadcast %126 : vector<1x256xf32> to vector<32x256xf32>
    %128 = arith.mulf %125, %127 : vector<32x256xf32>
    %c0_62 = arith.constant 0 : index
    %c0_63 = arith.constant 0 : index
    %129 = vector.load %arg21[%c0_62, %c0_63] : memref<1x256xf32, #tpu.memory_space<vmem>>, vector<1x256xf32>
    %130 = vector.broadcast %129 : vector<1x256xf32> to vector<32x256xf32>
    %131 = arith.addf %128, %130 : vector<32x256xf32>
    %c1_i32_64 = arith.constant 1 : i32
    %132 = tpu.dynamic_rotate %131 by %c1_i32_64 dim 0 : vector<32x256xf32>, i32 -> vector<32x256xf32>
    %133 = vector.broadcast %20 : vector<32x1xf32> to vector<32x256xf32>
    %134 = arith.mulf %132, %133 : vector<32x256xf32>
    %c31_i32_65 = arith.constant 31 : i32
    %135 = tpu.dynamic_rotate %131 by %c31_i32_65 dim 0 : vector<32x256xf32>, i32 -> vector<32x256xf32>
    %136 = vector.broadcast %24 : vector<32x1xf32> to vector<32x256xf32>
    %137 = arith.mulf %135, %136 : vector<32x256xf32>
    %138 = tpu.concatenate %134, %131, %137 in 1 : vector<32x256xf32>, vector<32x256xf32>, vector<32x256xf32> -> vector<32x768xf32>
    %139 = arith.truncf %138 : vector<32x768xf32> to vector<32x768xbf16>
    %c0_66 = arith.constant 0 : index
    %c0_67 = arith.constant 0 : index
    %140 = vector.load %arg22[%c0_66, %c0_67] : memref<768x512xbf16, #tpu.memory_space<vmem>>, vector<768x512xbf16>
    %cst_68 = arith.constant dense<0.000000e+00> : vector<32x512xf32>
    %141 = tpu.matmul %139, %140, %cst_68 {dimension_numbers = #tpu.dot_dimension_numbers<[1], [0], [0], [1], [0, 0, 1, 1], [], []>} : vector<32x768xbf16>, vector<768x512xbf16>, vector<32x512xf32> -> vector<32x512xf32>
    %c0_69 = arith.constant 0 : index
    %c0_70 = arith.constant 0 : index
    %142 = vector.load %arg23[%c0_69, %c0_70] : memref<1x512xf32, #tpu.memory_space<vmem>>, vector<1x512xf32>
    %143 = vector.broadcast %142 : vector<1x512xf32> to vector<32x512xf32>
    %144 = arith.addf %141, %143 : vector<32x512xf32>
    %cst_71 = arith.constant 0.000000e+00 : f32
    %145 = vector.broadcast %cst_71 : f32 to vector<32x512xf32>
    %146 = arith.maximumf %144, %145 : vector<32x512xf32>
    %c0_72 = arith.constant 0 : index
    %c0_73 = arith.constant 0 : index
    %147 = vector.load %arg24[%c0_72, %c0_73] : memref<1x512xf32, #tpu.memory_space<vmem>>, vector<1x512xf32>
    %148 = vector.broadcast %147 : vector<1x512xf32> to vector<32x512xf32>
    %149 = arith.mulf %146, %148 : vector<32x512xf32>
    %c0_74 = arith.constant 0 : index
    %c0_75 = arith.constant 0 : index
    %150 = vector.load %arg25[%c0_74, %c0_75] : memref<1x512xf32, #tpu.memory_space<vmem>>, vector<1x512xf32>
    %151 = vector.broadcast %150 : vector<1x512xf32> to vector<32x512xf32>
    %152 = arith.addf %149, %151 : vector<32x512xf32>
    %153 = arith.truncf %152 : vector<32x512xf32> to vector<32x512xbf16>
    %c0_76 = arith.constant 0 : index
    %c0_77 = arith.constant 0 : index
    %154 = vector.load %arg26[%c0_76, %c0_77] : memref<512x128xbf16, #tpu.memory_space<vmem>>, vector<512x128xbf16>
    %cst_78 = arith.constant dense<0.000000e+00> : vector<32x128xf32>
    %155 = tpu.matmul %153, %154, %cst_78 {dimension_numbers = #tpu.dot_dimension_numbers<[1], [0], [0], [1], [0, 0, 1, 1], [], []>} : vector<32x512xbf16>, vector<512x128xbf16>, vector<32x128xf32> -> vector<32x128xf32>
    %c0_79 = arith.constant 0 : index
    %c0_80 = arith.constant 0 : index
    %156 = vector.load %arg27[%c0_79, %c0_80] : memref<1x128xf32, #tpu.memory_space<vmem>>, vector<1x128xf32>
    %157 = vector.broadcast %156 : vector<1x128xf32> to vector<32x128xf32>
    %158 = arith.addf %155, %157 : vector<32x128xf32>
    %159 = vector.shape_cast %158 : vector<32x128xf32> to vector<2x16x128xf32>
    %c0_81 = arith.constant 0 : index
    %c0_82 = arith.constant 0 : index
    %c0_83 = arith.constant 0 : index
    %160 = vector.load %arg34[%c0_81, %c0_82, %c0_83] : memref<2x16x128xf32, #tpu.memory_space<vmem>>, vector<2x16x128xf32>
    tpu.vector_store %arg34[%c0_81, %c0_82, %c0_83], %159 {strides = array<i32>} : memref<2x16x128xf32, #tpu.memory_space<vmem>>, vector<2x16x128xf32>,
    %c1_i32_84 = arith.constant 1 : i32
    %161 = tpu.dynamic_rotate %152 by %c1_i32_84 dim 0 : vector<32x512xf32>, i32 -> vector<32x512xf32>
    %162 = vector.broadcast %20 : vector<32x1xf32> to vector<32x512xf32>
    %163 = arith.mulf %161, %162 : vector<32x512xf32>
    %c31_i32_85 = arith.constant 31 : i32
    %164 = tpu.dynamic_rotate %152 by %c31_i32_85 dim 0 : vector<32x512xf32>, i32 -> vector<32x512xf32>
    %165 = vector.broadcast %24 : vector<32x1xf32> to vector<32x512xf32>
    %166 = arith.mulf %164, %165 : vector<32x512xf32>
    %167 = tpu.concatenate %163, %152, %166 in 1 : vector<32x512xf32>, vector<32x512xf32>, vector<32x512xf32> -> vector<32x1536xf32>
    %168 = arith.truncf %167 : vector<32x1536xf32> to vector<32x1536xbf16>
    %c0_86 = arith.constant 0 : index
    %c0_87 = arith.constant 0 : index
    %169 = vector.load %arg28[%c0_86, %c0_87] : memref<1536x1024xbf16, #tpu.memory_space<vmem>>, vector<1536x1024xbf16>
    %cst_88 = arith.constant dense<0.000000e+00> : vector<32x1024xf32>
    %170 = tpu.matmul %168, %169, %cst_88 {dimension_numbers = #tpu.dot_dimension_numbers<[1], [0], [0], [1], [0, 0, 1, 1], [], []>} : vector<32x1536xbf16>, vector<1536x1024xbf16>, vector<32x1024xf32> -> vector<32x1024xf32>
    %c0_89 = arith.constant 0 : index
    %c0_90 = arith.constant 0 : index
    %171 = vector.load %arg29[%c0_89, %c0_90] : memref<1x1024xf32, #tpu.memory_space<vmem>>, vector<1x1024xf32>
    %172 = vector.broadcast %171 : vector<1x1024xf32> to vector<32x1024xf32>
    %173 = arith.addf %170, %172 : vector<32x1024xf32>
    %cst_91 = arith.constant 0.000000e+00 : f32
    %174 = vector.broadcast %cst_91 : f32 to vector<32x1024xf32>
    %175 = arith.maximumf %173, %174 : vector<32x1024xf32>
    %c0_92 = arith.constant 0 : index
    %c0_93 = arith.constant 0 : index
    %176 = vector.load %arg30[%c0_92, %c0_93] : memref<1x1024xf32, #tpu.memory_space<vmem>>, vector<1x1024xf32>
    %177 = vector.broadcast %176 : vector<1x1024xf32> to vector<32x1024xf32>
    %178 = arith.mulf %175, %177 : vector<32x1024xf32>
    %c0_94 = arith.constant 0 : index
    %c0_95 = arith.constant 0 : index
    %179 = vector.load %arg31[%c0_94, %c0_95] : memref<1x1024xf32, #tpu.memory_space<vmem>>, vector<1x1024xf32>
    %180 = vector.broadcast %179 : vector<1x1024xf32> to vector<32x1024xf32>
    %181 = arith.addf %178, %180 : vector<32x1024xf32>
    %182 = arith.truncf %181 : vector<32x1024xf32> to vector<32x1024xbf16>
    %c0_96 = arith.constant 0 : index
    %c0_97 = arith.constant 0 : index
    %183 = vector.load %arg32[%c0_96, %c0_97] : memref<1024x128xbf16, #tpu.memory_space<vmem>>, vector<1024x128xbf16>
    %cst_98 = arith.constant dense<0.000000e+00> : vector<32x128xf32>
    %184 = tpu.matmul %182, %183, %cst_98 {dimension_numbers = #tpu.dot_dimension_numbers<[1], [0], [0], [1], [0, 0, 1, 1], [], []>} : vector<32x1024xbf16>, vector<1024x128xbf16>, vector<32x128xf32> -> vector<32x128xf32>
    %c0_99 = arith.constant 0 : index
    %c0_100 = arith.constant 0 : index
    %185 = vector.load %arg33[%c0_99, %c0_100] : memref<1x128xf32, #tpu.memory_space<vmem>>, vector<1x128xf32>
    %186 = vector.broadcast %185 : vector<1x128xf32> to vector<32x128xf32>
    %187 = arith.addf %184, %186 : vector<32x128xf32>
    %188 = vector.shape_cast %187 : vector<32x128xf32> to vector<2x16x128xf32>
    %c0_101 = arith.constant 0 : index
    %c0_102 = arith.constant 0 : index
    %c0_103 = arith.constant 0 : index
    %189 = vector.load %arg35[%c0_101, %c0_102, %c0_103] : memref<2x16x128xf32, #tpu.memory_space<vmem>>, vector<2x16x128xf32>
    tpu.vector_store %arg35[%c0_101, %c0_102, %c0_103], %188 {strides = array<i32>} : memref<2x16x128xf32, #tpu.memory_space<vmem>>, vector<2x16x128xf32>,
    return
  }
  func.func @transform_0(%arg0: i32) -> (i32, i32, i32) {
    %c0_i32 = arith.constant 0 : i32
    %c0_i32_0 = arith.constant 0 : i32
    %c0_i32_1 = arith.constant 0 : i32
    return %arg0, %c0_i32, %c0_i32_0 : i32, i32, i32
  }
  func.func @transform_1(%arg0: i32) -> (i32, i32) {
    %c0_i32 = arith.constant 0 : i32
    %c0_i32_0 = arith.constant 0 : i32
    %c0_i32_1 = arith.constant 0 : i32
    return %c0_i32, %c0_i32_0 : i32, i32
  }
  func.func @transform_2(%arg0: i32) -> (i32, i32) {
    %c0_i32 = arith.constant 0 : i32
    %c0_i32_0 = arith.constant 0 : i32
    %c0_i32_1 = arith.constant 0 : i32
    return %c0_i32, %c0_i32_0 : i32, i32
  }
  func.func @transform_3(%arg0: i32) -> (i32, i32) {
    %c0_i32 = arith.constant 0 : i32
    %c0_i32_0 = arith.constant 0 : i32
    %c0_i32_1 = arith.constant 0 : i32
    return %c0_i32, %c0_i32_0 : i32, i32
  }
  func.func @transform_4(%arg0: i32) -> (i32, i32) {
    %c0_i32 = arith.constant 0 : i32
    %c0_i32_0 = arith.constant 0 : i32
    %c0_i32_1 = arith.constant 0 : i32
    return %c0_i32, %c0_i32_0 : i32, i32
  }
  func.func @transform_5(%arg0: i32) -> (i32, i32) {
    %c0_i32 = arith.constant 0 : i32
    %c0_i32_0 = arith.constant 0 : i32
    %c0_i32_1 = arith.constant 0 : i32
    return %c0_i32, %c0_i32_0 : i32, i32
  }
  func.func @transform_6(%arg0: i32) -> (i32, i32) {
    %c0_i32 = arith.constant 0 : i32
    %c0_i32_0 = arith.constant 0 : i32
    %c0_i32_1 = arith.constant 0 : i32
    return %c0_i32, %c0_i32_0 : i32, i32
  }
  func.func @transform_7(%arg0: i32) -> (i32, i32) {
    %c0_i32 = arith.constant 0 : i32
    %c0_i32_0 = arith.constant 0 : i32
    %c0_i32_1 = arith.constant 0 : i32
    return %c0_i32, %c0_i32_0 : i32, i32
  }
  func.func @transform_8(%arg0: i32) -> (i32, i32) {
    %c0_i32 = arith.constant 0 : i32
    %c0_i32_0 = arith.constant 0 : i32
    %c0_i32_1 = arith.constant 0 : i32
    return %c0_i32, %c0_i32_0 : i32, i32
  }
  func.func @transform_9(%arg0: i32) -> (i32, i32) {
    %c0_i32 = arith.constant 0 : i32
    %c0_i32_0 = arith.constant 0 : i32
    %c0_i32_1 = arith.constant 0 : i32
    return %c0_i32, %c0_i32_0 : i32, i32
  }
  func.func @transform_10(%arg0: i32) -> (i32, i32) {
    %c0_i32 = arith.constant 0 : i32
    %c0_i32_0 = arith.constant 0 : i32
    %c0_i32_1 = arith.constant 0 : i32
    return %c0_i32, %c0_i32_0 : i32, i32
  }
  func.func @transform_11(%arg0: i32) -> (i32, i32) {
    %c0_i32 = arith.constant 0 : i32
    %c0_i32_0 = arith.constant 0 : i32
    %c0_i32_1 = arith.constant 0 : i32
    return %c0_i32, %c0_i32_0 : i32, i32
  }
  func.func @transform_12(%arg0: i32) -> (i32, i32) {
    %c0_i32 = arith.constant 0 : i32
    %c0_i32_0 = arith.constant 0 : i32
    %c0_i32_1 = arith.constant 0 : i32
    return %c0_i32, %c0_i32_0 : i32, i32
  }
  func.func @transform_13(%arg0: i32) -> (i32, i32) {
    %c0_i32 = arith.constant 0 : i32
    %c0_i32_0 = arith.constant 0 : i32
    %c0_i32_1 = arith.constant 0 : i32
    return %c0_i32, %c0_i32_0 : i32, i32
  }
  func.func @transform_14(%arg0: i32) -> (i32, i32) {
    %c0_i32 = arith.constant 0 : i32
    %c0_i32_0 = arith.constant 0 : i32
    %c0_i32_1 = arith.constant 0 : i32
    return %c0_i32, %c0_i32_0 : i32, i32
  }
  func.func @transform_15(%arg0: i32) -> (i32, i32) {
    %c0_i32 = arith.constant 0 : i32
    %c0_i32_0 = arith.constant 0 : i32
    %c0_i32_1 = arith.constant 0 : i32
    return %c0_i32, %c0_i32_0 : i32, i32
  }
  func.func @transform_16(%arg0: i32) -> (i32, i32) {
    %c0_i32 = arith.constant 0 : i32
    %c0_i32_0 = arith.constant 0 : i32
    %c0_i32_1 = arith.constant 0 : i32
    return %c0_i32, %c0_i32_0 : i32, i32
  }
  func.func @transform_17(%arg0: i32) -> (i32, i32) {
    %c0_i32 = arith.constant 0 : i32
    %c0_i32_0 = arith.constant 0 : i32
    %c0_i32_1 = arith.constant 0 : i32
    return %c0_i32, %c0_i32_0 : i32, i32
  }
  func.func @transform_18(%arg0: i32) -> (i32, i32) {
    %c0_i32 = arith.constant 0 : i32
    %c0_i32_0 = arith.constant 0 : i32
    %c0_i32_1 = arith.constant 0 : i32
    return %c0_i32, %c0_i32_0 : i32, i32
  }
  func.func @transform_19(%arg0: i32) -> (i32, i32) {
    %c0_i32 = arith.constant 0 : i32
    %c0_i32_0 = arith.constant 0 : i32
    %c0_i32_1 = arith.constant 0 : i32
    return %c0_i32, %c0_i32_0 : i32, i32
  }
  func.func @transform_20(%arg0: i32) -> (i32, i32) {
    %c0_i32 = arith.constant 0 : i32
    %c0_i32_0 = arith.constant 0 : i32
    %c0_i32_1 = arith.constant 0 : i32
    return %c0_i32, %c0_i32_0 : i32, i32
  }
  func.func @transform_21(%arg0: i32) -> (i32, i32) {
    %c0_i32 = arith.constant 0 : i32
    %c0_i32_0 = arith.constant 0 : i32
    %c0_i32_1 = arith.constant 0 : i32
    return %c0_i32, %c0_i32_0 : i32, i32
  }
  func.func @transform_22(%arg0: i32) -> (i32, i32) {
    %c0_i32 = arith.constant 0 : i32
    %c0_i32_0 = arith.constant 0 : i32
    %c0_i32_1 = arith.constant 0 : i32
    return %c0_i32, %c0_i32_0 : i32, i32
  }
  func.func @transform_23(%arg0: i32) -> (i32, i32) {
    %c0_i32 = arith.constant 0 : i32
    %c0_i32_0 = arith.constant 0 : i32
    %c0_i32_1 = arith.constant 0 : i32
    return %c0_i32, %c0_i32_0 : i32, i32
  }
  func.func @transform_24(%arg0: i32) -> (i32, i32) {
    %c0_i32 = arith.constant 0 : i32
    %c0_i32_0 = arith.constant 0 : i32
    %c0_i32_1 = arith.constant 0 : i32
    return %c0_i32, %c0_i32_0 : i32, i32
  }
  func.func @transform_25(%arg0: i32) -> (i32, i32) {
    %c0_i32 = arith.constant 0 : i32
    %c0_i32_0 = arith.constant 0 : i32
    %c0_i32_1 = arith.constant 0 : i32
    return %c0_i32, %c0_i32_0 : i32, i32
  }
  func.func @transform_26(%arg0: i32) -> (i32, i32) {
    %c0_i32 = arith.constant 0 : i32
    %c0_i32_0 = arith.constant 0 : i32
    %c0_i32_1 = arith.constant 0 : i32
    return %c0_i32, %c0_i32_0 : i32, i32
  }
  func.func @transform_27(%arg0: i32) -> (i32, i32) {
    %c0_i32 = arith.constant 0 : i32
    %c0_i32_0 = arith.constant 0 : i32
    %c0_i32_1 = arith.constant 0 : i32
    return %c0_i32, %c0_i32_0 : i32, i32
  }
  func.func @transform_28(%arg0: i32) -> (i32, i32) {
    %c0_i32 = arith.constant 0 : i32
    %c0_i32_0 = arith.constant 0 : i32
    %c0_i32_1 = arith.constant 0 : i32
    return %c0_i32, %c0_i32_0 : i32, i32
  }
  func.func @transform_29(%arg0: i32) -> (i32, i32) {
    %c0_i32 = arith.constant 0 : i32
    %c0_i32_0 = arith.constant 0 : i32
    %c0_i32_1 = arith.constant 0 : i32
    return %c0_i32, %c0_i32_0 : i32, i32
  }
  func.func @transform_30(%arg0: i32) -> (i32, i32) {
    %c0_i32 = arith.constant 0 : i32
    %c0_i32_0 = arith.constant 0 : i32
    %c0_i32_1 = arith.constant 0 : i32
    return %c0_i32, %c0_i32_0 : i32, i32
  }
  func.func @transform_31(%arg0: i32) -> (i32, i32) {
    %c0_i32 = arith.constant 0 : i32
    %c0_i32_0 = arith.constant 0 : i32
    %c0_i32_1 = arith.constant 0 : i32
    return %c0_i32, %c0_i32_0 : i32, i32
  }
  func.func @transform_32(%arg0: i32) -> (i32, i32) {
    %c0_i32 = arith.constant 0 : i32
    %c0_i32_0 = arith.constant 0 : i32
    %c0_i32_1 = arith.constant 0 : i32
    return %c0_i32, %c0_i32_0 : i32, i32
  }
  func.func @transform_33(%arg0: i32) -> (i32, i32, i32) {
    %c0_i32 = arith.constant 0 : i32
    %c0_i32_0 = arith.constant 0 : i32
    %c0_i32_1 = arith.constant 0 : i32
    return %arg0, %c0_i32, %c0_i32_0 : i32, i32, i32
  }
  func.func @transform_34(%arg0: i32) -> (i32, i32, i32) {
    %c0_i32 = arith.constant 0 : i32
    %c0_i32_0 = arith.constant 0 : i32
    %c0_i32_1 = arith.constant 0 : i32
    return %arg0, %c0_i32, %c0_i32_0 : i32, i32, i32
  }
}

</mosaic_0001>

<llo_original>
// kernel: poly_penn_fcn_forward.1
$region0: #{poly_penn_fcn_forward.1}
  #allocation0 [shape = 'u32[]', space=smem, size = 0x4, offset = 0x4, fixed_abs, tag = 'smem constant byte address 0x4 - core index']
  #allocation1 [shape = 'u32[72,128]{1,0:T(1,128)}', space=vmem, size = 0x9000, scoped, tag = 'internal scratch']
  %s0 = inlined_call_operand.smem [shape: u32[35], index: -1, kind: input, shape index: {}]
  %s1 = sld [smem:[%s0]]
  %s2 = scalar_lea.smem %s0, 1
  %s3 = sld [smem:[%s2]]
  %s4 = scalar_lea.smem %s0, 2
  %s5 = sld [smem:[%s4]]
  %s6 = scalar_lea.smem %s0, 3
  %s7 = sld [smem:[%s6]]
  %s8 = scalar_lea.smem %s0, 4
  %s9 = sld [smem:[%s8]]
  %s10 = scalar_lea.smem %s0, 5
  %s11 = sld [smem:[%s10]]
  %s12 = scalar_lea.smem %s0, 6
  %s13 = sld [smem:[%s12]]
  %s14 = scalar_lea.smem %s0, 7
  %s15 = sld [smem:[%s14]]
  %s16 = scalar_lea.smem %s0, 8
  %s17 = sld [smem:[%s16]]
  %s18 = scalar_lea.smem %s0, 9
  %s19 = sld [smem:[%s18]]
  %s20 = scalar_lea.smem %s0, 10
  %s21 = sld [smem:[%s20]]
  %s22 = scalar_lea.smem %s0, 11
  %s23 = sld [smem:[%s22]]
  %s24 = scalar_lea.smem %s0, 12
  %s25 = sld [smem:[%s24]]
  %s26 = scalar_lea.smem %s0, 13
  %s27 = sld [smem:[%s26]]
  %s28 = scalar_lea.smem %s0, 14
  %s29 = sld [smem:[%s28]]
  %s30 = scalar_lea.smem %s0, 15
  %s31 = sld [smem:[%s30]]
  %s32 = scalar_lea.smem %s0, 16
  %s33 = sld [smem:[%s32]]
  %s34 = scalar_lea.smem %s0, 17
  %s35 = sld [smem:[%s34]]
  %s36 = scalar_lea.smem %s0, 18
  %s37 = sld [smem:[%s36]]
  %s38 = scalar_lea.smem %s0, 19
  %s39 = sld [smem:[%s38]]
  %s40 = scalar_lea.smem %s0, 20
  %s41 = sld [smem:[%s40]]
  %s42 = scalar_lea.smem %s0, 21
  %s43 = sld [smem:[%s42]]
  %s44 = scalar_lea.smem %s0, 22
  %s45 = sld [smem:[%s44]]
  %s46 = scalar_lea.smem %s0, 23
  %s47 = sld [smem:[%s46]]
  %s48 = scalar_lea.smem %s0, 24
  %s49 = sld [smem:[%s48]]
  %s50 = scalar_lea.smem %s0, 25
  %s51 = sld [smem:[%s50]]
  %s52 = scalar_lea.smem %s0, 26
  %s53 = sld [smem:[%s52]]
  %s54 = scalar_lea.smem %s0, 27
  %s55 = sld [smem:[%s54]]
  %s56 = scalar_lea.smem %s0, 28
  %s57 = sld [smem:[%s56]]
  %s58 = scalar_lea.smem %s0, 29
  %s59 = sld [smem:[%s58]]
  %s60 = scalar_lea.smem %s0, 30
  %s61 = sld [smem:[%s60]]
  %s62 = scalar_lea.smem %s0, 31
  %s63 = sld [smem:[%s62]]
  %s64 = scalar_lea.smem %s0, 32
  %s65 = sld [smem:[%s64]]
  %s66 = scalar_lea.smem %s0, 33
  %s67 = sld [smem:[%s66]]
  %s68 = scalar_lea.smem %s0, 34
  %s69 = sld [smem:[%s68]]
  %70 = xla_tuple %s67, %s69
  %s71 = sld [smem:[#allocation0]]
  $region278: #{poly_penn_fcn_forward.1} parent=0
    _
  %s73 = ssub.s32 1, %s71
  %s74 = scalar_select 0, %s73, %s71
  $region1: #{poly_penn_fcn_forward.1} parent=0
    #allocation2 [shape = 'u8[196608]{0}', space=vmem, size = 0x30000, scoped, tag = 'input window, operand 1, single buffered']
    #allocation3 [shape = 's32[1]{0}', space=sflag, size = 0x4, scoped, tag = 'scoped memory for poly_penn_fcn_forward.1']
    #allocation4 [shape = 'u8[1024]{0}', space=vmem, size = 0x400, scoped, tag = 'input window, operand 2, single buffered']
    #allocation5 [shape = 's32[1]{0}', space=sflag, size = 0x4, scoped, tag = 'scoped memory for poly_penn_fcn_forward.1']
    #allocation6 [shape = 'u8[1024]{0}', space=vmem, size = 0x400, scoped, tag = 'input window, operand 3, single buffered']
    #allocation7 [shape = 'u8[1024]{0}', space=vmem, size = 0x400, scoped, tag = 'input window, operand 4, single buffered']
    #allocation8 [shape = 's32[1]{0}', space=sflag, size = 0x4, scoped, tag = 'scoped memory for poly_penn_fcn_forward.1']
    #allocation9 [shape = 'u8[196608]{0}', space=vmem, size = 0x30000, scoped, tag = 'input window, operand 5, single buffered']
    #allocation10 [shape = 'u8[512]{0}', space=vmem, size = 0x400, scoped, tag = 'input window, operand 6, single buffered']
    #allocation11 [shape = 's32[1]{0}', space=sflag, size = 0x4, scoped, tag = 'scoped memory for poly_penn_fcn_forward.1']
    #allocation12 [shape = 'u8[512]{0}', space=vmem, size = 0x400, scoped, tag = 'input window, operand 7, single buffered']
    #allocation13 [shape = 'u8[512]{0}', space=vmem, size = 0x400, scoped, tag = 'input window, operand 8, single buffered']
    #allocation14 [shape = 's32[1]{0}', space=sflag, size = 0x4, scoped, tag = 'scoped memory for poly_penn_fcn_forward.1']
    #allocation15 [shape = 'u8[98304]{0}', space=vmem, size = 0x18000, scoped, tag = 'input window, operand 9, single buffered']
    #allocation16 [shape = 'u8[512]{0}', space=vmem, size = 0x400, scoped, tag = 'input window, operand 10, single buffered']
    #allocation17 [shape = 's32[1]{0}', space=sflag, size = 0x4, scoped, tag = 'scoped memory for poly_penn_fcn_forward.1']
    #allocation18 [shape = 'u8[512]{0}', space=vmem, size = 0x400, scoped, tag = 'input window, operand 11, single buffered']
    #allocation19 [shape = 'u8[512]{0}', space=vmem, size = 0x400, scoped, tag = 'input window, operand 12, single buffered']
    #allocation20 [shape = 's32[1]{0}', space=sflag, size = 0x4, scoped, tag = 'scoped memory for poly_penn_fcn_forward.1']
    #allocation21 [shape = 'u8[98304]{0}', space=vmem, size = 0x18000, scoped, tag = 'input window, operand 13, single buffered']
    #allocation22 [shape = 'u8[512]{0}', space=vmem, size = 0x400, scoped, tag = 'input window, operand 14, single buffered']
    #allocation23 [shape = 's32[1]{0}', space=sflag, size = 0x4, scoped, tag = 'scoped memory for poly_penn_fcn_forward.1']
    #allocation24 [shape = 'u8[512]{0}', space=vmem, size = 0x400, scoped, tag = 'input window, operand 15, single buffered']
    #allocation25 [shape = 'u8[512]{0}', space=vmem, size = 0x400, scoped, tag = 'input window, operand 16, single buffered']
    #allocation26 [shape = 's32[1]{0}', space=sflag, size = 0x4, scoped, tag = 'scoped memory for poly_penn_fcn_forward.1']
    #allocation27 [shape = 'u8[196608]{0}', space=vmem, size = 0x30000, scoped, tag = 'input window, operand 17, single buffered']
    #allocation28 [shape = 'u8[1024]{0}', space=vmem, size = 0x400, scoped, tag = 'input window, operand 18, single buffered']
    #allocation29 [shape = 's32[1]{0}', space=sflag, size = 0x4, scoped, tag = 'scoped memory for poly_penn_fcn_forward.1']
    #allocation30 [shape = 'u8[1024]{0}', space=vmem, size = 0x400, scoped, tag = 'input window, operand 19, single buffered']
    #allocation31 [shape = 'u8[1024]{0}', space=vmem, size = 0x400, scoped, tag = 'input window, operand 20, single buffered']
    #allocation32 [shape = 's32[1]{0}', space=sflag, size = 0x4, scoped, tag = 'scoped memory for poly_penn_fcn_forward.1']
    #allocation33 [shape = 'u8[786432]{0}', space=vmem, size = 0xc0000, scoped, tag = 'input window, operand 21, single buffered']
    #allocation34 [shape = 'u8[2048]{0}', space=vmem, size = 0x800, scoped, tag = 'input window, operand 22, single buffered']
    #allocation35 [shape = 's32[1]{0}', space=sflag, size = 0x4, scoped, tag = 'scoped memory for poly_penn_fcn_forward.1']
    #allocation36 [shape = 'u8[2048]{0}', space=vmem, size = 0x800, scoped, tag = 'input window, operand 23, single buffered']
    #allocation37 [shape = 'u8[2048]{0}', space=vmem, size = 0x800, scoped, tag = 'input window, operand 24, single buffered']
    #allocation38 [shape = 's32[1]{0}', space=sflag, size = 0x4, scoped, tag = 'scoped memory for poly_penn_fcn_forward.1']
    #allocation39 [shape = 'u8[131072]{0}', space=vmem, size = 0x20000, scoped, tag = 'input window, operand 25, single buffered']
    #allocation40 [shape = 'u8[512]{0}', space=vmem, size = 0x400, scoped, tag = 'input window, operand 26, single buffered']
    #allocation41 [shape = 's32[1]{0}', space=sflag, size = 0x4, scoped, tag = 'scoped memory for poly_penn_fcn_forward.1']
    #allocation42 [shape = 'u8[3145728]{0}', space=vmem, size = 0x300000, scoped, tag = 'input window, operand 27, single buffered']
    #allocation43 [shape = 'u8[4096]{0}', space=vmem, size = 0x1000, scoped, tag = 'input window, operand 28, single buffered']
    #allocation44 [shape = 's32[1]{0}', space=sflag, size = 0x4, scoped, tag = 'scoped memory for poly_penn_fcn_forward.1']
    #allocation45 [shape = 'u8[4096]{0}', space=vmem, size = 0x1000, scoped, tag = 'input window, operand 29, single buffered']
    #allocation46 [shape = 'u8[4096]{0}', space=vmem, size = 0x1000, scoped, tag = 'input window, operand 30, single buffered']
    #allocation47 [shape = 's32[1]{0}', space=sflag, size = 0x4, scoped, tag = 'scoped memory for poly_penn_fcn_forward.1']
    #allocation48 [shape = 'u8[262144]{0}', space=vmem, size = 0x40000, scoped, tag = 'input window, operand 31, single buffered']
    #allocation49 [shape = 'u8[512]{0}', space=vmem, size = 0x400, scoped, tag = 'input window, operand 32, single buffered']
    #allocation50 [shape = 's32[1]{0}', space=sflag, size = 0x4, scoped, tag = 'scoped memory for poly_penn_fcn_forward.1']
    %75 = vsyncpa [#allocation3], 0
    %76 = vsyncpa [#allocation5], 0
    %77 = vsyncpa [#allocation8], 0
    %78 = vsyncpa [#allocation11], 0
    %79 = vsyncpa [#allocation14], 0
    %80 = vsyncpa [#allocation17], 0
    %81 = vsyncpa [#allocation20], 0
    %82 = vsyncpa [#allocation23], 0
    %83 = vsyncpa [#allocation26], 0
    %84 = vsyncpa [#allocation29], 0
    %85 = vsyncpa [#allocation32], 0
    %86 = vsyncpa [#allocation35], 0
    %87 = vsyncpa [#allocation38], 0
    %88 = vsyncpa [#allocation41], 0
    %89 = vsyncpa [#allocation44], 0
    %90 = vsyncpa [#allocation47], 0
    %91 = vsyncpa [#allocation50], 0
    // Predicated region
    $region2: #{poly_penn_fcn_forward.1} parent=1 // pred_check
      _
    $region3: #{poly_penn_fcn_forward.1} parent=1 // pred_check_branch
      %93 = sbr.rel (0) target = $region5
    $region4: #{poly_penn_fcn_forward.1} parent=1 // pred_region
      _
    $region5: #{poly_penn_fcn_forward.1} parent=1 // pred_fallthru
      _
    // Predicated region
    $region6: #{poly_penn_fcn_forward.1} parent=1 // pred_check
      _
    $region7: #{poly_penn_fcn_forward.1} parent=1 // pred_check_branch
      %95 = sbr.rel (0) target = $region9
    $region8: #{poly_penn_fcn_forward.1} parent=1 // pred_region
      %97 = vsyncadd [#allocation3], 0
      %s98 = sshll.u32 %s3, 4
      %s99 = int_to_ptr.hbm [resolvable:$true] %s98
      %s100 = sshll.u32 [#allocation2], 4
      %s101 = int_to_ptr.vmem [resolvable:$true] %s100
      %106 = dma.hbm_to_vmem [thread:$0]  %s99, 6144, %s101, [#allocation3], 128, 128, 8
    $region9: #{poly_penn_fcn_forward.1} parent=1 // pred_fallthru
      _
    // Predicated region
    $region10: #{poly_penn_fcn_forward.1} parent=1 // pred_check
      _
    $region11: #{poly_penn_fcn_forward.1} parent=1 // pred_check_branch
      %108 = sbr.rel (0) target = $region13
    $region12: #{poly_penn_fcn_forward.1} parent=1 // pred_region
      %110 = vsyncadd [#allocation5], 0
      %s112 = sshll.u32 %s5, 4
      %s113 = int_to_ptr.hbm [resolvable:$true] %s112
      %s114 = sshll.u32 [#allocation4], 4
      %s115 = int_to_ptr.vmem [resolvable:$true] %s114
      %117 = dma.hbm_to_vmem [thread:$0]  %s113, 32, %s115, [#allocation5]
    $region13: #{poly_penn_fcn_forward.1} parent=1 // pred_fallthru
      _
    // Predicated region
    $region14: #{poly_penn_fcn_forward.1} parent=1 // pred_check
      _
    $region15: #{poly_penn_fcn_forward.1} parent=1 // pred_check_branch
      %119 = sbr.rel (0) target = $region17
    $region16: #{poly_penn_fcn_forward.1} parent=1 // pred_region
      %121 = vsyncadd [#allocation5], 0
      %s123 = sshll.u32 %s7, 4
      %s124 = int_to_ptr.hbm [resolvable:$true] %s123
      %s125 = sshll.u32 [#allocation6], 4
      %s126 = int_to_ptr.vmem [resolvable:$true] %s125
      %128 = dma.hbm_to_vmem [thread:$0]  %s124, 32, %s126, [#allocation5]
    $region17: #{poly_penn_fcn_forward.1} parent=1 // pred_fallthru
      _
    // Predicated region
    $region18: #{poly_penn_fcn_forward.1} parent=1 // pred_check
      _
    $region19: #{poly_penn_fcn_forward.1} parent=1 // pred_check_branch
      %130 = sbr.rel (0) target = $region21
    $region20: #{poly_penn_fcn_forward.1} parent=1 // pred_region
      %132 = vsyncadd [#allocation8], 0
      %s134 = sshll.u32 %s9, 4
      %s135 = int_to_ptr.hbm [resolvable:$true] %s134
      %s136 = sshll.u32 [#allocation7], 4
      %s137 = int_to_ptr.vmem [resolvable:$true] %s136
      %139 = dma.hbm_to_vmem [thread:$0]  %s135, 32, %s137, [#allocation8]
    $region21: #{poly_penn_fcn_forward.1} parent=1 // pred_fallthru
      _
    // Predicated region
    $region22: #{poly_penn_fcn_forward.1} parent=1 // pred_check
      _
    $region23: #{poly_penn_fcn_forward.1} parent=1 // pred_check_branch
      %141 = sbr.rel (0) target = $region25
    $region24: #{poly_penn_fcn_forward.1} parent=1 // pred_region
      %143 = vsyncadd [#allocation8], 0
      %s144 = sshll.u32 %s11, 4
      %s145 = int_to_ptr.hbm [resolvable:$true] %s144
      %s146 = sshll.u32 [#allocation9], 4
      %s147 = int_to_ptr.vmem [resolvable:$true] %s146
      %152 = dma.hbm_to_vmem [thread:$0]  %s145, 6144, %s147, [#allocation8], 64, 64, 4
    $region25: #{poly_penn_fcn_forward.1} parent=1 // pred_fallthru
      _
    // Predicated region
    $region26: #{poly_penn_fcn_forward.1} parent=1 // pred_check
      _
    $region27: #{poly_penn_fcn_forward.1} parent=1 // pred_check_branch
      %154 = sbr.rel (0) target = $region29
    $region28: #{poly_penn_fcn_forward.1} parent=1 // pred_region
      %156 = vsyncadd [#allocation11], 0
      %s158 = sshll.u32 %s13, 4
      %s159 = int_to_ptr.hbm [resolvable:$true] %s158
      %s160 = sshll.u32 [#allocation10], 4
      %s161 = int_to_ptr.vmem [resolvable:$true] %s160
      %163 = dma.hbm_to_vmem [thread:$0]  %s159, 16, %s161, [#allocation11]
    $region29: #{poly_penn_fcn_forward.1} parent=1 // pred_fallthru
      _
    // Predicated region
    $region30: #{poly_penn_fcn_forward.1} parent=1 // pred_check
      _
    $region31: #{poly_penn_fcn_forward.1} parent=1 // pred_check_branch
      %165 = sbr.rel (0) target = $region33
    $region32: #{poly_penn_fcn_forward.1} parent=1 // pred_region
      %167 = vsyncadd [#allocation11], 0
      %s169 = sshll.u32 %s15, 4
      %s170 = int_to_ptr.hbm [resolvable:$true] %s169
      %s171 = sshll.u32 [#allocation12], 4
      %s172 = int_to_ptr.vmem [resolvable:$true] %s171
      %174 = dma.hbm_to_vmem [thread:$0]  %s170, 16, %s172, [#allocation11]
    $region33: #{poly_penn_fcn_forward.1} parent=1 // pred_fallthru
      _
    // Predicated region
    $region34: #{poly_penn_fcn_forward.1} parent=1 // pred_check
      _
    $region35: #{poly_penn_fcn_forward.1} parent=1 // pred_check_branch
      %176 = sbr.rel (0) target = $region37
    $region36: #{poly_penn_fcn_forward.1} parent=1 // pred_region
      %178 = vsyncadd [#allocation14], 0
      %s180 = sshll.u32 %s17, 4
      %s181 = int_to_ptr.hbm [resolvable:$true] %s180
      %s182 = sshll.u32 [#allocation13], 4
      %s183 = int_to_ptr.vmem [resolvable:$true] %s182
      %185 = dma.hbm_to_vmem [thread:$0]  %s181, 16, %s183, [#allocation14]
    $region37: #{poly_penn_fcn_forward.1} parent=1 // pred_fallthru
      _
    // Predicated region
    $region38: #{poly_penn_fcn_forward.1} parent=1 // pred_check
      _
    $region39: #{poly_penn_fcn_forward.1} parent=1 // pred_check_branch
      %187 = sbr.rel (0) target = $region41
    $region40: #{poly_penn_fcn_forward.1} parent=1 // pred_region
      %189 = vsyncadd [#allocation14], 0
      %s190 = sshll.u32 %s19, 4
      %s191 = int_to_ptr.hbm [resolvable:$true] %s190
      %s192 = sshll.u32 [#allocation15], 4
      %s193 = int_to_ptr.vmem [resolvable:$true] %s192
      %198 = dma.hbm_to_vmem [thread:$0]  %s191, 3072, %s193, [#allocation14], 64, 64, 4
    $region41: #{poly_penn_fcn_forward.1} parent=1 // pred_fallthru
      _
    // Predicated region
    $region42: #{poly_penn_fcn_forward.1} parent=1 // pred_check
      _
    $region43: #{poly_penn_fcn_forward.1} parent=1 // pred_check_branch
      %200 = sbr.rel (0) target = $region45
    $region44: #{poly_penn_fcn_forward.1} parent=1 // pred_region
      %202 = vsyncadd [#allocation17], 0
      %s204 = sshll.u32 %s21, 4
      %s205 = int_to_ptr.hbm [resolvable:$true] %s204
      %s206 = sshll.u32 [#allocation16], 4
      %s207 = int_to_ptr.vmem [resolvable:$true] %s206
      %209 = dma.hbm_to_vmem [thread:$0]  %s205, 16, %s207, [#allocation17]
    $region45: #{poly_penn_fcn_forward.1} parent=1 // pred_fallthru
      _
    // Predicated region
    $region46: #{poly_penn_fcn_forward.1} parent=1 // pred_check
      _
    $region47: #{poly_penn_fcn_forward.1} parent=1 // pred_check_branch
      %211 = sbr.rel (0) target = $region49
    $region48: #{poly_penn_fcn_forward.1} parent=1 // pred_region
      %213 = vsyncadd [#allocation17], 0
      %s215 = sshll.u32 %s23, 4
      %s216 = int_to_ptr.hbm [resolvable:$true] %s215
      %s217 = sshll.u32 [#allocation18], 4
      %s218 = int_to_ptr.vmem [resolvable:$true] %s217
      %220 = dma.hbm_to_vmem [thread:$0]  %s216, 16, %s218, [#allocation17]
    $region49: #{poly_penn_fcn_forward.1} parent=1 // pred_fallthru
      _
    // Predicated region
    $region50: #{poly_penn_fcn_forward.1} parent=1 // pred_check
      _
    $region51: #{poly_penn_fcn_forward.1} parent=1 // pred_check_branch
      %222 = sbr.rel (0) target = $region53
    $region52: #{poly_penn_fcn_forward.1} parent=1 // pred_region
      %224 = vsyncadd [#allocation20], 0
      %s226 = sshll.u32 %s25, 4
      %s227 = int_to_ptr.hbm [resolvable:$true] %s226
      %s228 = sshll.u32 [#allocation19], 4
      %s229 = int_to_ptr.vmem [resolvable:$true] %s228
      %231 = dma.hbm_to_vmem [thread:$0]  %s227, 16, %s229, [#allocation20]
    $region53: #{poly_penn_fcn_forward.1} parent=1 // pred_fallthru
      _
    // Predicated region
    $region54: #{poly_penn_fcn_forward.1} parent=1 // pred_check
      _
    $region55: #{poly_penn_fcn_forward.1} parent=1 // pred_check_branch
      %233 = sbr.rel (0) target = $region57
    $region56: #{poly_penn_fcn_forward.1} parent=1 // pred_region
      %235 = vsyncadd [#allocation20], 0
      %s236 = sshll.u32 %s27, 4
      %s237 = int_to_ptr.hbm [resolvable:$true] %s236
      %s238 = sshll.u32 [#allocation21], 4
      %s239 = int_to_ptr.vmem [resolvable:$true] %s238
      %244 = dma.hbm_to_vmem [thread:$0]  %s237, 3072, %s239, [#allocation20], 64, 64, 4
    $region57: #{poly_penn_fcn_forward.1} parent=1 // pred_fallthru
      _
    // Predicated region
    $region58: #{poly_penn_fcn_forward.1} parent=1 // pred_check
      _
    $region59: #{poly_penn_fcn_forward.1} parent=1 // pred_check_branch
      %246 = sbr.rel (0) target = $region61
    $region60: #{poly_penn_fcn_forward.1} parent=1 // pred_region
      %248 = vsyncadd [#allocation23], 0
      %s250 = sshll.u32 %s29, 4
      %s251 = int_to_ptr.hbm [resolvable:$true] %s250
      %s252 = sshll.u32 [#allocation22], 4
      %s253 = int_to_ptr.vmem [resolvable:$true] %s252
      %255 = dma.hbm_to_vmem [thread:$0]  %s251, 16, %s253, [#allocation23]
    $region61: #{poly_penn_fcn_forward.1} parent=1 // pred_fallthru
      _
    // Predicated region
    $region62: #{poly_penn_fcn_forward.1} parent=1 // pred_check
      _
    $region63: #{poly_penn_fcn_forward.1} parent=1 // pred_check_branch
      %257 = sbr.rel (0) target = $region65
    $region64: #{poly_penn_fcn_forward.1} parent=1 // pred_region
      %259 = vsyncadd [#allocation23], 0
      %s261 = sshll.u32 %s31, 4
      %s262 = int_to_ptr.hbm [resolvable:$true] %s261
      %s263 = sshll.u32 [#allocation24], 4
      %s264 = int_to_ptr.vmem [resolvable:$true] %s263
      %266 = dma.hbm_to_vmem [thread:$0]  %s262, 16, %s264, [#allocation23]
    $region65: #{poly_penn_fcn_forward.1} parent=1 // pred_fallthru
      _
    // Predicated region
    $region66: #{poly_penn_fcn_forward.1} parent=1 // pred_check
      _
    $region67: #{poly_penn_fcn_forward.1} parent=1 // pred_check_branch
      %268 = sbr.rel (0) target = $region69
    $region68: #{poly_penn_fcn_forward.1} parent=1 // pred_region
      %270 = vsyncadd [#allocation26], 0
      %s272 = sshll.u32 %s33, 4
      %s273 = int_to_ptr.hbm [resolvable:$true] %s272
      %s274 = sshll.u32 [#allocation25], 4
      %s275 = int_to_ptr.vmem [resolvable:$true] %s274
      %277 = dma.hbm_to_vmem [thread:$0]  %s273, 16, %s275, [#allocation26]
    $region69: #{poly_penn_fcn_forward.1} parent=1 // pred_fallthru
      _
    // Predicated region
    $region70: #{poly_penn_fcn_forward.1} parent=1 // pred_check
      _
    $region71: #{poly_penn_fcn_forward.1} parent=1 // pred_check_branch
      %279 = sbr.rel (0) target = $region73
    $region72: #{poly_penn_fcn_forward.1} parent=1 // pred_region
      %281 = vsyncadd [#allocation26], 0
      %s282 = sshll.u32 %s35, 4
      %s283 = int_to_ptr.hbm [resolvable:$true] %s282
      %s284 = sshll.u32 [#allocation27], 4
      %s285 = int_to_ptr.vmem [resolvable:$true] %s284
      %290 = dma.hbm_to_vmem [thread:$0]  %s283, 6144, %s285, [#allocation26], 128, 128, 8
    $region73: #{poly_penn_fcn_forward.1} parent=1 // pred_fallthru
      _
    // Predicated region
    $region74: #{poly_penn_fcn_forward.1} parent=1 // pred_check
      _
    $region75: #{poly_penn_fcn_forward.1} parent=1 // pred_check_branch
      %292 = sbr.rel (0) target = $region77
    $region76: #{poly_penn_fcn_forward.1} parent=1 // pred_region
      %294 = vsyncadd [#allocation29], 0
      %s296 = sshll.u32 %s37, 4
      %s297 = int_to_ptr.hbm [resolvable:$true] %s296
      %s298 = sshll.u32 [#allocation28], 4
      %s299 = int_to_ptr.vmem [resolvable:$true] %s298
      %301 = dma.hbm_to_vmem [thread:$0]  %s297, 32, %s299, [#allocation29]
    $region77: #{poly_penn_fcn_forward.1} parent=1 // pred_fallthru
      _
    // Predicated region
    $region78: #{poly_penn_fcn_forward.1} parent=1 // pred_check
      _
    $region79: #{poly_penn_fcn_forward.1} parent=1 // pred_check_branch
      %303 = sbr.rel (0) target = $region81
    $region80: #{poly_penn_fcn_forward.1} parent=1 // pred_region
      %305 = vsyncadd [#allocation29], 0
      %s307 = sshll.u32 %s39, 4
      %s308 = int_to_ptr.hbm [resolvable:$true] %s307
      %s309 = sshll.u32 [#allocation30], 4
      %s310 = int_to_ptr.vmem [resolvable:$true] %s309
      %312 = dma.hbm_to_vmem [thread:$0]  %s308, 32, %s310, [#allocation29]
    $region81: #{poly_penn_fcn_forward.1} parent=1 // pred_fallthru
      _
    // Predicated region
    $region82: #{poly_penn_fcn_forward.1} parent=1 // pred_check
      _
    $region83: #{poly_penn_fcn_forward.1} parent=1 // pred_check_branch
      %314 = sbr.rel (0) target = $region85
    $region84: #{poly_penn_fcn_forward.1} parent=1 // pred_region
      %316 = vsyncadd [#allocation32], 0
      %s318 = sshll.u32 %s41, 4
      %s319 = int_to_ptr.hbm [resolvable:$true] %s318
      %s320 = sshll.u32 [#allocation31], 4
      %s321 = int_to_ptr.vmem [resolvable:$true] %s320
      %323 = dma.hbm_to_vmem [thread:$0]  %s319, 32, %s321, [#allocation32]
    $region85: #{poly_penn_fcn_forward.1} parent=1 // pred_fallthru
      _
    // Predicated region
    $region86: #{poly_penn_fcn_forward.1} parent=1 // pred_check
      _
    $region87: #{poly_penn_fcn_forward.1} parent=1 // pred_check_branch
      %325 = sbr.rel (0) target = $region89
    $region88: #{poly_penn_fcn_forward.1} parent=1 // pred_region
      %327 = vsyncadd [#allocation32], 0
      %s328 = sshll.u32 %s43, 4
      %s329 = int_to_ptr.hbm [resolvable:$true] %s328
      %s330 = sshll.u32 [#allocation33], 4
      %s331 = int_to_ptr.vmem [resolvable:$true] %s330
      %336 = dma.hbm_to_vmem [thread:$0]  %s329, 24576, %s331, [#allocation32], 256, 256, 16
    $region89: #{poly_penn_fcn_forward.1} parent=1 // pred_fallthru
      _
    // Predicated region
    $region90: #{poly_penn_fcn_forward.1} parent=1 // pred_check
      _
    $region91: #{poly_penn_fcn_forward.1} parent=1 // pred_check_branch
      %338 = sbr.rel (0) target = $region93
    $region92: #{poly_penn_fcn_forward.1} parent=1 // pred_region
      %340 = vsyncadd [#allocation35], 0
      %s342 = sshll.u32 %s45, 4
      %s343 = int_to_ptr.hbm [resolvable:$true] %s342
      %s344 = sshll.u32 [#allocation34], 4
      %s345 = int_to_ptr.vmem [resolvable:$true] %s344
      %347 = dma.hbm_to_vmem [thread:$0]  %s343, 64, %s345, [#allocation35]
    $region93: #{poly_penn_fcn_forward.1} parent=1 // pred_fallthru
      _
    // Predicated region
    $region94: #{poly_penn_fcn_forward.1} parent=1 // pred_check
      _
    $region95: #{poly_penn_fcn_forward.1} parent=1 // pred_check_branch
      %349 = sbr.rel (0) target = $region97
    $region96: #{poly_penn_fcn_forward.1} parent=1 // pred_region
      %351 = vsyncadd [#allocation35], 0
      %s353 = sshll.u32 %s47, 4
      %s354 = int_to_ptr.hbm [resolvable:$true] %s353
      %s355 = sshll.u32 [#allocation36], 4
      %s356 = int_to_ptr.vmem [resolvable:$true] %s355
      %358 = dma.hbm_to_vmem [thread:$0]  %s354, 64, %s356, [#allocation35]
    $region97: #{poly_penn_fcn_forward.1} parent=1 // pred_fallthru
      _
    // Predicated region
    $region98: #{poly_penn_fcn_forward.1} parent=1 // pred_check
      _
    $region99: #{poly_penn_fcn_forward.1} parent=1 // pred_check_branch
      %360 = sbr.rel (0) target = $region101
    $region100: #{poly_penn_fcn_forward.1} parent=1 // pred_region
      %362 = vsyncadd [#allocation38], 0
      %s364 = sshll.u32 %s49, 4
      %s365 = int_to_ptr.hbm [resolvable:$true] %s364
      %s366 = sshll.u32 [#allocation37], 4
      %s367 = int_to_ptr.vmem [resolvable:$true] %s366
      %369 = dma.hbm_to_vmem [thread:$0]  %s365, 64, %s367, [#allocation38]
    $region101: #{poly_penn_fcn_forward.1} parent=1 // pred_fallthru
      _
    // Predicated region
    $region102: #{poly_penn_fcn_forward.1} parent=1 // pred_check
      _
    $region103: #{poly_penn_fcn_forward.1} parent=1 // pred_check_branch
      %371 = sbr.rel (0) target = $region105
    $region104: #{poly_penn_fcn_forward.1} parent=1 // pred_region
      %373 = vsyncadd [#allocation38], 0
      %s374 = sshll.u32 %s51, 4
      %s375 = int_to_ptr.hbm [resolvable:$true] %s374
      %s376 = sshll.u32 [#allocation39], 4
      %s377 = int_to_ptr.vmem [resolvable:$true] %s376
      %382 = dma.hbm_to_vmem [thread:$0]  %s375, 4096, %s377, [#allocation38], 64, 64, 4
    $region105: #{poly_penn_fcn_forward.1} parent=1 // pred_fallthru
      _
    // Predicated region
    $region106: #{poly_penn_fcn_forward.1} parent=1 // pred_check
      _
    $region107: #{poly_penn_fcn_forward.1} parent=1 // pred_check_branch
      %384 = sbr.rel (0) target = $region109
    $region108: #{poly_penn_fcn_forward.1} parent=1 // pred_region
      %386 = vsyncadd [#allocation41], 0
      %s388 = sshll.u32 %s53, 4
      %s389 = int_to_ptr.hbm [resolvable:$true] %s388
      %s390 = sshll.u32 [#allocation40], 4
      %s391 = int_to_ptr.vmem [resolvable:$true] %s390
      %393 = dma.hbm_to_vmem [thread:$0]  %s389, 16, %s391, [#allocation41]
    $region109: #{poly_penn_fcn_forward.1} parent=1 // pred_fallthru
      _
    // Predicated region
    $region110: #{poly_penn_fcn_forward.1} parent=1 // pred_check
      _
    $region111: #{poly_penn_fcn_forward.1} parent=1 // pred_check_branch
      %395 = sbr.rel (0) target = $region113
    $region112: #{poly_penn_fcn_forward.1} parent=1 // pred_region
      %397 = vsyncadd [#allocation41], 0
      %s398 = sshll.u32 %s55, 4
      %s399 = int_to_ptr.hbm [resolvable:$true] %s398
      %s400 = sshll.u32 [#allocation42], 4
      %s401 = int_to_ptr.vmem [resolvable:$true] %s400
      %406 = dma.hbm_to_vmem [thread:$0]  %s399, 98304, %s401, [#allocation41], 512, 512, 32
    $region113: #{poly_penn_fcn_forward.1} parent=1 // pred_fallthru
      _
    // Predicated region
    $region114: #{poly_penn_fcn_forward.1} parent=1 // pred_check
      _
    $region115: #{poly_penn_fcn_forward.1} parent=1 // pred_check_branch
      %408 = sbr.rel (0) target = $region117
    $region116: #{poly_penn_fcn_forward.1} parent=1 // pred_region
      %410 = vsyncadd [#allocation44], 0
      %s412 = sshll.u32 %s57, 4
      %s413 = int_to_ptr.hbm [resolvable:$true] %s412
      %s414 = sshll.u32 [#allocation43], 4
      %s415 = int_to_ptr.vmem [resolvable:$true] %s414
      %417 = dma.hbm_to_vmem [thread:$0]  %s413, 128, %s415, [#allocation44]
    $region117: #{poly_penn_fcn_forward.1} parent=1 // pred_fallthru
      _
    // Predicated region
    $region118: #{poly_penn_fcn_forward.1} parent=1 // pred_check
      _
    $region119: #{poly_penn_fcn_forward.1} parent=1 // pred_check_branch
      %419 = sbr.rel (0) target = $region121
    $region120: #{poly_penn_fcn_forward.1} parent=1 // pred_region
      %421 = vsyncadd [#allocation44], 0
      %s423 = sshll.u32 %s59, 4
      %s424 = int_to_ptr.hbm [resolvable:$true] %s423
      %s425 = sshll.u32 [#allocation45], 4
      %s426 = int_to_ptr.vmem [resolvable:$true] %s425
      %428 = dma.hbm_to_vmem [thread:$0]  %s424, 128, %s426, [#allocation44]
    $region121: #{poly_penn_fcn_forward.1} parent=1 // pred_fallthru
      _
    // Predicated region
    $region122: #{poly_penn_fcn_forward.1} parent=1 // pred_check
      _
    $region123: #{poly_penn_fcn_forward.1} parent=1 // pred_check_branch
      %430 = sbr.rel (0) target = $region125
    $region124: #{poly_penn_fcn_forward.1} parent=1 // pred_region
      %432 = vsyncadd [#allocation47], 0
      %s434 = sshll.u32 %s61, 4
      %s435 = int_to_ptr.hbm [resolvable:$true] %s434
      %s436 = sshll.u32 [#allocation46], 4
      %s437 = int_to_ptr.vmem [resolvable:$true] %s436
      %439 = dma.hbm_to_vmem [thread:$0]  %s435, 128, %s437, [#allocation47]
    $region125: #{poly_penn_fcn_forward.1} parent=1 // pred_fallthru
      _
    // Predicated region
    $region126: #{poly_penn_fcn_forward.1} parent=1 // pred_check
      _
    $region127: #{poly_penn_fcn_forward.1} parent=1 // pred_check_branch
      %441 = sbr.rel (0) target = $region129
    $region128: #{poly_penn_fcn_forward.1} parent=1 // pred_region
      %443 = vsyncadd [#allocation47], 0
      %s444 = sshll.u32 %s63, 4
      %s445 = int_to_ptr.hbm [resolvable:$true] %s444
      %s446 = sshll.u32 [#allocation48], 4
      %s447 = int_to_ptr.vmem [resolvable:$true] %s446
      %452 = dma.hbm_to_vmem [thread:$0]  %s445, 8192, %s447, [#allocation47], 64, 64, 4
    $region129: #{poly_penn_fcn_forward.1} parent=1 // pred_fallthru
      _
    // Predicated region
    $region130: #{poly_penn_fcn_forward.1} parent=1 // pred_check
      _
    $region131: #{poly_penn_fcn_forward.1} parent=1 // pred_check_branch
      %454 = sbr.rel (0) target = $region133
    $region132: #{poly_penn_fcn_forward.1} parent=1 // pred_region
      %456 = vsyncadd [#allocation50], 0
      %s458 = sshll.u32 %s65, 4
      %s459 = int_to_ptr.hbm [resolvable:$true] %s458
      %s460 = sshll.u32 [#allocation49], 4
      %s461 = int_to_ptr.vmem [resolvable:$true] %s460
      %463 = dma.hbm_to_vmem [thread:$0]  %s459, 16, %s461, [#allocation50]
    $region133: #{poly_penn_fcn_forward.1} parent=1 // pred_fallthru
      _
    // Predicated region
    $region134: #{poly_penn_fcn_forward.1} parent=1 // pred_check
      _
    $region135: #{poly_penn_fcn_forward.1} parent=1 // pred_check_branch
      %465 = sbr.rel (0) target = $region137
    $region136: #{poly_penn_fcn_forward.1} parent=1 // pred_region
      %467 = dma.done [#allocation3], 6144
    $region137: #{poly_penn_fcn_forward.1} parent=1 // pred_fallthru
      _
    // Predicated region
    $region138: #{poly_penn_fcn_forward.1} parent=1 // pred_check
      _
    $region139: #{poly_penn_fcn_forward.1} parent=1 // pred_check_branch
      %469 = sbr.rel (0) target = $region141
    $region140: #{poly_penn_fcn_forward.1} parent=1 // pred_region
      %471 = dma.done [#allocation5], 32
    $region141: #{poly_penn_fcn_forward.1} parent=1 // pred_fallthru
      _
    // Predicated region
    $region142: #{poly_penn_fcn_forward.1} parent=1 // pred_check
      _
    $region143: #{poly_penn_fcn_forward.1} parent=1 // pred_check_branch
      %473 = sbr.rel (0) target = $region145
    $region144: #{poly_penn_fcn_forward.1} parent=1 // pred_region
      %475 = dma.done [#allocation5], 32
    $region145: #{poly_penn_fcn_forward.1} parent=1 // pred_fallthru
      _
    // Predicated region
    $region146: #{poly_penn_fcn_forward.1} parent=1 // pred_check
      _
    $region147: #{poly_penn_fcn_forward.1} parent=1 // pred_check_branch
      %477 = sbr.rel (0) target = $region149
    $region148: #{poly_penn_fcn_forward.1} parent=1 // pred_region
      %479 = dma.done [#allocation8], 32
    $region149: #{poly_penn_fcn_forward.1} parent=1 // pred_fallthru
      _
    // Predicated region
    $region150: #{poly_penn_fcn_forward.1} parent=1 // pred_check
      _
    $region151: #{poly_penn_fcn_forward.1} parent=1 // pred_check_branch
      %481 = sbr.rel (0) target = $region153
    $region152: #{poly_penn_fcn_forward.1} parent=1 // pred_region
      %483 = dma.done [#allocation8], 6144
    $region153: #{poly_penn_fcn_forward.1} parent=1 // pred_fallthru
      _
    // Predicated region
    $region154: #{poly_penn_fcn_forward.1} parent=1 // pred_check
      _
    $region155: #{poly_penn_fcn_forward.1} parent=1 // pred_check_branch
      %485 = sbr.rel (0) target = $region157
    $region156: #{poly_penn_fcn_forward.1} parent=1 // pred_region
      %487 = dma.done [#allocation11], 16
    $region157: #{poly_penn_fcn_forward.1} parent=1 // pred_fallthru
      _
    // Predicated region
    $region158: #{poly_penn_fcn_forward.1} parent=1 // pred_check
      _
    $region159: #{poly_penn_fcn_forward.1} parent=1 // pred_check_branch
      %489 = sbr.rel (0) target = $region161
    $region160: #{poly_penn_fcn_forward.1} parent=1 // pred_region
      %491 = dma.done [#allocation11], 16
    $region161: #{poly_penn_fcn_forward.1} parent=1 // pred_fallthru
      _
    // Predicated region
    $region162: #{poly_penn_fcn_forward.1} parent=1 // pred_check
      _
    $region163: #{poly_penn_fcn_forward.1} parent=1 // pred_check_branch
      %493 = sbr.rel (0) target = $region165
    $region164: #{poly_penn_fcn_forward.1} parent=1 // pred_region
      %495 = dma.done [#allocation14], 16
    $region165: #{poly_penn_fcn_forward.1} parent=1 // pred_fallthru
      _
    // Predicated region
    $region166: #{poly_penn_fcn_forward.1} parent=1 // pred_check
      _
    $region167: #{poly_penn_fcn_forward.1} parent=1 // pred_check_branch
      %497 = sbr.rel (0) target = $region169
    $region168: #{poly_penn_fcn_forward.1} parent=1 // pred_region
      %499 = dma.done [#allocation14], 3072
    $region169: #{poly_penn_fcn_forward.1} parent=1 // pred_fallthru
      _
    // Predicated region
    $region170: #{poly_penn_fcn_forward.1} parent=1 // pred_check
      _
    $region171: #{poly_penn_fcn_forward.1} parent=1 // pred_check_branch
      %501 = sbr.rel (0) target = $region173
    $region172: #{poly_penn_fcn_forward.1} parent=1 // pred_region
      %503 = dma.done [#allocation17], 16
    $region173: #{poly_penn_fcn_forward.1} parent=1 // pred_fallthru
      _
    // Predicated region
    $region174: #{poly_penn_fcn_forward.1} parent=1 // pred_check
      _
    $region175: #{poly_penn_fcn_forward.1} parent=1 // pred_check_branch
      %505 = sbr.rel (0) target = $region177
    $region176: #{poly_penn_fcn_forward.1} parent=1 // pred_region
      %507 = dma.done [#allocation17], 16
    $region177: #{poly_penn_fcn_forward.1} parent=1 // pred_fallthru
      _
    // Predicated region
    $region178: #{poly_penn_fcn_forward.1} parent=1 // pred_check
      _
    $region179: #{poly_penn_fcn_forward.1} parent=1 // pred_check_branch
      %509 = sbr.rel (0) target = $region181
    $region180: #{poly_penn_fcn_forward.1} parent=1 // pred_region
      %511 = dma.done [#allocation20], 16
    $region181: #{poly_penn_fcn_forward.1} parent=1 // pred_fallthru
      _
    // Predicated region
    $region182: #{poly_penn_fcn_forward.1} parent=1 // pred_check
      _
    $region183: #{poly_penn_fcn_forward.1} parent=1 // pred_check_branch
      %513 = sbr.rel (0) target = $region185
    $region184: #{poly_penn_fcn_forward.1} parent=1 // pred_region
      %515 = dma.done [#allocation20], 3072
    $region185: #{poly_penn_fcn_forward.1} parent=1 // pred_fallthru
      _
    // Predicated region
    $region186: #{poly_penn_fcn_forward.1} parent=1 // pred_check
      _
    $region187: #{poly_penn_fcn_forward.1} parent=1 // pred_check_branch
      %517 = sbr.rel (0) target = $region189
    $region188: #{poly_penn_fcn_forward.1} parent=1 // pred_region
      %519 = dma.done [#allocation23], 16
    $region189: #{poly_penn_fcn_forward.1} parent=1 // pred_fallthru
      _
    // Predicated region
    $region190: #{poly_penn_fcn_forward.1} parent=1 // pred_check
      _
    $region191: #{poly_penn_fcn_forward.1} parent=1 // pred_check_branch
      %521 = sbr.rel (0) target = $region193
    $region192: #{poly_penn_fcn_forward.1} parent=1 // pred_region
      %523 = dma.done [#allocation23], 16
    $region193: #{poly_penn_fcn_forward.1} parent=1 // pred_fallthru
      _
    // Predicated region
    $region194: #{poly_penn_fcn_forward.1} parent=1 // pred_check
      _
    $region195: #{poly_penn_fcn_forward.1} parent=1 // pred_check_branch
      %525 = sbr.rel (0) target = $region197
    $region196: #{poly_penn_fcn_forward.1} parent=1 // pred_region
      %527 = dma.done [#allocation26], 16
    $region197: #{poly_penn_fcn_forward.1} parent=1 // pred_fallthru
      _
    // Predicated region
    $region198: #{poly_penn_fcn_forward.1} parent=1 // pred_check
      _
    $region199: #{poly_penn_fcn_forward.1} parent=1 // pred_check_branch
      %529 = sbr.rel (0) target = $region201
    $region200: #{poly_penn_fcn_forward.1} parent=1 // pred_region
      %531 = dma.done [#allocation26], 6144
    $region201: #{poly_penn_fcn_forward.1} parent=1 // pred_fallthru
      _
    // Predicated region
    $region202: #{poly_penn_fcn_forward.1} parent=1 // pred_check
      _
    $region203: #{poly_penn_fcn_forward.1} parent=1 // pred_check_branch
      %533 = sbr.rel (0) target = $region205
    $region204: #{poly_penn_fcn_forward.1} parent=1 // pred_region
      %535 = dma.done [#allocation29], 32
    $region205: #{poly_penn_fcn_forward.1} parent=1 // pred_fallthru
      _
    // Predicated region
    $region206: #{poly_penn_fcn_forward.1} parent=1 // pred_check
      _
    $region207: #{poly_penn_fcn_forward.1} parent=1 // pred_check_branch
      %537 = sbr.rel (0) target = $region209
    $region208: #{poly_penn_fcn_forward.1} parent=1 // pred_region
      %539 = dma.done [#allocation29], 32
    $region209: #{poly_penn_fcn_forward.1} parent=1 // pred_fallthru
      _
    // Predicated region
    $region210: #{poly_penn_fcn_forward.1} parent=1 // pred_check
      _
    $region211: #{poly_penn_fcn_forward.1} parent=1 // pred_check_branch
      %541 = sbr.rel (0) target = $region213
    $region212: #{poly_penn_fcn_forward.1} parent=1 // pred_region
      %543 = dma.done [#allocation32], 32
    $region213: #{poly_penn_fcn_forward.1} parent=1 // pred_fallthru
      _
    // Predicated region
    $region214: #{poly_penn_fcn_forward.1} parent=1 // pred_check
      _
    $region215: #{poly_penn_fcn_forward.1} parent=1 // pred_check_branch
      %545 = sbr.rel (0) target = $region217
    $region216: #{poly_penn_fcn_forward.1} parent=1 // pred_region
      %547 = dma.done [#allocation32], 24576
    $region217: #{poly_penn_fcn_forward.1} parent=1 // pred_fallthru
      _
    // Predicated region
    $region218: #{poly_penn_fcn_forward.1} parent=1 // pred_check
      _
    $region219: #{poly_penn_fcn_forward.1} parent=1 // pred_check_branch
      %549 = sbr.rel (0) target = $region221
    $region220: #{poly_penn_fcn_forward.1} parent=1 // pred_region
      %551 = dma.done [#allocation35], 64
    $region221: #{poly_penn_fcn_forward.1} parent=1 // pred_fallthru
      _
    // Predicated region
    $region222: #{poly_penn_fcn_forward.1} parent=1 // pred_check
      _
    $region223: #{poly_penn_fcn_forward.1} parent=1 // pred_check_branch
      %553 = sbr.rel (0) target = $region225
    $region224: #{poly_penn_fcn_forward.1} parent=1 // pred_region
      %555 = dma.done [#allocation35], 64
    $region225: #{poly_penn_fcn_forward.1} parent=1 // pred_fallthru
      _
    // Predicated region
    $region226: #{poly_penn_fcn_forward.1} parent=1 // pred_check
      _
    $region227: #{poly_penn_fcn_forward.1} parent=1 // pred_check_branch
      %557 = sbr.rel (0) target = $region229
    $region228: #{poly_penn_fcn_forward.1} parent=1 // pred_region
      %559 = dma.done [#allocation38], 64
    $region229: #{poly_penn_fcn_forward.1} parent=1 // pred_fallthru
      _
    // Predicated region
    $region230: #{poly_penn_fcn_forward.1} parent=1 // pred_check
      _
    $region231: #{poly_penn_fcn_forward.1} parent=1 // pred_check_branch
      %561 = sbr.rel (0) target = $region233
    $region232: #{poly_penn_fcn_forward.1} parent=1 // pred_region
      %563 = dma.done [#allocation38], 4096
    $region233: #{poly_penn_fcn_forward.1} parent=1 // pred_fallthru
      _
    // Predicated region
    $region234: #{poly_penn_fcn_forward.1} parent=1 // pred_check
      _
    $region235: #{poly_penn_fcn_forward.1} parent=1 // pred_check_branch
      %565 = sbr.rel (0) target = $region237
    $region236: #{poly_penn_fcn_forward.1} parent=1 // pred_region
      %567 = dma.done [#allocation41], 16
    $region237: #{poly_penn_fcn_forward.1} parent=1 // pred_fallthru
      _
    // Predicated region
    $region238: #{poly_penn_fcn_forward.1} parent=1 // pred_check
      _
    $region239: #{poly_penn_fcn_forward.1} parent=1 // pred_check_branch
      %569 = sbr.rel (0) target = $region241
    $region240: #{poly_penn_fcn_forward.1} parent=1 // pred_region
      %571 = dma.done [#allocation41], 98304
    $region241: #{poly_penn_fcn_forward.1} parent=1 // pred_fallthru
      _
    // Predicated region
    $region242: #{poly_penn_fcn_forward.1} parent=1 // pred_check
      _
    $region243: #{poly_penn_fcn_forward.1} parent=1 // pred_check_branch
      %573 = sbr.rel (0) target = $region245
    $region244: #{poly_penn_fcn_forward.1} parent=1 // pred_region
      %575 = dma.done [#allocation44], 128
    $region245: #{poly_penn_fcn_forward.1} parent=1 // pred_fallthru
      _
    // Predicated region
    $region246: #{poly_penn_fcn_forward.1} parent=1 // pred_check
      _
    $region247: #{poly_penn_fcn_forward.1} parent=1 // pred_check_branch
      %577 = sbr.rel (0) target = $region249
    $region248: #{poly_penn_fcn_forward.1} parent=1 // pred_region
      %579 = dma.done [#allocation44], 128
    $region249: #{poly_penn_fcn_forward.1} parent=1 // pred_fallthru
      _
    // Predicated region
    $region250: #{poly_penn_fcn_forward.1} parent=1 // pred_check
      _
    $region251: #{poly_penn_fcn_forward.1} parent=1 // pred_check_branch
      %581 = sbr.rel (0) target = $region253
    $region252: #{poly_penn_fcn_forward.1} parent=1 // pred_region
      %583 = dma.done [#allocation47], 128
    $region253: #{poly_penn_fcn_forward.1} parent=1 // pred_fallthru
      _
    // Predicated region
    $region254: #{poly_penn_fcn_forward.1} parent=1 // pred_check
      _
    $region255: #{poly_penn_fcn_forward.1} parent=1 // pred_check_branch
      %585 = sbr.rel (0) target = $region257
    $region256: #{poly_penn_fcn_forward.1} parent=1 // pred_region
      %587 = dma.done [#allocation47], 8192
    $region257: #{poly_penn_fcn_forward.1} parent=1 // pred_fallthru
      _
    // Predicated region
    $region258: #{poly_penn_fcn_forward.1} parent=1 // pred_check
      _
    $region259: #{poly_penn_fcn_forward.1} parent=1 // pred_check_branch
      %589 = sbr.rel (0) target = $region261
    $region260: #{poly_penn_fcn_forward.1} parent=1 // pred_region
      %591 = dma.done [#allocation50], 16
    $region261: #{poly_penn_fcn_forward.1} parent=1 // pred_fallthru
      _
    %v592 = vlaneseq
    %v593 = vshrl.u32 %v592, 7
    %v594 = vadd.s32 %v593, 8
    %v595 = vadd.s32 %v593, 16
    %v596 = vadd.s32 %v593, 24
    %vm597 = vcmp.lt.s32.totalorder %v593, 0
    %v598 = vsub.s32 0, %v593
    %v599 = vsel %vm597, %v598, %v593
    %v600 = vshrl.u32 %v599, 4
    %v601 = vand.u32 %v599, 15
    %v602 = vsub.s32 0, %v601
    %v603 = vsel %vm597, %v602, %v601
    %vm604 = vcmp.lt.s32.totalorder %v594, 0
    %v605 = vsub.s32 0, %v594
    %v606 = vsel %vm604, %v605, %v594
    %v607 = vshrl.u32 %v606, 4
    %v608 = vand.u32 %v606, 15
    %v609 = vsub.s32 0, %v608
    %v610 = vsel %vm604, %v609, %v608
    %vm611 = vcmp.lt.s32.totalorder %v595, 0
    %v612 = vsub.s32 0, %v595
    %v613 = vsel %vm611, %v612, %v595
    %v614 = vshrl.u32 %v613, 4
    %v615 = vand.u32 %v613, 15
    %v616 = vsub.s32 0, %v615
    %v617 = vsel %vm611, %v616, %v615
    %vm618 = vcmp.lt.s32.totalorder %v596, 0
    %v619 = vsub.s32 0, %v596
    %v620 = vsel %vm618, %v619, %v596
    %v621 = vshrl.u32 %v620, 4
    %v622 = vand.u32 %v620, 15
    %v623 = vsub.s32 0, %v622
    %v624 = vsel %vm618, %v623, %v622
    %vm625 = vcmp.ne.s32.totalorder %v603, 0
    %vm626 = vcmp.ne.s32.totalorder %v610, 0
    %vm627 = vcmp.ne.s32.totalorder %v617, 0
    %vm628 = vcmp.ne.s32.totalorder %v624, 0
    %vm629 = vcmp.lt.s32.totalorder %v603, 0
    %vm630 = vcmp.lt.s32.totalorder %v610, 0
    %vm631 = vcmp.lt.s32.totalorder %v617, 0
    %vm632 = vcmp.lt.s32.totalorder %v624, 0
    %vm633 = vmand %vm629, %vm625
    %vm634 = vmand %vm630, %vm626
    %vm635 = vmand %vm631, %vm627
    %vm636 = vmand %vm632, %vm628
    %v637 = vadd.s32 %v603, 16
    %v638 = vadd.s32 %v610, 16
    %v639 = vadd.s32 %v617, 16
    %v640 = vadd.s32 %v624, 16
    %v641 = vsel %vm633, %v637, %v603
    %v642 = vsel %vm634, %v638, %v610
    %v643 = vsel %vm635, %v639, %v617
    %v644 = vsel %vm636, %v640, %v624
    %vm645 = vcmp.ne.s32.totalorder %v641, 0
    %vm646 = vcmp.ne.s32.totalorder %v642, 0
    %vm647 = vcmp.ne.s32.totalorder %v643, 0
    %vm648 = vcmp.ne.s32.totalorder %v644, 0
    %v649 = vsel %vm645, 1, 0
    %v650 = vsel %vm646, 1, 0
    %v651 = vsel %vm647, 1, 0
    %v652 = vsel %vm648, 1, 0
    %v653 = vcvt.s32.f32 %v649
    %v654 = vcvt.s32.f32 %v650
    %v655 = vcvt.s32.f32 %v651
    %v656 = vcvt.s32.f32 %v652
    %vm657 = vcmp.ne.s32.totalorder %v641, 15
    %vm658 = vcmp.ne.s32.totalorder %v642, 15
    %vm659 = vcmp.ne.s32.totalorder %v643, 15
    %vm660 = vcmp.ne.s32.totalorder %v644, 15
    %v661 = vsel %vm657, 1, 0
    %v662 = vsel %vm658, 1, 0
    %v663 = vsel %vm659, 1, 0
    %v664 = vsel %vm660, 1, 0
    %v665 = vcvt.s32.f32 %v661
    %v666 = vcvt.s32.f32 %v662
    %v667 = vcvt.s32.f32 %v663
    %v668 = vcvt.s32.f32 %v664
    %v669 = vld [vmem:[%s1] sm:$0xff]
    %v670 = vld [vmem:[%s1 + $0x8] sm:$0xff]
    %v671 = vld [vmem:[%s1 + $0x10] sm:$0xff]
    %v672 = vld [vmem:[%s1 + $0x18] sm:$0xff]
    %v673 = vrot.slane %v669, 7
    %v674 = vrot.slane %v670, 7
    %v675 = vrot.slane %v671, 7
    %v676 = vrot.slane %v672, 7
    %vm677 = vcmp.lt.s32.totalorder %v593, 1
    %v678 = vsel %vm677, %v675, %v676
    %v679 = vsel %vm677, %v674, %v675
    %v680 = vsel %vm677, %v673, %v674
    %v681 = vsel %vm677, %v676, %v673
    %v682 = vmul.f32 %v681, %v653
    %v683 = vmul.f32 %v680, %v654
    %v684 = vmul.f32 %v679, %v655
    %v685 = vmul.f32 %v678, %v656
    %v686 = vrot.slane %v669, 1
    %v687 = vrot.slane %v670, 1
    %v688 = vrot.slane %v671, 1
    %v689 = vrot.slane %v672, 1
    %vm690 = vcmp.lt.s32.totalorder %v593, 7
    %v691 = vsel %vm690, %v688, %v689
    %v692 = vsel %vm690, %v687, %v688
    %v693 = vsel %vm690, %v686, %v687
    %v694 = vsel %vm690, %v689, %v686
    %v695 = vmul.f32 %v693, %v665
    %v696 = vmul.f32 %v692, %v666
    %v697 = vmul.f32 %v691, %v667
    %v698 = vmul.f32 %v694, %v668
    %v699 = vpack.c.bf16 %v683, %v682
    %v700 = vpack.c.bf16 %v670, %v669
    %v701 = vpack.c.bf16 %v696, %v695
    %v702 = vpack.c.bf16 %v685, %v684
    %v703 = vpack.c.bf16 %v672, %v671
    %v704 = vpack.c.bf16 %v698, %v697
    %v705 = vld [vmem:[#allocation2] sm:$0xff]
    %v706 = vld [vmem:[#allocation2 + $0x8] sm:$0xff]
    %v707 = vld [vmem:[#allocation2 + $0x10] sm:$0xff]
    %v708 = vld [vmem:[#allocation2 + $0x18] sm:$0xff]
    %v709 = vld [vmem:[#allocation2 + $0x20] sm:$0xff]
    %v710 = vld [vmem:[#allocation2 + $0x28] sm:$0xff]
    %v711 = vld [vmem:[#allocation2 + $0x30] sm:$0xff]
    %v712 = vld [vmem:[#allocation2 + $0x38] sm:$0xff]
    %v713 = vld [vmem:[#allocation2 + $0x40] sm:$0xff]
    %v714 = vld [vmem:[#allocation2 + $0x48] sm:$0xff]
    %v715 = vld [vmem:[#allocation2 + $0x50] sm:$0xff]
    %v716 = vld [vmem:[#allocation2 + $0x58] sm:$0xff]
    %v717 = vld [vmem:[#allocation2 + $0x60] sm:$0xff]
    %v718 = vld [vmem:[#allocation2 + $0x68] sm:$0xff]
    %v719 = vld [vmem:[#allocation2 + $0x70] sm:$0xff]
    %v720 = vld [vmem:[#allocation2 + $0x78] sm:$0xff]
    %v721 = vld [vmem:[#allocation2 + $0x80] sm:$0xff]
    %v722 = vld [vmem:[#allocation2 + $0x88] sm:$0xff]
    %v723 = vld [vmem:[#allocation2 + $0x90] sm:$0xff]
    %v724 = vld [vmem:[#allocation2 + $0x98] sm:$0xff]
    %v725 = vld [vmem:[#allocation2 + $0xa0] sm:$0xff]
    %v726 = vld [vmem:[#allocation2 + $0xa8] sm:$0xff]
    %v727 = vld [vmem:[#allocation2 + $0xb0] sm:$0xff]
    %v728 = vld [vmem:[#allocation2 + $0xb8] sm:$0xff]
    %v729 = vld [vmem:[#allocation2 + $0xc0] sm:$0xff]
    %v730 = vld [vmem:[#allocation2 + $0xc8] sm:$0xff]
    %v731 = vld [vmem:[#allocation2 + $0xd0] sm:$0xff]
    %v732 = vld [vmem:[#allocation2 + $0xd8] sm:$0xff]
    %v733 = vld [vmem:[#allocation2 + $0xe0] sm:$0xff]
    %v734 = vld [vmem:[#allocation2 + $0xe8] sm:$0xff]
    %v735 = vld [vmem:[#allocation2 + $0xf0] sm:$0xff]
    %v736 = vld [vmem:[#allocation2 + $0xf8] sm:$0xff]
    %v737 = vld [vmem:[#allocation2 + $0x100] sm:$0xff]
    %v738 = vld [vmem:[#allocation2 + $0x108] sm:$0xff]
    %v739 = vld [vmem:[#allocation2 + $0x110] sm:$0xff]
    %v740 = vld [vmem:[#allocation2 + $0x118] sm:$0xff]
    %v741 = vld [vmem:[#allocation2 + $0x120] sm:$0xff]
    %v742 = vld [vmem:[#allocation2 + $0x128] sm:$0xff]
    %v743 = vld [vmem:[#allocation2 + $0x130] sm:$0xff]
    %v744 = vld [vmem:[#allocation2 + $0x138] sm:$0xff]
    %v745 = vld [vmem:[#allocation2 + $0x140] sm:$0xff]
    %v746 = vld [vmem:[#allocation2 + $0x148] sm:$0xff]
    %v747 = vld [vmem:[#allocation2 + $0x150] sm:$0xff]
    %v748 = vld [vmem:[#allocation2 + $0x158] sm:$0xff]
    %v749 = vld [vmem:[#allocation2 + $0x160] sm:$0xff]
    %v750 = vld [vmem:[#allocation2 + $0x168] sm:$0xff]
    %v751 = vld [vmem:[#allocation2 + $0x170] sm:$0xff]
    %v752 = vld [vmem:[#allocation2 + $0x178] sm:$0xff]
    %v753 = vld [vmem:[#allocation4] sm:$0x3]
    %v755 = vperm.slane %v753, 0
    %v756 = vperm.slane %v753, 1
    %v807 = vunpack.c.l.b16 %v705
    %v808 = vunpack.c.h.b16 %v705
    %v809 = vunpack.c.l.b16 %v706
    %v810 = vunpack.c.h.b16 %v706
    %v811 = vunpack.c.l.b16 %v707
    %v812 = vunpack.c.h.b16 %v707
    %v813 = vunpack.c.l.b16 %v708
    %v814 = vunpack.c.h.b16 %v708
    %v815 = vunpack.c.l.b16 %v709
    %v816 = vunpack.c.h.b16 %v709
    %v817 = vunpack.c.l.b16 %v710
    %v818 = vunpack.c.h.b16 %v710
    %v819 = vunpack.c.l.b16 %v711
    %v820 = vunpack.c.h.b16 %v711
    %v821 = vunpack.c.l.b16 %v712
    %v822 = vunpack.c.h.b16 %v712
    %v823 = vunpack.c.l.b16 %v713
    %v824 = vunpack.c.h.b16 %v713
    %v825 = vunpack.c.l.b16 %v714
    %v826 = vunpack.c.h.b16 %v714
    %v827 = vunpack.c.l.b16 %v715
    %v828 = vunpack.c.h.b16 %v715
    %v829 = vunpack.c.l.b16 %v716
    %v830 = vunpack.c.h.b16 %v716
    %v831 = vunpack.c.l.b16 %v717
    %v832 = vunpack.c.h.b16 %v717
    %v833 = vunpack.c.l.b16 %v718
    %v834 = vunpack.c.h.b16 %v718
    %v835 = vunpack.c.l.b16 %v719
    %v836 = vunpack.c.h.b16 %v719
    %v837 = vunpack.c.l.b16 %v720
    %v838 = vunpack.c.h.b16 %v720
    %v839 = vunpack.c.l.b16 %v721
    %v840 = vunpack.c.h.b16 %v721
    %v841 = vunpack.c.l.b16 %v722
    %v842 = vunpack.c.h.b16 %v722
    %v843 = vunpack.c.l.b16 %v723
    %v844 = vunpack.c.h.b16 %v723
    %v845 = vunpack.c.l.b16 %v724
    %v846 = vunpack.c.h.b16 %v724
    %v847 = vunpack.c.l.b16 %v725
    %v848 = vunpack.c.h.b16 %v725
    %v849 = vunpack.c.l.b16 %v726
    %v850 = vunpack.c.h.b16 %v726
    %v851 = vunpack.c.l.b16 %v727
    %v852 = vunpack.c.h.b16 %v727
    %v853 = vunpack.c.l.b16 %v728
    %v854 = vunpack.c.h.b16 %v728
    %v855 = vunpack.c.l.b16 %v729
    %v856 = vunpack.c.h.b16 %v729
    %v857 = vunpack.c.l.b16 %v730
    %v858 = vunpack.c.h.b16 %v730
    %v859 = vunpack.c.l.b16 %v731
    %v860 = vunpack.c.h.b16 %v731
    %v861 = vunpack.c.l.b16 %v732
    %v862 = vunpack.c.h.b16 %v732
    %v863 = vunpack.c.l.b16 %v733
    %v864 = vunpack.c.h.b16 %v733
    %v865 = vunpack.c.l.b16 %v734
    %v866 = vunpack.c.h.b16 %v734
    %v867 = vunpack.c.l.b16 %v735
    %v868 = vunpack.c.h.b16 %v735
    %v869 = vunpack.c.l.b16 %v736
    %v870 = vunpack.c.h.b16 %v736
    %v871 = vunpack.c.l.b16 %v737
    %v872 = vunpack.c.h.b16 %v737
    %v873 = vunpack.c.l.b16 %v738
    %v874 = vunpack.c.h.b16 %v738
    %v875 = vunpack.c.l.b16 %v739
    %v876 = vunpack.c.h.b16 %v739
    %v877 = vunpack.c.l.b16 %v740
    %v878 = vunpack.c.h.b16 %v740
    %v879 = vunpack.c.l.b16 %v741
    %v880 = vunpack.c.h.b16 %v741
    %v881 = vunpack.c.l.b16 %v742
    %v882 = vunpack.c.h.b16 %v742
    %v883 = vunpack.c.l.b16 %v743
    %v884 = vunpack.c.h.b16 %v743
    %v885 = vunpack.c.l.b16 %v744
    %v886 = vunpack.c.h.b16 %v744
    %v887 = vunpack.c.l.b16 %v745
    %v888 = vunpack.c.h.b16 %v745
    %v889 = vunpack.c.l.b16 %v746
    %v890 = vunpack.c.h.b16 %v746
    %v891 = vunpack.c.l.b16 %v747
    %v892 = vunpack.c.h.b16 %v747
    %v893 = vunpack.c.l.b16 %v748
    %v894 = vunpack.c.h.b16 %v748
    %v895 = vunpack.c.l.b16 %v749
    %v896 = vunpack.c.h.b16 %v749
    %v897 = vunpack.c.l.b16 %v750
    %v898 = vunpack.c.h.b16 %v750
    %v899 = vunpack.c.l.b16 %v751
    %v900 = vunpack.c.h.b16 %v751
    %v901 = vunpack.c.l.b16 %v752
    %v902 = vunpack.c.h.b16 %v752
    %v903 = vpack.c.b16 %v809, %v807
    %v904 = vpack.c.b16 %v810, %v808
    %v905 = vpack.c.b16 %v813, %v811
    %v906 = vpack.c.b16 %v814, %v812
    %v907 = vpack.c.b16 %v817, %v815
    %v908 = vpack.c.b16 %v818, %v816
    %v909 = vpack.c.b16 %v821, %v819
    %v910 = vpack.c.b16 %v822, %v820
    %v911 = vpack.c.b16 %v825, %v823
    %v912 = vpack.c.b16 %v826, %v824
    %v913 = vpack.c.b16 %v829, %v827
    %v914 = vpack.c.b16 %v830, %v828
    %v915 = vpack.c.b16 %v833, %v831
    %v916 = vpack.c.b16 %v834, %v832
    %v917 = vpack.c.b16 %v837, %v835
    %v918 = vpack.c.b16 %v838, %v836
    %v919 = vpack.c.b16 %v841, %v839
    %v920 = vpack.c.b16 %v842, %v840
    %v921 = vpack.c.b16 %v845, %v843
    %v922 = vpack.c.b16 %v846, %v844
    %v923 = vpack.c.b16 %v849, %v847
    %v924 = vpack.c.b16 %v850, %v848
    %v925 = vpack.c.b16 %v853, %v851
    %v926 = vpack.c.b16 %v854, %v852
    %v927 = vpack.c.b16 %v857, %v855
    %v928 = vpack.c.b16 %v858, %v856
    %v929 = vpack.c.b16 %v861, %v859
    %v930 = vpack.c.b16 %v862, %v860
    %v931 = vpack.c.b16 %v865, %v863
    %v932 = vpack.c.b16 %v866, %v864
    %v933 = vpack.c.b16 %v869, %v867
    %v934 = vpack.c.b16 %v870, %v868
    %v935 = vpack.c.b16 %v873, %v871
    %v936 = vpack.c.b16 %v874, %v872
    %v937 = vpack.c.b16 %v877, %v875
    %v938 = vpack.c.b16 %v878, %v876
    %v939 = vpack.c.b16 %v881, %v879
    %v940 = vpack.c.b16 %v882, %v880
    %v941 = vpack.c.b16 %v885, %v883
    %v942 = vpack.c.b16 %v886, %v884
    %v943 = vpack.c.b16 %v889, %v887
    %v944 = vpack.c.b16 %v890, %v888
    %v945 = vpack.c.b16 %v893, %v891
    %v946 = vpack.c.b16 %v894, %v892
    %v947 = vpack.c.b16 %v897, %v895
    %v948 = vpack.c.b16 %v898, %v896
    %v949 = vpack.c.b16 %v901, %v899
    %v950 = vpack.c.b16 %v902, %v900
    %999 = vmatpush.bf16.msra.mxu0 %v917
    %1000 = vmatpush.bf16.msra.mxu0 %v915
    %1001 = vmatpush.bf16.msra.mxu0 %v913
    %1002 = vmatpush.bf16.msra.mxu0 %v911
    %1003 = vmatpush.bf16.msra.mxu0 %v909
    %1004 = vmatpush.bf16.msra.mxu0 %v907
    %1005 = vmatpush.bf16.msra.mxu0 %v905
    %1006 = vmatpush.bf16.msra.mxu0 %v903
    %1007 = vmatmul.bf16.gmra.mxu0 %v699
    %v1008 = vpop.f32.mrf.mxu0
    %v1009 = vadd.f32 %v755, %v1008
    %v1010 = vpop.f32.mrf.mxu0
    %v1011 = vadd.f32 %v755, %v1010
    %1012 = vmatmul.bf16.gmra.mxu0 %v702
    %v1013 = vpop.f32.mrf.mxu0
    %v1014 = vadd.f32 %v755, %v1013
    %v1015 = vpop.f32.mrf.mxu0
    %v1016 = vadd.f32 %v755, %v1015
    %1017 = vdwg.mxu0
    %1018 = vmatpush.bf16.msra.mxu0 %v933
    %1019 = vmatpush.bf16.msra.mxu0 %v931
    %1020 = vmatpush.bf16.msra.mxu0 %v929
    %1021 = vmatpush.bf16.msra.mxu0 %v927
    %1022 = vmatpush.bf16.msra.mxu0 %v925
    %1023 = vmatpush.bf16.msra.mxu0 %v923
    %1024 = vmatpush.bf16.msra.mxu0 %v921
    %1025 = vmatpush.bf16.msra.mxu0 %v919
    %1026 = vmatmul.bf16.gmra.mxu0 %v700
    %v1027 = vpop.f32.mrf.mxu0
    %v1028 = vadd.f32 %v1009, %v1027
    %v1029 = vpop.f32.mrf.mxu0
    %v1030 = vadd.f32 %v1011, %v1029
    %1031 = vmatmul.bf16.gmra.mxu0 %v703
    %v1032 = vpop.f32.mrf.mxu0
    %v1033 = vadd.f32 %v1014, %v1032
    %v1034 = vpop.f32.mrf.mxu0
    %v1035 = vadd.f32 %v1016, %v1034
    %1036 = vdwg.mxu0
    %1037 = vmatpush.bf16.msra.mxu0 %v949
    %1038 = vmatpush.bf16.msra.mxu0 %v947
    %1039 = vmatpush.bf16.msra.mxu0 %v945
    %1040 = vmatpush.bf16.msra.mxu0 %v943
    %1041 = vmatpush.bf16.msra.mxu0 %v941
    %1042 = vmatpush.bf16.msra.mxu0 %v939
    %1043 = vmatpush.bf16.msra.mxu0 %v937
    %1044 = vmatpush.bf16.msra.mxu0 %v935
    %1045 = vmatmul.bf16.gmra.mxu0 %v701
    %v1046 = vpop.f32.mrf.mxu0
    %v1047 = vadd.f32 %v1028, %v1046
    %v1048 = vpop.f32.mrf.mxu0
    %v1049 = vadd.f32 %v1030, %v1048
    %1050 = vmatmul.bf16.gmra.mxu0 %v704
    %v1051 = vpop.f32.mrf.mxu0
    %v1052 = vadd.f32 %v1033, %v1051
    %v1053 = vpop.f32.mrf.mxu0
    %v1054 = vadd.f32 %v1035, %v1053
    %1055 = vdwg.mxu0
    %1056 = vmatpush.bf16.msra.mxu0 %v918
    %1057 = vmatpush.bf16.msra.mxu0 %v916
    %1058 = vmatpush.bf16.msra.mxu0 %v914
    %1059 = vmatpush.bf16.msra.mxu0 %v912
    %1060 = vmatpush.bf16.msra.mxu0 %v910
    %1061 = vmatpush.bf16.msra.mxu0 %v908
    %1062 = vmatpush.bf16.msra.mxu0 %v906
    %1063 = vmatpush.bf16.msra.mxu0 %v904
    %1064 = vmatmul.bf16.gmra.mxu0 %v699
    %v1065 = vpop.f32.mrf.mxu0
    %v1066 = vadd.f32 %v756, %v1065
    %v1067 = vpop.f32.mrf.mxu0
    %v1068 = vadd.f32 %v756, %v1067
    %1069 = vmatmul.bf16.gmra.mxu0 %v702
    %v1070 = vpop.f32.mrf.mxu0
    %v1071 = vadd.f32 %v756, %v1070
    %v1072 = vpop.f32.mrf.mxu0
    %v1073 = vadd.f32 %v756, %v1072
    %1074 = vdwg.mxu0
    %1075 = vmatpush.bf16.msra.mxu0 %v934
    %1076 = vmatpush.bf16.msra.mxu0 %v932
    %1077 = vmatpush.bf16.msra.mxu0 %v930
    %1078 = vmatpush.bf16.msra.mxu0 %v928
    %1079 = vmatpush.bf16.msra.mxu0 %v926
    %1080 = vmatpush.bf16.msra.mxu0 %v924
    %1081 = vmatpush.bf16.msra.mxu0 %v922
    %1082 = vmatpush.bf16.msra.mxu0 %v920
    %1083 = vmatmul.bf16.gmra.mxu0 %v700
    %v1084 = vpop.f32.mrf.mxu0
    %v1085 = vadd.f32 %v1066, %v1084
    %v1086 = vpop.f32.mrf.mxu0
    %v1087 = vadd.f32 %v1068, %v1086
    %1088 = vmatmul.bf16.gmra.mxu0 %v703
    %v1089 = vpop.f32.mrf.mxu0
    %v1090 = vadd.f32 %v1071, %v1089
    %v1091 = vpop.f32.mrf.mxu0
    %v1092 = vadd.f32 %v1073, %v1091
    %1093 = vdwg.mxu0
    %1094 = vmatpush.bf16.msra.mxu0 %v950
    %1095 = vmatpush.bf16.msra.mxu0 %v948
    %1096 = vmatpush.bf16.msra.mxu0 %v946
    %1097 = vmatpush.bf16.msra.mxu0 %v944
    %1098 = vmatpush.bf16.msra.mxu0 %v942
    %1099 = vmatpush.bf16.msra.mxu0 %v940
    %1100 = vmatpush.bf16.msra.mxu0 %v938
    %1101 = vmatpush.bf16.msra.mxu0 %v936
    %1102 = vmatmul.bf16.gmra.mxu0 %v701
    %v1103 = vpop.f32.mrf.mxu0
    %v1104 = vadd.f32 %v1085, %v1103
    %v1105 = vpop.f32.mrf.mxu0
    %v1106 = vadd.f32 %v1087, %v1105
    %1107 = vmatmul.bf16.gmra.mxu0 %v704
    %v1108 = vpop.f32.mrf.mxu0
    %v1109 = vadd.f32 %v1090, %v1108
    %v1110 = vpop.f32.mrf.mxu0
    %v1111 = vadd.f32 %v1092, %v1110
    %1112 = vdwg.mxu0
    %v1113 = vmax.f32 %v1047, 0.0
    %v1114 = vmax.f32 %v1104, 0.0
    %v1115 = vmax.f32 %v1049, 0.0
    %v1116 = vmax.f32 %v1106, 0.0
    %v1117 = vmax.f32 %v1052, 0.0
    %v1118 = vmax.f32 %v1109, 0.0
    %v1119 = vmax.f32 %v1054, 0.0
    %v1120 = vmax.f32 %v1111, 0.0
    %v1121 = vld [vmem:[#allocation6] sm:$0x3]
    %v1123 = vperm.slane %v1121, 0
    %v1124 = vperm.slane %v1121, 1
    %v1127 = vmul.f32 %v1113, %v1123
    %v1128 = vmul.f32 %v1114, %v1124
    %v1129 = vmul.f32 %v1115, %v1123
    %v1130 = vmul.f32 %v1116, %v1124
    %v1131 = vmul.f32 %v1117, %v1123
    %v1132 = vmul.f32 %v1118, %v1124
    %v1133 = vmul.f32 %v1119, %v1123
    %v1134 = vmul.f32 %v1120, %v1124
    %v1135 = vld [vmem:[#allocation7] sm:$0x3]
    %v1137 = vperm.slane %v1135, 0
    %v1138 = vperm.slane %v1135, 1
    %v1141 = vadd.f32 %v1127, %v1137
    %v1142 = vadd.f32 %v1128, %v1138
    %v1143 = vadd.f32 %v1129, %v1137
    %v1144 = vadd.f32 %v1130, %v1138
    %v1145 = vadd.f32 %v1131, %v1137
    %v1146 = vadd.f32 %v1132, %v1138
    %v1147 = vadd.f32 %v1133, %v1137
    %v1148 = vadd.f32 %v1134, %v1138
    %v1149 = vrot.slane %v1141, 7
    %v1150 = vrot.slane %v1142, 7
    %v1151 = vrot.slane %v1143, 7
    %v1152 = vrot.slane %v1144, 7
    %v1153 = vrot.slane %v1145, 7
    %v1154 = vrot.slane %v1146, 7
    %v1155 = vrot.slane %v1147, 7
    %v1156 = vrot.slane %v1148, 7
    %v1157 = vsel %vm677, %v1153, %v1155
    %v1158 = vsel %vm677, %v1154, %v1156
    %v1159 = vsel %vm677, %v1151, %v1153
    %v1160 = vsel %vm677, %v1152, %v1154
    %v1161 = vsel %vm677, %v1149, %v1151
    %v1162 = vsel %vm677, %v1150, %v1152
    %v1163 = vsel %vm677, %v1155, %v1149
    %v1164 = vsel %vm677, %v1156, %v1150
    %v1165 = vmul.f32 %v1163, %v653
    %v1166 = vmul.f32 %v1164, %v653
    %v1167 = vmul.f32 %v1161, %v654
    %v1168 = vmul.f32 %v1162, %v654
    %v1169 = vmul.f32 %v1159, %v655
    %v1170 = vmul.f32 %v1160, %v655
    %v1171 = vmul.f32 %v1157, %v656
    %v1172 = vmul.f32 %v1158, %v656
    %v1173 = vrot.slane %v1141, 1
    %v1174 = vrot.slane %v1142, 1
    %v1175 = vrot.slane %v1143, 1
    %v1176 = vrot.slane %v1144, 1
    %v1177 = vrot.slane %v1145, 1
    %v1178 = vrot.slane %v1146, 1
    %v1179 = vrot.slane %v1147, 1
    %v1180 = vrot.slane %v1148, 1
    %v1181 = vsel %vm690, %v1177, %v1179
    %v1182 = vsel %vm690, %v1178, %v1180
    %v1183 = vsel %vm690, %v1175, %v1177
    %v1184 = vsel %vm690, %v1176, %v1178
    %v1185 = vsel %vm690, %v1173, %v1175
    %v1186 = vsel %vm690, %v1174, %v1176
    %v1187 = vsel %vm690, %v1179, %v1173
    %v1188 = vsel %vm690, %v1180, %v1174
    %v1189 = vmul.f32 %v1185, %v665
    %v1190 = vmul.f32 %v1186, %v665
    %v1191 = vmul.f32 %v1183, %v666
    %v1192 = vmul.f32 %v1184, %v666
    %v1193 = vmul.f32 %v1181, %v667
    %v1194 = vmul.f32 %v1182, %v667
    %v1195 = vmul.f32 %v1187, %v668
    %v1196 = vmul.f32 %v1188, %v668
    %v1197 = vpack.c.bf16 %v1167, %v1165
    %v1198 = vpack.c.bf16 %v1168, %v1166
    %v1199 = vpack.c.bf16 %v1143, %v1141
    %v1200 = vpack.c.bf16 %v1144, %v1142
    %v1201 = vpack.c.bf16 %v1191, %v1189
    %v1202 = vpack.c.bf16 %v1192, %v1190
    %v1203 = vpack.c.bf16 %v1171, %v1169
    %v1204 = vpack.c.bf16 %v1172, %v1170
    %v1205 = vpack.c.bf16 %v1147, %v1145
    %v1206 = vpack.c.bf16 %v1148, %v1146
    %v1207 = vpack.c.bf16 %v1195, %v1193
    %v1208 = vpack.c.bf16 %v1196, %v1194
    %v1209 = vld [vmem:[#allocation9] sm:$0xf]
    %v1210 = vld [vmem:[#allocation9 + $0x4] sm:$0xf]
    %v1211 = vld [vmem:[#allocation9 + $0x8] sm:$0xf]
    %v1212 = vld [vmem:[#allocation9 + $0xc] sm:$0xf]
    %v1213 = vld [vmem:[#allocation9 + $0x10] sm:$0xf]
    %v1214 = vld [vmem:[#allocation9 + $0x14] sm:$0xf]
    %v1215 = vld [vmem:[#allocation9 + $0x18] sm:$0xf]
    %v1216 = vld [vmem:[#allocation9 + $0x1c] sm:$0xf]
    %v1217 = vld [vmem:[#allocation9 + $0x20] sm:$0xf]
    %v1218 = vld [vmem:[#allocation9 + $0x24] sm:$0xf]
    %v1219 = vld [vmem:[#allocation9 + $0x28] sm:$0xf]
    %v1220 = vld [vmem:[#allocation9 + $0x2c] sm:$0xf]
    %v1221 = vld [vmem:[#allocation9 + $0x30] sm:$0xf]
    %v1222 = vld [vmem:[#allocation9 + $0x34] sm:$0xf]
    %v1223 = vld [vmem:[#allocation9 + $0x38] sm:$0xf]
    %v1224 = vld [vmem:[#allocation9 + $0x3c] sm:$0xf]
    %v1225 = vld [vmem:[#allocation9 + $0x40] sm:$0xf]
    %v1226 = vld [vmem:[#allocation9 + $0x44] sm:$0xf]
    %v1227 = vld [vmem:[#allocation9 + $0x48] sm:$0xf]
    %v1228 = vld [vmem:[#allocation9 + $0x4c] sm:$0xf]
    %v1229 = vld [vmem:[#allocation9 + $0x50] sm:$0xf]
    %v1230 = vld [vmem:[#allocation9 + $0x54] sm:$0xf]
    %v1231 = vld [vmem:[#allocation9 + $0x58] sm:$0xf]
    %v1232 = vld [vmem:[#allocation9 + $0x5c] sm:$0xf]
    %v1233 = vld [vmem:[#allocation9 + $0x60] sm:$0xf]
    %v1234 = vld [vmem:[#allocation9 + $0x64] sm:$0xf]
    %v1235 = vld [vmem:[#allocation9 + $0x68] sm:$0xf]
    %v1236 = vld [vmem:[#allocation9 + $0x6c] sm:$0xf]
    %v1237 = vld [vmem:[#allocation9 + $0x70] sm:$0xf]
    %v1238 = vld [vmem:[#allocation9 + $0x74] sm:$0xf]
    %v1239 = vld [vmem:[#allocation9 + $0x78] sm:$0xf]
    %v1240 = vld [vmem:[#allocation9 + $0x7c] sm:$0xf]
    %v1241 = vld [vmem:[#allocation9 + $0x80] sm:$0xf]
    %v1242 = vld [vmem:[#allocation9 + $0x84] sm:$0xf]
    %v1243 = vld [vmem:[#allocation9 + $0x88] sm:$0xf]
    %v1244 = vld [vmem:[#allocation9 + $0x8c] sm:$0xf]
    %v1245 = vld [vmem:[#allocation9 + $0x90] sm:$0xf]
    %v1246 = vld [vmem:[#allocation9 + $0x94] sm:$0xf]
    %v1247 = vld [vmem:[#allocation9 + $0x98] sm:$0xf]
    %v1248 = vld [vmem:[#allocation9 + $0x9c] sm:$0xf]
    %v1249 = vld [vmem:[#allocation9 + $0xa0] sm:$0xf]
    %v1250 = vld [vmem:[#allocation9 + $0xa4] sm:$0xf]
    %v1251 = vld [vmem:[#allocation9 + $0xa8] sm:$0xf]
    %v1252 = vld [vmem:[#allocation9 + $0xac] sm:$0xf]
    %v1253 = vld [vmem:[#allocation9 + $0xb0] sm:$0xf]
    %v1254 = vld [vmem:[#allocation9 + $0xb4] sm:$0xf]
    %v1255 = vld [vmem:[#allocation9 + $0xb8] sm:$0xf]
    %v1256 = vld [vmem:[#allocation9 + $0xbc] sm:$0xf]
    %v1257 = vld [vmem:[#allocation9 + $0xc0] sm:$0xf]
    %v1258 = vld [vmem:[#allocation9 + $0xc4] sm:$0xf]
    %v1259 = vld [vmem:[#allocation9 + $0xc8] sm:$0xf]
    %v1260 = vld [vmem:[#allocation9 + $0xcc] sm:$0xf]
    %v1261 = vld [vmem:[#allocation9 + $0xd0] sm:$0xf]
    %v1262 = vld [vmem:[#allocation9 + $0xd4] sm:$0xf]
    %v1263 = vld [vmem:[#allocation9 + $0xd8] sm:$0xf]
    %v1264 = vld [vmem:[#allocation9 + $0xdc] sm:$0xf]
    %v1265 = vld [vmem:[#allocation9 + $0xe0] sm:$0xf]
    %v1266 = vld [vmem:[#allocation9 + $0xe4] sm:$0xf]
    %v1267 = vld [vmem:[#allocation9 + $0xe8] sm:$0xf]
    %v1268 = vld [vmem:[#allocation9 + $0xec] sm:$0xf]
    %v1269 = vld [vmem:[#allocation9 + $0xf0] sm:$0xf]
    %v1270 = vld [vmem:[#allocation9 + $0xf4] sm:$0xf]
    %v1271 = vld [vmem:[#allocation9 + $0xf8] sm:$0xf]
    %v1272 = vld [vmem:[#allocation9 + $0xfc] sm:$0xf]
    %v1273 = vld [vmem:[#allocation9 + $0x100] sm:$0xf]
    %v1274 = vld [vmem:[#allocation9 + $0x104] sm:$0xf]
    %v1275 = vld [vmem:[#allocation9 + $0x108] sm:$0xf]
    %v1276 = vld [vmem:[#allocation9 + $0x10c] sm:$0xf]
    %v1277 = vld [vmem:[#allocation9 + $0x110] sm:$0xf]
    %v1278 = vld [vmem:[#allocation9 + $0x114] sm:$0xf]
    %v1279 = vld [vmem:[#allocation9 + $0x118] sm:$0xf]
    %v1280 = vld [vmem:[#allocation9 + $0x11c] sm:$0xf]
    %v1281 = vld [vmem:[#allocation9 + $0x120] sm:$0xf]
    %v1282 = vld [vmem:[#allocation9 + $0x124] sm:$0xf]
    %v1283 = vld [vmem:[#allocation9 + $0x128] sm:$0xf]
    %v1284 = vld [vmem:[#allocation9 + $0x12c] sm:$0xf]
    %v1285 = vld [vmem:[#allocation9 + $0x130] sm:$0xf]
    %v1286 = vld [vmem:[#allocation9 + $0x134] sm:$0xf]
    %v1287 = vld [vmem:[#allocation9 + $0x138] sm:$0xf]
    %v1288 = vld [vmem:[#allocation9 + $0x13c] sm:$0xf]
    %v1289 = vld [vmem:[#allocation9 + $0x140] sm:$0xf]
    %v1290 = vld [vmem:[#allocation9 + $0x144] sm:$0xf]
    %v1291 = vld [vmem:[#allocation9 + $0x148] sm:$0xf]
    %v1292 = vld [vmem:[#allocation9 + $0x14c] sm:$0xf]
    %v1293 = vld [vmem:[#allocation9 + $0x150] sm:$0xf]
    %v1294 = vld [vmem:[#allocation9 + $0x154] sm:$0xf]
    %v1295 = vld [vmem:[#allocation9 + $0x158] sm:$0xf]
    %v1296 = vld [vmem:[#allocation9 + $0x15c] sm:$0xf]
    %v1297 = vld [vmem:[#allocation9 + $0x160] sm:$0xf]
    %v1298 = vld [vmem:[#allocation9 + $0x164] sm:$0xf]
    %v1299 = vld [vmem:[#allocation9 + $0x168] sm:$0xf]
    %v1300 = vld [vmem:[#allocation9 + $0x16c] sm:$0xf]
    %v1301 = vld [vmem:[#allocation9 + $0x170] sm:$0xf]
    %v1302 = vld [vmem:[#allocation9 + $0x174] sm:$0xf]
    %v1303 = vld [vmem:[#allocation9 + $0x178] sm:$0xf]
    %v1304 = vld [vmem:[#allocation9 + $0x17c] sm:$0xf]
    %v1305 = vld [vmem:[#allocation10] sm:$0x1]
    %v1307 = vperm.slane %v1305, 0
    %v1405 = vunpack.c.l.b16 %v1209
    %v1406 = vunpack.c.l.b16 %v1210
    %v1407 = vunpack.c.l.b16 %v1211
    %v1408 = vunpack.c.l.b16 %v1212
    %v1409 = vunpack.c.l.b16 %v1213
    %v1410 = vunpack.c.l.b16 %v1214
    %v1411 = vunpack.c.l.b16 %v1215
    %v1412 = vunpack.c.l.b16 %v1216
    %v1413 = vunpack.c.l.b16 %v1217
    %v1414 = vunpack.c.l.b16 %v1218
    %v1415 = vunpack.c.l.b16 %v1219
    %v1416 = vunpack.c.l.b16 %v1220
    %v1417 = vunpack.c.l.b16 %v1221
    %v1418 = vunpack.c.l.b16 %v1222
    %v1419 = vunpack.c.l.b16 %v1223
    %v1420 = vunpack.c.l.b16 %v1224
    %v1421 = vunpack.c.l.b16 %v1225
    %v1422 = vunpack.c.l.b16 %v1226
    %v1423 = vunpack.c.l.b16 %v1227
    %v1424 = vunpack.c.l.b16 %v1228
    %v1425 = vunpack.c.l.b16 %v1229
    %v1426 = vunpack.c.l.b16 %v1230
    %v1427 = vunpack.c.l.b16 %v1231
    %v1428 = vunpack.c.l.b16 %v1232
    %v1429 = vunpack.c.l.b16 %v1233
    %v1430 = vunpack.c.l.b16 %v1234
    %v1431 = vunpack.c.l.b16 %v1235
    %v1432 = vunpack.c.l.b16 %v1236
    %v1433 = vunpack.c.l.b16 %v1237
    %v1434 = vunpack.c.l.b16 %v1238
    %v1435 = vunpack.c.l.b16 %v1239
    %v1436 = vunpack.c.l.b16 %v1240
    %v1437 = vunpack.c.l.b16 %v1241
    %v1438 = vunpack.c.l.b16 %v1242
    %v1439 = vunpack.c.l.b16 %v1243
    %v1440 = vunpack.c.l.b16 %v1244
    %v1441 = vunpack.c.l.b16 %v1245
    %v1442 = vunpack.c.l.b16 %v1246
    %v1443 = vunpack.c.l.b16 %v1247
    %v1444 = vunpack.c.l.b16 %v1248
    %v1445 = vunpack.c.l.b16 %v1249
    %v1446 = vunpack.c.l.b16 %v1250
    %v1447 = vunpack.c.l.b16 %v1251
    %v1448 = vunpack.c.l.b16 %v1252
    %v1449 = vunpack.c.l.b16 %v1253
    %v1450 = vunpack.c.l.b16 %v1254
    %v1451 = vunpack.c.l.b16 %v1255
    %v1452 = vunpack.c.l.b16 %v1256
    %v1453 = vunpack.c.l.b16 %v1257
    %v1454 = vunpack.c.l.b16 %v1258
    %v1455 = vunpack.c.l.b16 %v1259
    %v1456 = vunpack.c.l.b16 %v1260
    %v1457 = vunpack.c.l.b16 %v1261
    %v1458 = vunpack.c.l.b16 %v1262
    %v1459 = vunpack.c.l.b16 %v1263
    %v1460 = vunpack.c.l.b16 %v1264
    %v1461 = vunpack.c.l.b16 %v1265
    %v1462 = vunpack.c.l.b16 %v1266
    %v1463 = vunpack.c.l.b16 %v1267
    %v1464 = vunpack.c.l.b16 %v1268
    %v1465 = vunpack.c.l.b16 %v1269
    %v1466 = vunpack.c.l.b16 %v1270
    %v1467 = vunpack.c.l.b16 %v1271
    %v1468 = vunpack.c.l.b16 %v1272
    %v1469 = vunpack.c.l.b16 %v1273
    %v1470 = vunpack.c.l.b16 %v1274
    %v1471 = vunpack.c.l.b16 %v1275
    %v1472 = vunpack.c.l.b16 %v1276
    %v1473 = vunpack.c.l.b16 %v1277
    %v1474 = vunpack.c.l.b16 %v1278
    %v1475 = vunpack.c.l.b16 %v1279
    %v1476 = vunpack.c.l.b16 %v1280
    %v1477 = vunpack.c.l.b16 %v1281
    %v1478 = vunpack.c.l.b16 %v1282
    %v1479 = vunpack.c.l.b16 %v1283
    %v1480 = vunpack.c.l.b16 %v1284
    %v1481 = vunpack.c.l.b16 %v1285
    %v1482 = vunpack.c.l.b16 %v1286
    %v1483 = vunpack.c.l.b16 %v1287
    %v1484 = vunpack.c.l.b16 %v1288
    %v1485 = vunpack.c.l.b16 %v1289
    %v1486 = vunpack.c.l.b16 %v1290
    %v1487 = vunpack.c.l.b16 %v1291
    %v1488 = vunpack.c.l.b16 %v1292
    %v1489 = vunpack.c.l.b16 %v1293
    %v1490 = vunpack.c.l.b16 %v1294
    %v1491 = vunpack.c.l.b16 %v1295
    %v1492 = vunpack.c.l.b16 %v1296
    %v1493 = vunpack.c.l.b16 %v1297
    %v1494 = vunpack.c.l.b16 %v1298
    %v1495 = vunpack.c.l.b16 %v1299
    %v1496 = vunpack.c.l.b16 %v1300
    %v1497 = vunpack.c.l.b16 %v1301
    %v1498 = vunpack.c.l.b16 %v1302
    %v1499 = vunpack.c.l.b16 %v1303
    %v1500 = vunpack.c.l.b16 %v1304
    %v1501 = vpack.c.b16 %v1406, %v1405
    %v1502 = vpack.c.b16 %v1408, %v1407
    %v1503 = vpack.c.b16 %v1410, %v1409
    %v1504 = vpack.c.b16 %v1412, %v1411
    %v1505 = vpack.c.b16 %v1414, %v1413
    %v1506 = vpack.c.b16 %v1416, %v1415
    %v1507 = vpack.c.b16 %v1418, %v1417
    %v1508 = vpack.c.b16 %v1420, %v1419
    %v1509 = vpack.c.b16 %v1422, %v1421
    %v1510 = vpack.c.b16 %v1424, %v1423
    %v1511 = vpack.c.b16 %v1426, %v1425
    %v1512 = vpack.c.b16 %v1428, %v1427
    %v1513 = vpack.c.b16 %v1430, %v1429
    %v1514 = vpack.c.b16 %v1432, %v1431
    %v1515 = vpack.c.b16 %v1434, %v1433
    %v1516 = vpack.c.b16 %v1436, %v1435
    %v1517 = vpack.c.b16 %v1438, %v1437
    %v1518 = vpack.c.b16 %v1440, %v1439
    %v1519 = vpack.c.b16 %v1442, %v1441
    %v1520 = vpack.c.b16 %v1444, %v1443
    %v1521 = vpack.c.b16 %v1446, %v1445
    %v1522 = vpack.c.b16 %v1448, %v1447
    %v1523 = vpack.c.b16 %v1450, %v1449
    %v1524 = vpack.c.b16 %v1452, %v1451
    %v1525 = vpack.c.b16 %v1454, %v1453
    %v1526 = vpack.c.b16 %v1456, %v1455
    %v1527 = vpack.c.b16 %v1458, %v1457
    %v1528 = vpack.c.b16 %v1460, %v1459
    %v1529 = vpack.c.b16 %v1462, %v1461
    %v1530 = vpack.c.b16 %v1464, %v1463
    %v1531 = vpack.c.b16 %v1466, %v1465
    %v1532 = vpack.c.b16 %v1468, %v1467
    %v1533 = vpack.c.b16 %v1470, %v1469
    %v1534 = vpack.c.b16 %v1472, %v1471
    %v1535 = vpack.c.b16 %v1474, %v1473
    %v1536 = vpack.c.b16 %v1476, %v1475
    %v1537 = vpack.c.b16 %v1478, %v1477
    %v1538 = vpack.c.b16 %v1480, %v1479
    %v1539 = vpack.c.b16 %v1482, %v1481
    %v1540 = vpack.c.b16 %v1484, %v1483
    %v1541 = vpack.c.b16 %v1486, %v1485
    %v1542 = vpack.c.b16 %v1488, %v1487
    %v1543 = vpack.c.b16 %v1490, %v1489
    %v1544 = vpack.c.b16 %v1492, %v1491
    %v1545 = vpack.c.b16 %v1494, %v1493
    %v1546 = vpack.c.b16 %v1496, %v1495
    %v1547 = vpack.c.b16 %v1498, %v1497
    %v1548 = vpack.c.b16 %v1500, %v1499
    %1597 = vmatpush.bf16.msra.mxu0 %v1508
    %1598 = vmatpush.bf16.msra.mxu0 %v1507
    %1599 = vmatpush.bf16.msra.mxu0 %v1506
    %1600 = vmatpush.bf16.msra.mxu0 %v1505
    %1601 = vmatpush.bf16.msra.mxu0 %v1504
    %1602 = vmatpush.bf16.msra.mxu0 %v1503
    %1603 = vmatpush.bf16.msra.mxu0 %v1502
    %1604 = vmatpush.bf16.msra.mxu0 %v1501
    %1605 = vmatmul.bf16.gmra.mxu0 %v1197
    %v1606 = vpop.f32.mrf.mxu0
    %v1607 = vadd.f32 %v1307, %v1606
    %v1608 = vpop.f32.mrf.mxu0
    %v1609 = vadd.f32 %v1307, %v1608
    %1610 = vmatmul.bf16.gmra.mxu0 %v1203
    %v1611 = vpop.f32.mrf.mxu0
    %v1612 = vadd.f32 %v1307, %v1611
    %v1613 = vpop.f32.mrf.mxu0
    %v1614 = vadd.f32 %v1307, %v1613
    %1615 = vdwg.mxu0
    %1616 = vmatpush.bf16.msra.mxu0 %v1516
    %1617 = vmatpush.bf16.msra.mxu0 %v1515
    %1618 = vmatpush.bf16.msra.mxu0 %v1514
    %1619 = vmatpush.bf16.msra.mxu0 %v1513
    %1620 = vmatpush.bf16.msra.mxu0 %v1512
    %1621 = vmatpush.bf16.msra.mxu0 %v1511
    %1622 = vmatpush.bf16.msra.mxu0 %v1510
    %1623 = vmatpush.bf16.msra.mxu0 %v1509
    %1624 = vmatmul.bf16.gmra.mxu0 %v1198
    %v1625 = vpop.f32.mrf.mxu0
    %v1626 = vadd.f32 %v1607, %v1625
    %v1627 = vpop.f32.mrf.mxu0
    %v1628 = vadd.f32 %v1609, %v1627
    %1629 = vmatmul.bf16.gmra.mxu0 %v1204
    %v1630 = vpop.f32.mrf.mxu0
    %v1631 = vadd.f32 %v1612, %v1630
    %v1632 = vpop.f32.mrf.mxu0
    %v1633 = vadd.f32 %v1614, %v1632
    %1634 = vdwg.mxu0
    %1635 = vmatpush.bf16.msra.mxu0 %v1524
    %1636 = vmatpush.bf16.msra.mxu0 %v1523
    %1637 = vmatpush.bf16.msra.mxu0 %v1522
    %1638 = vmatpush.bf16.msra.mxu0 %v1521
    %1639 = vmatpush.bf16.msra.mxu0 %v1520
    %1640 = vmatpush.bf16.msra.mxu0 %v1519
    %1641 = vmatpush.bf16.msra.mxu0 %v1518
    %1642 = vmatpush.bf16.msra.mxu0 %v1517
    %1643 = vmatmul.bf16.gmra.mxu0 %v1199
    %v1644 = vpop.f32.mrf.mxu0
    %v1645 = vadd.f32 %v1626, %v1644
    %v1646 = vpop.f32.mrf.mxu0
    %v1647 = vadd.f32 %v1628, %v1646
    %1648 = vmatmul.bf16.gmra.mxu0 %v1205
    %v1649 = vpop.f32.mrf.mxu0
    %v1650 = vadd.f32 %v1631, %v1649
    %v1651 = vpop.f32.mrf.mxu0
    %v1652 = vadd.f32 %v1633, %v1651
    %1653 = vdwg.mxu0
    %1654 = vmatpush.bf16.msra.mxu0 %v1532
    %1655 = vmatpush.bf16.msra.mxu0 %v1531
    %1656 = vmatpush.bf16.msra.mxu0 %v1530
    %1657 = vmatpush.bf16.msra.mxu0 %v1529
    %1658 = vmatpush.bf16.msra.mxu0 %v1528
    %1659 = vmatpush.bf16.msra.mxu0 %v1527
    %1660 = vmatpush.bf16.msra.mxu0 %v1526
    %1661 = vmatpush.bf16.msra.mxu0 %v1525
    %1662 = vmatmul.bf16.gmra.mxu0 %v1200
    %v1663 = vpop.f32.mrf.mxu0
    %v1664 = vadd.f32 %v1645, %v1663
    %v1665 = vpop.f32.mrf.mxu0
    %v1666 = vadd.f32 %v1647, %v1665
    %1667 = vmatmul.bf16.gmra.mxu0 %v1206
    %v1668 = vpop.f32.mrf.mxu0
    %v1669 = vadd.f32 %v1650, %v1668
    %v1670 = vpop.f32.mrf.mxu0
    %v1671 = vadd.f32 %v1652, %v1670
    %1672 = vdwg.mxu0
    %1673 = vmatpush.bf16.msra.mxu0 %v1540
    %1674 = vmatpush.bf16.msra.mxu0 %v1539
    %1675 = vmatpush.bf16.msra.mxu0 %v1538
    %1676 = vmatpush.bf16.msra.mxu0 %v1537
    %1677 = vmatpush.bf16.msra.mxu0 %v1536
    %1678 = vmatpush.bf16.msra.mxu0 %v1535
    %1679 = vmatpush.bf16.msra.mxu0 %v1534
    %1680 = vmatpush.bf16.msra.mxu0 %v1533
    %1681 = vmatmul.bf16.gmra.mxu0 %v1201
    %v1682 = vpop.f32.mrf.mxu0
    %v1683 = vadd.f32 %v1664, %v1682
    %v1684 = vpop.f32.mrf.mxu0
    %v1685 = vadd.f32 %v1666, %v1684
    %1686 = vmatmul.bf16.gmra.mxu0 %v1207
    %v1687 = vpop.f32.mrf.mxu0
    %v1688 = vadd.f32 %v1669, %v1687
    %v1689 = vpop.f32.mrf.mxu0
    %v1690 = vadd.f32 %v1671, %v1689
    %1691 = vdwg.mxu0
    %1692 = vmatpush.bf16.msra.mxu0 %v1548
    %1693 = vmatpush.bf16.msra.mxu0 %v1547
    %1694 = vmatpush.bf16.msra.mxu0 %v1546
    %1695 = vmatpush.bf16.msra.mxu0 %v1545
    %1696 = vmatpush.bf16.msra.mxu0 %v1544
    %1697 = vmatpush.bf16.msra.mxu0 %v1543
    %1698 = vmatpush.bf16.msra.mxu0 %v1542
    %1699 = vmatpush.bf16.msra.mxu0 %v1541
    %1700 = vmatmul.bf16.gmra.mxu0 %v1202
    %v1701 = vpop.f32.mrf.mxu0
    %v1702 = vadd.f32 %v1683, %v1701
    %v1703 = vpop.f32.mrf.mxu0
    %v1704 = vadd.f32 %v1685, %v1703
    %1705 = vmatmul.bf16.gmra.mxu0 %v1208
    %v1706 = vpop.f32.mrf.mxu0
    %v1707 = vadd.f32 %v1688, %v1706
    %v1708 = vpop.f32.mrf.mxu0
    %v1709 = vadd.f32 %v1690, %v1708
    %1710 = vdwg.mxu0
    %v1711 = vmax.f32 %v1702, 0.0
    %v1712 = vmax.f32 %v1704, 0.0
    %v1713 = vmax.f32 %v1707, 0.0
    %v1714 = vmax.f32 %v1709, 0.0
    %v1715 = vld [vmem:[#allocation12] sm:$0x1]
    %v1717 = vperm.slane %v1715, 0
    %v1719 = vmul.f32 %v1711, %v1717
    %v1720 = vmul.f32 %v1712, %v1717
    %v1721 = vmul.f32 %v1713, %v1717
    %v1722 = vmul.f32 %v1714, %v1717
    %v1723 = vld [vmem:[#allocation13] sm:$0x1]
    %v1725 = vperm.slane %v1723, 0
    %v1727 = vadd.f32 %v1719, %v1725
    %v1728 = vadd.f32 %v1720, %v1725
    %v1729 = vadd.f32 %v1721, %v1725
    %v1730 = vadd.f32 %v1722, %v1725
    %v1731 = vrot.slane %v1727, 7
    %v1732 = vrot.slane %v1728, 7
    %v1733 = vrot.slane %v1729, 7
    %v1734 = vrot.slane %v1730, 7
    %v1735 = vsel %vm677, %v1733, %v1734
    %v1736 = vsel %vm677, %v1732, %v1733
    %v1737 = vsel %vm677, %v1731, %v1732
    %v1738 = vsel %vm677, %v1734, %v1731
    %v1739 = vmul.f32 %v1738, %v653
    %v1740 = vmul.f32 %v1737, %v654
    %v1741 = vmul.f32 %v1736, %v655
    %v1742 = vmul.f32 %v1735, %v656
    %v1743 = vrot.slane %v1727, 1
    %v1744 = vrot.slane %v1728, 1
    %v1745 = vrot.slane %v1729, 1
    %v1746 = vrot.slane %v1730, 1
    %v1747 = vsel %vm690, %v1745, %v1746
    %v1748 = vsel %vm690, %v1744, %v1745
    %v1749 = vsel %vm690, %v1743, %v1744
    %v1750 = vsel %vm690, %v1746, %v1743
    %v1751 = vmul.f32 %v1749, %v665
    %v1752 = vmul.f32 %v1748, %v666
    %v1753 = vmul.f32 %v1747, %v667
    %v1754 = vmul.f32 %v1750, %v668
    %v1755 = vpack.c.bf16 %v1740, %v1739
    %v1756 = vpack.c.bf16 %v1728, %v1727
    %v1757 = vpack.c.bf16 %v1752, %v1751
    %v1758 = vpack.c.bf16 %v1742, %v1741
    %v1759 = vpack.c.bf16 %v1730, %v1729
    %v1760 = vpack.c.bf16 %v1754, %v1753
    %v1761 = vld [vmem:[#allocation15] sm:$0xf]
    %v1762 = vld [vmem:[#allocation15 + $0x4] sm:$0xf]
    %v1763 = vld [vmem:[#allocation15 + $0x8] sm:$0xf]
    %v1764 = vld [vmem:[#allocation15 + $0xc] sm:$0xf]
    %v1765 = vld [vmem:[#allocation15 + $0x10] sm:$0xf]
    %v1766 = vld [vmem:[#allocation15 + $0x14] sm:$0xf]
    %v1767 = vld [vmem:[#allocation15 + $0x18] sm:$0xf]
    %v1768 = vld [vmem:[#allocation15 + $0x1c] sm:$0xf]
    %v1769 = vld [vmem:[#allocation15 + $0x20] sm:$0xf]
    %v1770 = vld [vmem:[#allocation15 + $0x24] sm:$0xf]
    %v1771 = vld [vmem:[#allocation15 + $0x28] sm:$0xf]
    %v1772 = vld [vmem:[#allocation15 + $0x2c] sm:$0xf]
    %v1773 = vld [vmem:[#allocation15 + $0x30] sm:$0xf]
    %v1774 = vld [vmem:[#allocation15 + $0x34] sm:$0xf]
    %v1775 = vld [vmem:[#allocation15 + $0x38] sm:$0xf]
    %v1776 = vld [vmem:[#allocation15 + $0x3c] sm:$0xf]
    %v1777 = vld [vmem:[#allocation15 + $0x40] sm:$0xf]
    %v1778 = vld [vmem:[#allocation15 + $0x44] sm:$0xf]
    %v1779 = vld [vmem:[#allocation15 + $0x48] sm:$0xf]
    %v1780 = vld [vmem:[#allocation15 + $0x4c] sm:$0xf]
    %v1781 = vld [vmem:[#allocation15 + $0x50] sm:$0xf]
    %v1782 = vld [vmem:[#allocation15 + $0x54] sm:$0xf]
    %v1783 = vld [vmem:[#allocation15 + $0x58] sm:$0xf]
    %v1784 = vld [vmem:[#allocation15 + $0x5c] sm:$0xf]
    %v1785 = vld [vmem:[#allocation15 + $0x60] sm:$0xf]
    %v1786 = vld [vmem:[#allocation15 + $0x64] sm:$0xf]
    %v1787 = vld [vmem:[#allocation15 + $0x68] sm:$0xf]
    %v1788 = vld [vmem:[#allocation15 + $0x6c] sm:$0xf]
    %v1789 = vld [vmem:[#allocation15 + $0x70] sm:$0xf]
    %v1790 = vld [vmem:[#allocation15 + $0x74] sm:$0xf]
    %v1791 = vld [vmem:[#allocation15 + $0x78] sm:$0xf]
    %v1792 = vld [vmem:[#allocation15 + $0x7c] sm:$0xf]
    %v1793 = vld [vmem:[#allocation15 + $0x80] sm:$0xf]
    %v1794 = vld [vmem:[#allocation15 + $0x84] sm:$0xf]
    %v1795 = vld [vmem:[#allocation15 + $0x88] sm:$0xf]
    %v1796 = vld [vmem:[#allocation15 + $0x8c] sm:$0xf]
    %v1797 = vld [vmem:[#allocation15 + $0x90] sm:$0xf]
    %v1798 = vld [vmem:[#allocation15 + $0x94] sm:$0xf]
    %v1799 = vld [vmem:[#allocation15 + $0x98] sm:$0xf]
    %v1800 = vld [vmem:[#allocation15 + $0x9c] sm:$0xf]
    %v1801 = vld [vmem:[#allocation15 + $0xa0] sm:$0xf]
    %v1802 = vld [vmem:[#allocation15 + $0xa4] sm:$0xf]
    %v1803 = vld [vmem:[#allocation15 + $0xa8] sm:$0xf]
    %v1804 = vld [vmem:[#allocation15 + $0xac] sm:$0xf]
    %v1805 = vld [vmem:[#allocation15 + $0xb0] sm:$0xf]
    %v1806 = vld [vmem:[#allocation15 + $0xb4] sm:$0xf]
    %v1807 = vld [vmem:[#allocation15 + $0xb8] sm:$0xf]
    %v1808 = vld [vmem:[#allocation15 + $0xbc] sm:$0xf]
    %v1809 = vld [vmem:[#allocation16] sm:$0x1]
    %v1811 = vperm.slane %v1809, 0
    %v1861 = vunpack.c.l.b16 %v1761
    %v1862 = vunpack.c.l.b16 %v1762
    %v1863 = vunpack.c.l.b16 %v1763
    %v1864 = vunpack.c.l.b16 %v1764
    %v1865 = vunpack.c.l.b16 %v1765
    %v1866 = vunpack.c.l.b16 %v1766
    %v1867 = vunpack.c.l.b16 %v1767
    %v1868 = vunpack.c.l.b16 %v1768
    %v1869 = vunpack.c.l.b16 %v1769
    %v1870 = vunpack.c.l.b16 %v1770
    %v1871 = vunpack.c.l.b16 %v1771
    %v1872 = vunpack.c.l.b16 %v1772
    %v1873 = vunpack.c.l.b16 %v1773
    %v1874 = vunpack.c.l.b16 %v1774
    %v1875 = vunpack.c.l.b16 %v1775
    %v1876 = vunpack.c.l.b16 %v1776
    %v1877 = vunpack.c.l.b16 %v1777
    %v1878 = vunpack.c.l.b16 %v1778
    %v1879 = vunpack.c.l.b16 %v1779
    %v1880 = vunpack.c.l.b16 %v1780
    %v1881 = vunpack.c.l.b16 %v1781
    %v1882 = vunpack.c.l.b16 %v1782
    %v1883 = vunpack.c.l.b16 %v1783
    %v1884 = vunpack.c.l.b16 %v1784
    %v1885 = vunpack.c.l.b16 %v1785
    %v1886 = vunpack.c.l.b16 %v1786
    %v1887 = vunpack.c.l.b16 %v1787
    %v1888 = vunpack.c.l.b16 %v1788
    %v1889 = vunpack.c.l.b16 %v1789
    %v1890 = vunpack.c.l.b16 %v1790
    %v1891 = vunpack.c.l.b16 %v1791
    %v1892 = vunpack.c.l.b16 %v1792
    %v1893 = vunpack.c.l.b16 %v1793
    %v1894 = vunpack.c.l.b16 %v1794
    %v1895 = vunpack.c.l.b16 %v1795
    %v1896 = vunpack.c.l.b16 %v1796
    %v1897 = vunpack.c.l.b16 %v1797
    %v1898 = vunpack.c.l.b16 %v1798
    %v1899 = vunpack.c.l.b16 %v1799
    %v1900 = vunpack.c.l.b16 %v1800
    %v1901 = vunpack.c.l.b16 %v1801
    %v1902 = vunpack.c.l.b16 %v1802
    %v1903 = vunpack.c.l.b16 %v1803
    %v1904 = vunpack.c.l.b16 %v1804
    %v1905 = vunpack.c.l.b16 %v1805
    %v1906 = vunpack.c.l.b16 %v1806
    %v1907 = vunpack.c.l.b16 %v1807
    %v1908 = vunpack.c.l.b16 %v1808
    %v1909 = vpack.c.b16 %v1862, %v1861
    %v1910 = vpack.c.b16 %v1864, %v1863
    %v1911 = vpack.c.b16 %v1866, %v1865
    %v1912 = vpack.c.b16 %v1868, %v1867
    %v1913 = vpack.c.b16 %v1870, %v1869
    %v1914 = vpack.c.b16 %v1872, %v1871
    %v1915 = vpack.c.b16 %v1874, %v1873
    %v1916 = vpack.c.b16 %v1876, %v1875
    %v1917 = vpack.c.b16 %v1878, %v1877
    %v1918 = vpack.c.b16 %v1880, %v1879
    %v1919 = vpack.c.b16 %v1882, %v1881
    %v1920 = vpack.c.b16 %v1884, %v1883
    %v1921 = vpack.c.b16 %v1886, %v1885
    %v1922 = vpack.c.b16 %v1888, %v1887
    %v1923 = vpack.c.b16 %v1890, %v1889
    %v1924 = vpack.c.b16 %v1892, %v1891
    %v1925 = vpack.c.b16 %v1894, %v1893
    %v1926 = vpack.c.b16 %v1896, %v1895
    %v1927 = vpack.c.b16 %v1898, %v1897
    %v1928 = vpack.c.b16 %v1900, %v1899
    %v1929 = vpack.c.b16 %v1902, %v1901
    %v1930 = vpack.c.b16 %v1904, %v1903
    %v1931 = vpack.c.b16 %v1906, %v1905
    %v1932 = vpack.c.b16 %v1908, %v1907
    %1957 = vmatpush.bf16.msra.mxu0 %v1916
    %1958 = vmatpush.bf16.msra.mxu0 %v1915
    %1959 = vmatpush.bf16.msra.mxu0 %v1914
    %1960 = vmatpush.bf16.msra.mxu0 %v1913
    %1961 = vmatpush.bf16.msra.mxu0 %v1912
    %1962 = vmatpush.bf16.msra.mxu0 %v1911
    %1963 = vmatpush.bf16.msra.mxu0 %v1910
    %1964 = vmatpush.bf16.msra.mxu0 %v1909
    %1965 = vmatmul.bf16.gmra.mxu0 %v1755
    %v1966 = vpop.f32.mrf.mxu0
    %v1967 = vadd.f32 %v1811, %v1966
    %v1968 = vpop.f32.mrf.mxu0
    %v1969 = vadd.f32 %v1811, %v1968
    %1970 = vmatmul.bf16.gmra.mxu0 %v1758
    %v1971 = vpop.f32.mrf.mxu0
    %v1972 = vadd.f32 %v1811, %v1971
    %v1973 = vpop.f32.mrf.mxu0
    %v1974 = vadd.f32 %v1811, %v1973
    %1975 = vdwg.mxu0
    %1976 = vmatpush.bf16.msra.mxu0 %v1924
    %1977 = vmatpush.bf16.msra.mxu0 %v1923
    %1978 = vmatpush.bf16.msra.mxu0 %v1922
    %1979 = vmatpush.bf16.msra.mxu0 %v1921
    %1980 = vmatpush.bf16.msra.mxu0 %v1920
    %1981 = vmatpush.bf16.msra.mxu0 %v1919
    %1982 = vmatpush.bf16.msra.mxu0 %v1918
    %1983 = vmatpush.bf16.msra.mxu0 %v1917
    %1984 = vmatmul.bf16.gmra.mxu0 %v1756
    %v1985 = vpop.f32.mrf.mxu0
    %v1986 = vadd.f32 %v1967, %v1985
    %v1987 = vpop.f32.mrf.mxu0
    %v1988 = vadd.f32 %v1969, %v1987
    %1989 = vmatmul.bf16.gmra.mxu0 %v1759
    %v1990 = vpop.f32.mrf.mxu0
    %v1991 = vadd.f32 %v1972, %v1990
    %v1992 = vpop.f32.mrf.mxu0
    %v1993 = vadd.f32 %v1974, %v1992
    %1994 = vdwg.mxu0
    %1995 = vmatpush.bf16.msra.mxu0 %v1932
    %1996 = vmatpush.bf16.msra.mxu0 %v1931
    %1997 = vmatpush.bf16.msra.mxu0 %v1930
    %1998 = vmatpush.bf16.msra.mxu0 %v1929
    %1999 = vmatpush.bf16.msra.mxu0 %v1928
    %2000 = vmatpush.bf16.msra.mxu0 %v1927
    %2001 = vmatpush.bf16.msra.mxu0 %v1926
    %2002 = vmatpush.bf16.msra.mxu0 %v1925
    %2003 = vmatmul.bf16.gmra.mxu0 %v1757
    %v2004 = vpop.f32.mrf.mxu0
    %v2005 = vadd.f32 %v1986, %v2004
    %v2006 = vpop.f32.mrf.mxu0
    %v2007 = vadd.f32 %v1988, %v2006
    %2008 = vmatmul.bf16.gmra.mxu0 %v1760
    %v2009 = vpop.f32.mrf.mxu0
    %v2010 = vadd.f32 %v1991, %v2009
    %v2011 = vpop.f32.mrf.mxu0
    %v2012 = vadd.f32 %v1993, %v2011
    %2013 = vdwg.mxu0
    %v2014 = vmax.f32 %v2005, 0.0
    %v2015 = vmax.f32 %v2007, 0.0
    %v2016 = vmax.f32 %v2010, 0.0
    %v2017 = vmax.f32 %v2012, 0.0
    %v2018 = vld [vmem:[#allocation18] sm:$0x1]
    %v2020 = vperm.slane %v2018, 0
    %v2022 = vmul.f32 %v2014, %v2020
    %v2023 = vmul.f32 %v2015, %v2020
    %v2024 = vmul.f32 %v2016, %v2020
    %v2025 = vmul.f32 %v2017, %v2020
    %v2026 = vld [vmem:[#allocation19] sm:$0x1]
    %v2028 = vperm.slane %v2026, 0
    %v2030 = vadd.f32 %v2022, %v2028
    %v2031 = vadd.f32 %v2023, %v2028
    %v2032 = vadd.f32 %v2024, %v2028
    %v2033 = vadd.f32 %v2025, %v2028
    %v2034 = vrot.slane %v2030, 7
    %v2035 = vrot.slane %v2031, 7
    %v2036 = vrot.slane %v2032, 7
    %v2037 = vrot.slane %v2033, 7
    %v2038 = vsel %vm677, %v2036, %v2037
    %v2039 = vsel %vm677, %v2035, %v2036
    %v2040 = vsel %vm677, %v2034, %v2035
    %v2041 = vsel %vm677, %v2037, %v2034
    %v2042 = vmul.f32 %v2041, %v653
    %v2043 = vmul.f32 %v2040, %v654
    %v2044 = vmul.f32 %v2039, %v655
    %v2045 = vmul.f32 %v2038, %v656
    %v2046 = vrot.slane %v2030, 1
    %v2047 = vrot.slane %v2031, 1
    %v2048 = vrot.slane %v2032, 1
    %v2049 = vrot.slane %v2033, 1
    %v2050 = vsel %vm690, %v2048, %v2049
    %v2051 = vsel %vm690, %v2047, %v2048
    %v2052 = vsel %vm690, %v2046, %v2047
    %v2053 = vsel %vm690, %v2049, %v2046
    %v2054 = vmul.f32 %v2052, %v665
    %v2055 = vmul.f32 %v2051, %v666
    %v2056 = vmul.f32 %v2050, %v667
    %v2057 = vmul.f32 %v2053, %v668
    %v2058 = vpack.c.bf16 %v2043, %v2042
    %v2059 = vpack.c.bf16 %v2031, %v2030
    %v2060 = vpack.c.bf16 %v2055, %v2054
    %v2061 = vpack.c.bf16 %v2045, %v2044
    %v2062 = vpack.c.bf16 %v2033, %v2032
    %v2063 = vpack.c.bf16 %v2057, %v2056
    %v2064 = vld [vmem:[#allocation21] sm:$0xf]
    %v2065 = vld [vmem:[#allocation21 + $0x4] sm:$0xf]
    %v2066 = vld [vmem:[#allocation21 + $0x8] sm:$0xf]
    %v2067 = vld [vmem:[#allocation21 + $0xc] sm:$0xf]
    %v2068 = vld [vmem:[#allocation21 + $0x10] sm:$0xf]
    %v2069 = vld [vmem:[#allocation21 + $0x14] sm:$0xf]
    %v2070 = vld [vmem:[#allocation21 + $0x18] sm:$0xf]
    %v2071 = vld [vmem:[#allocation21 + $0x1c] sm:$0xf]
    %v2072 = vld [vmem:[#allocation21 + $0x20] sm:$0xf]
    %v2073 = vld [vmem:[#allocation21 + $0x24] sm:$0xf]
    %v2074 = vld [vmem:[#allocation21 + $0x28] sm:$0xf]
    %v2075 = vld [vmem:[#allocation21 + $0x2c] sm:$0xf]
    %v2076 = vld [vmem:[#allocation21 + $0x30] sm:$0xf]
    %v2077 = vld [vmem:[#allocation21 + $0x34] sm:$0xf]
    %v2078 = vld [vmem:[#allocation21 + $0x38] sm:$0xf]
    %v2079 = vld [vmem:[#allocation21 + $0x3c] sm:$0xf]
    %v2080 = vld [vmem:[#allocation21 + $0x40] sm:$0xf]
    %v2081 = vld [vmem:[#allocation21 + $0x44] sm:$0xf]
    %v2082 = vld [vmem:[#allocation21 + $0x48] sm:$0xf]
    %v2083 = vld [vmem:[#allocation21 + $0x4c] sm:$0xf]
    %v2084 = vld [vmem:[#allocation21 + $0x50] sm:$0xf]
    %v2085 = vld [vmem:[#allocation21 + $0x54] sm:$0xf]
    %v2086 = vld [vmem:[#allocation21 + $0x58] sm:$0xf]
    %v2087 = vld [vmem:[#allocation21 + $0x5c] sm:$0xf]
    %v2088 = vld [vmem:[#allocation21 + $0x60] sm:$0xf]
    %v2089 = vld [vmem:[#allocation21 + $0x64] sm:$0xf]
    %v2090 = vld [vmem:[#allocation21 + $0x68] sm:$0xf]
    %v2091 = vld [vmem:[#allocation21 + $0x6c] sm:$0xf]
    %v2092 = vld [vmem:[#allocation21 + $0x70] sm:$0xf]
    %v2093 = vld [vmem:[#allocation21 + $0x74] sm:$0xf]
    %v2094 = vld [vmem:[#allocation21 + $0x78] sm:$0xf]
    %v2095 = vld [vmem:[#allocation21 + $0x7c] sm:$0xf]
    %v2096 = vld [vmem:[#allocation21 + $0x80] sm:$0xf]
    %v2097 = vld [vmem:[#allocation21 + $0x84] sm:$0xf]
    %v2098 = vld [vmem:[#allocation21 + $0x88] sm:$0xf]
    %v2099 = vld [vmem:[#allocation21 + $0x8c] sm:$0xf]
    %v2100 = vld [vmem:[#allocation21 + $0x90] sm:$0xf]
    %v2101 = vld [vmem:[#allocation21 + $0x94] sm:$0xf]
    %v2102 = vld [vmem:[#allocation21 + $0x98] sm:$0xf]
    %v2103 = vld [vmem:[#allocation21 + $0x9c] sm:$0xf]
    %v2104 = vld [vmem:[#allocation21 + $0xa0] sm:$0xf]
    %v2105 = vld [vmem:[#allocation21 + $0xa4] sm:$0xf]
    %v2106 = vld [vmem:[#allocation21 + $0xa8] sm:$0xf]
    %v2107 = vld [vmem:[#allocation21 + $0xac] sm:$0xf]
    %v2108 = vld [vmem:[#allocation21 + $0xb0] sm:$0xf]
    %v2109 = vld [vmem:[#allocation21 + $0xb4] sm:$0xf]
    %v2110 = vld [vmem:[#allocation21 + $0xb8] sm:$0xf]
    %v2111 = vld [vmem:[#allocation21 + $0xbc] sm:$0xf]
    %v2112 = vld [vmem:[#allocation22] sm:$0x1]
    %v2114 = vperm.slane %v2112, 0
    %v2164 = vunpack.c.l.b16 %v2064
    %v2165 = vunpack.c.l.b16 %v2065
    %v2166 = vunpack.c.l.b16 %v2066
    %v2167 = vunpack.c.l.b16 %v2067
    %v2168 = vunpack.c.l.b16 %v2068
    %v2169 = vunpack.c.l.b16 %v2069
    %v2170 = vunpack.c.l.b16 %v2070
    %v2171 = vunpack.c.l.b16 %v2071
    %v2172 = vunpack.c.l.b16 %v2072
    %v2173 = vunpack.c.l.b16 %v2073
    %v2174 = vunpack.c.l.b16 %v2074
    %v2175 = vunpack.c.l.b16 %v2075
    %v2176 = vunpack.c.l.b16 %v2076
    %v2177 = vunpack.c.l.b16 %v2077
    %v2178 = vunpack.c.l.b16 %v2078
    %v2179 = vunpack.c.l.b16 %v2079
    %v2180 = vunpack.c.l.b16 %v2080
    %v2181 = vunpack.c.l.b16 %v2081
    %v2182 = vunpack.c.l.b16 %v2082
    %v2183 = vunpack.c.l.b16 %v2083
    %v2184 = vunpack.c.l.b16 %v2084
    %v2185 = vunpack.c.l.b16 %v2085
    %v2186 = vunpack.c.l.b16 %v2086
    %v2187 = vunpack.c.l.b16 %v2087
    %v2188 = vunpack.c.l.b16 %v2088
    %v2189 = vunpack.c.l.b16 %v2089
    %v2190 = vunpack.c.l.b16 %v2090
    %v2191 = vunpack.c.l.b16 %v2091
    %v2192 = vunpack.c.l.b16 %v2092
    %v2193 = vunpack.c.l.b16 %v2093
    %v2194 = vunpack.c.l.b16 %v2094
    %v2195 = vunpack.c.l.b16 %v2095
    %v2196 = vunpack.c.l.b16 %v2096
    %v2197 = vunpack.c.l.b16 %v2097
    %v2198 = vunpack.c.l.b16 %v2098
    %v2199 = vunpack.c.l.b16 %v2099
    %v2200 = vunpack.c.l.b16 %v2100
    %v2201 = vunpack.c.l.b16 %v2101
    %v2202 = vunpack.c.l.b16 %v2102
    %v2203 = vunpack.c.l.b16 %v2103
    %v2204 = vunpack.c.l.b16 %v2104
    %v2205 = vunpack.c.l.b16 %v2105
    %v2206 = vunpack.c.l.b16 %v2106
    %v2207 = vunpack.c.l.b16 %v2107
    %v2208 = vunpack.c.l.b16 %v2108
    %v2209 = vunpack.c.l.b16 %v2109
    %v2210 = vunpack.c.l.b16 %v2110
    %v2211 = vunpack.c.l.b16 %v2111
    %v2212 = vpack.c.b16 %v2165, %v2164
    %v2213 = vpack.c.b16 %v2167, %v2166
    %v2214 = vpack.c.b16 %v2169, %v2168
    %v2215 = vpack.c.b16 %v2171, %v2170
    %v2216 = vpack.c.b16 %v2173, %v2172
    %v2217 = vpack.c.b16 %v2175, %v2174
    %v2218 = vpack.c.b16 %v2177, %v2176
    %v2219 = vpack.c.b16 %v2179, %v2178
    %v2220 = vpack.c.b16 %v2181, %v2180
    %v2221 = vpack.c.b16 %v2183, %v2182
    %v2222 = vpack.c.b16 %v2185, %v2184
    %v2223 = vpack.c.b16 %v2187, %v2186
    %v2224 = vpack.c.b16 %v2189, %v2188
    %v2225 = vpack.c.b16 %v2191, %v2190
    %v2226 = vpack.c.b16 %v2193, %v2192
    %v2227 = vpack.c.b16 %v2195, %v2194
    %v2228 = vpack.c.b16 %v2197, %v2196
    %v2229 = vpack.c.b16 %v2199, %v2198
    %v2230 = vpack.c.b16 %v2201, %v2200
    %v2231 = vpack.c.b16 %v2203, %v2202
    %v2232 = vpack.c.b16 %v2205, %v2204
    %v2233 = vpack.c.b16 %v2207, %v2206
    %v2234 = vpack.c.b16 %v2209, %v2208
    %v2235 = vpack.c.b16 %v2211, %v2210
    %2260 = vmatpush.bf16.msra.mxu0 %v2219
    %2261 = vmatpush.bf16.msra.mxu0 %v2218
    %2262 = vmatpush.bf16.msra.mxu0 %v2217
    %2263 = vmatpush.bf16.msra.mxu0 %v2216
    %2264 = vmatpush.bf16.msra.mxu0 %v2215
    %2265 = vmatpush.bf16.msra.mxu0 %v2214
    %2266 = vmatpush.bf16.msra.mxu0 %v2213
    %2267 = vmatpush.bf16.msra.mxu0 %v2212
    %2268 = vmatmul.bf16.gmra.mxu0 %v2058
    %v2269 = vpop.f32.mrf.mxu0
    %v2270 = vadd.f32 %v2114, %v2269
    %v2271 = vpop.f32.mrf.mxu0
    %v2272 = vadd.f32 %v2114, %v2271
    %2273 = vmatmul.bf16.gmra.mxu0 %v2061
    %v2274 = vpop.f32.mrf.mxu0
    %v2275 = vadd.f32 %v2114, %v2274
    %v2276 = vpop.f32.mrf.mxu0
    %v2277 = vadd.f32 %v2114, %v2276
    %2278 = vdwg.mxu0
    %2279 = vmatpush.bf16.msra.mxu0 %v2227
    %2280 = vmatpush.bf16.msra.mxu0 %v2226
    %2281 = vmatpush.bf16.msra.mxu0 %v2225
    %2282 = vmatpush.bf16.msra.mxu0 %v2224
    %2283 = vmatpush.bf16.msra.mxu0 %v2223
    %2284 = vmatpush.bf16.msra.mxu0 %v2222
    %2285 = vmatpush.bf16.msra.mxu0 %v2221
    %2286 = vmatpush.bf16.msra.mxu0 %v2220
    %2287 = vmatmul.bf16.gmra.mxu0 %v2059
    %v2288 = vpop.f32.mrf.mxu0
    %v2289 = vadd.f32 %v2270, %v2288
    %v2290 = vpop.f32.mrf.mxu0
    %v2291 = vadd.f32 %v2272, %v2290
    %2292 = vmatmul.bf16.gmra.mxu0 %v2062
    %v2293 = vpop.f32.mrf.mxu0
    %v2294 = vadd.f32 %v2275, %v2293
    %v2295 = vpop.f32.mrf.mxu0
    %v2296 = vadd.f32 %v2277, %v2295
    %2297 = vdwg.mxu0
    %2298 = vmatpush.bf16.msra.mxu0 %v2235
    %2299 = vmatpush.bf16.msra.mxu0 %v2234
    %2300 = vmatpush.bf16.msra.mxu0 %v2233
    %2301 = vmatpush.bf16.msra.mxu0 %v2232
    %2302 = vmatpush.bf16.msra.mxu0 %v2231
    %2303 = vmatpush.bf16.msra.mxu0 %v2230
    %2304 = vmatpush.bf16.msra.mxu0 %v2229
    %2305 = vmatpush.bf16.msra.mxu0 %v2228
    %2306 = vmatmul.bf16.gmra.mxu0 %v2060
    %v2307 = vpop.f32.mrf.mxu0
    %v2308 = vadd.f32 %v2289, %v2307
    %v2309 = vpop.f32.mrf.mxu0
    %v2310 = vadd.f32 %v2291, %v2309
    %2311 = vmatmul.bf16.gmra.mxu0 %v2063
    %v2312 = vpop.f32.mrf.mxu0
    %v2313 = vadd.f32 %v2294, %v2312
    %v2314 = vpop.f32.mrf.mxu0
    %v2315 = vadd.f32 %v2296, %v2314
    %2316 = vdwg.mxu0
    %v2317 = vmax.f32 %v2308, 0.0
    %v2318 = vmax.f32 %v2310, 0.0
    %v2319 = vmax.f32 %v2313, 0.0
    %v2320 = vmax.f32 %v2315, 0.0
    %v2321 = vld [vmem:[#allocation24] sm:$0x1]
    %v2323 = vperm.slane %v2321, 0
    %v2325 = vmul.f32 %v2317, %v2323
    %v2326 = vmul.f32 %v2318, %v2323
    %v2327 = vmul.f32 %v2319, %v2323
    %v2328 = vmul.f32 %v2320, %v2323
    %v2329 = vld [vmem:[#allocation25] sm:$0x1]
    %v2331 = vperm.slane %v2329, 0
    %v2333 = vadd.f32 %v2325, %v2331
    %v2334 = vadd.f32 %v2326, %v2331
    %v2335 = vadd.f32 %v2327, %v2331
    %v2336 = vadd.f32 %v2328, %v2331
    %v2337 = vrot.slane %v2333, 7
    %v2338 = vrot.slane %v2334, 7
    %v2339 = vrot.slane %v2335, 7
    %v2340 = vrot.slane %v2336, 7
    %v2341 = vsel %vm677, %v2339, %v2340
    %v2342 = vsel %vm677, %v2338, %v2339
    %v2343 = vsel %vm677, %v2337, %v2338
    %v2344 = vsel %vm677, %v2340, %v2337
    %v2345 = vmul.f32 %v2344, %v653
    %v2346 = vmul.f32 %v2343, %v654
    %v2347 = vmul.f32 %v2342, %v655
    %v2348 = vmul.f32 %v2341, %v656
    %v2349 = vrot.slane %v2333, 1
    %v2350 = vrot.slane %v2334, 1
    %v2351 = vrot.slane %v2335, 1
    %v2352 = vrot.slane %v2336, 1
    %v2353 = vsel %vm690, %v2351, %v2352
    %v2354 = vsel %vm690, %v2350, %v2351
    %v2355 = vsel %vm690, %v2349, %v2350
    %v2356 = vsel %vm690, %v2352, %v2349
    %v2357 = vmul.f32 %v2355, %v665
    %v2358 = vmul.f32 %v2354, %v666
    %v2359 = vmul.f32 %v2353, %v667
    %v2360 = vmul.f32 %v2356, %v668
    %v2361 = vpack.c.bf16 %v2346, %v2345
    %v2362 = vpack.c.bf16 %v2334, %v2333
    %v2363 = vpack.c.bf16 %v2358, %v2357
    %v2364 = vpack.c.bf16 %v2348, %v2347
    %v2365 = vpack.c.bf16 %v2336, %v2335
    %v2366 = vpack.c.bf16 %v2360, %v2359
    %v2367 = vld [vmem:[#allocation27] sm:$0xff]
    %v2368 = vld [vmem:[#allocation27 + $0x8] sm:$0xff]
    %v2369 = vld [vmem:[#allocation27 + $0x10] sm:$0xff]
    %v2370 = vld [vmem:[#allocation27 + $0x18] sm:$0xff]
    %v2371 = vld [vmem:[#allocation27 + $0x20] sm:$0xff]
    %v2372 = vld [vmem:[#allocation27 + $0x28] sm:$0xff]
    %v2373 = vld [vmem:[#allocation27 + $0x30] sm:$0xff]
    %v2374 = vld [vmem:[#allocation27 + $0x38] sm:$0xff]
    %v2375 = vld [vmem:[#allocation27 + $0x40] sm:$0xff]
    %v2376 = vld [vmem:[#allocation27 + $0x48] sm:$0xff]
    %v2377 = vld [vmem:[#allocation27 + $0x50] sm:$0xff]
    %v2378 = vld [vmem:[#allocation27 + $0x58] sm:$0xff]
    %v2379 = vld [vmem:[#allocation27 + $0x60] sm:$0xff]
    %v2380 = vld [vmem:[#allocation27 + $0x68] sm:$0xff]
    %v2381 = vld [vmem:[#allocation27 + $0x70] sm:$0xff]
    %v2382 = vld [vmem:[#allocation27 + $0x78] sm:$0xff]
    %v2383 = vld [vmem:[#allocation27 + $0x80] sm:$0xff]
    %v2384 = vld [vmem:[#allocation27 + $0x88] sm:$0xff]
    %v2385 = vld [vmem:[#allocation27 + $0x90] sm:$0xff]
    %v2386 = vld [vmem:[#allocation27 + $0x98] sm:$0xff]
    %v2387 = vld [vmem:[#allocation27 + $0xa0] sm:$0xff]
    %v2388 = vld [vmem:[#allocation27 + $0xa8] sm:$0xff]
    %v2389 = vld [vmem:[#allocation27 + $0xb0] sm:$0xff]
    %v2390 = vld [vmem:[#allocation27 + $0xb8] sm:$0xff]
    %v2391 = vld [vmem:[#allocation27 + $0xc0] sm:$0xff]
    %v2392 = vld [vmem:[#allocation27 + $0xc8] sm:$0xff]
    %v2393 = vld [vmem:[#allocation27 + $0xd0] sm:$0xff]
    %v2394 = vld [vmem:[#allocation27 + $0xd8] sm:$0xff]
    %v2395 = vld [vmem:[#allocation27 + $0xe0] sm:$0xff]
    %v2396 = vld [vmem:[#allocation27 + $0xe8] sm:$0xff]
    %v2397 = vld [vmem:[#allocation27 + $0xf0] sm:$0xff]
    %v2398 = vld [vmem:[#allocation27 + $0xf8] sm:$0xff]
    %v2399 = vld [vmem:[#allocation27 + $0x100] sm:$0xff]
    %v2400 = vld [vmem:[#allocation27 + $0x108] sm:$0xff]
    %v2401 = vld [vmem:[#allocation27 + $0x110] sm:$0xff]
    %v2402 = vld [vmem:[#allocation27 + $0x118] sm:$0xff]
    %v2403 = vld [vmem:[#allocation27 + $0x120] sm:$0xff]
    %v2404 = vld [vmem:[#allocation27 + $0x128] sm:$0xff]
    %v2405 = vld [vmem:[#allocation27 + $0x130] sm:$0xff]
    %v2406 = vld [vmem:[#allocation27 + $0x138] sm:$0xff]
    %v2407 = vld [vmem:[#allocation27 + $0x140] sm:$0xff]
    %v2408 = vld [vmem:[#allocation27 + $0x148] sm:$0xff]
    %v2409 = vld [vmem:[#allocation27 + $0x150] sm:$0xff]
    %v2410 = vld [vmem:[#allocation27 + $0x158] sm:$0xff]
    %v2411 = vld [vmem:[#allocation27 + $0x160] sm:$0xff]
    %v2412 = vld [vmem:[#allocation27 + $0x168] sm:$0xff]
    %v2413 = vld [vmem:[#allocation27 + $0x170] sm:$0xff]
    %v2414 = vld [vmem:[#allocation27 + $0x178] sm:$0xff]
    %v2415 = vld [vmem:[#allocation28] sm:$0x3]
    %v2417 = vperm.slane %v2415, 0
    %v2418 = vperm.slane %v2415, 1
    %v2469 = vunpack.c.l.b16 %v2367
    %v2470 = vunpack.c.h.b16 %v2367
    %v2471 = vunpack.c.l.b16 %v2368
    %v2472 = vunpack.c.h.b16 %v2368
    %v2473 = vunpack.c.l.b16 %v2369
    %v2474 = vunpack.c.h.b16 %v2369
    %v2475 = vunpack.c.l.b16 %v2370
    %v2476 = vunpack.c.h.b16 %v2370
    %v2477 = vunpack.c.l.b16 %v2371
    %v2478 = vunpack.c.h.b16 %v2371
    %v2479 = vunpack.c.l.b16 %v2372
    %v2480 = vunpack.c.h.b16 %v2372
    %v2481 = vunpack.c.l.b16 %v2373
    %v2482 = vunpack.c.h.b16 %v2373
    %v2483 = vunpack.c.l.b16 %v2374
    %v2484 = vunpack.c.h.b16 %v2374
    %v2485 = vunpack.c.l.b16 %v2375
    %v2486 = vunpack.c.h.b16 %v2375
    %v2487 = vunpack.c.l.b16 %v2376
    %v2488 = vunpack.c.h.b16 %v2376
    %v2489 = vunpack.c.l.b16 %v2377
    %v2490 = vunpack.c.h.b16 %v2377
    %v2491 = vunpack.c.l.b16 %v2378
    %v2492 = vunpack.c.h.b16 %v2378
    %v2493 = vunpack.c.l.b16 %v2379
    %v2494 = vunpack.c.h.b16 %v2379
    %v2495 = vunpack.c.l.b16 %v2380
    %v2496 = vunpack.c.h.b16 %v2380
    %v2497 = vunpack.c.l.b16 %v2381
    %v2498 = vunpack.c.h.b16 %v2381
    %v2499 = vunpack.c.l.b16 %v2382
    %v2500 = vunpack.c.h.b16 %v2382
    %v2501 = vunpack.c.l.b16 %v2383
    %v2502 = vunpack.c.h.b16 %v2383
    %v2503 = vunpack.c.l.b16 %v2384
    %v2504 = vunpack.c.h.b16 %v2384
    %v2505 = vunpack.c.l.b16 %v2385
    %v2506 = vunpack.c.h.b16 %v2385
    %v2507 = vunpack.c.l.b16 %v2386
    %v2508 = vunpack.c.h.b16 %v2386
    %v2509 = vunpack.c.l.b16 %v2387
    %v2510 = vunpack.c.h.b16 %v2387
    %v2511 = vunpack.c.l.b16 %v2388
    %v2512 = vunpack.c.h.b16 %v2388
    %v2513 = vunpack.c.l.b16 %v2389
    %v2514 = vunpack.c.h.b16 %v2389
    %v2515 = vunpack.c.l.b16 %v2390
    %v2516 = vunpack.c.h.b16 %v2390
    %v2517 = vunpack.c.l.b16 %v2391
    %v2518 = vunpack.c.h.b16 %v2391
    %v2519 = vunpack.c.l.b16 %v2392
    %v2520 = vunpack.c.h.b16 %v2392
    %v2521 = vunpack.c.l.b16 %v2393
    %v2522 = vunpack.c.h.b16 %v2393
    %v2523 = vunpack.c.l.b16 %v2394
    %v2524 = vunpack.c.h.b16 %v2394
    %v2525 = vunpack.c.l.b16 %v2395
    %v2526 = vunpack.c.h.b16 %v2395
    %v2527 = vunpack.c.l.b16 %v2396
    %v2528 = vunpack.c.h.b16 %v2396
    %v2529 = vunpack.c.l.b16 %v2397
    %v2530 = vunpack.c.h.b16 %v2397
    %v2531 = vunpack.c.l.b16 %v2398
    %v2532 = vunpack.c.h.b16 %v2398
    %v2533 = vunpack.c.l.b16 %v2399
    %v2534 = vunpack.c.h.b16 %v2399
    %v2535 = vunpack.c.l.b16 %v2400
    %v2536 = vunpack.c.h.b16 %v2400
    %v2537 = vunpack.c.l.b16 %v2401
    %v2538 = vunpack.c.h.b16 %v2401
    %v2539 = vunpack.c.l.b16 %v2402
    %v2540 = vunpack.c.h.b16 %v2402
    %v2541 = vunpack.c.l.b16 %v2403
    %v2542 = vunpack.c.h.b16 %v2403
    %v2543 = vunpack.c.l.b16 %v2404
    %v2544 = vunpack.c.h.b16 %v2404
    %v2545 = vunpack.c.l.b16 %v2405
    %v2546 = vunpack.c.h.b16 %v2405
    %v2547 = vunpack.c.l.b16 %v2406
    %v2548 = vunpack.c.h.b16 %v2406
    %v2549 = vunpack.c.l.b16 %v2407
    %v2550 = vunpack.c.h.b16 %v2407
    %v2551 = vunpack.c.l.b16 %v2408
    %v2552 = vunpack.c.h.b16 %v2408
    %v2553 = vunpack.c.l.b16 %v2409
    %v2554 = vunpack.c.h.b16 %v2409
    %v2555 = vunpack.c.l.b16 %v2410
    %v2556 = vunpack.c.h.b16 %v2410
    %v2557 = vunpack.c.l.b16 %v2411
    %v2558 = vunpack.c.h.b16 %v2411
    %v2559 = vunpack.c.l.b16 %v2412
    %v2560 = vunpack.c.h.b16 %v2412
    %v2561 = vunpack.c.l.b16 %v2413
    %v2562 = vunpack.c.h.b16 %v2413
    %v2563 = vunpack.c.l.b16 %v2414
    %v2564 = vunpack.c.h.b16 %v2414
    %v2565 = vpack.c.b16 %v2471, %v2469
    %v2566 = vpack.c.b16 %v2472, %v2470
    %v2567 = vpack.c.b16 %v2475, %v2473
    %v2568 = vpack.c.b16 %v2476, %v2474
    %v2569 = vpack.c.b16 %v2479, %v2477
    %v2570 = vpack.c.b16 %v2480, %v2478
    %v2571 = vpack.c.b16 %v2483, %v2481
    %v2572 = vpack.c.b16 %v2484, %v2482
    %v2573 = vpack.c.b16 %v2487, %v2485
    %v2574 = vpack.c.b16 %v2488, %v2486
    %v2575 = vpack.c.b16 %v2491, %v2489
    %v2576 = vpack.c.b16 %v2492, %v2490
    %v2577 = vpack.c.b16 %v2495, %v2493
    %v2578 = vpack.c.b16 %v2496, %v2494
    %v2579 = vpack.c.b16 %v2499, %v2497
    %v2580 = vpack.c.b16 %v2500, %v2498
    %v2581 = vpack.c.b16 %v2503, %v2501
    %v2582 = vpack.c.b16 %v2504, %v2502
    %v2583 = vpack.c.b16 %v2507, %v2505
    %v2584 = vpack.c.b16 %v2508, %v2506
    %v2585 = vpack.c.b16 %v2511, %v2509
    %v2586 = vpack.c.b16 %v2512, %v2510
    %v2587 = vpack.c.b16 %v2515, %v2513
    %v2588 = vpack.c.b16 %v2516, %v2514
    %v2589 = vpack.c.b16 %v2519, %v2517
    %v2590 = vpack.c.b16 %v2520, %v2518
    %v2591 = vpack.c.b16 %v2523, %v2521
    %v2592 = vpack.c.b16 %v2524, %v2522
    %v2593 = vpack.c.b16 %v2527, %v2525
    %v2594 = vpack.c.b16 %v2528, %v2526
    %v2595 = vpack.c.b16 %v2531, %v2529
    %v2596 = vpack.c.b16 %v2532, %v2530
    %v2597 = vpack.c.b16 %v2535, %v2533
    %v2598 = vpack.c.b16 %v2536, %v2534
    %v2599 = vpack.c.b16 %v2539, %v2537
    %v2600 = vpack.c.b16 %v2540, %v2538
    %v2601 = vpack.c.b16 %v2543, %v2541
    %v2602 = vpack.c.b16 %v2544, %v2542
    %v2603 = vpack.c.b16 %v2547, %v2545
    %v2604 = vpack.c.b16 %v2548, %v2546
    %v2605 = vpack.c.b16 %v2551, %v2549
    %v2606 = vpack.c.b16 %v2552, %v2550
    %v2607 = vpack.c.b16 %v2555, %v2553
    %v2608 = vpack.c.b16 %v2556, %v2554
    %v2609 = vpack.c.b16 %v2559, %v2557
    %v2610 = vpack.c.b16 %v2560, %v2558
    %v2611 = vpack.c.b16 %v2563, %v2561
    %v2612 = vpack.c.b16 %v2564, %v2562
    %2661 = vmatpush.bf16.msra.mxu0 %v2579
    %2662 = vmatpush.bf16.msra.mxu0 %v2577
    %2663 = vmatpush.bf16.msra.mxu0 %v2575
    %2664 = vmatpush.bf16.msra.mxu0 %v2573
    %2665 = vmatpush.bf16.msra.mxu0 %v2571
    %2666 = vmatpush.bf16.msra.mxu0 %v2569
    %2667 = vmatpush.bf16.msra.mxu0 %v2567
    %2668 = vmatpush.bf16.msra.mxu0 %v2565
    %2669 = vmatmul.bf16.gmra.mxu0 %v2361
    %v2670 = vpop.f32.mrf.mxu0
    %v2671 = vadd.f32 %v2417, %v2670
    %v2672 = vpop.f32.mrf.mxu0
    %v2673 = vadd.f32 %v2417, %v2672
    %2674 = vmatmul.bf16.gmra.mxu0 %v2364
    %v2675 = vpop.f32.mrf.mxu0
    %v2676 = vadd.f32 %v2417, %v2675
    %v2677 = vpop.f32.mrf.mxu0
    %v2678 = vadd.f32 %v2417, %v2677
    %2679 = vdwg.mxu0
    %2680 = vmatpush.bf16.msra.mxu0 %v2595
    %2681 = vmatpush.bf16.msra.mxu0 %v2593
    %2682 = vmatpush.bf16.msra.mxu0 %v2591
    %2683 = vmatpush.bf16.msra.mxu0 %v2589
    %2684 = vmatpush.bf16.msra.mxu0 %v2587
    %2685 = vmatpush.bf16.msra.mxu0 %v2585
    %2686 = vmatpush.bf16.msra.mxu0 %v2583
    %2687 = vmatpush.bf16.msra.mxu0 %v2581
    %2688 = vmatmul.bf16.gmra.mxu0 %v2362
    %v2689 = vpop.f32.mrf.mxu0
    %v2690 = vadd.f32 %v2671, %v2689
    %v2691 = vpop.f32.mrf.mxu0
    %v2692 = vadd.f32 %v2673, %v2691
    %2693 = vmatmul.bf16.gmra.mxu0 %v2365
    %v2694 = vpop.f32.mrf.mxu0
    %v2695 = vadd.f32 %v2676, %v2694
    %v2696 = vpop.f32.mrf.mxu0
    %v2697 = vadd.f32 %v2678, %v2696
    %2698 = vdwg.mxu0
    %2699 = vmatpush.bf16.msra.mxu0 %v2611
    %2700 = vmatpush.bf16.msra.mxu0 %v2609
    %2701 = vmatpush.bf16.msra.mxu0 %v2607
    %2702 = vmatpush.bf16.msra.mxu0 %v2605
    %2703 = vmatpush.bf16.msra.mxu0 %v2603
    %2704 = vmatpush.bf16.msra.mxu0 %v2601
    %2705 = vmatpush.bf16.msra.mxu0 %v2599
    %2706 = vmatpush.bf16.msra.mxu0 %v2597
    %2707 = vmatmul.bf16.gmra.mxu0 %v2363
    %v2708 = vpop.f32.mrf.mxu0
    %v2709 = vadd.f32 %v2690, %v2708
    %v2710 = vpop.f32.mrf.mxu0
    %v2711 = vadd.f32 %v2692, %v2710
    %2712 = vmatmul.bf16.gmra.mxu0 %v2366
    %v2713 = vpop.f32.mrf.mxu0
    %v2714 = vadd.f32 %v2695, %v2713
    %v2715 = vpop.f32.mrf.mxu0
    %v2716 = vadd.f32 %v2697, %v2715
    %2717 = vdwg.mxu0
    %2718 = vmatpush.bf16.msra.mxu0 %v2580
    %2719 = vmatpush.bf16.msra.mxu0 %v2578
    %2720 = vmatpush.bf16.msra.mxu0 %v2576
    %2721 = vmatpush.bf16.msra.mxu0 %v2574
    %2722 = vmatpush.bf16.msra.mxu0 %v2572
    %2723 = vmatpush.bf16.msra.mxu0 %v2570
    %2724 = vmatpush.bf16.msra.mxu0 %v2568
    %2725 = vmatpush.bf16.msra.mxu0 %v2566
    %2726 = vmatmul.bf16.gmra.mxu0 %v2361
    %v2727 = vpop.f32.mrf.mxu0
    %v2728 = vadd.f32 %v2418, %v2727
    %v2729 = vpop.f32.mrf.mxu0
    %v2730 = vadd.f32 %v2418, %v2729
    %2731 = vmatmul.bf16.gmra.mxu0 %v2364
    %v2732 = vpop.f32.mrf.mxu0
    %v2733 = vadd.f32 %v2418, %v2732
    %v2734 = vpop.f32.mrf.mxu0
    %v2735 = vadd.f32 %v2418, %v2734
    %2736 = vdwg.mxu0
    %2737 = vmatpush.bf16.msra.mxu0 %v2596
    %2738 = vmatpush.bf16.msra.mxu0 %v2594
    %2739 = vmatpush.bf16.msra.mxu0 %v2592
    %2740 = vmatpush.bf16.msra.mxu0 %v2590
    %2741 = vmatpush.bf16.msra.mxu0 %v2588
    %2742 = vmatpush.bf16.msra.mxu0 %v2586
    %2743 = vmatpush.bf16.msra.mxu0 %v2584
    %2744 = vmatpush.bf16.msra.mxu0 %v2582
    %2745 = vmatmul.bf16.gmra.mxu0 %v2362
    %v2746 = vpop.f32.mrf.mxu0
    %v2747 = vadd.f32 %v2728, %v2746
    %v2748 = vpop.f32.mrf.mxu0
    %v2749 = vadd.f32 %v2730, %v2748
    %2750 = vmatmul.bf16.gmra.mxu0 %v2365
    %v2751 = vpop.f32.mrf.mxu0
    %v2752 = vadd.f32 %v2733, %v2751
    %v2753 = vpop.f32.mrf.mxu0
    %v2754 = vadd.f32 %v2735, %v2753
    %2755 = vdwg.mxu0
    %2756 = vmatpush.bf16.msra.mxu0 %v2612
    %2757 = vmatpush.bf16.msra.mxu0 %v2610
    %2758 = vmatpush.bf16.msra.mxu0 %v2608
    %2759 = vmatpush.bf16.msra.mxu0 %v2606
    %2760 = vmatpush.bf16.msra.mxu0 %v2604
    %2761 = vmatpush.bf16.msra.mxu0 %v2602
    %2762 = vmatpush.bf16.msra.mxu0 %v2600
    %2763 = vmatpush.bf16.msra.mxu0 %v2598
    %2764 = vmatmul.bf16.gmra.mxu0 %v2363
    %v2765 = vpop.f32.mrf.mxu0
    %v2766 = vadd.f32 %v2747, %v2765
    %v2767 = vpop.f32.mrf.mxu0
    %v2768 = vadd.f32 %v2749, %v2767
    %2769 = vmatmul.bf16.gmra.mxu0 %v2366
    %v2770 = vpop.f32.mrf.mxu0
    %v2771 = vadd.f32 %v2752, %v2770
    %v2772 = vpop.f32.mrf.mxu0
    %v2773 = vadd.f32 %v2754, %v2772
    %2774 = vdwg.mxu0
    %v2775 = vmax.f32 %v2709, 0.0
    %v2776 = vmax.f32 %v2766, 0.0
    %v2777 = vmax.f32 %v2711, 0.0
    %v2778 = vmax.f32 %v2768, 0.0
    %v2779 = vmax.f32 %v2714, 0.0
    %v2780 = vmax.f32 %v2771, 0.0
    %v2781 = vmax.f32 %v2716, 0.0
    %v2782 = vmax.f32 %v2773, 0.0
    %v2783 = vld [vmem:[#allocation30] sm:$0x3]
    %v2785 = vperm.slane %v2783, 0
    %v2786 = vperm.slane %v2783, 1
    %v2789 = vmul.f32 %v2775, %v2785
    %v2790 = vmul.f32 %v2776, %v2786
    %v2791 = vmul.f32 %v2777, %v2785
    %v2792 = vmul.f32 %v2778, %v2786
    %v2793 = vmul.f32 %v2779, %v2785
    %v2794 = vmul.f32 %v2780, %v2786
    %v2795 = vmul.f32 %v2781, %v2785
    %v2796 = vmul.f32 %v2782, %v2786
    %v2797 = vld [vmem:[#allocation31] sm:$0x3]
    %v2799 = vperm.slane %v2797, 0
    %v2800 = vperm.slane %v2797, 1
    %v2803 = vadd.f32 %v2789, %v2799
    %v2804 = vadd.f32 %v2790, %v2800
    %v2805 = vadd.f32 %v2791, %v2799
    %v2806 = vadd.f32 %v2792, %v2800
    %v2807 = vadd.f32 %v2793, %v2799
    %v2808 = vadd.f32 %v2794, %v2800
    %v2809 = vadd.f32 %v2795, %v2799
    %v2810 = vadd.f32 %v2796, %v2800
    %v2811 = vrot.slane %v2803, 7
    %v2812 = vrot.slane %v2804, 7
    %v2813 = vrot.slane %v2805, 7
    %v2814 = vrot.slane %v2806, 7
    %v2815 = vrot.slane %v2807, 7
    %v2816 = vrot.slane %v2808, 7
    %v2817 = vrot.slane %v2809, 7
    %v2818 = vrot.slane %v2810, 7
    %v2819 = vsel %vm677, %v2815, %v2817
    %v2820 = vsel %vm677, %v2816, %v2818
    %v2821 = vsel %vm677, %v2813, %v2815
    %v2822 = vsel %vm677, %v2814, %v2816
    %v2823 = vsel %vm677, %v2811, %v2813
    %v2824 = vsel %vm677, %v2812, %v2814
    %v2825 = vsel %vm677, %v2817, %v2811
    %v2826 = vsel %vm677, %v2818, %v2812
    %v2827 = vmul.f32 %v2825, %v653
    %v2828 = vmul.f32 %v2826, %v653
    %v2829 = vmul.f32 %v2823, %v654
    %v2830 = vmul.f32 %v2824, %v654
    %v2831 = vmul.f32 %v2821, %v655
    %v2832 = vmul.f32 %v2822, %v655
    %v2833 = vmul.f32 %v2819, %v656
    %v2834 = vmul.f32 %v2820, %v656
    %v2835 = vrot.slane %v2803, 1
    %v2836 = vrot.slane %v2804, 1
    %v2837 = vrot.slane %v2805, 1
    %v2838 = vrot.slane %v2806, 1
    %v2839 = vrot.slane %v2807, 1
    %v2840 = vrot.slane %v2808, 1
    %v2841 = vrot.slane %v2809, 1
    %v2842 = vrot.slane %v2810, 1
    %v2843 = vsel %vm690, %v2839, %v2841
    %v2844 = vsel %vm690, %v2840, %v2842
    %v2845 = vsel %vm690, %v2837, %v2839
    %v2846 = vsel %vm690, %v2838, %v2840
    %v2847 = vsel %vm690, %v2835, %v2837
    %v2848 = vsel %vm690, %v2836, %v2838
    %v2849 = vsel %vm690, %v2841, %v2835
    %v2850 = vsel %vm690, %v2842, %v2836
    %v2851 = vmul.f32 %v2847, %v665
    %v2852 = vmul.f32 %v2848, %v665
    %v2853 = vmul.f32 %v2845, %v666
    %v2854 = vmul.f32 %v2846, %v666
    %v2855 = vmul.f32 %v2843, %v667
    %v2856 = vmul.f32 %v2844, %v667
    %v2857 = vmul.f32 %v2849, %v668
    %v2858 = vmul.f32 %v2850, %v668
    %v2859 = vpack.c.bf16 %v2829, %v2827
    %v2860 = vpack.c.bf16 %v2830, %v2828
    %v2861 = vpack.c.bf16 %v2805, %v2803
    %v2862 = vpack.c.bf16 %v2806, %v2804
    %v2863 = vpack.c.bf16 %v2853, %v2851
    %v2864 = vpack.c.bf16 %v2854, %v2852
    %v2865 = vpack.c.bf16 %v2833, %v2831
    %v2866 = vpack.c.bf16 %v2834, %v2832
    %v2867 = vpack.c.bf16 %v2809, %v2807
    %v2868 = vpack.c.bf16 %v2810, %v2808
    %v2869 = vpack.c.bf16 %v2857, %v2855
    %v2870 = vpack.c.bf16 %v2858, %v2856
    %v2871 = vld [vmem:[#allocation33] sm:$0xff]
    %v2872 = vld [vmem:[#allocation33 + $0x8] sm:$0xff]
    %v2873 = vld [vmem:[#allocation33 + $0x10] sm:$0xff]
    %v2874 = vld [vmem:[#allocation33 + $0x18] sm:$0xff]
    %v2875 = vld [vmem:[#allocation33 + $0x20] sm:$0xff]
    %v2876 = vld [vmem:[#allocation33 + $0x28] sm:$0xff]
    %v2877 = vld [vmem:[#allocation33 + $0x30] sm:$0xff]
    %v2878 = vld [vmem:[#allocation33 + $0x38] sm:$0xff]
    %v2879 = vld [vmem:[#allocation33 + $0x40] sm:$0xff]
    %v2880 = vld [vmem:[#allocation33 + $0x48] sm:$0xff]
    %v2881 = vld [vmem:[#allocation33 + $0x50] sm:$0xff]
    %v2882 = vld [vmem:[#allocation33 + $0x58] sm:$0xff]
    %v2883 = vld [vmem:[#allocation33 + $0x60] sm:$0xff]
    %v2884 = vld [vmem:[#allocation33 + $0x68] sm:$0xff]
    %v2885 = vld [vmem:[#allocation33 + $0x70] sm:$0xff]
    %v2886 = vld [vmem:[#allocation33 + $0x78] sm:$0xff]
    %v2887 = vld [vmem:[#allocation33 + $0x80] sm:$0xff]
    %v2888 = vld [vmem:[#allocation33 + $0x88] sm:$0xff]
    %v2889 = vld [vmem:[#allocation33 + $0x90] sm:$0xff]
    %v2890 = vld [vmem:[#allocation33 + $0x98] sm:$0xff]
    %v2891 = vld [vmem:[#allocation33 + $0xa0] sm:$0xff]
    %v2892 = vld [vmem:[#allocation33 + $0xa8] sm:$0xff]
    %v2893 = vld [vmem:[#allocation33 + $0xb0] sm:$0xff]
    %v2894 = vld [vmem:[#allocation33 + $0xb8] sm:$0xff]
    %v2895 = vld [vmem:[#allocation33 + $0xc0] sm:$0xff]
    %v2896 = vld [vmem:[#allocation33 + $0xc8] sm:$0xff]
    %v2897 = vld [vmem:[#allocation33 + $0xd0] sm:$0xff]
    %v2898 = vld [vmem:[#allocation33 + $0xd8] sm:$0xff]
    %v2899 = vld [vmem:[#allocation33 + $0xe0] sm:$0xff]
    %v2900 = vld [vmem:[#allocation33 + $0xe8] sm:$0xff]
    %v2901 = vld [vmem:[#allocation33 + $0xf0] sm:$0xff]
    %v2902 = vld [vmem:[#allocation33 + $0xf8] sm:$0xff]
    %v2903 = vld [vmem:[#allocation33 + $0x100] sm:$0xff]
    %v2904 = vld [vmem:[#allocation33 + $0x108] sm:$0xff]
    %v2905 = vld [vmem:[#allocation33 + $0x110] sm:$0xff]
    %v2906 = vld [vmem:[#allocation33 + $0x118] sm:$0xff]
    %v2907 = vld [vmem:[#allocation33 + $0x120] sm:$0xff]
    %v2908 = vld [vmem:[#allocation33 + $0x128] sm:$0xff]
    %v2909 = vld [vmem:[#allocation33 + $0x130] sm:$0xff]
    %v2910 = vld [vmem:[#allocation33 + $0x138] sm:$0xff]
    %v2911 = vld [vmem:[#allocation33 + $0x140] sm:$0xff]
    %v2912 = vld [vmem:[#allocation33 + $0x148] sm:$0xff]
    %v2913 = vld [vmem:[#allocation33 + $0x150] sm:$0xff]
    %v2914 = vld [vmem:[#allocation33 + $0x158] sm:$0xff]
    %v2915 = vld [vmem:[#allocation33 + $0x160] sm:$0xff]
    %v2916 = vld [vmem:[#allocation33 + $0x168] sm:$0xff]
    %v2917 = vld [vmem:[#allocation33 + $0x170] sm:$0xff]
    %v2918 = vld [vmem:[#allocation33 + $0x178] sm:$0xff]
    %v2919 = vld [vmem:[#allocation33 + $0x180] sm:$0xff]
    %v2920 = vld [vmem:[#allocation33 + $0x188] sm:$0xff]
    %v2921 = vld [vmem:[#allocation33 + $0x190] sm:$0xff]
    %v2922 = vld [vmem:[#allocation33 + $0x198] sm:$0xff]
    %v2923 = vld [vmem:[#allocation33 + $0x1a0] sm:$0xff]
    %v2924 = vld [vmem:[#allocation33 + $0x1a8] sm:$0xff]
    %v2925 = vld [vmem:[#allocation33 + $0x1b0] sm:$0xff]
    %v2926 = vld [vmem:[#allocation33 + $0x1b8] sm:$0xff]
    %v2927 = vld [vmem:[#allocation33 + $0x1c0] sm:$0xff]
    %v2928 = vld [vmem:[#allocation33 + $0x1c8] sm:$0xff]
    %v2929 = vld [vmem:[#allocation33 + $0x1d0] sm:$0xff]
    %v2930 = vld [vmem:[#allocation33 + $0x1d8] sm:$0xff]
    %v2931 = vld [vmem:[#allocation33 + $0x1e0] sm:$0xff]
    %v2932 = vld [vmem:[#allocation33 + $0x1e8] sm:$0xff]
    %v2933 = vld [vmem:[#allocation33 + $0x1f0] sm:$0xff]
    %v2934 = vld [vmem:[#allocation33 + $0x1f8] sm:$0xff]
    %v2935 = vld [vmem:[#allocation33 + $0x200] sm:$0xff]
    %v2936 = vld [vmem:[#allocation33 + $0x208] sm:$0xff]
    %v2937 = vld [vmem:[#allocation33 + $0x210] sm:$0xff]
    %v2938 = vld [vmem:[#allocation33 + $0x218] sm:$0xff]
    %v2939 = vld [vmem:[#allocation33 + $0x220] sm:$0xff]
    %v2940 = vld [vmem:[#allocation33 + $0x228] sm:$0xff]
    %v2941 = vld [vmem:[#allocation33 + $0x230] sm:$0xff]
    %v2942 = vld [vmem:[#allocation33 + $0x238] sm:$0xff]
    %v2943 = vld [vmem:[#allocation33 + $0x240] sm:$0xff]
    %v2944 = vld [vmem:[#allocation33 + $0x248] sm:$0xff]
    %v2945 = vld [vmem:[#allocation33 + $0x250] sm:$0xff]
    %v2946 = vld [vmem:[#allocation33 + $0x258] sm:$0xff]
    %v2947 = vld [vmem:[#allocation33 + $0x260] sm:$0xff]
    %v2948 = vld [vmem:[#allocation33 + $0x268] sm:$0xff]
    %v2949 = vld [vmem:[#allocation33 + $0x270] sm:$0xff]
    %v2950 = vld [vmem:[#allocation33 + $0x278] sm:$0xff]
    %v2951 = vld [vmem:[#allocation33 + $0x280] sm:$0xff]
    %v2952 = vld [vmem:[#allocation33 + $0x288] sm:$0xff]
    %v2953 = vld [vmem:[#allocation33 + $0x290] sm:$0xff]
    %v2954 = vld [vmem:[#allocation33 + $0x298] sm:$0xff]
    %v2955 = vld [vmem:[#allocation33 + $0x2a0] sm:$0xff]
    %v2956 = vld [vmem:[#allocation33 + $0x2a8] sm:$0xff]
    %v2957 = vld [vmem:[#allocation33 + $0x2b0] sm:$0xff]
    %v2958 = vld [vmem:[#allocation33 + $0x2b8] sm:$0xff]
    %v2959 = vld [vmem:[#allocation33 + $0x2c0] sm:$0xff]
    %v2960 = vld [vmem:[#allocation33 + $0x2c8] sm:$0xff]
    %v2961 = vld [vmem:[#allocation33 + $0x2d0] sm:$0xff]
    %v2962 = vld [vmem:[#allocation33 + $0x2d8] sm:$0xff]
    %v2963 = vld [vmem:[#allocation33 + $0x2e0] sm:$0xff]
    %v2964 = vld [vmem:[#allocation33 + $0x2e8] sm:$0xff]
    %v2965 = vld [vmem:[#allocation33 + $0x2f0] sm:$0xff]
    %v2966 = vld [vmem:[#allocation33 + $0x2f8] sm:$0xff]
    %v2967 = vld [vmem:[#allocation33 + $0x300] sm:$0xff]
    %v2968 = vld [vmem:[#allocation33 + $0x308] sm:$0xff]
    %v2969 = vld [vmem:[#allocation33 + $0x310] sm:$0xff]
    %v2970 = vld [vmem:[#allocation33 + $0x318] sm:$0xff]
    %v2971 = vld [vmem:[#allocation33 + $0x320] sm:$0xff]
    %v2972 = vld [vmem:[#allocation33 + $0x328] sm:$0xff]
    %v2973 = vld [vmem:[#allocation33 + $0x330] sm:$0xff]
    %v2974 = vld [vmem:[#allocation33 + $0x338] sm:$0xff]
    %v2975 = vld [vmem:[#allocation33 + $0x340] sm:$0xff]
    %v2976 = vld [vmem:[#allocation33 + $0x348] sm:$0xff]
    %v2977 = vld [vmem:[#allocation33 + $0x350] sm:$0xff]
    %v2978 = vld [vmem:[#allocation33 + $0x358] sm:$0xff]
    %v2979 = vld [vmem:[#allocation33 + $0x360] sm:$0xff]
    %v2980 = vld [vmem:[#allocation33 + $0x368] sm:$0xff]
    %v2981 = vld [vmem:[#allocation33 + $0x370] sm:$0xff]
    %v2982 = vld [vmem:[#allocation33 + $0x378] sm:$0xff]
    %v2983 = vld [vmem:[#allocation33 + $0x380] sm:$0xff]
    %v2984 = vld [vmem:[#allocation33 + $0x388] sm:$0xff]
    %v2985 = vld [vmem:[#allocation33 + $0x390] sm:$0xff]
    %v2986 = vld [vmem:[#allocation33 + $0x398] sm:$0xff]
    %v2987 = vld [vmem:[#allocation33 + $0x3a0] sm:$0xff]
    %v2988 = vld [vmem:[#allocation33 + $0x3a8] sm:$0xff]
    %v2989 = vld [vmem:[#allocation33 + $0x3b0] sm:$0xff]
    %v2990 = vld [vmem:[#allocation33 + $0x3b8] sm:$0xff]
    %v2991 = vld [vmem:[#allocation33 + $0x3c0] sm:$0xff]
    %v2992 = vld [vmem:[#allocation33 + $0x3c8] sm:$0xff]
    %v2993 = vld [vmem:[#allocation33 + $0x3d0] sm:$0xff]
    %v2994 = vld [vmem:[#allocation33 + $0x3d8] sm:$0xff]
    %v2995 = vld [vmem:[#allocation33 + $0x3e0] sm:$0xff]
    %v2996 = vld [vmem:[#allocation33 + $0x3e8] sm:$0xff]
    %v2997 = vld [vmem:[#allocation33 + $0x3f0] sm:$0xff]
    %v2998 = vld [vmem:[#allocation33 + $0x3f8] sm:$0xff]
    %v2999 = vld [vmem:[#allocation33 + $0x400] sm:$0xff]
    %v3000 = vld [vmem:[#allocation33 + $0x408] sm:$0xff]
    %v3001 = vld [vmem:[#allocation33 + $0x410] sm:$0xff]
    %v3002 = vld [vmem:[#allocation33 + $0x418] sm:$0xff]
    %v3003 = vld [vmem:[#allocation33 + $0x420] sm:$0xff]
    %v3004 = vld [vmem:[#allocation33 + $0x428] sm:$0xff]
    %v3005 = vld [vmem:[#allocation33 + $0x430] sm:$0xff]
    %v3006 = vld [vmem:[#allocation33 + $0x438] sm:$0xff]
    %v3007 = vld [vmem:[#allocation33 + $0x440] sm:$0xff]
    %v3008 = vld [vmem:[#allocation33 + $0x448] sm:$0xff]
    %v3009 = vld [vmem:[#allocation33 + $0x450] sm:$0xff]
    %v3010 = vld [vmem:[#allocation33 + $0x458] sm:$0xff]
    %v3011 = vld [vmem:[#allocation33 + $0x460] sm:$0xff]
    %v3012 = vld [vmem:[#allocation33 + $0x468] sm:$0xff]
    %v3013 = vld [vmem:[#allocation33 + $0x470] sm:$0xff]
    %v3014 = vld [vmem:[#allocation33 + $0x478] sm:$0xff]
    %v3015 = vld [vmem:[#allocation33 + $0x480] sm:$0xff]
    %v3016 = vld [vmem:[#allocation33 + $0x488] sm:$0xff]
    %v3017 = vld [vmem:[#allocation33 + $0x490] sm:$0xff]
    %v3018 = vld [vmem:[#allocation33 + $0x498] sm:$0xff]
    %v3019 = vld [vmem:[#allocation33 + $0x4a0] sm:$0xff]
    %v3020 = vld [vmem:[#allocation33 + $0x4a8] sm:$0xff]
    %v3021 = vld [vmem:[#allocation33 + $0x4b0] sm:$0xff]
    %v3022 = vld [vmem:[#allocation33 + $0x4b8] sm:$0xff]
    %v3023 = vld [vmem:[#allocation33 + $0x4c0] sm:$0xff]
    %v3024 = vld [vmem:[#allocation33 + $0x4c8] sm:$0xff]
    %v3025 = vld [vmem:[#allocation33 + $0x4d0] sm:$0xff]
    %v3026 = vld [vmem:[#allocation33 + $0x4d8] sm:$0xff]
    %v3027 = vld [vmem:[#allocation33 + $0x4e0] sm:$0xff]
    %v3028 = vld [vmem:[#allocation33 + $0x4e8] sm:$0xff]
    %v3029 = vld [vmem:[#allocation33 + $0x4f0] sm:$0xff]
    %v3030 = vld [vmem:[#allocation33 + $0x4f8] sm:$0xff]
    %v3031 = vld [vmem:[#allocation33 + $0x500] sm:$0xff]
    %v3032 = vld [vmem:[#allocation33 + $0x508] sm:$0xff]
    %v3033 = vld [vmem:[#allocation33 + $0x510] sm:$0xff]
    %v3034 = vld [vmem:[#allocation33 + $0x518] sm:$0xff]
    %v3035 = vld [vmem:[#allocation33 + $0x520] sm:$0xff]
    %v3036 = vld [vmem:[#allocation33 + $0x528] sm:$0xff]
    %v3037 = vld [vmem:[#allocation33 + $0x530] sm:$0xff]
    %v3038 = vld [vmem:[#allocation33 + $0x538] sm:$0xff]
    %v3039 = vld [vmem:[#allocation33 + $0x540] sm:$0xff]
    %v3040 = vld [vmem:[#allocation33 + $0x548] sm:$0xff]
    %v3041 = vld [vmem:[#allocation33 + $0x550] sm:$0xff]
    %v3042 = vld [vmem:[#allocation33 + $0x558] sm:$0xff]
    %v3043 = vld [vmem:[#allocation33 + $0x560] sm:$0xff]
    %v3044 = vld [vmem:[#allocation33 + $0x568] sm:$0xff]
    %v3045 = vld [vmem:[#allocation33 + $0x570] sm:$0xff]
    %v3046 = vld [vmem:[#allocation33 + $0x578] sm:$0xff]
    %v3047 = vld [vmem:[#allocation33 + $0x580] sm:$0xff]
    %v3048 = vld [vmem:[#allocation33 + $0x588] sm:$0xff]
    %v3049 = vld [vmem:[#allocation33 + $0x590] sm:$0xff]
    %v3050 = vld [vmem:[#allocation33 + $0x598] sm:$0xff]
    %v3051 = vld [vmem:[#allocation33 + $0x5a0] sm:$0xff]
    %v3052 = vld [vmem:[#allocation33 + $0x5a8] sm:$0xff]
    %v3053 = vld [vmem:[#allocation33 + $0x5b0] sm:$0xff]
    %v3054 = vld [vmem:[#allocation33 + $0x5b8] sm:$0xff]
    %v3055 = vld [vmem:[#allocation33 + $0x5c0] sm:$0xff]
    %v3056 = vld [vmem:[#allocation33 + $0x5c8] sm:$0xff]
    %v3057 = vld [vmem:[#allocation33 + $0x5d0] sm:$0xff]
    %v3058 = vld [vmem:[#allocation33 + $0x5d8] sm:$0xff]
    %v3059 = vld [vmem:[#allocation33 + $0x5e0] sm:$0xff]
    %v3060 = vld [vmem:[#allocation33 + $0x5e8] sm:$0xff]
    %v3061 = vld [vmem:[#allocation33 + $0x5f0] sm:$0xff]
    %v3062 = vld [vmem:[#allocation33 + $0x5f8] sm:$0xff]
    %v3063 = vld [vmem:[#allocation34] sm:$0xf]
    %v3065 = vperm.slane %v3063, 0
    %v3066 = vperm.slane %v3063, 1
    %v3067 = vperm.slane %v3063, 2
    %v3068 = vperm.slane %v3063, 3
    %v3265 = vunpack.c.l.b16 %v2871
    %v3266 = vunpack.c.h.b16 %v2871
    %v3267 = vunpack.c.l.b16 %v2872
    %v3268 = vunpack.c.h.b16 %v2872
    %v3269 = vunpack.c.l.b16 %v2873
    %v3270 = vunpack.c.h.b16 %v2873
    %v3271 = vunpack.c.l.b16 %v2874
    %v3272 = vunpack.c.h.b16 %v2874
    %v3273 = vunpack.c.l.b16 %v2875
    %v3274 = vunpack.c.h.b16 %v2875
    %v3275 = vunpack.c.l.b16 %v2876
    %v3276 = vunpack.c.h.b16 %v2876
    %v3277 = vunpack.c.l.b16 %v2877
    %v3278 = vunpack.c.h.b16 %v2877
    %v3279 = vunpack.c.l.b16 %v2878
    %v3280 = vunpack.c.h.b16 %v2878
    %v3281 = vunpack.c.l.b16 %v2879
    %v3282 = vunpack.c.h.b16 %v2879
    %v3283 = vunpack.c.l.b16 %v2880
    %v3284 = vunpack.c.h.b16 %v2880
    %v3285 = vunpack.c.l.b16 %v2881
    %v3286 = vunpack.c.h.b16 %v2881
    %v3287 = vunpack.c.l.b16 %v2882
    %v3288 = vunpack.c.h.b16 %v2882
    %v3289 = vunpack.c.l.b16 %v2883
    %v3290 = vunpack.c.h.b16 %v2883
    %v3291 = vunpack.c.l.b16 %v2884
    %v3292 = vunpack.c.h.b16 %v2884
    %v3293 = vunpack.c.l.b16 %v2885
    %v3294 = vunpack.c.h.b16 %v2885
    %v3295 = vunpack.c.l.b16 %v2886
    %v3296 = vunpack.c.h.b16 %v2886
    %v3297 = vunpack.c.l.b16 %v2887
    %v3298 = vunpack.c.h.b16 %v2887
    %v3299 = vunpack.c.l.b16 %v2888
    %v3300 = vunpack.c.h.b16 %v2888
    %v3301 = vunpack.c.l.b16 %v2889
    %v3302 = vunpack.c.h.b16 %v2889
    %v3303 = vunpack.c.l.b16 %v2890
    %v3304 = vunpack.c.h.b16 %v2890
    %v3305 = vunpack.c.l.b16 %v2891
    %v3306 = vunpack.c.h.b16 %v2891
    %v3307 = vunpack.c.l.b16 %v2892
    %v3308 = vunpack.c.h.b16 %v2892
    %v3309 = vunpack.c.l.b16 %v2893
    %v3310 = vunpack.c.h.b16 %v2893
    %v3311 = vunpack.c.l.b16 %v2894
    %v3312 = vunpack.c.h.b16 %v2894
    %v3313 = vunpack.c.l.b16 %v2895
    %v3314 = vunpack.c.h.b16 %v2895
    %v3315 = vunpack.c.l.b16 %v2896
    %v3316 = vunpack.c.h.b16 %v2896
    %v3317 = vunpack.c.l.b16 %v2897
    %v3318 = vunpack.c.h.b16 %v2897
    %v3319 = vunpack.c.l.b16 %v2898
    %v3320 = vunpack.c.h.b16 %v2898
    %v3321 = vunpack.c.l.b16 %v2899
    %v3322 = vunpack.c.h.b16 %v2899
    %v3323 = vunpack.c.l.b16 %v2900
    %v3324 = vunpack.c.h.b16 %v2900
    %v3325 = vunpack.c.l.b16 %v2901
    %v3326 = vunpack.c.h.b16 %v2901
    %v3327 = vunpack.c.l.b16 %v2902
    %v3328 = vunpack.c.h.b16 %v2902
    %v3329 = vunpack.c.l.b16 %v2903
    %v3330 = vunpack.c.h.b16 %v2903
    %v3331 = vunpack.c.l.b16 %v2904
    %v3332 = vunpack.c.h.b16 %v2904
    %v3333 = vunpack.c.l.b16 %v2905
    %v3334 = vunpack.c.h.b16 %v2905
    %v3335 = vunpack.c.l.b16 %v2906
    %v3336 = vunpack.c.h.b16 %v2906
    %v3337 = vunpack.c.l.b16 %v2907
    %v3338 = vunpack.c.h.b16 %v2907
    %v3339 = vunpack.c.l.b16 %v2908
    %v3340 = vunpack.c.h.b16 %v2908
    %v3341 = vunpack.c.l.b16 %v2909
    %v3342 = vunpack.c.h.b16 %v2909
    %v3343 = vunpack.c.l.b16 %v2910
    %v3344 = vunpack.c.h.b16 %v2910
    %v3345 = vunpack.c.l.b16 %v2911
    %v3346 = vunpack.c.h.b16 %v2911
    %v3347 = vunpack.c.l.b16 %v2912
    %v3348 = vunpack.c.h.b16 %v2912
    %v3349 = vunpack.c.l.b16 %v2913
    %v3350 = vunpack.c.h.b16 %v2913
    %v3351 = vunpack.c.l.b16 %v2914
    %v3352 = vunpack.c.h.b16 %v2914
    %v3353 = vunpack.c.l.b16 %v2915
    %v3354 = vunpack.c.h.b16 %v2915
    %v3355 = vunpack.c.l.b16 %v2916
    %v3356 = vunpack.c.h.b16 %v2916
    %v3357 = vunpack.c.l.b16 %v2917
    %v3358 = vunpack.c.h.b16 %v2917
    %v3359 = vunpack.c.l.b16 %v2918
    %v3360 = vunpack.c.h.b16 %v2918
    %v3361 = vunpack.c.l.b16 %v2919
    %v3362 = vunpack.c.h.b16 %v2919
    %v3363 = vunpack.c.l.b16 %v2920
    %v3364 = vunpack.c.h.b16 %v2920
    %v3365 = vunpack.c.l.b16 %v2921
    %v3366 = vunpack.c.h.b16 %v2921
    %v3367 = vunpack.c.l.b16 %v2922
    %v3368 = vunpack.c.h.b16 %v2922
    %v3369 = vunpack.c.l.b16 %v2923
    %v3370 = vunpack.c.h.b16 %v2923
    %v3371 = vunpack.c.l.b16 %v2924
    %v3372 = vunpack.c.h.b16 %v2924
    %v3373 = vunpack.c.l.b16 %v2925
    %v3374 = vunpack.c.h.b16 %v2925
    %v3375 = vunpack.c.l.b16 %v2926
    %v3376 = vunpack.c.h.b16 %v2926
    %v3377 = vunpack.c.l.b16 %v2927
    %v3378 = vunpack.c.h.b16 %v2927
    %v3379 = vunpack.c.l.b16 %v2928
    %v3380 = vunpack.c.h.b16 %v2928
    %v3381 = vunpack.c.l.b16 %v2929
    %v3382 = vunpack.c.h.b16 %v2929
    %v3383 = vunpack.c.l.b16 %v2930
    %v3384 = vunpack.c.h.b16 %v2930
    %v3385 = vunpack.c.l.b16 %v2931
    %v3386 = vunpack.c.h.b16 %v2931
    %v3387 = vunpack.c.l.b16 %v2932
    %v3388 = vunpack.c.h.b16 %v2932
    %v3389 = vunpack.c.l.b16 %v2933
    %v3390 = vunpack.c.h.b16 %v2933
    %v3391 = vunpack.c.l.b16 %v2934
    %v3392 = vunpack.c.h.b16 %v2934
    %v3393 = vunpack.c.l.b16 %v2935
    %v3394 = vunpack.c.h.b16 %v2935
    %v3395 = vunpack.c.l.b16 %v2936
    %v3396 = vunpack.c.h.b16 %v2936
    %v3397 = vunpack.c.l.b16 %v2937
    %v3398 = vunpack.c.h.b16 %v2937
    %v3399 = vunpack.c.l.b16 %v2938
    %v3400 = vunpack.c.h.b16 %v2938
    %v3401 = vunpack.c.l.b16 %v2939
    %v3402 = vunpack.c.h.b16 %v2939
    %v3403 = vunpack.c.l.b16 %v2940
    %v3404 = vunpack.c.h.b16 %v2940
    %v3405 = vunpack.c.l.b16 %v2941
    %v3406 = vunpack.c.h.b16 %v2941
    %v3407 = vunpack.c.l.b16 %v2942
    %v3408 = vunpack.c.h.b16 %v2942
    %v3409 = vunpack.c.l.b16 %v2943
    %v3410 = vunpack.c.h.b16 %v2943
    %v3411 = vunpack.c.l.b16 %v2944
    %v3412 = vunpack.c.h.b16 %v2944
    %v3413 = vunpack.c.l.b16 %v2945
    %v3414 = vunpack.c.h.b16 %v2945
    %v3415 = vunpack.c.l.b16 %v2946
    %v3416 = vunpack.c.h.b16 %v2946
    %v3417 = vunpack.c.l.b16 %v2947
    %v3418 = vunpack.c.h.b16 %v2947
    %v3419 = vunpack.c.l.b16 %v2948
    %v3420 = vunpack.c.h.b16 %v2948
    %v3421 = vunpack.c.l.b16 %v2949
    %v3422 = vunpack.c.h.b16 %v2949
    %v3423 = vunpack.c.l.b16 %v2950
    %v3424 = vunpack.c.h.b16 %v2950
    %v3425 = vunpack.c.l.b16 %v2951
    %v3426 = vunpack.c.h.b16 %v2951
    %v3427 = vunpack.c.l.b16 %v2952
    %v3428 = vunpack.c.h.b16 %v2952
    %v3429 = vunpack.c.l.b16 %v2953
    %v3430 = vunpack.c.h.b16 %v2953
    %v3431 = vunpack.c.l.b16 %v2954
    %v3432 = vunpack.c.h.b16 %v2954
    %v3433 = vunpack.c.l.b16 %v2955
    %v3434 = vunpack.c.h.b16 %v2955
    %v3435 = vunpack.c.l.b16 %v2956
    %v3436 = vunpack.c.h.b16 %v2956
    %v3437 = vunpack.c.l.b16 %v2957
    %v3438 = vunpack.c.h.b16 %v2957
    %v3439 = vunpack.c.l.b16 %v2958
    %v3440 = vunpack.c.h.b16 %v2958
    %v3441 = vunpack.c.l.b16 %v2959
    %v3442 = vunpack.c.h.b16 %v2959
    %v3443 = vunpack.c.l.b16 %v2960
    %v3444 = vunpack.c.h.b16 %v2960
    %v3445 = vunpack.c.l.b16 %v2961
    %v3446 = vunpack.c.h.b16 %v2961
    %v3447 = vunpack.c.l.b16 %v2962
    %v3448 = vunpack.c.h.b16 %v2962
    %v3449 = vunpack.c.l.b16 %v2963
    %v3450 = vunpack.c.h.b16 %v2963
    %v3451 = vunpack.c.l.b16 %v2964
    %v3452 = vunpack.c.h.b16 %v2964
    %v3453 = vunpack.c.l.b16 %v2965
    %v3454 = vunpack.c.h.b16 %v2965
    %v3455 = vunpack.c.l.b16 %v2966
    %v3456 = vunpack.c.h.b16 %v2966
    %v3457 = vunpack.c.l.b16 %v2967
    %v3458 = vunpack.c.h.b16 %v2967
    %v3459 = vunpack.c.l.b16 %v2968
    %v3460 = vunpack.c.h.b16 %v2968
    %v3461 = vunpack.c.l.b16 %v2969
    %v3462 = vunpack.c.h.b16 %v2969
    %v3463 = vunpack.c.l.b16 %v2970
    %v3464 = vunpack.c.h.b16 %v2970
    %v3465 = vunpack.c.l.b16 %v2971
    %v3466 = vunpack.c.h.b16 %v2971
    %v3467 = vunpack.c.l.b16 %v2972
    %v3468 = vunpack.c.h.b16 %v2972
    %v3469 = vunpack.c.l.b16 %v2973
    %v3470 = vunpack.c.h.b16 %v2973
    %v3471 = vunpack.c.l.b16 %v2974
    %v3472 = vunpack.c.h.b16 %v2974
    %v3473 = vunpack.c.l.b16 %v2975
    %v3474 = vunpack.c.h.b16 %v2975
    %v3475 = vunpack.c.l.b16 %v2976
    %v3476 = vunpack.c.h.b16 %v2976
    %v3477 = vunpack.c.l.b16 %v2977
    %v3478 = vunpack.c.h.b16 %v2977
    %v3479 = vunpack.c.l.b16 %v2978
    %v3480 = vunpack.c.h.b16 %v2978
    %v3481 = vunpack.c.l.b16 %v2979
    %v3482 = vunpack.c.h.b16 %v2979
    %v3483 = vunpack.c.l.b16 %v2980
    %v3484 = vunpack.c.h.b16 %v2980
    %v3485 = vunpack.c.l.b16 %v2981
    %v3486 = vunpack.c.h.b16 %v2981
    %v3487 = vunpack.c.l.b16 %v2982
    %v3488 = vunpack.c.h.b16 %v2982
    %v3489 = vunpack.c.l.b16 %v2983
    %v3490 = vunpack.c.h.b16 %v2983
    %v3491 = vunpack.c.l.b16 %v2984
    %v3492 = vunpack.c.h.b16 %v2984
    %v3493 = vunpack.c.l.b16 %v2985
    %v3494 = vunpack.c.h.b16 %v2985
    %v3495 = vunpack.c.l.b16 %v2986
    %v3496 = vunpack.c.h.b16 %v2986
    %v3497 = vunpack.c.l.b16 %v2987
    %v3498 = vunpack.c.h.b16 %v2987
    %v3499 = vunpack.c.l.b16 %v2988
    %v3500 = vunpack.c.h.b16 %v2988
    %v3501 = vunpack.c.l.b16 %v2989
    %v3502 = vunpack.c.h.b16 %v2989
    %v3503 = vunpack.c.l.b16 %v2990
    %v3504 = vunpack.c.h.b16 %v2990
    %v3505 = vunpack.c.l.b16 %v2991
    %v3506 = vunpack.c.h.b16 %v2991
    %v3507 = vunpack.c.l.b16 %v2992
    %v3508 = vunpack.c.h.b16 %v2992
    %v3509 = vunpack.c.l.b16 %v2993
    %v3510 = vunpack.c.h.b16 %v2993
    %v3511 = vunpack.c.l.b16 %v2994
    %v3512 = vunpack.c.h.b16 %v2994
    %v3513 = vunpack.c.l.b16 %v2995
    %v3514 = vunpack.c.h.b16 %v2995
    %v3515 = vunpack.c.l.b16 %v2996
    %v3516 = vunpack.c.h.b16 %v2996
    %v3517 = vunpack.c.l.b16 %v2997
    %v3518 = vunpack.c.h.b16 %v2997
    %v3519 = vunpack.c.l.b16 %v2998
    %v3520 = vunpack.c.h.b16 %v2998
    %v3521 = vunpack.c.l.b16 %v2999
    %v3522 = vunpack.c.h.b16 %v2999
    %v3523 = vunpack.c.l.b16 %v3000
    %v3524 = vunpack.c.h.b16 %v3000
    %v3525 = vunpack.c.l.b16 %v3001
    %v3526 = vunpack.c.h.b16 %v3001
    %v3527 = vunpack.c.l.b16 %v3002
    %v3528 = vunpack.c.h.b16 %v3002
    %v3529 = vunpack.c.l.b16 %v3003
    %v3530 = vunpack.c.h.b16 %v3003
    %v3531 = vunpack.c.l.b16 %v3004
    %v3532 = vunpack.c.h.b16 %v3004
    %v3533 = vunpack.c.l.b16 %v3005
    %v3534 = vunpack.c.h.b16 %v3005
    %v3535 = vunpack.c.l.b16 %v3006
    %v3536 = vunpack.c.h.b16 %v3006
    %v3537 = vunpack.c.l.b16 %v3007
    %v3538 = vunpack.c.h.b16 %v3007
    %v3539 = vunpack.c.l.b16 %v3008
    %v3540 = vunpack.c.h.b16 %v3008
    %v3541 = vunpack.c.l.b16 %v3009
    %v3542 = vunpack.c.h.b16 %v3009
    %v3543 = vunpack.c.l.b16 %v3010
    %v3544 = vunpack.c.h.b16 %v3010
    %v3545 = vunpack.c.l.b16 %v3011
    %v3546 = vunpack.c.h.b16 %v3011
    %v3547 = vunpack.c.l.b16 %v3012
    %v3548 = vunpack.c.h.b16 %v3012
    %v3549 = vunpack.c.l.b16 %v3013
    %v3550 = vunpack.c.h.b16 %v3013
    %v3551 = vunpack.c.l.b16 %v3014
    %v3552 = vunpack.c.h.b16 %v3014
    %v3553 = vunpack.c.l.b16 %v3015
    %v3554 = vunpack.c.h.b16 %v3015
    %v3555 = vunpack.c.l.b16 %v3016
    %v3556 = vunpack.c.h.b16 %v3016
    %v3557 = vunpack.c.l.b16 %v3017
    %v3558 = vunpack.c.h.b16 %v3017
    %v3559 = vunpack.c.l.b16 %v3018
    %v3560 = vunpack.c.h.b16 %v3018
    %v3561 = vunpack.c.l.b16 %v3019
    %v3562 = vunpack.c.h.b16 %v3019
    %v3563 = vunpack.c.l.b16 %v3020
    %v3564 = vunpack.c.h.b16 %v3020
    %v3565 = vunpack.c.l.b16 %v3021
    %v3566 = vunpack.c.h.b16 %v3021
    %v3567 = vunpack.c.l.b16 %v3022
    %v3568 = vunpack.c.h.b16 %v3022
    %v3569 = vunpack.c.l.b16 %v3023
    %v3570 = vunpack.c.h.b16 %v3023
    %v3571 = vunpack.c.l.b16 %v3024
    %v3572 = vunpack.c.h.b16 %v3024
    %v3573 = vunpack.c.l.b16 %v3025
    %v3574 = vunpack.c.h.b16 %v3025
    %v3575 = vunpack.c.l.b16 %v3026
    %v3576 = vunpack.c.h.b16 %v3026
    %v3577 = vunpack.c.l.b16 %v3027
    %v3578 = vunpack.c.h.b16 %v3027
    %v3579 = vunpack.c.l.b16 %v3028
    %v3580 = vunpack.c.h.b16 %v3028
    %v3581 = vunpack.c.l.b16 %v3029
    %v3582 = vunpack.c.h.b16 %v3029
    %v3583 = vunpack.c.l.b16 %v3030
    %v3584 = vunpack.c.h.b16 %v3030
    %v3585 = vunpack.c.l.b16 %v3031
    %v3586 = vunpack.c.h.b16 %v3031
    %v3587 = vunpack.c.l.b16 %v3032
    %v3588 = vunpack.c.h.b16 %v3032
    %v3589 = vunpack.c.l.b16 %v3033
    %v3590 = vunpack.c.h.b16 %v3033
    %v3591 = vunpack.c.l.b16 %v3034
    %v3592 = vunpack.c.h.b16 %v3034
    %v3593 = vunpack.c.l.b16 %v3035
    %v3594 = vunpack.c.h.b16 %v3035
    %v3595 = vunpack.c.l.b16 %v3036
    %v3596 = vunpack.c.h.b16 %v3036
    %v3597 = vunpack.c.l.b16 %v3037
    %v3598 = vunpack.c.h.b16 %v3037
    %v3599 = vunpack.c.l.b16 %v3038
    %v3600 = vunpack.c.h.b16 %v3038
    %v3601 = vunpack.c.l.b16 %v3039
    %v3602 = vunpack.c.h.b16 %v3039
    %v3603 = vunpack.c.l.b16 %v3040
    %v3604 = vunpack.c.h.b16 %v3040
    %v3605 = vunpack.c.l.b16 %v3041
    %v3606 = vunpack.c.h.b16 %v3041
    %v3607 = vunpack.c.l.b16 %v3042
    %v3608 = vunpack.c.h.b16 %v3042
    %v3609 = vunpack.c.l.b16 %v3043
    %v3610 = vunpack.c.h.b16 %v3043
    %v3611 = vunpack.c.l.b16 %v3044
    %v3612 = vunpack.c.h.b16 %v3044
    %v3613 = vunpack.c.l.b16 %v3045
    %v3614 = vunpack.c.h.b16 %v3045
    %v3615 = vunpack.c.l.b16 %v3046
    %v3616 = vunpack.c.h.b16 %v3046
    %v3617 = vunpack.c.l.b16 %v3047
    %v3618 = vunpack.c.h.b16 %v3047
    %v3619 = vunpack.c.l.b16 %v3048
    %v3620 = vunpack.c.h.b16 %v3048
    %v3621 = vunpack.c.l.b16 %v3049
    %v3622 = vunpack.c.h.b16 %v3049
    %v3623 = vunpack.c.l.b16 %v3050
    %v3624 = vunpack.c.h.b16 %v3050
    %v3625 = vunpack.c.l.b16 %v3051
    %v3626 = vunpack.c.h.b16 %v3051
    %v3627 = vunpack.c.l.b16 %v3052
    %v3628 = vunpack.c.h.b16 %v3052
    %v3629 = vunpack.c.l.b16 %v3053
    %v3630 = vunpack.c.h.b16 %v3053
    %v3631 = vunpack.c.l.b16 %v3054
    %v3632 = vunpack.c.h.b16 %v3054
    %v3633 = vunpack.c.l.b16 %v3055
    %v3634 = vunpack.c.h.b16 %v3055
    %v3635 = vunpack.c.l.b16 %v3056
    %v3636 = vunpack.c.h.b16 %v3056
    %v3637 = vunpack.c.l.b16 %v3057
    %v3638 = vunpack.c.h.b16 %v3057
    %v3639 = vunpack.c.l.b16 %v3058
    %v3640 = vunpack.c.h.b16 %v3058
    %v3641 = vunpack.c.l.b16 %v3059
    %v3642 = vunpack.c.h.b16 %v3059
    %v3643 = vunpack.c.l.b16 %v3060
    %v3644 = vunpack.c.h.b16 %v3060
    %v3645 = vunpack.c.l.b16 %v3061
    %v3646 = vunpack.c.h.b16 %v3061
    %v3647 = vunpack.c.l.b16 %v3062
    %v3648 = vunpack.c.h.b16 %v3062
    %v3649 = vpack.c.b16 %v3269, %v3265
    %v3650 = vpack.c.b16 %v3270, %v3266
    %v3651 = vpack.c.b16 %v3271, %v3267
    %v3652 = vpack.c.b16 %v3272, %v3268
    %v3653 = vpack.c.b16 %v3277, %v3273
    %v3654 = vpack.c.b16 %v3278, %v3274
    %v3655 = vpack.c.b16 %v3279, %v3275
    %v3656 = vpack.c.b16 %v3280, %v3276
    %v3657 = vpack.c.b16 %v3285, %v3281
    %v3658 = vpack.c.b16 %v3286, %v3282
    %v3659 = vpack.c.b16 %v3287, %v3283
    %v3660 = vpack.c.b16 %v3288, %v3284
    %v3661 = vpack.c.b16 %v3293, %v3289
    %v3662 = vpack.c.b16 %v3294, %v3290
    %v3663 = vpack.c.b16 %v3295, %v3291
    %v3664 = vpack.c.b16 %v3296, %v3292
    %v3665 = vpack.c.b16 %v3301, %v3297
    %v3666 = vpack.c.b16 %v3302, %v3298
    %v3667 = vpack.c.b16 %v3303, %v3299
    %v3668 = vpack.c.b16 %v3304, %v3300
    %v3669 = vpack.c.b16 %v3309, %v3305
    %v3670 = vpack.c.b16 %v3310, %v3306
    %v3671 = vpack.c.b16 %v3311, %v3307
    %v3672 = vpack.c.b16 %v3312, %v3308
    %v3673 = vpack.c.b16 %v3317, %v3313
    %v3674 = vpack.c.b16 %v3318, %v3314
    %v3675 = vpack.c.b16 %v3319, %v3315
    %v3676 = vpack.c.b16 %v3320, %v3316
    %v3677 = vpack.c.b16 %v3325, %v3321
    %v3678 = vpack.c.b16 %v3326, %v3322
    %v3679 = vpack.c.b16 %v3327, %v3323
    %v3680 = vpack.c.b16 %v3328, %v3324
    %v3681 = vpack.c.b16 %v3333, %v3329
    %v3682 = vpack.c.b16 %v3334, %v3330
    %v3683 = vpack.c.b16 %v3335, %v3331
    %v3684 = vpack.c.b16 %v3336, %v3332
    %v3685 = vpack.c.b16 %v3341, %v3337
    %v3686 = vpack.c.b16 %v3342, %v3338
    %v3687 = vpack.c.b16 %v3343, %v3339
    %v3688 = vpack.c.b16 %v3344, %v3340
    %v3689 = vpack.c.b16 %v3349, %v3345
    %v3690 = vpack.c.b16 %v3350, %v3346
    %v3691 = vpack.c.b16 %v3351, %v3347
    %v3692 = vpack.c.b16 %v3352, %v3348
    %v3693 = vpack.c.b16 %v3357, %v3353
    %v3694 = vpack.c.b16 %v3358, %v3354
    %v3695 = vpack.c.b16 %v3359, %v3355
    %v3696 = vpack.c.b16 %v3360, %v3356
    %v3697 = vpack.c.b16 %v3365, %v3361
    %v3698 = vpack.c.b16 %v3366, %v3362
    %v3699 = vpack.c.b16 %v3367, %v3363
    %v3700 = vpack.c.b16 %v3368, %v3364
    %v3701 = vpack.c.b16 %v3373, %v3369
    %v3702 = vpack.c.b16 %v3374, %v3370
    %v3703 = vpack.c.b16 %v3375, %v3371
    %v3704 = vpack.c.b16 %v3376, %v3372
    %v3705 = vpack.c.b16 %v3381, %v3377
    %v3706 = vpack.c.b16 %v3382, %v3378
    %v3707 = vpack.c.b16 %v3383, %v3379
    %v3708 = vpack.c.b16 %v3384, %v3380
    %v3709 = vpack.c.b16 %v3389, %v3385
    %v3710 = vpack.c.b16 %v3390, %v3386
    %v3711 = vpack.c.b16 %v3391, %v3387
    %v3712 = vpack.c.b16 %v3392, %v3388
    %v3713 = vpack.c.b16 %v3397, %v3393
    %v3714 = vpack.c.b16 %v3398, %v3394
    %v3715 = vpack.c.b16 %v3399, %v3395
    %v3716 = vpack.c.b16 %v3400, %v3396
    %v3717 = vpack.c.b16 %v3405, %v3401
    %v3718 = vpack.c.b16 %v3406, %v3402
    %v3719 = vpack.c.b16 %v3407, %v3403
    %v3720 = vpack.c.b16 %v3408, %v3404
    %v3721 = vpack.c.b16 %v3413, %v3409
    %v3722 = vpack.c.b16 %v3414, %v3410
    %v3723 = vpack.c.b16 %v3415, %v3411
    %v3724 = vpack.c.b16 %v3416, %v3412
    %v3725 = vpack.c.b16 %v3421, %v3417
    %v3726 = vpack.c.b16 %v3422, %v3418
    %v3727 = vpack.c.b16 %v3423, %v3419
    %v3728 = vpack.c.b16 %v3424, %v3420
    %v3729 = vpack.c.b16 %v3429, %v3425
    %v3730 = vpack.c.b16 %v3430, %v3426
    %v3731 = vpack.c.b16 %v3431, %v3427
    %v3732 = vpack.c.b16 %v3432, %v3428
    %v3733 = vpack.c.b16 %v3437, %v3433
    %v3734 = vpack.c.b16 %v3438, %v3434
    %v3735 = vpack.c.b16 %v3439, %v3435
    %v3736 = vpack.c.b16 %v3440, %v3436
    %v3737 = vpack.c.b16 %v3445, %v3441
    %v3738 = vpack.c.b16 %v3446, %v3442
    %v3739 = vpack.c.b16 %v3447, %v3443
    %v3740 = vpack.c.b16 %v3448, %v3444
    %v3741 = vpack.c.b16 %v3453, %v3449
    %v3742 = vpack.c.b16 %v3454, %v3450
    %v3743 = vpack.c.b16 %v3455, %v3451
    %v3744 = vpack.c.b16 %v3456, %v3452
    %v3745 = vpack.c.b16 %v3461, %v3457
    %v3746 = vpack.c.b16 %v3462, %v3458
    %v3747 = vpack.c.b16 %v3463, %v3459
    %v3748 = vpack.c.b16 %v3464, %v3460
    %v3749 = vpack.c.b16 %v3469, %v3465
    %v3750 = vpack.c.b16 %v3470, %v3466
    %v3751 = vpack.c.b16 %v3471, %v3467
    %v3752 = vpack.c.b16 %v3472, %v3468
    %v3753 = vpack.c.b16 %v3477, %v3473
    %v3754 = vpack.c.b16 %v3478, %v3474
    %v3755 = vpack.c.b16 %v3479, %v3475
    %v3756 = vpack.c.b16 %v3480, %v3476
    %v3757 = vpack.c.b16 %v3485, %v3481
    %v3758 = vpack.c.b16 %v3486, %v3482
    %v3759 = vpack.c.b16 %v3487, %v3483
    %v3760 = vpack.c.b16 %v3488, %v3484
    %v3761 = vpack.c.b16 %v3493, %v3489
    %v3762 = vpack.c.b16 %v3494, %v3490
    %v3763 = vpack.c.b16 %v3495, %v3491
    %v3764 = vpack.c.b16 %v3496, %v3492
    %v3765 = vpack.c.b16 %v3501, %v3497
    %v3766 = vpack.c.b16 %v3502, %v3498
    %v3767 = vpack.c.b16 %v3503, %v3499
    %v3768 = vpack.c.b16 %v3504, %v3500
    %v3769 = vpack.c.b16 %v3509, %v3505
    %v3770 = vpack.c.b16 %v3510, %v3506
    %v3771 = vpack.c.b16 %v3511, %v3507
    %v3772 = vpack.c.b16 %v3512, %v3508
    %v3773 = vpack.c.b16 %v3517, %v3513
    %v3774 = vpack.c.b16 %v3518, %v3514
    %v3775 = vpack.c.b16 %v3519, %v3515
    %v3776 = vpack.c.b16 %v3520, %v3516
    %v3777 = vpack.c.b16 %v3525, %v3521
    %v3778 = vpack.c.b16 %v3526, %v3522
    %v3779 = vpack.c.b16 %v3527, %v3523
    %v3780 = vpack.c.b16 %v3528, %v3524
    %v3781 = vpack.c.b16 %v3533, %v3529
    %v3782 = vpack.c.b16 %v3534, %v3530
    %v3783 = vpack.c.b16 %v3535, %v3531
    %v3784 = vpack.c.b16 %v3536, %v3532
    %v3785 = vpack.c.b16 %v3541, %v3537
    %v3786 = vpack.c.b16 %v3542, %v3538
    %v3787 = vpack.c.b16 %v3543, %v3539
    %v3788 = vpack.c.b16 %v3544, %v3540
    %v3789 = vpack.c.b16 %v3549, %v3545
    %v3790 = vpack.c.b16 %v3550, %v3546
    %v3791 = vpack.c.b16 %v3551, %v3547
    %v3792 = vpack.c.b16 %v3552, %v3548
    %v3793 = vpack.c.b16 %v3557, %v3553
    %v3794 = vpack.c.b16 %v3558, %v3554
    %v3795 = vpack.c.b16 %v3559, %v3555
    %v3796 = vpack.c.b16 %v3560, %v3556
    %v3797 = vpack.c.b16 %v3565, %v3561
    %v3798 = vpack.c.b16 %v3566, %v3562
    %v3799 = vpack.c.b16 %v3567, %v3563
    %v3800 = vpack.c.b16 %v3568, %v3564
    %v3801 = vpack.c.b16 %v3573, %v3569
    %v3802 = vpack.c.b16 %v3574, %v3570
    %v3803 = vpack.c.b16 %v3575, %v3571
    %v3804 = vpack.c.b16 %v3576, %v3572
    %v3805 = vpack.c.b16 %v3581, %v3577
    %v3806 = vpack.c.b16 %v3582, %v3578
    %v3807 = vpack.c.b16 %v3583, %v3579
    %v3808 = vpack.c.b16 %v3584, %v3580
    %v3809 = vpack.c.b16 %v3589, %v3585
    %v3810 = vpack.c.b16 %v3590, %v3586
    %v3811 = vpack.c.b16 %v3591, %v3587
    %v3812 = vpack.c.b16 %v3592, %v3588
    %v3813 = vpack.c.b16 %v3597, %v3593
    %v3814 = vpack.c.b16 %v3598, %v3594
    %v3815 = vpack.c.b16 %v3599, %v3595
    %v3816 = vpack.c.b16 %v3600, %v3596
    %v3817 = vpack.c.b16 %v3605, %v3601
    %v3818 = vpack.c.b16 %v3606, %v3602
    %v3819 = vpack.c.b16 %v3607, %v3603
    %v3820 = vpack.c.b16 %v3608, %v3604
    %v3821 = vpack.c.b16 %v3613, %v3609
    %v3822 = vpack.c.b16 %v3614, %v3610
    %v3823 = vpack.c.b16 %v3615, %v3611
    %v3824 = vpack.c.b16 %v3616, %v3612
    %v3825 = vpack.c.b16 %v3621, %v3617
    %v3826 = vpack.c.b16 %v3622, %v3618
    %v3827 = vpack.c.b16 %v3623, %v3619
    %v3828 = vpack.c.b16 %v3624, %v3620
    %v3829 = vpack.c.b16 %v3629, %v3625
    %v3830 = vpack.c.b16 %v3630, %v3626
    %v3831 = vpack.c.b16 %v3631, %v3627
    %v3832 = vpack.c.b16 %v3632, %v3628
    %v3833 = vpack.c.b16 %v3637, %v3633
    %v3834 = vpack.c.b16 %v3638, %v3634
    %v3835 = vpack.c.b16 %v3639, %v3635
    %v3836 = vpack.c.b16 %v3640, %v3636
    %v3837 = vpack.c.b16 %v3645, %v3641
    %v3838 = vpack.c.b16 %v3646, %v3642
    %v3839 = vpack.c.b16 %v3647, %v3643
    %v3840 = vpack.c.b16 %v3648, %v3644
    %4033 = vmatpush.bf16.msra.mxu0 %v3677
    %4034 = vmatpush.bf16.msra.mxu0 %v3673
    %4035 = vmatpush.bf16.msra.mxu0 %v3669
    %4036 = vmatpush.bf16.msra.mxu0 %v3665
    %4037 = vmatpush.bf16.msra.mxu0 %v3661
    %4038 = vmatpush.bf16.msra.mxu0 %v3657
    %4039 = vmatpush.bf16.msra.mxu0 %v3653
    %4040 = vmatpush.bf16.msra.mxu0 %v3649
    %4041 = vmatmul.bf16.gmra.mxu0 %v2859
    %v4042 = vpop.f32.mrf.mxu0
    %v4043 = vadd.f32 %v3065, %v4042
    %v4044 = vpop.f32.mrf.mxu0
    %v4045 = vadd.f32 %v3065, %v4044
    %4046 = vmatmul.bf16.gmra.mxu0 %v2865
    %v4047 = vpop.f32.mrf.mxu0
    %v4048 = vadd.f32 %v3065, %v4047
    %v4049 = vpop.f32.mrf.mxu0
    %v4050 = vadd.f32 %v3065, %v4049
    %4051 = vdwg.mxu0
    %4052 = vmatpush.bf16.msra.mxu0 %v3709
    %4053 = vmatpush.bf16.msra.mxu0 %v3705
    %4054 = vmatpush.bf16.msra.mxu0 %v3701
    %4055 = vmatpush.bf16.msra.mxu0 %v3697
    %4056 = vmatpush.bf16.msra.mxu0 %v3693
    %4057 = vmatpush.bf16.msra.mxu0 %v3689
    %4058 = vmatpush.bf16.msra.mxu0 %v3685
    %4059 = vmatpush.bf16.msra.mxu0 %v3681
    %4060 = vmatmul.bf16.gmra.mxu0 %v2860
    %v4061 = vpop.f32.mrf.mxu0
    %v4062 = vadd.f32 %v4043, %v4061
    %v4063 = vpop.f32.mrf.mxu0
    %v4064 = vadd.f32 %v4045, %v4063
    %4065 = vmatmul.bf16.gmra.mxu0 %v2866
    %v4066 = vpop.f32.mrf.mxu0
    %v4067 = vadd.f32 %v4048, %v4066
    %v4068 = vpop.f32.mrf.mxu0
    %v4069 = vadd.f32 %v4050, %v4068
    %4070 = vdwg.mxu0
    %4071 = vmatpush.bf16.msra.mxu0 %v3741
    %4072 = vmatpush.bf16.msra.mxu0 %v3737
    %4073 = vmatpush.bf16.msra.mxu0 %v3733
    %4074 = vmatpush.bf16.msra.mxu0 %v3729
    %4075 = vmatpush.bf16.msra.mxu0 %v3725
    %4076 = vmatpush.bf16.msra.mxu0 %v3721
    %4077 = vmatpush.bf16.msra.mxu0 %v3717
    %4078 = vmatpush.bf16.msra.mxu0 %v3713
    %4079 = vmatmul.bf16.gmra.mxu0 %v2861
    %v4080 = vpop.f32.mrf.mxu0
    %v4081 = vadd.f32 %v4062, %v4080
    %v4082 = vpop.f32.mrf.mxu0
    %v4083 = vadd.f32 %v4064, %v4082
    %4084 = vmatmul.bf16.gmra.mxu0 %v2867
    %v4085 = vpop.f32.mrf.mxu0
    %v4086 = vadd.f32 %v4067, %v4085
    %v4087 = vpop.f32.mrf.mxu0
    %v4088 = vadd.f32 %v4069, %v4087
    %4089 = vdwg.mxu0
    %4090 = vmatpush.bf16.msra.mxu0 %v3773
    %4091 = vmatpush.bf16.msra.mxu0 %v3769
    %4092 = vmatpush.bf16.msra.mxu0 %v3765
    %4093 = vmatpush.bf16.msra.mxu0 %v3761
    %4094 = vmatpush.bf16.msra.mxu0 %v3757
    %4095 = vmatpush.bf16.msra.mxu0 %v3753
    %4096 = vmatpush.bf16.msra.mxu0 %v3749
    %4097 = vmatpush.bf16.msra.mxu0 %v3745
    %4098 = vmatmul.bf16.gmra.mxu0 %v2862
    %v4099 = vpop.f32.mrf.mxu0
    %v4100 = vadd.f32 %v4081, %v4099
    %v4101 = vpop.f32.mrf.mxu0
    %v4102 = vadd.f32 %v4083, %v4101
    %4103 = vmatmul.bf16.gmra.mxu0 %v2868
    %v4104 = vpop.f32.mrf.mxu0
    %v4105 = vadd.f32 %v4086, %v4104
    %v4106 = vpop.f32.mrf.mxu0
    %v4107 = vadd.f32 %v4088, %v4106
    %4108 = vdwg.mxu0
    %4109 = vmatpush.bf16.msra.mxu0 %v3805
    %4110 = vmatpush.bf16.msra.mxu0 %v3801
    %4111 = vmatpush.bf16.msra.mxu0 %v3797
    %4112 = vmatpush.bf16.msra.mxu0 %v3793
    %4113 = vmatpush.bf16.msra.mxu0 %v3789
    %4114 = vmatpush.bf16.msra.mxu0 %v3785
    %4115 = vmatpush.bf16.msra.mxu0 %v3781
    %4116 = vmatpush.bf16.msra.mxu0 %v3777
    %4117 = vmatmul.bf16.gmra.mxu0 %v2863
    %v4118 = vpop.f32.mrf.mxu0
    %v4119 = vadd.f32 %v4100, %v4118
    %v4120 = vpop.f32.mrf.mxu0
    %v4121 = vadd.f32 %v4102, %v4120
    %4122 = vmatmul.bf16.gmra.mxu0 %v2869
    %v4123 = vpop.f32.mrf.mxu0
    %v4124 = vadd.f32 %v4105, %v4123
    %v4125 = vpop.f32.mrf.mxu0
    %v4126 = vadd.f32 %v4107, %v4125
    %4127 = vdwg.mxu0
    %4128 = vmatpush.bf16.msra.mxu0 %v3837
    %4129 = vmatpush.bf16.msra.mxu0 %v3833
    %4130 = vmatpush.bf16.msra.mxu0 %v3829
    %4131 = vmatpush.bf16.msra.mxu0 %v3825
    %4132 = vmatpush.bf16.msra.mxu0 %v3821
    %4133 = vmatpush.bf16.msra.mxu0 %v3817
    %4134 = vmatpush.bf16.msra.mxu0 %v3813
    %4135 = vmatpush.bf16.msra.mxu0 %v3809
    %4136 = vmatmul.bf16.gmra.mxu0 %v2864
    %v4137 = vpop.f32.mrf.mxu0
    %v4138 = vadd.f32 %v4119, %v4137
    %v4139 = vpop.f32.mrf.mxu0
    %v4140 = vadd.f32 %v4121, %v4139
    %4141 = vmatmul.bf16.gmra.mxu0 %v2870
    %v4142 = vpop.f32.mrf.mxu0
    %v4143 = vadd.f32 %v4124, %v4142
    %v4144 = vpop.f32.mrf.mxu0
    %v4145 = vadd.f32 %v4126, %v4144
    %4146 = vdwg.mxu0
    %4147 = vmatpush.bf16.msra.mxu0 %v3678
    %4148 = vmatpush.bf16.msra.mxu0 %v3674
    %4149 = vmatpush.bf16.msra.mxu0 %v3670
    %4150 = vmatpush.bf16.msra.mxu0 %v3666
    %4151 = vmatpush.bf16.msra.mxu0 %v3662
    %4152 = vmatpush.bf16.msra.mxu0 %v3658
    %4153 = vmatpush.bf16.msra.mxu0 %v3654
    %4154 = vmatpush.bf16.msra.mxu0 %v3650
    %4155 = vmatmul.bf16.gmra.mxu0 %v2859
    %v4156 = vpop.f32.mrf.mxu0
    %v4157 = vadd.f32 %v3066, %v4156
    %v4158 = vpop.f32.mrf.mxu0
    %v4159 = vadd.f32 %v3066, %v4158
    %4160 = vmatmul.bf16.gmra.mxu0 %v2865
    %v4161 = vpop.f32.mrf.mxu0
    %v4162 = vadd.f32 %v3066, %v4161
    %v4163 = vpop.f32.mrf.mxu0
    %v4164 = vadd.f32 %v3066, %v4163
    %4165 = vdwg.mxu0
    %4166 = vmatpush.bf16.msra.mxu0 %v3710
    %4167 = vmatpush.bf16.msra.mxu0 %v3706
    %4168 = vmatpush.bf16.msra.mxu0 %v3702
    %4169 = vmatpush.bf16.msra.mxu0 %v3698
    %4170 = vmatpush.bf16.msra.mxu0 %v3694
    %4171 = vmatpush.bf16.msra.mxu0 %v3690
    %4172 = vmatpush.bf16.msra.mxu0 %v3686
    %4173 = vmatpush.bf16.msra.mxu0 %v3682
    %4174 = vmatmul.bf16.gmra.mxu0 %v2860
    %v4175 = vpop.f32.mrf.mxu0
    %v4176 = vadd.f32 %v4157, %v4175
    %v4177 = vpop.f32.mrf.mxu0
    %v4178 = vadd.f32 %v4159, %v4177
    %4179 = vmatmul.bf16.gmra.mxu0 %v2866
    %v4180 = vpop.f32.mrf.mxu0
    %v4181 = vadd.f32 %v4162, %v4180
    %v4182 = vpop.f32.mrf.mxu0
    %v4183 = vadd.f32 %v4164, %v4182
    %4184 = vdwg.mxu0
    %4185 = vmatpush.bf16.msra.mxu0 %v3742
    %4186 = vmatpush.bf16.msra.mxu0 %v3738
    %4187 = vmatpush.bf16.msra.mxu0 %v3734
    %4188 = vmatpush.bf16.msra.mxu0 %v3730
    %4189 = vmatpush.bf16.msra.mxu0 %v3726
    %4190 = vmatpush.bf16.msra.mxu0 %v3722
    %4191 = vmatpush.bf16.msra.mxu0 %v3718
    %4192 = vmatpush.bf16.msra.mxu0 %v3714
    %4193 = vmatmul.bf16.gmra.mxu0 %v2861
    %v4194 = vpop.f32.mrf.mxu0
    %v4195 = vadd.f32 %v4176, %v4194
    %v4196 = vpop.f32.mrf.mxu0
    %v4197 = vadd.f32 %v4178, %v4196
    %4198 = vmatmul.bf16.gmra.mxu0 %v2867
    %v4199 = vpop.f32.mrf.mxu0
    %v4200 = vadd.f32 %v4181, %v4199
    %v4201 = vpop.f32.mrf.mxu0
    %v4202 = vadd.f32 %v4183, %v4201
    %4203 = vdwg.mxu0
    %4204 = vmatpush.bf16.msra.mxu0 %v3774
    %4205 = vmatpush.bf16.msra.mxu0 %v3770
    %4206 = vmatpush.bf16.msra.mxu0 %v3766
    %4207 = vmatpush.bf16.msra.mxu0 %v3762
    %4208 = vmatpush.bf16.msra.mxu0 %v3758
    %4209 = vmatpush.bf16.msra.mxu0 %v3754
    %4210 = vmatpush.bf16.msra.mxu0 %v3750
    %4211 = vmatpush.bf16.msra.mxu0 %v3746
    %4212 = vmatmul.bf16.gmra.mxu0 %v2862
    %v4213 = vpop.f32.mrf.mxu0
    %v4214 = vadd.f32 %v4195, %v4213
    %v4215 = vpop.f32.mrf.mxu0
    %v4216 = vadd.f32 %v4197, %v4215
    %4217 = vmatmul.bf16.gmra.mxu0 %v2868
    %v4218 = vpop.f32.mrf.mxu0
    %v4219 = vadd.f32 %v4200, %v4218
    %v4220 = vpop.f32.mrf.mxu0
    %v4221 = vadd.f32 %v4202, %v4220
    %4222 = vdwg.mxu0
    %4223 = vmatpush.bf16.msra.mxu0 %v3806
    %4224 = vmatpush.bf16.msra.mxu0 %v3802
    %4225 = vmatpush.bf16.msra.mxu0 %v3798
    %4226 = vmatpush.bf16.msra.mxu0 %v3794
    %4227 = vmatpush.bf16.msra.mxu0 %v3790
    %4228 = vmatpush.bf16.msra.mxu0 %v3786
    %4229 = vmatpush.bf16.msra.mxu0 %v3782
    %4230 = vmatpush.bf16.msra.mxu0 %v3778
    %4231 = vmatmul.bf16.gmra.mxu0 %v2863
    %v4232 = vpop.f32.mrf.mxu0
    %v4233 = vadd.f32 %v4214, %v4232
    %v4234 = vpop.f32.mrf.mxu0
    %v4235 = vadd.f32 %v4216, %v4234
    %4236 = vmatmul.bf16.gmra.mxu0 %v2869
    %v4237 = vpop.f32.mrf.mxu0
    %v4238 = vadd.f32 %v4219, %v4237
    %v4239 = vpop.f32.mrf.mxu0
    %v4240 = vadd.f32 %v4221, %v4239
    %4241 = vdwg.mxu0
    %4242 = vmatpush.bf16.msra.mxu0 %v3838
    %4243 = vmatpush.bf16.msra.mxu0 %v3834
    %4244 = vmatpush.bf16.msra.mxu0 %v3830
    %4245 = vmatpush.bf16.msra.mxu0 %v3826
    %4246 = vmatpush.bf16.msra.mxu0 %v3822
    %4247 = vmatpush.bf16.msra.mxu0 %v3818
    %4248 = vmatpush.bf16.msra.mxu0 %v3814
    %4249 = vmatpush.bf16.msra.mxu0 %v3810
    %4250 = vmatmul.bf16.gmra.mxu0 %v2864
    %v4251 = vpop.f32.mrf.mxu0
    %v4252 = vadd.f32 %v4233, %v4251
    %v4253 = vpop.f32.mrf.mxu0
    %v4254 = vadd.f32 %v4235, %v4253
    %4255 = vmatmul.bf16.gmra.mxu0 %v2870
    %v4256 = vpop.f32.mrf.mxu0
    %v4257 = vadd.f32 %v4238, %v4256
    %v4258 = vpop.f32.mrf.mxu0
    %v4259 = vadd.f32 %v4240, %v4258
    %4260 = vdwg.mxu0
    %4261 = vmatpush.bf16.msra.mxu0 %v3679
    %4262 = vmatpush.bf16.msra.mxu0 %v3675
    %4263 = vmatpush.bf16.msra.mxu0 %v3671
    %4264 = vmatpush.bf16.msra.mxu0 %v3667
    %4265 = vmatpush.bf16.msra.mxu0 %v3663
    %4266 = vmatpush.bf16.msra.mxu0 %v3659
    %4267 = vmatpush.bf16.msra.mxu0 %v3655
    %4268 = vmatpush.bf16.msra.mxu0 %v3651
    %4269 = vmatmul.bf16.gmra.mxu0 %v2859
    %v4270 = vpop.f32.mrf.mxu0
    %v4271 = vadd.f32 %v3067, %v4270
    %v4272 = vpop.f32.mrf.mxu0
    %v4273 = vadd.f32 %v3067, %v4272
    %4274 = vmatmul.bf16.gmra.mxu0 %v2865
    %v4275 = vpop.f32.mrf.mxu0
    %v4276 = vadd.f32 %v3067, %v4275
    %v4277 = vpop.f32.mrf.mxu0
    %v4278 = vadd.f32 %v3067, %v4277
    %4279 = vdwg.mxu0
    %4280 = vmatpush.bf16.msra.mxu0 %v3711
    %4281 = vmatpush.bf16.msra.mxu0 %v3707
    %4282 = vmatpush.bf16.msra.mxu0 %v3703
    %4283 = vmatpush.bf16.msra.mxu0 %v3699
    %4284 = vmatpush.bf16.msra.mxu0 %v3695
    %4285 = vmatpush.bf16.msra.mxu0 %v3691
    %4286 = vmatpush.bf16.msra.mxu0 %v3687
    %4287 = vmatpush.bf16.msra.mxu0 %v3683
    %4288 = vmatmul.bf16.gmra.mxu0 %v2860
    %v4289 = vpop.f32.mrf.mxu0
    %v4290 = vadd.f32 %v4271, %v4289
    %v4291 = vpop.f32.mrf.mxu0
    %v4292 = vadd.f32 %v4273, %v4291
    %4293 = vmatmul.bf16.gmra.mxu0 %v2866
    %v4294 = vpop.f32.mrf.mxu0
    %v4295 = vadd.f32 %v4276, %v4294
    %v4296 = vpop.f32.mrf.mxu0
    %v4297 = vadd.f32 %v4278, %v4296
    %4298 = vdwg.mxu0
    %4299 = vmatpush.bf16.msra.mxu0 %v3743
    %4300 = vmatpush.bf16.msra.mxu0 %v3739
    %4301 = vmatpush.bf16.msra.mxu0 %v3735
    %4302 = vmatpush.bf16.msra.mxu0 %v3731
    %4303 = vmatpush.bf16.msra.mxu0 %v3727
    %4304 = vmatpush.bf16.msra.mxu0 %v3723
    %4305 = vmatpush.bf16.msra.mxu0 %v3719
    %4306 = vmatpush.bf16.msra.mxu0 %v3715
    %4307 = vmatmul.bf16.gmra.mxu0 %v2861
    %v4308 = vpop.f32.mrf.mxu0
    %v4309 = vadd.f32 %v4290, %v4308
    %v4310 = vpop.f32.mrf.mxu0
    %v4311 = vadd.f32 %v4292, %v4310
    %4312 = vmatmul.bf16.gmra.mxu0 %v2867
    %v4313 = vpop.f32.mrf.mxu0
    %v4314 = vadd.f32 %v4295, %v4313
    %v4315 = vpop.f32.mrf.mxu0
    %v4316 = vadd.f32 %v4297, %v4315
    %4317 = vdwg.mxu0
    %4318 = vmatpush.bf16.msra.mxu0 %v3775
    %4319 = vmatpush.bf16.msra.mxu0 %v3771
    %4320 = vmatpush.bf16.msra.mxu0 %v3767
    %4321 = vmatpush.bf16.msra.mxu0 %v3763
    %4322 = vmatpush.bf16.msra.mxu0 %v3759
    %4323 = vmatpush.bf16.msra.mxu0 %v3755
    %4324 = vmatpush.bf16.msra.mxu0 %v3751
    %4325 = vmatpush.bf16.msra.mxu0 %v3747
    %4326 = vmatmul.bf16.gmra.mxu0 %v2862
    %v4327 = vpop.f32.mrf.mxu0
    %v4328 = vadd.f32 %v4309, %v4327
    %v4329 = vpop.f32.mrf.mxu0
    %v4330 = vadd.f32 %v4311, %v4329
    %4331 = vmatmul.bf16.gmra.mxu0 %v2868
    %v4332 = vpop.f32.mrf.mxu0
    %v4333 = vadd.f32 %v4314, %v4332
    %v4334 = vpop.f32.mrf.mxu0
    %v4335 = vadd.f32 %v4316, %v4334
    %4336 = vdwg.mxu0
    %4337 = vmatpush.bf16.msra.mxu0 %v3807
    %4338 = vmatpush.bf16.msra.mxu0 %v3803
    %4339 = vmatpush.bf16.msra.mxu0 %v3799
    %4340 = vmatpush.bf16.msra.mxu0 %v3795
    %4341 = vmatpush.bf16.msra.mxu0 %v3791
    %4342 = vmatpush.bf16.msra.mxu0 %v3787
    %4343 = vmatpush.bf16.msra.mxu0 %v3783
    %4344 = vmatpush.bf16.msra.mxu0 %v3779
    %4345 = vmatmul.bf16.gmra.mxu0 %v2863
    %v4346 = vpop.f32.mrf.mxu0
    %v4347 = vadd.f32 %v4328, %v4346
    %v4348 = vpop.f32.mrf.mxu0
    %v4349 = vadd.f32 %v4330, %v4348
    %4350 = vmatmul.bf16.gmra.mxu0 %v2869
    %v4351 = vpop.f32.mrf.mxu0
    %v4352 = vadd.f32 %v4333, %v4351
    %v4353 = vpop.f32.mrf.mxu0
    %v4354 = vadd.f32 %v4335, %v4353
    %4355 = vdwg.mxu0
    %4356 = vmatpush.bf16.msra.mxu0 %v3839
    %4357 = vmatpush.bf16.msra.mxu0 %v3835
    %4358 = vmatpush.bf16.msra.mxu0 %v3831
    %4359 = vmatpush.bf16.msra.mxu0 %v3827
    %4360 = vmatpush.bf16.msra.mxu0 %v3823
    %4361 = vmatpush.bf16.msra.mxu0 %v3819
    %4362 = vmatpush.bf16.msra.mxu0 %v3815
    %4363 = vmatpush.bf16.msra.mxu0 %v3811
    %4364 = vmatmul.bf16.gmra.mxu0 %v2864
    %v4365 = vpop.f32.mrf.mxu0
    %v4366 = vadd.f32 %v4347, %v4365
    %v4367 = vpop.f32.mrf.mxu0
    %v4368 = vadd.f32 %v4349, %v4367
    %4369 = vmatmul.bf16.gmra.mxu0 %v2870
    %v4370 = vpop.f32.mrf.mxu0
    %v4371 = vadd.f32 %v4352, %v4370
    %v4372 = vpop.f32.mrf.mxu0
    %v4373 = vadd.f32 %v4354, %v4372
    %4374 = vdwg.mxu0
    %4375 = vmatpush.bf16.msra.mxu0 %v3680
    %4376 = vmatpush.bf16.msra.mxu0 %v3676
    %4377 = vmatpush.bf16.msra.mxu0 %v3672
    %4378 = vmatpush.bf16.msra.mxu0 %v3668
    %4379 = vmatpush.bf16.msra.mxu0 %v3664
    %4380 = vmatpush.bf16.msra.mxu0 %v3660
    %4381 = vmatpush.bf16.msra.mxu0 %v3656
    %4382 = vmatpush.bf16.msra.mxu0 %v3652
    %4383 = vmatmul.bf16.gmra.mxu0 %v2859
    %v4384 = vpop.f32.mrf.mxu0
    %v4385 = vadd.f32 %v3068, %v4384
    %v4386 = vpop.f32.mrf.mxu0
    %v4387 = vadd.f32 %v3068, %v4386
    %4388 = vmatmul.bf16.gmra.mxu0 %v2865
    %v4389 = vpop.f32.mrf.mxu0
    %v4390 = vadd.f32 %v3068, %v4389
    %v4391 = vpop.f32.mrf.mxu0
    %v4392 = vadd.f32 %v3068, %v4391
    %4393 = vdwg.mxu0
    %4394 = vmatpush.bf16.msra.mxu0 %v3712
    %4395 = vmatpush.bf16.msra.mxu0 %v3708
    %4396 = vmatpush.bf16.msra.mxu0 %v3704
    %4397 = vmatpush.bf16.msra.mxu0 %v3700
    %4398 = vmatpush.bf16.msra.mxu0 %v3696
    %4399 = vmatpush.bf16.msra.mxu0 %v3692
    %4400 = vmatpush.bf16.msra.mxu0 %v3688
    %4401 = vmatpush.bf16.msra.mxu0 %v3684
    %4402 = vmatmul.bf16.gmra.mxu0 %v2860
    %v4403 = vpop.f32.mrf.mxu0
    %v4404 = vadd.f32 %v4385, %v4403
    %v4405 = vpop.f32.mrf.mxu0
    %v4406 = vadd.f32 %v4387, %v4405
    %4407 = vmatmul.bf16.gmra.mxu0 %v2866
    %v4408 = vpop.f32.mrf.mxu0
    %v4409 = vadd.f32 %v4390, %v4408
    %v4410 = vpop.f32.mrf.mxu0
    %v4411 = vadd.f32 %v4392, %v4410
    %4412 = vdwg.mxu0
    %4413 = vmatpush.bf16.msra.mxu0 %v3744
    %4414 = vmatpush.bf16.msra.mxu0 %v3740
    %4415 = vmatpush.bf16.msra.mxu0 %v3736
    %4416 = vmatpush.bf16.msra.mxu0 %v3732
    %4417 = vmatpush.bf16.msra.mxu0 %v3728
    %4418 = vmatpush.bf16.msra.mxu0 %v3724
    %4419 = vmatpush.bf16.msra.mxu0 %v3720
    %4420 = vmatpush.bf16.msra.mxu0 %v3716
    %4421 = vmatmul.bf16.gmra.mxu0 %v2861
    %v4422 = vpop.f32.mrf.mxu0
    %v4423 = vadd.f32 %v4404, %v4422
    %v4424 = vpop.f32.mrf.mxu0
    %v4425 = vadd.f32 %v4406, %v4424
    %4426 = vmatmul.bf16.gmra.mxu0 %v2867
    %v4427 = vpop.f32.mrf.mxu0
    %v4428 = vadd.f32 %v4409, %v4427
    %v4429 = vpop.f32.mrf.mxu0
    %v4430 = vadd.f32 %v4411, %v4429
    %4431 = vdwg.mxu0
    %4432 = vmatpush.bf16.msra.mxu0 %v3776
    %4433 = vmatpush.bf16.msra.mxu0 %v3772
    %4434 = vmatpush.bf16.msra.mxu0 %v3768
    %4435 = vmatpush.bf16.msra.mxu0 %v3764
    %4436 = vmatpush.bf16.msra.mxu0 %v3760
    %4437 = vmatpush.bf16.msra.mxu0 %v3756
    %4438 = vmatpush.bf16.msra.mxu0 %v3752
    %4439 = vmatpush.bf16.msra.mxu0 %v3748
    %4440 = vmatmul.bf16.gmra.mxu0 %v2862
    %v4441 = vpop.f32.mrf.mxu0
    %v4442 = vadd.f32 %v4423, %v4441
    %v4443 = vpop.f32.mrf.mxu0
    %v4444 = vadd.f32 %v4425, %v4443
    %4445 = vmatmul.bf16.gmra.mxu0 %v2868
    %v4446 = vpop.f32.mrf.mxu0
    %v4447 = vadd.f32 %v4428, %v4446
    %v4448 = vpop.f32.mrf.mxu0
    %v4449 = vadd.f32 %v4430, %v4448
    %4450 = vdwg.mxu0
    %4451 = vmatpush.bf16.msra.mxu0 %v3808
    %4452 = vmatpush.bf16.msra.mxu0 %v3804
    %4453 = vmatpush.bf16.msra.mxu0 %v3800
    %4454 = vmatpush.bf16.msra.mxu0 %v3796
    %4455 = vmatpush.bf16.msra.mxu0 %v3792
    %4456 = vmatpush.bf16.msra.mxu0 %v3788
    %4457 = vmatpush.bf16.msra.mxu0 %v3784
    %4458 = vmatpush.bf16.msra.mxu0 %v3780
    %4459 = vmatmul.bf16.gmra.mxu0 %v2863
    %v4460 = vpop.f32.mrf.mxu0
    %v4461 = vadd.f32 %v4442, %v4460
    %v4462 = vpop.f32.mrf.mxu0
    %v4463 = vadd.f32 %v4444, %v4462
    %4464 = vmatmul.bf16.gmra.mxu0 %v2869
    %v4465 = vpop.f32.mrf.mxu0
    %v4466 = vadd.f32 %v4447, %v4465
    %v4467 = vpop.f32.mrf.mxu0
    %v4468 = vadd.f32 %v4449, %v4467
    %4469 = vdwg.mxu0
    %4470 = vmatpush.bf16.msra.mxu0 %v3840
    %4471 = vmatpush.bf16.msra.mxu0 %v3836
    %4472 = vmatpush.bf16.msra.mxu0 %v3832
    %4473 = vmatpush.bf16.msra.mxu0 %v3828
    %4474 = vmatpush.bf16.msra.mxu0 %v3824
    %4475 = vmatpush.bf16.msra.mxu0 %v3820
    %4476 = vmatpush.bf16.msra.mxu0 %v3816
    %4477 = vmatpush.bf16.msra.mxu0 %v3812
    %4478 = vmatmul.bf16.gmra.mxu0 %v2864
    %v4479 = vpop.f32.mrf.mxu0
    %v4480 = vadd.f32 %v4461, %v4479
    %v4481 = vpop.f32.mrf.mxu0
    %v4482 = vadd.f32 %v4463, %v4481
    %4483 = vmatmul.bf16.gmra.mxu0 %v2870
    %v4484 = vpop.f32.mrf.mxu0
    %v4485 = vadd.f32 %v4466, %v4484
    %v4486 = vpop.f32.mrf.mxu0
    %v4487 = vadd.f32 %v4468, %v4486
    %4488 = vdwg.mxu0
    %v4489 = vmax.f32 %v4138, 0.0
    %v4490 = vmax.f32 %v4252, 0.0
    %v4491 = vmax.f32 %v4366, 0.0
    %v4492 = vmax.f32 %v4480, 0.0
    %v4493 = vmax.f32 %v4140, 0.0
    %v4494 = vmax.f32 %v4254, 0.0
    %v4495 = vmax.f32 %v4368, 0.0
    %v4496 = vmax.f32 %v4482, 0.0
    %v4497 = vmax.f32 %v4143, 0.0
    %v4498 = vmax.f32 %v4257, 0.0
    %v4499 = vmax.f32 %v4371, 0.0
    %v4500 = vmax.f32 %v4485, 0.0
    %v4501 = vmax.f32 %v4145, 0.0
    %v4502 = vmax.f32 %v4259, 0.0
    %v4503 = vmax.f32 %v4373, 0.0
    %v4504 = vmax.f32 %v4487, 0.0
    %v4505 = vld [vmem:[#allocation36] sm:$0xf]
    %v4507 = vperm.slane %v4505, 0
    %v4508 = vperm.slane %v4505, 1
    %v4509 = vperm.slane %v4505, 2
    %v4510 = vperm.slane %v4505, 3
    %v4515 = vmul.f32 %v4489, %v4507
    %v4516 = vmul.f32 %v4490, %v4508
    %v4517 = vmul.f32 %v4491, %v4509
    %v4518 = vmul.f32 %v4492, %v4510
    %v4519 = vmul.f32 %v4493, %v4507
    %v4520 = vmul.f32 %v4494, %v4508
    %v4521 = vmul.f32 %v4495, %v4509
    %v4522 = vmul.f32 %v4496, %v4510
    %v4523 = vmul.f32 %v4497, %v4507
    %v4524 = vmul.f32 %v4498, %v4508
    %v4525 = vmul.f32 %v4499, %v4509
    %v4526 = vmul.f32 %v4500, %v4510
    %v4527 = vmul.f32 %v4501, %v4507
    %v4528 = vmul.f32 %v4502, %v4508
    %v4529 = vmul.f32 %v4503, %v4509
    %v4530 = vmul.f32 %v4504, %v4510
    %v4531 = vld [vmem:[#allocation37] sm:$0xf]
    %v4533 = vperm.slane %v4531, 0
    %v4534 = vperm.slane %v4531, 1
    %v4535 = vperm.slane %v4531, 2
    %v4536 = vperm.slane %v4531, 3
    %v4541 = vadd.f32 %v4515, %v4533
    %v4542 = vadd.f32 %v4516, %v4534
    %v4543 = vadd.f32 %v4517, %v4535
    %v4544 = vadd.f32 %v4518, %v4536
    %v4545 = vadd.f32 %v4519, %v4533
    %v4546 = vadd.f32 %v4520, %v4534
    %v4547 = vadd.f32 %v4521, %v4535
    %v4548 = vadd.f32 %v4522, %v4536
    %v4549 = vadd.f32 %v4523, %v4533
    %v4550 = vadd.f32 %v4524, %v4534
    %v4551 = vadd.f32 %v4525, %v4535
    %v4552 = vadd.f32 %v4526, %v4536
    %v4553 = vadd.f32 %v4527, %v4533
    %v4554 = vadd.f32 %v4528, %v4534
    %v4555 = vadd.f32 %v4529, %v4535
    %v4556 = vadd.f32 %v4530, %v4536
    %v4557 = vpack.c.bf16 %v4545, %v4541
    %v4558 = vpack.c.bf16 %v4546, %v4542
    %v4559 = vpack.c.bf16 %v4547, %v4543
    %v4560 = vpack.c.bf16 %v4548, %v4544
    %v4561 = vpack.c.bf16 %v4553, %v4549
    %v4562 = vpack.c.bf16 %v4554, %v4550
    %v4563 = vpack.c.bf16 %v4555, %v4551
    %v4564 = vpack.c.bf16 %v4556, %v4552
    %v4565 = vld [vmem:[#allocation39] sm:$0xf]
    %v4566 = vld [vmem:[#allocation39 + $0x4] sm:$0xf]
    %v4567 = vld [vmem:[#allocation39 + $0x8] sm:$0xf]
    %v4568 = vld [vmem:[#allocation39 + $0xc] sm:$0xf]
    %v4569 = vld [vmem:[#allocation39 + $0x10] sm:$0xf]
    %v4570 = vld [vmem:[#allocation39 + $0x14] sm:$0xf]
    %v4571 = vld [vmem:[#allocation39 + $0x18] sm:$0xf]
    %v4572 = vld [vmem:[#allocation39 + $0x1c] sm:$0xf]
    %v4573 = vld [vmem:[#allocation39 + $0x20] sm:$0xf]
    %v4574 = vld [vmem:[#allocation39 + $0x24] sm:$0xf]
    %v4575 = vld [vmem:[#allocation39 + $0x28] sm:$0xf]
    %v4576 = vld [vmem:[#allocation39 + $0x2c] sm:$0xf]
    %v4577 = vld [vmem:[#allocation39 + $0x30] sm:$0xf]
    %v4578 = vld [vmem:[#allocation39 + $0x34] sm:$0xf]
    %v4579 = vld [vmem:[#allocation39 + $0x38] sm:$0xf]
    %v4580 = vld [vmem:[#allocation39 + $0x3c] sm:$0xf]
    %v4581 = vld [vmem:[#allocation39 + $0x40] sm:$0xf]
    %v4582 = vld [vmem:[#allocation39 + $0x44] sm:$0xf]
    %v4583 = vld [vmem:[#allocation39 + $0x48] sm:$0xf]
    %v4584 = vld [vmem:[#allocation39 + $0x4c] sm:$0xf]
    %v4585 = vld [vmem:[#allocation39 + $0x50] sm:$0xf]
    %v4586 = vld [vmem:[#allocation39 + $0x54] sm:$0xf]
    %v4587 = vld [vmem:[#allocation39 + $0x58] sm:$0xf]
    %v4588 = vld [vmem:[#allocation39 + $0x5c] sm:$0xf]
    %v4589 = vld [vmem:[#allocation39 + $0x60] sm:$0xf]
    %v4590 = vld [vmem:[#allocation39 + $0x64] sm:$0xf]
    %v4591 = vld [vmem:[#allocation39 + $0x68] sm:$0xf]
    %v4592 = vld [vmem:[#allocation39 + $0x6c] sm:$0xf]
    %v4593 = vld [vmem:[#allocation39 + $0x70] sm:$0xf]
    %v4594 = vld [vmem:[#allocation39 + $0x74] sm:$0xf]
    %v4595 = vld [vmem:[#allocation39 + $0x78] sm:$0xf]
    %v4596 = vld [vmem:[#allocation39 + $0x7c] sm:$0xf]
    %v4597 = vld [vmem:[#allocation39 + $0x80] sm:$0xf]
    %v4598 = vld [vmem:[#allocation39 + $0x84] sm:$0xf]
    %v4599 = vld [vmem:[#allocation39 + $0x88] sm:$0xf]
    %v4600 = vld [vmem:[#allocation39 + $0x8c] sm:$0xf]
    %v4601 = vld [vmem:[#allocation39 + $0x90] sm:$0xf]
    %v4602 = vld [vmem:[#allocation39 + $0x94] sm:$0xf]
    %v4603 = vld [vmem:[#allocation39 + $0x98] sm:$0xf]
    %v4604 = vld [vmem:[#allocation39 + $0x9c] sm:$0xf]
    %v4605 = vld [vmem:[#allocation39 + $0xa0] sm:$0xf]
    %v4606 = vld [vmem:[#allocation39 + $0xa4] sm:$0xf]
    %v4607 = vld [vmem:[#allocation39 + $0xa8] sm:$0xf]
    %v4608 = vld [vmem:[#allocation39 + $0xac] sm:$0xf]
    %v4609 = vld [vmem:[#allocation39 + $0xb0] sm:$0xf]
    %v4610 = vld [vmem:[#allocation39 + $0xb4] sm:$0xf]
    %v4611 = vld [vmem:[#allocation39 + $0xb8] sm:$0xf]
    %v4612 = vld [vmem:[#allocation39 + $0xbc] sm:$0xf]
    %v4613 = vld [vmem:[#allocation39 + $0xc0] sm:$0xf]
    %v4614 = vld [vmem:[#allocation39 + $0xc4] sm:$0xf]
    %v4615 = vld [vmem:[#allocation39 + $0xc8] sm:$0xf]
    %v4616 = vld [vmem:[#allocation39 + $0xcc] sm:$0xf]
    %v4617 = vld [vmem:[#allocation39 + $0xd0] sm:$0xf]
    %v4618 = vld [vmem:[#allocation39 + $0xd4] sm:$0xf]
    %v4619 = vld [vmem:[#allocation39 + $0xd8] sm:$0xf]
    %v4620 = vld [vmem:[#allocation39 + $0xdc] sm:$0xf]
    %v4621 = vld [vmem:[#allocation39 + $0xe0] sm:$0xf]
    %v4622 = vld [vmem:[#allocation39 + $0xe4] sm:$0xf]
    %v4623 = vld [vmem:[#allocation39 + $0xe8] sm:$0xf]
    %v4624 = vld [vmem:[#allocation39 + $0xec] sm:$0xf]
    %v4625 = vld [vmem:[#allocation39 + $0xf0] sm:$0xf]
    %v4626 = vld [vmem:[#allocation39 + $0xf4] sm:$0xf]
    %v4627 = vld [vmem:[#allocation39 + $0xf8] sm:$0xf]
    %v4628 = vld [vmem:[#allocation39 + $0xfc] sm:$0xf]
    %v4629 = vld [vmem:[#allocation40] sm:$0x1]
    %v4631 = vperm.slane %v4629, 0
    %v4697 = vunpack.c.l.b16 %v4565
    %v4698 = vunpack.c.l.b16 %v4566
    %v4699 = vunpack.c.l.b16 %v4567
    %v4700 = vunpack.c.l.b16 %v4568
    %v4701 = vunpack.c.l.b16 %v4569
    %v4702 = vunpack.c.l.b16 %v4570
    %v4703 = vunpack.c.l.b16 %v4571
    %v4704 = vunpack.c.l.b16 %v4572
    %v4705 = vunpack.c.l.b16 %v4573
    %v4706 = vunpack.c.l.b16 %v4574
    %v4707 = vunpack.c.l.b16 %v4575
    %v4708 = vunpack.c.l.b16 %v4576
    %v4709 = vunpack.c.l.b16 %v4577
    %v4710 = vunpack.c.l.b16 %v4578
    %v4711 = vunpack.c.l.b16 %v4579
    %v4712 = vunpack.c.l.b16 %v4580
    %v4713 = vunpack.c.l.b16 %v4581
    %v4714 = vunpack.c.l.b16 %v4582
    %v4715 = vunpack.c.l.b16 %v4583
    %v4716 = vunpack.c.l.b16 %v4584
    %v4717 = vunpack.c.l.b16 %v4585
    %v4718 = vunpack.c.l.b16 %v4586
    %v4719 = vunpack.c.l.b16 %v4587
    %v4720 = vunpack.c.l.b16 %v4588
    %v4721 = vunpack.c.l.b16 %v4589
    %v4722 = vunpack.c.l.b16 %v4590
    %v4723 = vunpack.c.l.b16 %v4591
    %v4724 = vunpack.c.l.b16 %v4592
    %v4725 = vunpack.c.l.b16 %v4593
    %v4726 = vunpack.c.l.b16 %v4594
    %v4727 = vunpack.c.l.b16 %v4595
    %v4728 = vunpack.c.l.b16 %v4596
    %v4729 = vunpack.c.l.b16 %v4597
    %v4730 = vunpack.c.l.b16 %v4598
    %v4731 = vunpack.c.l.b16 %v4599
    %v4732 = vunpack.c.l.b16 %v4600
    %v4733 = vunpack.c.l.b16 %v4601
    %v4734 = vunpack.c.l.b16 %v4602
    %v4735 = vunpack.c.l.b16 %v4603
    %v4736 = vunpack.c.l.b16 %v4604
    %v4737 = vunpack.c.l.b16 %v4605
    %v4738 = vunpack.c.l.b16 %v4606
    %v4739 = vunpack.c.l.b16 %v4607
    %v4740 = vunpack.c.l.b16 %v4608
    %v4741 = vunpack.c.l.b16 %v4609
    %v4742 = vunpack.c.l.b16 %v4610
    %v4743 = vunpack.c.l.b16 %v4611
    %v4744 = vunpack.c.l.b16 %v4612
    %v4745 = vunpack.c.l.b16 %v4613
    %v4746 = vunpack.c.l.b16 %v4614
    %v4747 = vunpack.c.l.b16 %v4615
    %v4748 = vunpack.c.l.b16 %v4616
    %v4749 = vunpack.c.l.b16 %v4617
    %v4750 = vunpack.c.l.b16 %v4618
    %v4751 = vunpack.c.l.b16 %v4619
    %v4752 = vunpack.c.l.b16 %v4620
    %v4753 = vunpack.c.l.b16 %v4621
    %v4754 = vunpack.c.l.b16 %v4622
    %v4755 = vunpack.c.l.b16 %v4623
    %v4756 = vunpack.c.l.b16 %v4624
    %v4757 = vunpack.c.l.b16 %v4625
    %v4758 = vunpack.c.l.b16 %v4626
    %v4759 = vunpack.c.l.b16 %v4627
    %v4760 = vunpack.c.l.b16 %v4628
    %v4761 = vpack.c.b16 %v4698, %v4697
    %v4762 = vpack.c.b16 %v4700, %v4699
    %v4763 = vpack.c.b16 %v4702, %v4701
    %v4764 = vpack.c.b16 %v4704, %v4703
    %v4765 = vpack.c.b16 %v4706, %v4705
    %v4766 = vpack.c.b16 %v4708, %v4707
    %v4767 = vpack.c.b16 %v4710, %v4709
    %v4768 = vpack.c.b16 %v4712, %v4711
    %v4769 = vpack.c.b16 %v4714, %v4713
    %v4770 = vpack.c.b16 %v4716, %v4715
    %v4771 = vpack.c.b16 %v4718, %v4717
    %v4772 = vpack.c.b16 %v4720, %v4719
    %v4773 = vpack.c.b16 %v4722, %v4721
    %v4774 = vpack.c.b16 %v4724, %v4723
    %v4775 = vpack.c.b16 %v4726, %v4725
    %v4776 = vpack.c.b16 %v4728, %v4727
    %v4777 = vpack.c.b16 %v4730, %v4729
    %v4778 = vpack.c.b16 %v4732, %v4731
    %v4779 = vpack.c.b16 %v4734, %v4733
    %v4780 = vpack.c.b16 %v4736, %v4735
    %v4781 = vpack.c.b16 %v4738, %v4737
    %v4782 = vpack.c.b16 %v4740, %v4739
    %v4783 = vpack.c.b16 %v4742, %v4741
    %v4784 = vpack.c.b16 %v4744, %v4743
    %v4785 = vpack.c.b16 %v4746, %v4745
    %v4786 = vpack.c.b16 %v4748, %v4747
    %v4787 = vpack.c.b16 %v4750, %v4749
    %v4788 = vpack.c.b16 %v4752, %v4751
    %v4789 = vpack.c.b16 %v4754, %v4753
    %v4790 = vpack.c.b16 %v4756, %v4755
    %v4791 = vpack.c.b16 %v4758, %v4757
    %v4792 = vpack.c.b16 %v4760, %v4759
    %4825 = vmatpush.bf16.msra.mxu0 %v4768
    %4826 = vmatpush.bf16.msra.mxu0 %v4767
    %4827 = vmatpush.bf16.msra.mxu0 %v4766
    %4828 = vmatpush.bf16.msra.mxu0 %v4765
    %4829 = vmatpush.bf16.msra.mxu0 %v4764
    %4830 = vmatpush.bf16.msra.mxu0 %v4763
    %4831 = vmatpush.bf16.msra.mxu0 %v4762
    %4832 = vmatpush.bf16.msra.mxu0 %v4761
    %4833 = vmatmul.bf16.gmra.mxu0 %v4557
    %v4834 = vpop.f32.mrf.mxu0
    %v4835 = vadd.f32 %v4631, %v4834
    %v4836 = vpop.f32.mrf.mxu0
    %v4837 = vadd.f32 %v4631, %v4836
    %4838 = vmatmul.bf16.gmra.mxu0 %v4561
    %v4839 = vpop.f32.mrf.mxu0
    %v4840 = vadd.f32 %v4631, %v4839
    %v4841 = vpop.f32.mrf.mxu0
    %v4842 = vadd.f32 %v4631, %v4841
    %4843 = vdwg.mxu0
    %4844 = vmatpush.bf16.msra.mxu0 %v4776
    %4845 = vmatpush.bf16.msra.mxu0 %v4775
    %4846 = vmatpush.bf16.msra.mxu0 %v4774
    %4847 = vmatpush.bf16.msra.mxu0 %v4773
    %4848 = vmatpush.bf16.msra.mxu0 %v4772
    %4849 = vmatpush.bf16.msra.mxu0 %v4771
    %4850 = vmatpush.bf16.msra.mxu0 %v4770
    %4851 = vmatpush.bf16.msra.mxu0 %v4769
    %4852 = vmatmul.bf16.gmra.mxu0 %v4558
    %v4853 = vpop.f32.mrf.mxu0
    %v4854 = vadd.f32 %v4835, %v4853
    %v4855 = vpop.f32.mrf.mxu0
    %v4856 = vadd.f32 %v4837, %v4855
    %4857 = vmatmul.bf16.gmra.mxu0 %v4562
    %v4858 = vpop.f32.mrf.mxu0
    %v4859 = vadd.f32 %v4840, %v4858
    %v4860 = vpop.f32.mrf.mxu0
    %v4861 = vadd.f32 %v4842, %v4860
    %4862 = vdwg.mxu0
    %4863 = vmatpush.bf16.msra.mxu0 %v4784
    %4864 = vmatpush.bf16.msra.mxu0 %v4783
    %4865 = vmatpush.bf16.msra.mxu0 %v4782
    %4866 = vmatpush.bf16.msra.mxu0 %v4781
    %4867 = vmatpush.bf16.msra.mxu0 %v4780
    %4868 = vmatpush.bf16.msra.mxu0 %v4779
    %4869 = vmatpush.bf16.msra.mxu0 %v4778
    %4870 = vmatpush.bf16.msra.mxu0 %v4777
    %4871 = vmatmul.bf16.gmra.mxu0 %v4559
    %v4872 = vpop.f32.mrf.mxu0
    %v4873 = vadd.f32 %v4854, %v4872
    %v4874 = vpop.f32.mrf.mxu0
    %v4875 = vadd.f32 %v4856, %v4874
    %4876 = vmatmul.bf16.gmra.mxu0 %v4563
    %v4877 = vpop.f32.mrf.mxu0
    %v4878 = vadd.f32 %v4859, %v4877
    %v4879 = vpop.f32.mrf.mxu0
    %v4880 = vadd.f32 %v4861, %v4879
    %4881 = vdwg.mxu0
    %4882 = vmatpush.bf16.msra.mxu0 %v4792
    %4883 = vmatpush.bf16.msra.mxu0 %v4791
    %4884 = vmatpush.bf16.msra.mxu0 %v4790
    %4885 = vmatpush.bf16.msra.mxu0 %v4789
    %4886 = vmatpush.bf16.msra.mxu0 %v4788
    %4887 = vmatpush.bf16.msra.mxu0 %v4787
    %4888 = vmatpush.bf16.msra.mxu0 %v4786
    %4889 = vmatpush.bf16.msra.mxu0 %v4785
    %4890 = vmatmul.bf16.gmra.mxu0 %v4560
    %v4891 = vpop.f32.mrf.mxu0
    %v4892 = vadd.f32 %v4873, %v4891
    %v4893 = vpop.f32.mrf.mxu0
    %v4894 = vadd.f32 %v4875, %v4893
    %4895 = vmatmul.bf16.gmra.mxu0 %v4564
    %v4896 = vpop.f32.mrf.mxu0
    %v4897 = vadd.f32 %v4878, %v4896
    %v4898 = vpop.f32.mrf.mxu0
    %v4899 = vadd.f32 %v4880, %v4898
    %4900 = vdwg.mxu0
    %4901 = vst [vmem:[%s67] sm:$0xff] %v4892
    %4902 = vst [vmem:[%s67 + $0x8] sm:$0xff] %v4894
    %4903 = vst [vmem:[%s67 + $0x10] sm:$0xff] %v4897
    %4904 = vst [vmem:[%s67 + $0x18] sm:$0xff] %v4899
    %v4905 = vrot.slane %v4541, 7
    %v4906 = vrot.slane %v4542, 7
    %v4907 = vrot.slane %v4543, 7
    %v4908 = vrot.slane %v4544, 7
    %v4909 = vrot.slane %v4545, 7
    %v4910 = vrot.slane %v4546, 7
    %v4911 = vrot.slane %v4547, 7
    %v4912 = vrot.slane %v4548, 7
    %v4913 = vrot.slane %v4549, 7
    %v4914 = vrot.slane %v4550, 7
    %v4915 = vrot.slane %v4551, 7
    %v4916 = vrot.slane %v4552, 7
    %v4917 = vrot.slane %v4553, 7
    %v4918 = vrot.slane %v4554, 7
    %v4919 = vrot.slane %v4555, 7
    %v4920 = vrot.slane %v4556, 7
    %v4921 = vsel %vm677, %v4913, %v4917
    %v4922 = vsel %vm677, %v4914, %v4918
    %v4923 = vsel %vm677, %v4915, %v4919
    %v4924 = vsel %vm677, %v4916, %v4920
    %v4925 = vsel %vm677, %v4909, %v4913
    %v4926 = vsel %vm677, %v4910, %v4914
    %v4927 = vsel %vm677, %v4911, %v4915
    %v4928 = vsel %vm677, %v4912, %v4916
    %v4929 = vsel %vm677, %v4905, %v4909
    %v4930 = vsel %vm677, %v4906, %v4910
    %v4931 = vsel %vm677, %v4907, %v4911
    %v4932 = vsel %vm677, %v4908, %v4912
    %v4933 = vsel %vm677, %v4917, %v4905
    %v4934 = vsel %vm677, %v4918, %v4906
    %v4935 = vsel %vm677, %v4919, %v4907
    %v4936 = vsel %vm677, %v4920, %v4908
    %v4937 = vmul.f32 %v4933, %v653
    %v4938 = vmul.f32 %v4934, %v653
    %v4939 = vmul.f32 %v4935, %v653
    %v4940 = vmul.f32 %v4936, %v653
    %v4941 = vmul.f32 %v4929, %v654
    %v4942 = vmul.f32 %v4930, %v654
    %v4943 = vmul.f32 %v4931, %v654
    %v4944 = vmul.f32 %v4932, %v654
    %v4945 = vmul.f32 %v4925, %v655
    %v4946 = vmul.f32 %v4926, %v655
    %v4947 = vmul.f32 %v4927, %v655
    %v4948 = vmul.f32 %v4928, %v655
    %v4949 = vmul.f32 %v4921, %v656
    %v4950 = vmul.f32 %v4922, %v656
    %v4951 = vmul.f32 %v4923, %v656
    %v4952 = vmul.f32 %v4924, %v656
    %v4953 = vrot.slane %v4541, 1
    %v4954 = vrot.slane %v4542, 1
    %v4955 = vrot.slane %v4543, 1
    %v4956 = vrot.slane %v4544, 1
    %v4957 = vrot.slane %v4545, 1
    %v4958 = vrot.slane %v4546, 1
    %v4959 = vrot.slane %v4547, 1
    %v4960 = vrot.slane %v4548, 1
    %v4961 = vrot.slane %v4549, 1
    %v4962 = vrot.slane %v4550, 1
    %v4963 = vrot.slane %v4551, 1
    %v4964 = vrot.slane %v4552, 1
    %v4965 = vrot.slane %v4553, 1
    %v4966 = vrot.slane %v4554, 1
    %v4967 = vrot.slane %v4555, 1
    %v4968 = vrot.slane %v4556, 1
    %v4969 = vsel %vm690, %v4961, %v4965
    %v4970 = vsel %vm690, %v4962, %v4966
    %v4971 = vsel %vm690, %v4963, %v4967
    %v4972 = vsel %vm690, %v4964, %v4968
    %v4973 = vsel %vm690, %v4957, %v4961
    %v4974 = vsel %vm690, %v4958, %v4962
    %v4975 = vsel %vm690, %v4959, %v4963
    %v4976 = vsel %vm690, %v4960, %v4964
    %v4977 = vsel %vm690, %v4953, %v4957
    %v4978 = vsel %vm690, %v4954, %v4958
    %v4979 = vsel %vm690, %v4955, %v4959
    %v4980 = vsel %vm690, %v4956, %v4960
    %v4981 = vsel %vm690, %v4965, %v4953
    %v4982 = vsel %vm690, %v4966, %v4954
    %v4983 = vsel %vm690, %v4967, %v4955
    %v4984 = vsel %vm690, %v4968, %v4956
    %v4985 = vmul.f32 %v4977, %v665
    %v4986 = vmul.f32 %v4978, %v665
    %v4987 = vmul.f32 %v4979, %v665
    %v4988 = vmul.f32 %v4980, %v665
    %v4989 = vmul.f32 %v4973, %v666
    %v4990 = vmul.f32 %v4974, %v666
    %v4991 = vmul.f32 %v4975, %v666
    %v4992 = vmul.f32 %v4976, %v666
    %v4993 = vmul.f32 %v4969, %v667
    %v4994 = vmul.f32 %v4970, %v667
    %v4995 = vmul.f32 %v4971, %v667
    %v4996 = vmul.f32 %v4972, %v667
    %v4997 = vmul.f32 %v4981, %v668
    %v4998 = vmul.f32 %v4982, %v668
    %v4999 = vmul.f32 %v4983, %v668
    %v5000 = vmul.f32 %v4984, %v668
    %v5001 = vpack.c.bf16 %v4941, %v4937
    %v5002 = vpack.c.bf16 %v4942, %v4938
    %v5003 = vpack.c.bf16 %v4943, %v4939
    %v5004 = vpack.c.bf16 %v4944, %v4940
    %v5005 = vpack.c.bf16 %v4989, %v4985
    %v5006 = vpack.c.bf16 %v4990, %v4986
    %v5007 = vpack.c.bf16 %v4991, %v4987
    %v5008 = vpack.c.bf16 %v4992, %v4988
    %v5009 = vpack.c.bf16 %v4949, %v4945
    %v5010 = vpack.c.bf16 %v4950, %v4946
    %v5011 = vpack.c.bf16 %v4951, %v4947
    %v5012 = vpack.c.bf16 %v4952, %v4948
    %v5013 = vpack.c.bf16 %v4997, %v4993
    %v5014 = vpack.c.bf16 %v4998, %v4994
    %v5015 = vpack.c.bf16 %v4999, %v4995
    %v5016 = vpack.c.bf16 %v5000, %v4996
    %v5017 = vld [vmem:[#allocation42] sm:$0xff]
    %v5018 = vld [vmem:[#allocation42 + $0x8] sm:$0xff]
    %v5019 = vld [vmem:[#allocation42 + $0x10] sm:$0xff]
    %v5020 = vld [vmem:[#allocation42 + $0x18] sm:$0xff]
    %v5021 = vld [vmem:[#allocation42 + $0x20] sm:$0xff]
    %v5022 = vld [vmem:[#allocation42 + $0x28] sm:$0xff]
    %v5023 = vld [vmem:[#allocation42 + $0x30] sm:$0xff]
    %v5024 = vld [vmem:[#allocation42 + $0x38] sm:$0xff]
    %v5025 = vld [vmem:[#allocation42 + $0x40] sm:$0xff]
    %v5026 = vld [vmem:[#allocation42 + $0x48] sm:$0xff]
    %v5027 = vld [vmem:[#allocation42 + $0x50] sm:$0xff]
    %v5028 = vld [vmem:[#allocation42 + $0x58] sm:$0xff]
    %v5029 = vld [vmem:[#allocation42 + $0x60] sm:$0xff]
    %v5030 = vld [vmem:[#allocation42 + $0x68] sm:$0xff]
    %v5031 = vld [vmem:[#allocation42 + $0x70] sm:$0xff]
    %v5032 = vld [vmem:[#allocation42 + $0x78] sm:$0xff]
    %v5033 = vld [vmem:[#allocation42 + $0x80] sm:$0xff]
    %v5034 = vld [vmem:[#allocation42 + $0x88] sm:$0xff]
    %v5035 = vld [vmem:[#allocation42 + $0x90] sm:$0xff]
    %v5036 = vld [vmem:[#allocation42 + $0x98] sm:$0xff]
    %v5037 = vld [vmem:[#allocation42 + $0xa0] sm:$0xff]
    %v5038 = vld [vmem:[#allocation42 + $0xa8] sm:$0xff]
    %v5039 = vld [vmem:[#allocation42 + $0xb0] sm:$0xff]
    %v5040 = vld [vmem:[#allocation42 + $0xb8] sm:$0xff]
    %v5041 = vld [vmem:[#allocation42 + $0xc0] sm:$0xff]
    %v5042 = vld [vmem:[#allocation42 + $0xc8] sm:$0xff]
    %v5043 = vld [vmem:[#allocation42 + $0xd0] sm:$0xff]
    %v5044 = vld [vmem:[#allocation42 + $0xd8] sm:$0xff]
    %v5045 = vld [vmem:[#allocation42 + $0xe0] sm:$0xff]
    %v5046 = vld [vmem:[#allocation42 + $0xe8] sm:$0xff]
    %v5047 = vld [vmem:[#allocation42 + $0xf0] sm:$0xff]
    %v5048 = vld [vmem:[#allocation42 + $0xf8] sm:$0xff]
    %v5049 = vld [vmem:[#allocation42 + $0x100] sm:$0xff]
    %v5050 = vld [vmem:[#allocation42 + $0x108] sm:$0xff]
    %v5051 = vld [vmem:[#allocation42 + $0x110] sm:$0xff]
    %v5052 = vld [vmem:[#allocation42 + $0x118] sm:$0xff]
    %v5053 = vld [vmem:[#allocation42 + $0x120] sm:$0xff]
    %v5054 = vld [vmem:[#allocation42 + $0x128] sm:$0xff]
    %v5055 = vld [vmem:[#allocation42 + $0x130] sm:$0xff]
    %v5056 = vld [vmem:[#allocation42 + $0x138] sm:$0xff]
    %v5057 = vld [vmem:[#allocation42 + $0x140] sm:$0xff]
    %v5058 = vld [vmem:[#allocation42 + $0x148] sm:$0xff]
    %v5059 = vld [vmem:[#allocation42 + $0x150] sm:$0xff]
    %v5060 = vld [vmem:[#allocation42 + $0x158] sm:$0xff]
    %v5061 = vld [vmem:[#allocation42 + $0x160] sm:$0xff]
    %v5062 = vld [vmem:[#allocation42 + $0x168] sm:$0xff]
    %v5063 = vld [vmem:[#allocation42 + $0x170] sm:$0xff]
    %v5064 = vld [vmem:[#allocation42 + $0x178] sm:$0xff]
    %v5065 = vld [vmem:[#allocation42 + $0x180] sm:$0xff]
    %v5066 = vld [vmem:[#allocation42 + $0x188] sm:$0xff]
    %v5067 = vld [vmem:[#allocation42 + $0x190] sm:$0xff]
    %v5068 = vld [vmem:[#allocation42 + $0x198] sm:$0xff]
    %v5069 = vld [vmem:[#allocation42 + $0x1a0] sm:$0xff]
    %v5070 = vld [vmem:[#allocation42 + $0x1a8] sm:$0xff]
    %v5071 = vld [vmem:[#allocation42 + $0x1b0] sm:$0xff]
    %v5072 = vld [vmem:[#allocation42 + $0x1b8] sm:$0xff]
    %v5073 = vld [vmem:[#allocation42 + $0x1c0] sm:$0xff]
    %v5074 = vld [vmem:[#allocation42 + $0x1c8] sm:$0xff]
    %v5075 = vld [vmem:[#allocation42 + $0x1d0] sm:$0xff]
    %v5076 = vld [vmem:[#allocation42 + $0x1d8] sm:$0xff]
    %v5077 = vld [vmem:[#allocation42 + $0x1e0] sm:$0xff]
    %v5078 = vld [vmem:[#allocation42 + $0x1e8] sm:$0xff]
    %v5079 = vld [vmem:[#allocation42 + $0x1f0] sm:$0xff]
    %v5080 = vld [vmem:[#allocation42 + $0x1f8] sm:$0xff]
    %v5081 = vld [vmem:[#allocation42 + $0x200] sm:$0xff]
    %v5082 = vld [vmem:[#allocation42 + $0x208] sm:$0xff]
    %v5083 = vld [vmem:[#allocation42 + $0x210] sm:$0xff]
    %v5084 = vld [vmem:[#allocation42 + $0x218] sm:$0xff]
    %v5085 = vld [vmem:[#allocation42 + $0x220] sm:$0xff]
    %v5086 = vld [vmem:[#allocation42 + $0x228] sm:$0xff]
    %v5087 = vld [vmem:[#allocation42 + $0x230] sm:$0xff]
    %v5088 = vld [vmem:[#allocation42 + $0x238] sm:$0xff]
    %v5089 = vld [vmem:[#allocation42 + $0x240] sm:$0xff]
    %v5090 = vld [vmem:[#allocation42 + $0x248] sm:$0xff]
    %v5091 = vld [vmem:[#allocation42 + $0x250] sm:$0xff]
    %v5092 = vld [vmem:[#allocation42 + $0x258] sm:$0xff]
    %v5093 = vld [vmem:[#allocation42 + $0x260] sm:$0xff]
    %v5094 = vld [vmem:[#allocation42 + $0x268] sm:$0xff]
    %v5095 = vld [vmem:[#allocation42 + $0x270] sm:$0xff]
    %v5096 = vld [vmem:[#allocation42 + $0x278] sm:$0xff]
    %v5097 = vld [vmem:[#allocation42 + $0x280] sm:$0xff]
    %v5098 = vld [vmem:[#allocation42 + $0x288] sm:$0xff]
    %v5099 = vld [vmem:[#allocation42 + $0x290] sm:$0xff]
    %v5100 = vld [vmem:[#allocation42 + $0x298] sm:$0xff]
    %v5101 = vld [vmem:[#allocation42 + $0x2a0] sm:$0xff]
    %v5102 = vld [vmem:[#allocation42 + $0x2a8] sm:$0xff]
    %v5103 = vld [vmem:[#allocation42 + $0x2b0] sm:$0xff]
    %v5104 = vld [vmem:[#allocation42 + $0x2b8] sm:$0xff]
    %v5105 = vld [vmem:[#allocation42 + $0x2c0] sm:$0xff]
    %v5106 = vld [vmem:[#allocation42 + $0x2c8] sm:$0xff]
    %v5107 = vld [vmem:[#allocation42 + $0x2d0] sm:$0xff]
    %v5108 = vld [vmem:[#allocation42 + $0x2d8] sm:$0xff]
    %v5109 = vld [vmem:[#allocation42 + $0x2e0] sm:$0xff]
    %v5110 = vld [vmem:[#allocation42 + $0x2e8] sm:$0xff]
    %v5111 = vld [vmem:[#allocation42 + $0x2f0] sm:$0xff]
    %v5112 = vld [vmem:[#allocation42 + $0x2f8] sm:$0xff]
    %v5113 = vld [vmem:[#allocation42 + $0x300] sm:$0xff]
    %v5114 = vld [vmem:[#allocation42 + $0x308] sm:$0xff]
    %v5115 = vld [vmem:[#allocation42 + $0x310] sm:$0xff]
    %v5116 = vld [vmem:[#allocation42 + $0x318] sm:$0xff]
    %v5117 = vld [vmem:[#allocation42 + $0x320] sm:$0xff]
    %v5118 = vld [vmem:[#allocation42 + $0x328] sm:$0xff]
    %v5119 = vld [vmem:[#allocation42 + $0x330] sm:$0xff]
    %v5120 = vld [vmem:[#allocation42 + $0x338] sm:$0xff]
    %v5121 = vld [vmem:[#allocation42 + $0x340] sm:$0xff]
    %v5122 = vld [vmem:[#allocation42 + $0x348] sm:$0xff]
    %v5123 = vld [vmem:[#allocation42 + $0x350] sm:$0xff]
    %v5124 = vld [vmem:[#allocation42 + $0x358] sm:$0xff]
    %v5125 = vld [vmem:[#allocation42 + $0x360] sm:$0xff]
    %v5126 = vld [vmem:[#allocation42 + $0x368] sm:$0xff]
    %v5127 = vld [vmem:[#allocation42 + $0x370] sm:$0xff]
    %v5128 = vld [vmem:[#allocation42 + $0x378] sm:$0xff]
    %v5129 = vld [vmem:[#allocation42 + $0x380] sm:$0xff]
    %v5130 = vld [vmem:[#allocation42 + $0x388] sm:$0xff]
    %v5131 = vld [vmem:[#allocation42 + $0x390] sm:$0xff]
    %v5132 = vld [vmem:[#allocation42 + $0x398] sm:$0xff]
    %v5133 = vld [vmem:[#allocation42 + $0x3a0] sm:$0xff]
    %v5134 = vld [vmem:[#allocation42 + $0x3a8] sm:$0xff]
    %v5135 = vld [vmem:[#allocation42 + $0x3b0] sm:$0xff]
    %v5136 = vld [vmem:[#allocation42 + $0x3b8] sm:$0xff]
    %v5137 = vld [vmem:[#allocation42 + $0x3c0] sm:$0xff]
    %v5138 = vld [vmem:[#allocation42 + $0x3c8] sm:$0xff]
    %v5139 = vld [vmem:[#allocation42 + $0x3d0] sm:$0xff]
    %v5140 = vld [vmem:[#allocation42 + $0x3d8] sm:$0xff]
    %v5141 = vld [vmem:[#allocation42 + $0x3e0] sm:$0xff]
    %v5142 = vld [vmem:[#allocation42 + $0x3e8] sm:$0xff]
    %v5143 = vld [vmem:[#allocation42 + $0x3f0] sm:$0xff]
    %v5144 = vld [vmem:[#allocation42 + $0x3f8] sm:$0xff]
    %v5145 = vld [vmem:[#allocation42 + $0x400] sm:$0xff]
    %v5146 = vld [vmem:[#allocation42 + $0x408] sm:$0xff]
    %v5147 = vld [vmem:[#allocation42 + $0x410] sm:$0xff]
    %v5148 = vld [vmem:[#allocation42 + $0x418] sm:$0xff]
    %v5149 = vld [vmem:[#allocation42 + $0x420] sm:$0xff]
    %v5150 = vld [vmem:[#allocation42 + $0x428] sm:$0xff]
    %v5151 = vld [vmem:[#allocation42 + $0x430] sm:$0xff]
    %v5152 = vld [vmem:[#allocation42 + $0x438] sm:$0xff]
    %v5153 = vld [vmem:[#allocation42 + $0x440] sm:$0xff]
    %v5154 = vld [vmem:[#allocation42 + $0x448] sm:$0xff]
    %v5155 = vld [vmem:[#allocation42 + $0x450] sm:$0xff]
    %v5156 = vld [vmem:[#allocation42 + $0x458] sm:$0xff]
    %v5157 = vld [vmem:[#allocation42 + $0x460] sm:$0xff]
    %v5158 = vld [vmem:[#allocation42 + $0x468] sm:$0xff]
    %v5159 = vld [vmem:[#allocation42 + $0x470] sm:$0xff]
    %v5160 = vld [vmem:[#allocation42 + $0x478] sm:$0xff]
    %v5161 = vld [vmem:[#allocation42 + $0x480] sm:$0xff]
    %v5162 = vld [vmem:[#allocation42 + $0x488] sm:$0xff]
    %v5163 = vld [vmem:[#allocation42 + $0x490] sm:$0xff]
    %v5164 = vld [vmem:[#allocation42 + $0x498] sm:$0xff]
    %v5165 = vld [vmem:[#allocation42 + $0x4a0] sm:$0xff]
    %v5166 = vld [vmem:[#allocation42 + $0x4a8] sm:$0xff]
    %v5167 = vld [vmem:[#allocation42 + $0x4b0] sm:$0xff]
    %v5168 = vld [vmem:[#allocation42 + $0x4b8] sm:$0xff]
    %v5169 = vld [vmem:[#allocation42 + $0x4c0] sm:$0xff]
    %v5170 = vld [vmem:[#allocation42 + $0x4c8] sm:$0xff]
    %v5171 = vld [vmem:[#allocation42 + $0x4d0] sm:$0xff]
    %v5172 = vld [vmem:[#allocation42 + $0x4d8] sm:$0xff]
    %v5173 = vld [vmem:[#allocation42 + $0x4e0] sm:$0xff]
    %v5174 = vld [vmem:[#allocation42 + $0x4e8] sm:$0xff]
    %v5175 = vld [vmem:[#allocation42 + $0x4f0] sm:$0xff]
    %v5176 = vld [vmem:[#allocation42 + $0x4f8] sm:$0xff]
    %v5177 = vld [vmem:[#allocation42 + $0x500] sm:$0xff]
    %v5178 = vld [vmem:[#allocation42 + $0x508] sm:$0xff]
    %v5179 = vld [vmem:[#allocation42 + $0x510] sm:$0xff]
    %v5180 = vld [vmem:[#allocation42 + $0x518] sm:$0xff]
    %v5181 = vld [vmem:[#allocation42 + $0x520] sm:$0xff]
    %v5182 = vld [vmem:[#allocation42 + $0x528] sm:$0xff]
    %v5183 = vld [vmem:[#allocation42 + $0x530] sm:$0xff]
    %v5184 = vld [vmem:[#allocation42 + $0x538] sm:$0xff]
    %v5185 = vld [vmem:[#allocation42 + $0x540] sm:$0xff]
    %v5186 = vld [vmem:[#allocation42 + $0x548] sm:$0xff]
    %v5187 = vld [vmem:[#allocation42 + $0x550] sm:$0xff]
    %v5188 = vld [vmem:[#allocation42 + $0x558] sm:$0xff]
    %v5189 = vld [vmem:[#allocation42 + $0x560] sm:$0xff]
    %v5190 = vld [vmem:[#allocation42 + $0x568] sm:$0xff]
    %v5191 = vld [vmem:[#allocation42 + $0x570] sm:$0xff]
    %v5192 = vld [vmem:[#allocation42 + $0x578] sm:$0xff]
    %v5193 = vld [vmem:[#allocation42 + $0x580] sm:$0xff]
    %v5194 = vld [vmem:[#allocation42 + $0x588] sm:$0xff]
    %v5195 = vld [vmem:[#allocation42 + $0x590] sm:$0xff]
    %v5196 = vld [vmem:[#allocation42 + $0x598] sm:$0xff]
    %v5197 = vld [vmem:[#allocation42 + $0x5a0] sm:$0xff]
    %v5198 = vld [vmem:[#allocation42 + $0x5a8] sm:$0xff]
    %v5199 = vld [vmem:[#allocation42 + $0x5b0] sm:$0xff]
    %v5200 = vld [vmem:[#allocation42 + $0x5b8] sm:$0xff]
    %v5201 = vld [vmem:[#allocation42 + $0x5c0] sm:$0xff]
    %v5202 = vld [vmem:[#allocation42 + $0x5c8] sm:$0xff]
    %v5203 = vld [vmem:[#allocation42 + $0x5d0] sm:$0xff]
    %v5204 = vld [vmem:[#allocation42 + $0x5d8] sm:$0xff]
    %v5205 = vld [vmem:[#allocation42 + $0x5e0] sm:$0xff]
    %v5206 = vld [vmem:[#allocation42 + $0x5e8] sm:$0xff]
    %v5207 = vld [vmem:[#allocation42 + $0x5f0] sm:$0xff]
    %v5208 = vld [vmem:[#allocation42 + $0x5f8] sm:$0xff]
    %v5209 = vld [vmem:[#allocation42 + $0x600] sm:$0xff]
    %v5210 = vld [vmem:[#allocation42 + $0x608] sm:$0xff]
    %v5211 = vld [vmem:[#allocation42 + $0x610] sm:$0xff]
    %v5212 = vld [vmem:[#allocation42 + $0x618] sm:$0xff]
    %v5213 = vld [vmem:[#allocation42 + $0x620] sm:$0xff]
    %v5214 = vld [vmem:[#allocation42 + $0x628] sm:$0xff]
    %v5215 = vld [vmem:[#allocation42 + $0x630] sm:$0xff]
    %v5216 = vld [vmem:[#allocation42 + $0x638] sm:$0xff]
    %v5217 = vld [vmem:[#allocation42 + $0x640] sm:$0xff]
    %v5218 = vld [vmem:[#allocation42 + $0x648] sm:$0xff]
    %v5219 = vld [vmem:[#allocation42 + $0x650] sm:$0xff]
    %v5220 = vld [vmem:[#allocation42 + $0x658] sm:$0xff]
    %v5221 = vld [vmem:[#allocation42 + $0x660] sm:$0xff]
    %v5222 = vld [vmem:[#allocation42 + $0x668] sm:$0xff]
    %v5223 = vld [vmem:[#allocation42 + $0x670] sm:$0xff]
    %v5224 = vld [vmem:[#allocation42 + $0x678] sm:$0xff]
    %v5225 = vld [vmem:[#allocation42 + $0x680] sm:$0xff]
    %v5226 = vld [vmem:[#allocation42 + $0x688] sm:$0xff]
    %v5227 = vld [vmem:[#allocation42 + $0x690] sm:$0xff]
    %v5228 = vld [vmem:[#allocation42 + $0x698] sm:$0xff]
    %v5229 = vld [vmem:[#allocation42 + $0x6a0] sm:$0xff]
    %v5230 = vld [vmem:[#allocation42 + $0x6a8] sm:$0xff]
    %v5231 = vld [vmem:[#allocation42 + $0x6b0] sm:$0xff]
    %v5232 = vld [vmem:[#allocation42 + $0x6b8] sm:$0xff]
    %v5233 = vld [vmem:[#allocation42 + $0x6c0] sm:$0xff]
    %v5234 = vld [vmem:[#allocation42 + $0x6c8] sm:$0xff]
    %v5235 = vld [vmem:[#allocation42 + $0x6d0] sm:$0xff]
    %v5236 = vld [vmem:[#allocation42 + $0x6d8] sm:$0xff]
    %v5237 = vld [vmem:[#allocation42 + $0x6e0] sm:$0xff]
    %v5238 = vld [vmem:[#allocation42 + $0x6e8] sm:$0xff]
    %v5239 = vld [vmem:[#allocation42 + $0x6f0] sm:$0xff]
    %v5240 = vld [vmem:[#allocation42 + $0x6f8] sm:$0xff]
    %v5241 = vld [vmem:[#allocation42 + $0x700] sm:$0xff]
    %v5242 = vld [vmem:[#allocation42 + $0x708] sm:$0xff]
    %v5243 = vld [vmem:[#allocation42 + $0x710] sm:$0xff]
    %v5244 = vld [vmem:[#allocation42 + $0x718] sm:$0xff]
    %v5245 = vld [vmem:[#allocation42 + $0x720] sm:$0xff]
    %v5246 = vld [vmem:[#allocation42 + $0x728] sm:$0xff]
    %v5247 = vld [vmem:[#allocation42 + $0x730] sm:$0xff]
    %v5248 = vld [vmem:[#allocation42 + $0x738] sm:$0xff]
    %v5249 = vld [vmem:[#allocation42 + $0x740] sm:$0xff]
    %v5250 = vld [vmem:[#allocation42 + $0x748] sm:$0xff]
    %v5251 = vld [vmem:[#allocation42 + $0x750] sm:$0xff]
    %v5252 = vld [vmem:[#allocation42 + $0x758] sm:$0xff]
    %v5253 = vld [vmem:[#allocation42 + $0x760] sm:$0xff]
    %v5254 = vld [vmem:[#allocation42 + $0x768] sm:$0xff]
    %v5255 = vld [vmem:[#allocation42 + $0x770] sm:$0xff]
    %v5256 = vld [vmem:[#allocation42 + $0x778] sm:$0xff]
    %v5257 = vld [vmem:[#allocation42 + $0x780] sm:$0xff]
    %v5258 = vld [vmem:[#allocation42 + $0x788] sm:$0xff]
    %v5259 = vld [vmem:[#allocation42 + $0x790] sm:$0xff]
    %v5260 = vld [vmem:[#allocation42 + $0x798] sm:$0xff]
    %v5261 = vld [vmem:[#allocation42 + $0x7a0] sm:$0xff]
    %v5262 = vld [vmem:[#allocation42 + $0x7a8] sm:$0xff]
    %v5263 = vld [vmem:[#allocation42 + $0x7b0] sm:$0xff]
    %v5264 = vld [vmem:[#allocation42 + $0x7b8] sm:$0xff]
    %v5265 = vld [vmem:[#allocation42 + $0x7c0] sm:$0xff]
    %v5266 = vld [vmem:[#allocation42 + $0x7c8] sm:$0xff]
    %v5267 = vld [vmem:[#allocation42 + $0x7d0] sm:$0xff]
    %v5268 = vld [vmem:[#allocation42 + $0x7d8] sm:$0xff]
    %v5269 = vld [vmem:[#allocation42 + $0x7e0] sm:$0xff]
    %v5270 = vld [vmem:[#allocation42 + $0x7e8] sm:$0xff]
    %v5271 = vld [vmem:[#allocation42 + $0x7f0] sm:$0xff]
    %v5272 = vld [vmem:[#allocation42 + $0x7f8] sm:$0xff]
    %v5273 = vld [vmem:[#allocation42 + $0x800] sm:$0xff]
    %v5274 = vld [vmem:[#allocation42 + $0x808] sm:$0xff]
    %v5275 = vld [vmem:[#allocation42 + $0x810] sm:$0xff]
    %v5276 = vld [vmem:[#allocation42 + $0x818] sm:$0xff]
    %v5277 = vld [vmem:[#allocation42 + $0x820] sm:$0xff]
    %v5278 = vld [vmem:[#allocation42 + $0x828] sm:$0xff]
    %v5279 = vld [vmem:[#allocation42 + $0x830] sm:$0xff]
    %v5280 = vld [vmem:[#allocation42 + $0x838] sm:$0xff]
    %v5281 = vld [vmem:[#allocation42 + $0x840] sm:$0xff]
    %v5282 = vld [vmem:[#allocation42 + $0x848] sm:$0xff]
    %v5283 = vld [vmem:[#allocation42 + $0x850] sm:$0xff]
    %v5284 = vld [vmem:[#allocation42 + $0x858] sm:$0xff]
    %v5285 = vld [vmem:[#allocation42 + $0x860] sm:$0xff]
    %v5286 = vld [vmem:[#allocation42 + $0x868] sm:$0xff]
    %v5287 = vld [vmem:[#allocation42 + $0x870] sm:$0xff]
    %v5288 = vld [vmem:[#allocation42 + $0x878] sm:$0xff]
    %v5289 = vld [vmem:[#allocation42 + $0x880] sm:$0xff]
    %v5290 = vld [vmem:[#allocation42 + $0x888] sm:$0xff]
    %v5291 = vld [vmem:[#allocation42 + $0x890] sm:$0xff]
    %v5292 = vld [vmem:[#allocation42 + $0x898] sm:$0xff]
    %v5293 = vld [vmem:[#allocation42 + $0x8a0] sm:$0xff]
    %v5294 = vld [vmem:[#allocation42 + $0x8a8] sm:$0xff]
    %v5295 = vld [vmem:[#allocation42 + $0x8b0] sm:$0xff]
    %v5296 = vld [vmem:[#allocation42 + $0x8b8] sm:$0xff]
    %v5297 = vld [vmem:[#allocation42 + $0x8c0] sm:$0xff]
    %v5298 = vld [vmem:[#allocation42 + $0x8c8] sm:$0xff]
    %v5299 = vld [vmem:[#allocation42 + $0x8d0] sm:$0xff]
    %v5300 = vld [vmem:[#allocation42 + $0x8d8] sm:$0xff]
    %v5301 = vld [vmem:[#allocation42 + $0x8e0] sm:$0xff]
    %v5302 = vld [vmem:[#allocation42 + $0x8e8] sm:$0xff]
    %v5303 = vld [vmem:[#allocation42 + $0x8f0] sm:$0xff]
    %v5304 = vld [vmem:[#allocation42 + $0x8f8] sm:$0xff]
    %v5305 = vld [vmem:[#allocation42 + $0x900] sm:$0xff]
    %v5306 = vld [vmem:[#allocation42 + $0x908] sm:$0xff]
    %v5307 = vld [vmem:[#allocation42 + $0x910] sm:$0xff]
    %v5308 = vld [vmem:[#allocation42 + $0x918] sm:$0xff]
    %v5309 = vld [vmem:[#allocation42 + $0x920] sm:$0xff]
    %v5310 = vld [vmem:[#allocation42 + $0x928] sm:$0xff]
    %v5311 = vld [vmem:[#allocation42 + $0x930] sm:$0xff]
    %v5312 = vld [vmem:[#allocation42 + $0x938] sm:$0xff]
    %v5313 = vld [vmem:[#allocation42 + $0x940] sm:$0xff]
    %v5314 = vld [vmem:[#allocation42 + $0x948] sm:$0xff]
    %v5315 = vld [vmem:[#allocation42 + $0x950] sm:$0xff]
    %v5316 = vld [vmem:[#allocation42 + $0x958] sm:$0xff]
    %v5317 = vld [vmem:[#allocation42 + $0x960] sm:$0xff]
    %v5318 = vld [vmem:[#allocation42 + $0x968] sm:$0xff]
    %v5319 = vld [vmem:[#allocation42 + $0x970] sm:$0xff]
    %v5320 = vld [vmem:[#allocation42 + $0x978] sm:$0xff]
    %v5321 = vld [vmem:[#allocation42 + $0x980] sm:$0xff]
    %v5322 = vld [vmem:[#allocation42 + $0x988] sm:$0xff]
    %v5323 = vld [vmem:[#allocation42 + $0x990] sm:$0xff]
    %v5324 = vld [vmem:[#allocation42 + $0x998] sm:$0xff]
    %v5325 = vld [vmem:[#allocation42 + $0x9a0] sm:$0xff]
    %v5326 = vld [vmem:[#allocation42 + $0x9a8] sm:$0xff]
    %v5327 = vld [vmem:[#allocation42 + $0x9b0] sm:$0xff]
    %v5328 = vld [vmem:[#allocation42 + $0x9b8] sm:$0xff]
    %v5329 = vld [vmem:[#allocation42 + $0x9c0] sm:$0xff]
    %v5330 = vld [vmem:[#allocation42 + $0x9c8] sm:$0xff]
    %v5331 = vld [vmem:[#allocation42 + $0x9d0] sm:$0xff]
    %v5332 = vld [vmem:[#allocation42 + $0x9d8] sm:$0xff]
    %v5333 = vld [vmem:[#allocation42 + $0x9e0] sm:$0xff]
    %v5334 = vld [vmem:[#allocation42 + $0x9e8] sm:$0xff]
    %v5335 = vld [vmem:[#allocation42 + $0x9f0] sm:$0xff]
    %v5336 = vld [vmem:[#allocation42 + $0x9f8] sm:$0xff]
    %v5337 = vld [vmem:[#allocation42 + $0xa00] sm:$0xff]
    %v5338 = vld [vmem:[#allocation42 + $0xa08] sm:$0xff]
    %v5339 = vld [vmem:[#allocation42 + $0xa10] sm:$0xff]
    %v5340 = vld [vmem:[#allocation42 + $0xa18] sm:$0xff]
    %v5341 = vld [vmem:[#allocation42 + $0xa20] sm:$0xff]
    %v5342 = vld [vmem:[#allocation42 + $0xa28] sm:$0xff]
    %v5343 = vld [vmem:[#allocation42 + $0xa30] sm:$0xff]
    %v5344 = vld [vmem:[#allocation42 + $0xa38] sm:$0xff]
    %v5345 = vld [vmem:[#allocation42 + $0xa40] sm:$0xff]
    %v5346 = vld [vmem:[#allocation42 + $0xa48] sm:$0xff]
    %v5347 = vld [vmem:[#allocation42 + $0xa50] sm:$0xff]
    %v5348 = vld [vmem:[#allocation42 + $0xa58] sm:$0xff]
    %v5349 = vld [vmem:[#allocation42 + $0xa60] sm:$0xff]
    %v5350 = vld [vmem:[#allocation42 + $0xa68] sm:$0xff]
    %v5351 = vld [vmem:[#allocation42 + $0xa70] sm:$0xff]
    %v5352 = vld [vmem:[#allocation42 + $0xa78] sm:$0xff]
    %v5353 = vld [vmem:[#allocation42 + $0xa80] sm:$0xff]
    %v5354 = vld [vmem:[#allocation42 + $0xa88] sm:$0xff]
    %v5355 = vld [vmem:[#allocation42 + $0xa90] sm:$0xff]
    %v5356 = vld [vmem:[#allocation42 + $0xa98] sm:$0xff]
    %v5357 = vld [vmem:[#allocation42 + $0xaa0] sm:$0xff]
    %v5358 = vld [vmem:[#allocation42 + $0xaa8] sm:$0xff]
    %v5359 = vld [vmem:[#allocation42 + $0xab0] sm:$0xff]
    %v5360 = vld [vmem:[#allocation42 + $0xab8] sm:$0xff]
    %v5361 = vld [vmem:[#allocation42 + $0xac0] sm:$0xff]
    %v5362 = vld [vmem:[#allocation42 + $0xac8] sm:$0xff]
    %v5363 = vld [vmem:[#allocation42 + $0xad0] sm:$0xff]
    %v5364 = vld [vmem:[#allocation42 + $0xad8] sm:$0xff]
    %v5365 = vld [vmem:[#allocation42 + $0xae0] sm:$0xff]
    %v5366 = vld [vmem:[#allocation42 + $0xae8] sm:$0xff]
    %v5367 = vld [vmem:[#allocation42 + $0xaf0] sm:$0xff]
    %v5368 = vld [vmem:[#allocation42 + $0xaf8] sm:$0xff]
    %v5369 = vld [vmem:[#allocation42 + $0xb00] sm:$0xff]
    %v5370 = vld [vmem:[#allocation42 + $0xb08] sm:$0xff]
    %v5371 = vld [vmem:[#allocation42 + $0xb10] sm:$0xff]
    %v5372 = vld [vmem:[#allocation42 + $0xb18] sm:$0xff]
    %v5373 = vld [vmem:[#allocation42 + $0xb20] sm:$0xff]
    %v5374 = vld [vmem:[#allocation42 + $0xb28] sm:$0xff]
    %v5375 = vld [vmem:[#allocation42 + $0xb30] sm:$0xff]
    %v5376 = vld [vmem:[#allocation42 + $0xb38] sm:$0xff]
    %v5377 = vld [vmem:[#allocation42 + $0xb40] sm:$0xff]
    %v5378 = vld [vmem:[#allocation42 + $0xb48] sm:$0xff]
    %v5379 = vld [vmem:[#allocation42 + $0xb50] sm:$0xff]
    %v5380 = vld [vmem:[#allocation42 + $0xb58] sm:$0xff]
    %v5381 = vld [vmem:[#allocation42 + $0xb60] sm:$0xff]
    %v5382 = vld [vmem:[#allocation42 + $0xb68] sm:$0xff]
    %v5383 = vld [vmem:[#allocation42 + $0xb70] sm:$0xff]
    %v5384 = vld [vmem:[#allocation42 + $0xb78] sm:$0xff]
    %v5385 = vld [vmem:[#allocation42 + $0xb80] sm:$0xff]
    %v5386 = vld [vmem:[#allocation42 + $0xb88] sm:$0xff]
    %v5387 = vld [vmem:[#allocation42 + $0xb90] sm:$0xff]
    %v5388 = vld [vmem:[#allocation42 + $0xb98] sm:$0xff]
    %v5389 = vld [vmem:[#allocation42 + $0xba0] sm:$0xff]
    %v5390 = vld [vmem:[#allocation42 + $0xba8] sm:$0xff]
    %v5391 = vld [vmem:[#allocation42 + $0xbb0] sm:$0xff]
    %v5392 = vld [vmem:[#allocation42 + $0xbb8] sm:$0xff]
    %v5393 = vld [vmem:[#allocation42 + $0xbc0] sm:$0xff]
    %v5394 = vld [vmem:[#allocation42 + $0xbc8] sm:$0xff]
    %v5395 = vld [vmem:[#allocation42 + $0xbd0] sm:$0xff]
    %v5396 = vld [vmem:[#allocation42 + $0xbd8] sm:$0xff]
    %v5397 = vld [vmem:[#allocation42 + $0xbe0] sm:$0xff]
    %v5398 = vld [vmem:[#allocation42 + $0xbe8] sm:$0xff]
    %v5399 = vld [vmem:[#allocation42 + $0xbf0] sm:$0xff]
    %v5400 = vld [vmem:[#allocation42 + $0xbf8] sm:$0xff]
    %v5401 = vld [vmem:[#allocation42 + $0xc00] sm:$0xff]
    %v5402 = vld [vmem:[#allocation42 + $0xc08] sm:$0xff]
    %v5403 = vld [vmem:[#allocation42 + $0xc10] sm:$0xff]
    %v5404 = vld [vmem:[#allocation42 + $0xc18] sm:$0xff]
    %v5405 = vld [vmem:[#allocation42 + $0xc20] sm:$0xff]
    %v5406 = vld [vmem:[#allocation42 + $0xc28] sm:$0xff]
    %v5407 = vld [vmem:[#allocation42 + $0xc30] sm:$0xff]
    %v5408 = vld [vmem:[#allocation42 + $0xc38] sm:$0xff]
    %v5409 = vld [vmem:[#allocation42 + $0xc40] sm:$0xff]
    %v5410 = vld [vmem:[#allocation42 + $0xc48] sm:$0xff]
    %v5411 = vld [vmem:[#allocation42 + $0xc50] sm:$0xff]
    %v5412 = vld [vmem:[#allocation42 + $0xc58] sm:$0xff]
    %v5413 = vld [vmem:[#allocation42 + $0xc60] sm:$0xff]
    %v5414 = vld [vmem:[#allocation42 + $0xc68] sm:$0xff]
    %v5415 = vld [vmem:[#allocation42 + $0xc70] sm:$0xff]
    %v5416 = vld [vmem:[#allocation42 + $0xc78] sm:$0xff]
    %v5417 = vld [vmem:[#allocation42 + $0xc80] sm:$0xff]
    %v5418 = vld [vmem:[#allocation42 + $0xc88] sm:$0xff]
    %v5419 = vld [vmem:[#allocation42 + $0xc90] sm:$0xff]
    %v5420 = vld [vmem:[#allocation42 + $0xc98] sm:$0xff]
    %v5421 = vld [vmem:[#allocation42 + $0xca0] sm:$0xff]
    %v5422 = vld [vmem:[#allocation42 + $0xca8] sm:$0xff]
    %v5423 = vld [vmem:[#allocation42 + $0xcb0] sm:$0xff]
    %v5424 = vld [vmem:[#allocation42 + $0xcb8] sm:$0xff]
    %v5425 = vld [vmem:[#allocation42 + $0xcc0] sm:$0xff]
    %v5426 = vld [vmem:[#allocation42 + $0xcc8] sm:$0xff]
    %v5427 = vld [vmem:[#allocation42 + $0xcd0] sm:$0xff]
    %v5428 = vld [vmem:[#allocation42 + $0xcd8] sm:$0xff]
    %v5429 = vld [vmem:[#allocation42 + $0xce0] sm:$0xff]
    %v5430 = vld [vmem:[#allocation42 + $0xce8] sm:$0xff]
    %v5431 = vld [vmem:[#allocation42 + $0xcf0] sm:$0xff]
    %v5432 = vld [vmem:[#allocation42 + $0xcf8] sm:$0xff]
    %v5433 = vld [vmem:[#allocation42 + $0xd00] sm:$0xff]
    %v5434 = vld [vmem:[#allocation42 + $0xd08] sm:$0xff]
    %v5435 = vld [vmem:[#allocation42 + $0xd10] sm:$0xff]
    %v5436 = vld [vmem:[#allocation42 + $0xd18] sm:$0xff]
    %v5437 = vld [vmem:[#allocation42 + $0xd20] sm:$0xff]
    %v5438 = vld [vmem:[#allocation42 + $0xd28] sm:$0xff]
    %v5439 = vld [vmem:[#allocation42 + $0xd30] sm:$0xff]
    %v5440 = vld [vmem:[#allocation42 + $0xd38] sm:$0xff]
    %v5441 = vld [vmem:[#allocation42 + $0xd40] sm:$0xff]
    %v5442 = vld [vmem:[#allocation42 + $0xd48] sm:$0xff]
    %v5443 = vld [vmem:[#allocation42 + $0xd50] sm:$0xff]
    %v5444 = vld [vmem:[#allocation42 + $0xd58] sm:$0xff]
    %v5445 = vld [vmem:[#allocation42 + $0xd60] sm:$0xff]
    %v5446 = vld [vmem:[#allocation42 + $0xd68] sm:$0xff]
    %v5447 = vld [vmem:[#allocation42 + $0xd70] sm:$0xff]
    %v5448 = vld [vmem:[#allocation42 + $0xd78] sm:$0xff]
    %v5449 = vld [vmem:[#allocation42 + $0xd80] sm:$0xff]
    %v5450 = vld [vmem:[#allocation42 + $0xd88] sm:$0xff]
    %v5451 = vld [vmem:[#allocation42 + $0xd90] sm:$0xff]
    %v5452 = vld [vmem:[#allocation42 + $0xd98] sm:$0xff]
    %v5453 = vld [vmem:[#allocation42 + $0xda0] sm:$0xff]
    %v5454 = vld [vmem:[#allocation42 + $0xda8] sm:$0xff]
    %v5455 = vld [vmem:[#allocation42 + $0xdb0] sm:$0xff]
    %v5456 = vld [vmem:[#allocation42 + $0xdb8] sm:$0xff]
    %v5457 = vld [vmem:[#allocation42 + $0xdc0] sm:$0xff]
    %v5458 = vld [vmem:[#allocation42 + $0xdc8] sm:$0xff]
    %v5459 = vld [vmem:[#allocation42 + $0xdd0] sm:$0xff]
    %v5460 = vld [vmem:[#allocation42 + $0xdd8] sm:$0xff]
    %v5461 = vld [vmem:[#allocation42 + $0xde0] sm:$0xff]
    %v5462 = vld [vmem:[#allocation42 + $0xde8] sm:$0xff]
    %v5463 = vld [vmem:[#allocation42 + $0xdf0] sm:$0xff]
    %v5464 = vld [vmem:[#allocation42 + $0xdf8] sm:$0xff]
    %v5465 = vld [vmem:[#allocation42 + $0xe00] sm:$0xff]
    %v5466 = vld [vmem:[#allocation42 + $0xe08] sm:$0xff]
    %v5467 = vld [vmem:[#allocation42 + $0xe10] sm:$0xff]
    %v5468 = vld [vmem:[#allocation42 + $0xe18] sm:$0xff]
    %v5469 = vld [vmem:[#allocation42 + $0xe20] sm:$0xff]
    %v5470 = vld [vmem:[#allocation42 + $0xe28] sm:$0xff]
    %v5471 = vld [vmem:[#allocation42 + $0xe30] sm:$0xff]
    %v5472 = vld [vmem:[#allocation42 + $0xe38] sm:$0xff]
    %v5473 = vld [vmem:[#allocation42 + $0xe40] sm:$0xff]
    %v5474 = vld [vmem:[#allocation42 + $0xe48] sm:$0xff]
    %v5475 = vld [vmem:[#allocation42 + $0xe50] sm:$0xff]
    %v5476 = vld [vmem:[#allocation42 + $0xe58] sm:$0xff]
    %v5477 = vld [vmem:[#allocation42 + $0xe60] sm:$0xff]
    %v5478 = vld [vmem:[#allocation42 + $0xe68] sm:$0xff]
    %v5479 = vld [vmem:[#allocation42 + $0xe70] sm:$0xff]
    %v5480 = vld [vmem:[#allocation42 + $0xe78] sm:$0xff]
    %v5481 = vld [vmem:[#allocation42 + $0xe80] sm:$0xff]
    %v5482 = vld [vmem:[#allocation42 + $0xe88] sm:$0xff]
    %v5483 = vld [vmem:[#allocation42 + $0xe90] sm:$0xff]
    %v5484 = vld [vmem:[#allocation42 + $0xe98] sm:$0xff]
    %v5485 = vld [vmem:[#allocation42 + $0xea0] sm:$0xff]
    %v5486 = vld [vmem:[#allocation42 + $0xea8] sm:$0xff]
    %v5487 = vld [vmem:[#allocation42 + $0xeb0] sm:$0xff]
    %v5488 = vld [vmem:[#allocation42 + $0xeb8] sm:$0xff]
    %v5489 = vld [vmem:[#allocation42 + $0xec0] sm:$0xff]
    %v5490 = vld [vmem:[#allocation42 + $0xec8] sm:$0xff]
    %v5491 = vld [vmem:[#allocation42 + $0xed0] sm:$0xff]
    %v5492 = vld [vmem:[#allocation42 + $0xed8] sm:$0xff]
    %v5493 = vld [vmem:[#allocation42 + $0xee0] sm:$0xff]
    %v5494 = vld [vmem:[#allocation42 + $0xee8] sm:$0xff]
    %v5495 = vld [vmem:[#allocation42 + $0xef0] sm:$0xff]
    %v5496 = vld [vmem:[#allocation42 + $0xef8] sm:$0xff]
    %v5497 = vld [vmem:[#allocation42 + $0xf00] sm:$0xff]
    %v5498 = vld [vmem:[#allocation42 + $0xf08] sm:$0xff]
    %v5499 = vld [vmem:[#allocation42 + $0xf10] sm:$0xff]
    %v5500 = vld [vmem:[#allocation42 + $0xf18] sm:$0xff]
    %v5501 = vld [vmem:[#allocation42 + $0xf20] sm:$0xff]
    %v5502 = vld [vmem:[#allocation42 + $0xf28] sm:$0xff]
    %v5503 = vld [vmem:[#allocation42 + $0xf30] sm:$0xff]
    %v5504 = vld [vmem:[#allocation42 + $0xf38] sm:$0xff]
    %v5505 = vld [vmem:[#allocation42 + $0xf40] sm:$0xff]
    %v5506 = vld [vmem:[#allocation42 + $0xf48] sm:$0xff]
    %v5507 = vld [vmem:[#allocation42 + $0xf50] sm:$0xff]
    %v5508 = vld [vmem:[#allocation42 + $0xf58] sm:$0xff]
    %v5509 = vld [vmem:[#allocation42 + $0xf60] sm:$0xff]
    %v5510 = vld [vmem:[#allocation42 + $0xf68] sm:$0xff]
    %v5511 = vld [vmem:[#allocation42 + $0xf70] sm:$0xff]
    %v5512 = vld [vmem:[#allocation42 + $0xf78] sm:$0xff]
    %v5513 = vld [vmem:[#allocation42 + $0xf80] sm:$0xff]
    %v5514 = vld [vmem:[#allocation42 + $0xf88] sm:$0xff]
    %v5515 = vld [vmem:[#allocation42 + $0xf90] sm:$0xff]
    %v5516 = vld [vmem:[#allocation42 + $0xf98] sm:$0xff]
    %v5517 = vld [vmem:[#allocation42 + $0xfa0] sm:$0xff]
    %v5518 = vld [vmem:[#allocation42 + $0xfa8] sm:$0xff]
    %v5519 = vld [vmem:[#allocation42 + $0xfb0] sm:$0xff]
    %v5520 = vld [vmem:[#allocation42 + $0xfb8] sm:$0xff]
    %v5521 = vld [vmem:[#allocation42 + $0xfc0] sm:$0xff]
    %v5522 = vld [vmem:[#allocation42 + $0xfc8] sm:$0xff]
    %v5523 = vld [vmem:[#allocation42 + $0xfd0] sm:$0xff]
    %v5524 = vld [vmem:[#allocation42 + $0xfd8] sm:$0xff]
    %v5525 = vld [vmem:[#allocation42 + $0xfe0] sm:$0xff]
    %v5526 = vld [vmem:[#allocation42 + $0xfe8] sm:$0xff]
    %v5527 = vld [vmem:[#allocation42 + $0xff0] sm:$0xff]
    %v5528 = vld [vmem:[#allocation42 + $0xff8] sm:$0xff]
    %v5529 = vld [vmem:[#allocation42 + $0x1000] sm:$0xff]
    %v5530 = vld [vmem:[#allocation42 + $0x1008] sm:$0xff]
    %v5531 = vld [vmem:[#allocation42 + $0x1010] sm:$0xff]
    %v5532 = vld [vmem:[#allocation42 + $0x1018] sm:$0xff]
    %v5533 = vld [vmem:[#allocation42 + $0x1020] sm:$0xff]
    %v5534 = vld [vmem:[#allocation42 + $0x1028] sm:$0xff]
    %v5535 = vld [vmem:[#allocation42 + $0x1030] sm:$0xff]
    %v5536 = vld [vmem:[#allocation42 + $0x1038] sm:$0xff]
    %v5537 = vld [vmem:[#allocation42 + $0x1040] sm:$0xff]
    %v5538 = vld [vmem:[#allocation42 + $0x1048] sm:$0xff]
    %v5539 = vld [vmem:[#allocation42 + $0x1050] sm:$0xff]
    %v5540 = vld [vmem:[#allocation42 + $0x1058] sm:$0xff]
    %v5541 = vld [vmem:[#allocation42 + $0x1060] sm:$0xff]
    %v5542 = vld [vmem:[#allocation42 + $0x1068] sm:$0xff]
    %v5543 = vld [vmem:[#allocation42 + $0x1070] sm:$0xff]
    %v5544 = vld [vmem:[#allocation42 + $0x1078] sm:$0xff]
    %v5545 = vld [vmem:[#allocation42 + $0x1080] sm:$0xff]
    %v5546 = vld [vmem:[#allocation42 + $0x1088] sm:$0xff]
    %v5547 = vld [vmem:[#allocation42 + $0x1090] sm:$0xff]
    %v5548 = vld [vmem:[#allocation42 + $0x1098] sm:$0xff]
    %v5549 = vld [vmem:[#allocation42 + $0x10a0] sm:$0xff]
    %v5550 = vld [vmem:[#allocation42 + $0x10a8] sm:$0xff]
    %v5551 = vld [vmem:[#allocation42 + $0x10b0] sm:$0xff]
    %v5552 = vld [vmem:[#allocation42 + $0x10b8] sm:$0xff]
    %v5553 = vld [vmem:[#allocation42 + $0x10c0] sm:$0xff]
    %v5554 = vld [vmem:[#allocation42 + $0x10c8] sm:$0xff]
    %v5555 = vld [vmem:[#allocation42 + $0x10d0] sm:$0xff]
    %v5556 = vld [vmem:[#allocation42 + $0x10d8] sm:$0xff]
    %v5557 = vld [vmem:[#allocation42 + $0x10e0] sm:$0xff]
    %v5558 = vld [vmem:[#allocation42 + $0x10e8] sm:$0xff]
    %v5559 = vld [vmem:[#allocation42 + $0x10f0] sm:$0xff]
    %v5560 = vld [vmem:[#allocation42 + $0x10f8] sm:$0xff]
    %v5561 = vld [vmem:[#allocation42 + $0x1100] sm:$0xff]
    %v5562 = vld [vmem:[#allocation42 + $0x1108] sm:$0xff]
    %v5563 = vld [vmem:[#allocation42 + $0x1110] sm:$0xff]
    %v5564 = vld [vmem:[#allocation42 + $0x1118] sm:$0xff]
    %v5565 = vld [vmem:[#allocation42 + $0x1120] sm:$0xff]
    %v5566 = vld [vmem:[#allocation42 + $0x1128] sm:$0xff]
    %v5567 = vld [vmem:[#allocation42 + $0x1130] sm:$0xff]
    %v5568 = vld [vmem:[#allocation42 + $0x1138] sm:$0xff]
    %v5569 = vld [vmem:[#allocation42 + $0x1140] sm:$0xff]
    %v5570 = vld [vmem:[#allocation42 + $0x1148] sm:$0xff]
    %v5571 = vld [vmem:[#allocation42 + $0x1150] sm:$0xff]
    %v5572 = vld [vmem:[#allocation42 + $0x1158] sm:$0xff]
    %v5573 = vld [vmem:[#allocation42 + $0x1160] sm:$0xff]
    %v5574 = vld [vmem:[#allocation42 + $0x1168] sm:$0xff]
    %v5575 = vld [vmem:[#allocation42 + $0x1170] sm:$0xff]
    %v5576 = vld [vmem:[#allocation42 + $0x1178] sm:$0xff]
    %v5577 = vld [vmem:[#allocation42 + $0x1180] sm:$0xff]
    %v5578 = vld [vmem:[#allocation42 + $0x1188] sm:$0xff]
    %v5579 = vld [vmem:[#allocation42 + $0x1190] sm:$0xff]
    %v5580 = vld [vmem:[#allocation42 + $0x1198] sm:$0xff]
    %v5581 = vld [vmem:[#allocation42 + $0x11a0] sm:$0xff]
    %v5582 = vld [vmem:[#allocation42 + $0x11a8] sm:$0xff]
    %v5583 = vld [vmem:[#allocation42 + $0x11b0] sm:$0xff]
    %v5584 = vld [vmem:[#allocation42 + $0x11b8] sm:$0xff]
    %v5585 = vld [vmem:[#allocation42 + $0x11c0] sm:$0xff]
    %v5586 = vld [vmem:[#allocation42 + $0x11c8] sm:$0xff]
    %v5587 = vld [vmem:[#allocation42 + $0x11d0] sm:$0xff]
    %v5588 = vld [vmem:[#allocation42 + $0x11d8] sm:$0xff]
    %v5589 = vld [vmem:[#allocation42 + $0x11e0] sm:$0xff]
    %v5590 = vld [vmem:[#allocation42 + $0x11e8] sm:$0xff]
    %v5591 = vld [vmem:[#allocation42 + $0x11f0] sm:$0xff]
    %v5592 = vld [vmem:[#allocation42 + $0x11f8] sm:$0xff]
    %v5593 = vld [vmem:[#allocation42 + $0x1200] sm:$0xff]
    %v5594 = vld [vmem:[#allocation42 + $0x1208] sm:$0xff]
    %v5595 = vld [vmem:[#allocation42 + $0x1210] sm:$0xff]
    %v5596 = vld [vmem:[#allocation42 + $0x1218] sm:$0xff]
    %v5597 = vld [vmem:[#allocation42 + $0x1220] sm:$0xff]
    %v5598 = vld [vmem:[#allocation42 + $0x1228] sm:$0xff]
    %v5599 = vld [vmem:[#allocation42 + $0x1230] sm:$0xff]
    %v5600 = vld [vmem:[#allocation42 + $0x1238] sm:$0xff]
    %v5601 = vld [vmem:[#allocation42 + $0x1240] sm:$0xff]
    %v5602 = vld [vmem:[#allocation42 + $0x1248] sm:$0xff]
    %v5603 = vld [vmem:[#allocation42 + $0x1250] sm:$0xff]
    %v5604 = vld [vmem:[#allocation42 + $0x1258] sm:$0xff]
    %v5605 = vld [vmem:[#allocation42 + $0x1260] sm:$0xff]
    %v5606 = vld [vmem:[#allocation42 + $0x1268] sm:$0xff]
    %v5607 = vld [vmem:[#allocation42 + $0x1270] sm:$0xff]
    %v5608 = vld [vmem:[#allocation42 + $0x1278] sm:$0xff]
    %v5609 = vld [vmem:[#allocation42 + $0x1280] sm:$0xff]
    %v5610 = vld [vmem:[#allocation42 + $0x1288] sm:$0xff]
    %v5611 = vld [vmem:[#allocation42 + $0x1290] sm:$0xff]
    %v5612 = vld [vmem:[#allocation42 + $0x1298] sm:$0xff]
    %v5613 = vld [vmem:[#allocation42 + $0x12a0] sm:$0xff]
    %v5614 = vld [vmem:[#allocation42 + $0x12a8] sm:$0xff]
    %v5615 = vld [vmem:[#allocation42 + $0x12b0] sm:$0xff]
    %v5616 = vld [vmem:[#allocation42 + $0x12b8] sm:$0xff]
    %v5617 = vld [vmem:[#allocation42 + $0x12c0] sm:$0xff]
    %v5618 = vld [vmem:[#allocation42 + $0x12c8] sm:$0xff]
    %v5619 = vld [vmem:[#allocation42 + $0x12d0] sm:$0xff]
    %v5620 = vld [vmem:[#allocation42 + $0x12d8] sm:$0xff]
    %v5621 = vld [vmem:[#allocation42 + $0x12e0] sm:$0xff]
    %v5622 = vld [vmem:[#allocation42 + $0x12e8] sm:$0xff]
    %v5623 = vld [vmem:[#allocation42 + $0x12f0] sm:$0xff]
    %v5624 = vld [vmem:[#allocation42 + $0x12f8] sm:$0xff]
    %v5625 = vld [vmem:[#allocation42 + $0x1300] sm:$0xff]
    %v5626 = vld [vmem:[#allocation42 + $0x1308] sm:$0xff]
    %v5627 = vld [vmem:[#allocation42 + $0x1310] sm:$0xff]
    %v5628 = vld [vmem:[#allocation42 + $0x1318] sm:$0xff]
    %v5629 = vld [vmem:[#allocation42 + $0x1320] sm:$0xff]
    %v5630 = vld [vmem:[#allocation42 + $0x1328] sm:$0xff]
    %v5631 = vld [vmem:[#allocation42 + $0x1330] sm:$0xff]
    %v5632 = vld [vmem:[#allocation42 + $0x1338] sm:$0xff]
    %v5633 = vld [vmem:[#allocation42 + $0x1340] sm:$0xff]
    %v5634 = vld [vmem:[#allocation42 + $0x1348] sm:$0xff]
    %v5635 = vld [vmem:[#allocation42 + $0x1350] sm:$0xff]
    %v5636 = vld [vmem:[#allocation42 + $0x1358] sm:$0xff]
    %v5637 = vld [vmem:[#allocation42 + $0x1360] sm:$0xff]
    %v5638 = vld [vmem:[#allocation42 + $0x1368] sm:$0xff]
    %v5639 = vld [vmem:[#allocation42 + $0x1370] sm:$0xff]
    %v5640 = vld [vmem:[#allocation42 + $0x1378] sm:$0xff]
    %v5641 = vld [vmem:[#allocation42 + $0x1380] sm:$0xff]
    %v5642 = vld [vmem:[#allocation42 + $0x1388] sm:$0xff]
    %v5643 = vld [vmem:[#allocation42 + $0x1390] sm:$0xff]
    %v5644 = vld [vmem:[#allocation42 + $0x1398] sm:$0xff]
    %v5645 = vld [vmem:[#allocation42 + $0x13a0] sm:$0xff]
    %v5646 = vld [vmem:[#allocation42 + $0x13a8] sm:$0xff]
    %v5647 = vld [vmem:[#allocation42 + $0x13b0] sm:$0xff]
    %v5648 = vld [vmem:[#allocation42 + $0x13b8] sm:$0xff]
    %v5649 = vld [vmem:[#allocation42 + $0x13c0] sm:$0xff]
    %v5650 = vld [vmem:[#allocation42 + $0x13c8] sm:$0xff]
    %v5651 = vld [vmem:[#allocation42 + $0x13d0] sm:$0xff]
    %v5652 = vld [vmem:[#allocation42 + $0x13d8] sm:$0xff]
    %v5653 = vld [vmem:[#allocation42 + $0x13e0] sm:$0xff]
    %v5654 = vld [vmem:[#allocation42 + $0x13e8] sm:$0xff]
    %v5655 = vld [vmem:[#allocation42 + $0x13f0] sm:$0xff]
    %v5656 = vld [vmem:[#allocation42 + $0x13f8] sm:$0xff]
    %v5657 = vld [vmem:[#allocation42 + $0x1400] sm:$0xff]
    %v5658 = vld [vmem:[#allocation42 + $0x1408] sm:$0xff]
    %v5659 = vld [vmem:[#allocation42 + $0x1410] sm:$0xff]
    %v5660 = vld [vmem:[#allocation42 + $0x1418] sm:$0xff]
    %v5661 = vld [vmem:[#allocation42 + $0x1420] sm:$0xff]
    %v5662 = vld [vmem:[#allocation42 + $0x1428] sm:$0xff]
    %v5663 = vld [vmem:[#allocation42 + $0x1430] sm:$0xff]
    %v5664 = vld [vmem:[#allocation42 + $0x1438] sm:$0xff]
    %v5665 = vld [vmem:[#allocation42 + $0x1440] sm:$0xff]
    %v5666 = vld [vmem:[#allocation42 + $0x1448] sm:$0xff]
    %v5667 = vld [vmem:[#allocation42 + $0x1450] sm:$0xff]
    %v5668 = vld [vmem:[#allocation42 + $0x1458] sm:$0xff]
    %v5669 = vld [vmem:[#allocation42 + $0x1460] sm:$0xff]
    %v5670 = vld [vmem:[#allocation42 + $0x1468] sm:$0xff]
    %v5671 = vld [vmem:[#allocation42 + $0x1470] sm:$0xff]
    %v5672 = vld [vmem:[#allocation42 + $0x1478] sm:$0xff]
    %v5673 = vld [vmem:[#allocation42 + $0x1480] sm:$0xff]
    %v5674 = vld [vmem:[#allocation42 + $0x1488] sm:$0xff]
    %v5675 = vld [vmem:[#allocation42 + $0x1490] sm:$0xff]
    %v5676 = vld [vmem:[#allocation42 + $0x1498] sm:$0xff]
    %v5677 = vld [vmem:[#allocation42 + $0x14a0] sm:$0xff]
    %v5678 = vld [vmem:[#allocation42 + $0x14a8] sm:$0xff]
    %v5679 = vld [vmem:[#allocation42 + $0x14b0] sm:$0xff]
    %v5680 = vld [vmem:[#allocation42 + $0x14b8] sm:$0xff]
    %v5681 = vld [vmem:[#allocation42 + $0x14c0] sm:$0xff]
    %v5682 = vld [vmem:[#allocation42 + $0x14c8] sm:$0xff]
    %v5683 = vld [vmem:[#allocation42 + $0x14d0] sm:$0xff]
    %v5684 = vld [vmem:[#allocation42 + $0x14d8] sm:$0xff]
    %v5685 = vld [vmem:[#allocation42 + $0x14e0] sm:$0xff]
    %v5686 = vld [vmem:[#allocation42 + $0x14e8] sm:$0xff]
    %v5687 = vld [vmem:[#allocation42 + $0x14f0] sm:$0xff]
    %v5688 = vld [vmem:[#allocation42 + $0x14f8] sm:$0xff]
    %v5689 = vld [vmem:[#allocation42 + $0x1500] sm:$0xff]
    %v5690 = vld [vmem:[#allocation42 + $0x1508] sm:$0xff]
    %v5691 = vld [vmem:[#allocation42 + $0x1510] sm:$0xff]
    %v5692 = vld [vmem:[#allocation42 + $0x1518] sm:$0xff]
    %v5693 = vld [vmem:[#allocation42 + $0x1520] sm:$0xff]
    %v5694 = vld [vmem:[#allocation42 + $0x1528] sm:$0xff]
    %v5695 = vld [vmem:[#allocation42 + $0x1530] sm:$0xff]
    %v5696 = vld [vmem:[#allocation42 + $0x1538] sm:$0xff]
    %v5697 = vld [vmem:[#allocation42 + $0x1540] sm:$0xff]
    %v5698 = vld [vmem:[#allocation42 + $0x1548] sm:$0xff]
    %v5699 = vld [vmem:[#allocation42 + $0x1550] sm:$0xff]
    %v5700 = vld [vmem:[#allocation42 + $0x1558] sm:$0xff]
    %v5701 = vld [vmem:[#allocation42 + $0x1560] sm:$0xff]
    %v5702 = vld [vmem:[#allocation42 + $0x1568] sm:$0xff]
    %v5703 = vld [vmem:[#allocation42 + $0x1570] sm:$0xff]
    %v5704 = vld [vmem:[#allocation42 + $0x1578] sm:$0xff]
    %v5705 = vld [vmem:[#allocation42 + $0x1580] sm:$0xff]
    %v5706 = vld [vmem:[#allocation42 + $0x1588] sm:$0xff]
    %v5707 = vld [vmem:[#allocation42 + $0x1590] sm:$0xff]
    %v5708 = vld [vmem:[#allocation42 + $0x1598] sm:$0xff]
    %v5709 = vld [vmem:[#allocation42 + $0x15a0] sm:$0xff]
    %v5710 = vld [vmem:[#allocation42 + $0x15a8] sm:$0xff]
    %v5711 = vld [vmem:[#allocation42 + $0x15b0] sm:$0xff]
    %v5712 = vld [vmem:[#allocation42 + $0x15b8] sm:$0xff]
    %v5713 = vld [vmem:[#allocation42 + $0x15c0] sm:$0xff]
    %v5714 = vld [vmem:[#allocation42 + $0x15c8] sm:$0xff]
    %v5715 = vld [vmem:[#allocation42 + $0x15d0] sm:$0xff]
    %v5716 = vld [vmem:[#allocation42 + $0x15d8] sm:$0xff]
    %v5717 = vld [vmem:[#allocation42 + $0x15e0] sm:$0xff]
    %v5718 = vld [vmem:[#allocation42 + $0x15e8] sm:$0xff]
    %v5719 = vld [vmem:[#allocation42 + $0x15f0] sm:$0xff]
    %v5720 = vld [vmem:[#allocation42 + $0x15f8] sm:$0xff]
    %v5721 = vld [vmem:[#allocation42 + $0x1600] sm:$0xff]
    %v5722 = vld [vmem:[#allocation42 + $0x1608] sm:$0xff]
    %v5723 = vld [vmem:[#allocation42 + $0x1610] sm:$0xff]
    %v5724 = vld [vmem:[#allocation42 + $0x1618] sm:$0xff]
    %v5725 = vld [vmem:[#allocation42 + $0x1620] sm:$0xff]
    %v5726 = vld [vmem:[#allocation42 + $0x1628] sm:$0xff]
    %v5727 = vld [vmem:[#allocation42 + $0x1630] sm:$0xff]
    %v5728 = vld [vmem:[#allocation42 + $0x1638] sm:$0xff]
    %v5729 = vld [vmem:[#allocation42 + $0x1640] sm:$0xff]
    %v5730 = vld [vmem:[#allocation42 + $0x1648] sm:$0xff]
    %v5731 = vld [vmem:[#allocation42 + $0x1650] sm:$0xff]
    %v5732 = vld [vmem:[#allocation42 + $0x1658] sm:$0xff]
    %v5733 = vld [vmem:[#allocation42 + $0x1660] sm:$0xff]
    %v5734 = vld [vmem:[#allocation42 + $0x1668] sm:$0xff]
    %v5735 = vld [vmem:[#allocation42 + $0x1670] sm:$0xff]
    %v5736 = vld [vmem:[#allocation42 + $0x1678] sm:$0xff]
    %v5737 = vld [vmem:[#allocation42 + $0x1680] sm:$0xff]
    %v5738 = vld [vmem:[#allocation42 + $0x1688] sm:$0xff]
    %v5739 = vld [vmem:[#allocation42 + $0x1690] sm:$0xff]
    %v5740 = vld [vmem:[#allocation42 + $0x1698] sm:$0xff]
    %v5741 = vld [vmem:[#allocation42 + $0x16a0] sm:$0xff]
    %v5742 = vld [vmem:[#allocation42 + $0x16a8] sm:$0xff]
    %v5743 = vld [vmem:[#allocation42 + $0x16b0] sm:$0xff]
    %v5744 = vld [vmem:[#allocation42 + $0x16b8] sm:$0xff]
    %v5745 = vld [vmem:[#allocation42 + $0x16c0] sm:$0xff]
    %v5746 = vld [vmem:[#allocation42 + $0x16c8] sm:$0xff]
    %v5747 = vld [vmem:[#allocation42 + $0x16d0] sm:$0xff]
    %v5748 = vld [vmem:[#allocation42 + $0x16d8] sm:$0xff]
    %v5749 = vld [vmem:[#allocation42 + $0x16e0] sm:$0xff]
    %v5750 = vld [vmem:[#allocation42 + $0x16e8] sm:$0xff]
    %v5751 = vld [vmem:[#allocation42 + $0x16f0] sm:$0xff]
    %v5752 = vld [vmem:[#allocation42 + $0x16f8] sm:$0xff]
    %v5753 = vld [vmem:[#allocation42 + $0x1700] sm:$0xff]
    %v5754 = vld [vmem:[#allocation42 + $0x1708] sm:$0xff]
    %v5755 = vld [vmem:[#allocation42 + $0x1710] sm:$0xff]
    %v5756 = vld [vmem:[#allocation42 + $0x1718] sm:$0xff]
    %v5757 = vld [vmem:[#allocation42 + $0x1720] sm:$0xff]
    %v5758 = vld [vmem:[#allocation42 + $0x1728] sm:$0xff]
    %v5759 = vld [vmem:[#allocation42 + $0x1730] sm:$0xff]
    %v5760 = vld [vmem:[#allocation42 + $0x1738] sm:$0xff]
    %v5761 = vld [vmem:[#allocation42 + $0x1740] sm:$0xff]
    %v5762 = vld [vmem:[#allocation42 + $0x1748] sm:$0xff]
    %v5763 = vld [vmem:[#allocation42 + $0x1750] sm:$0xff]
    %v5764 = vld [vmem:[#allocation42 + $0x1758] sm:$0xff]
    %v5765 = vld [vmem:[#allocation42 + $0x1760] sm:$0xff]
    %v5766 = vld [vmem:[#allocation42 + $0x1768] sm:$0xff]
    %v5767 = vld [vmem:[#allocation42 + $0x1770] sm:$0xff]
    %v5768 = vld [vmem:[#allocation42 + $0x1778] sm:$0xff]
    %v5769 = vld [vmem:[#allocation42 + $0x1780] sm:$0xff]
    %v5770 = vld [vmem:[#allocation42 + $0x1788] sm:$0xff]
    %v5771 = vld [vmem:[#allocation42 + $0x1790] sm:$0xff]
    %v5772 = vld [vmem:[#allocation42 + $0x1798] sm:$0xff]
    %v5773 = vld [vmem:[#allocation42 + $0x17a0] sm:$0xff]
    %v5774 = vld [vmem:[#allocation42 + $0x17a8] sm:$0xff]
    %v5775 = vld [vmem:[#allocation42 + $0x17b0] sm:$0xff]
    %v5776 = vld [vmem:[#allocation42 + $0x17b8] sm:$0xff]
    %v5777 = vld [vmem:[#allocation42 + $0x17c0] sm:$0xff]
    %v5778 = vld [vmem:[#allocation42 + $0x17c8] sm:$0xff]
    %v5779 = vld [vmem:[#allocation42 + $0x17d0] sm:$0xff]
    %v5780 = vld [vmem:[#allocation42 + $0x17d8] sm:$0xff]
    %v5781 = vld [vmem:[#allocation42 + $0x17e0] sm:$0xff]
    %v5782 = vld [vmem:[#allocation42 + $0x17e8] sm:$0xff]
    %v5783 = vld [vmem:[#allocation42 + $0x17f0] sm:$0xff]
    %v5784 = vld [vmem:[#allocation42 + $0x17f8] sm:$0xff]
    %v5785 = vld [vmem:[#allocation43] sm:$0xff]
    %v5787 = vperm.slane %v5785, 0
    %v5788 = vperm.slane %v5785, 1
    %v5789 = vperm.slane %v5785, 2
    %v5790 = vperm.slane %v5785, 3
    %v5791 = vperm.slane %v5785, 4
    %v5792 = vperm.slane %v5785, 5
    %v5793 = vperm.slane %v5785, 6
    %v5794 = vperm.slane %v5785, 7
    %v6571 = vunpack.c.l.b16 %v5017
    %v6572 = vunpack.c.h.b16 %v5017
    %v6573 = vunpack.c.l.b16 %v5018
    %v6574 = vunpack.c.h.b16 %v5018
    %v6575 = vunpack.c.l.b16 %v5019
    %v6576 = vunpack.c.h.b16 %v5019
    %v6577 = vunpack.c.l.b16 %v5020
    %v6578 = vunpack.c.h.b16 %v5020
    %v6579 = vunpack.c.l.b16 %v5021
    %v6580 = vunpack.c.h.b16 %v5021
    %v6581 = vunpack.c.l.b16 %v5022
    %v6582 = vunpack.c.h.b16 %v5022
    %v6583 = vunpack.c.l.b16 %v5023
    %v6584 = vunpack.c.h.b16 %v5023
    %v6585 = vunpack.c.l.b16 %v5024
    %v6586 = vunpack.c.h.b16 %v5024
    %v6587 = vunpack.c.l.b16 %v5025
    %v6588 = vunpack.c.h.b16 %v5025
    %v6589 = vunpack.c.l.b16 %v5026
    %v6590 = vunpack.c.h.b16 %v5026
    %v6591 = vunpack.c.l.b16 %v5027
    %v6592 = vunpack.c.h.b16 %v5027
    %v6593 = vunpack.c.l.b16 %v5028
    %v6594 = vunpack.c.h.b16 %v5028
    %v6595 = vunpack.c.l.b16 %v5029
    %v6596 = vunpack.c.h.b16 %v5029
    %v6597 = vunpack.c.l.b16 %v5030
    %v6598 = vunpack.c.h.b16 %v5030
    %v6599 = vunpack.c.l.b16 %v5031
    %v6600 = vunpack.c.h.b16 %v5031
    %v6601 = vunpack.c.l.b16 %v5032
    %v6602 = vunpack.c.h.b16 %v5032
    %v6603 = vunpack.c.l.b16 %v5033
    %v6604 = vunpack.c.h.b16 %v5033
    %v6605 = vunpack.c.l.b16 %v5034
    %v6606 = vunpack.c.h.b16 %v5034
    %v6607 = vunpack.c.l.b16 %v5035
    %v6608 = vunpack.c.h.b16 %v5035
    %v6609 = vunpack.c.l.b16 %v5036
    %v6610 = vunpack.c.h.b16 %v5036
    %v6611 = vunpack.c.l.b16 %v5037
    %v6612 = vunpack.c.h.b16 %v5037
    %v6613 = vunpack.c.l.b16 %v5038
    %v6614 = vunpack.c.h.b16 %v5038
    %v6615 = vunpack.c.l.b16 %v5039
    %v6616 = vunpack.c.h.b16 %v5039
    %v6617 = vunpack.c.l.b16 %v5040
    %v6618 = vunpack.c.h.b16 %v5040
    %v6619 = vunpack.c.l.b16 %v5041
    %v6620 = vunpack.c.h.b16 %v5041
    %v6621 = vunpack.c.l.b16 %v5042
    %v6622 = vunpack.c.h.b16 %v5042
    %v6623 = vunpack.c.l.b16 %v5043
    %v6624 = vunpack.c.h.b16 %v5043
    %v6625 = vunpack.c.l.b16 %v5044
    %v6626 = vunpack.c.h.b16 %v5044
    %v6627 = vunpack.c.l.b16 %v5045
    %v6628 = vunpack.c.h.b16 %v5045
    %v6629 = vunpack.c.l.b16 %v5046
    %v6630 = vunpack.c.h.b16 %v5046
    %v6631 = vunpack.c.l.b16 %v5047
    %v6632 = vunpack.c.h.b16 %v5047
    %v6633 = vunpack.c.l.b16 %v5048
    %v6634 = vunpack.c.h.b16 %v5048
    %v6635 = vunpack.c.l.b16 %v5049
    %v6636 = vunpack.c.h.b16 %v5049
    %v6637 = vunpack.c.l.b16 %v5050
    %v6638 = vunpack.c.h.b16 %v5050
    %v6639 = vunpack.c.l.b16 %v5051
    %v6640 = vunpack.c.h.b16 %v5051
    %v6641 = vunpack.c.l.b16 %v5052
    %v6642 = vunpack.c.h.b16 %v5052
    %v6643 = vunpack.c.l.b16 %v5053
    %v6644 = vunpack.c.h.b16 %v5053
    %v6645 = vunpack.c.l.b16 %v5054
    %v6646 = vunpack.c.h.b16 %v5054
    %v6647 = vunpack.c.l.b16 %v5055
    %v6648 = vunpack.c.h.b16 %v5055
    %v6649 = vunpack.c.l.b16 %v5056
    %v6650 = vunpack.c.h.b16 %v5056
    %v6651 = vunpack.c.l.b16 %v5057
    %v6652 = vunpack.c.h.b16 %v5057
    %v6653 = vunpack.c.l.b16 %v5058
    %v6654 = vunpack.c.h.b16 %v5058
    %v6655 = vunpack.c.l.b16 %v5059
    %v6656 = vunpack.c.h.b16 %v5059
    %v6657 = vunpack.c.l.b16 %v5060
    %v6658 = vunpack.c.h.b16 %v5060
    %v6659 = vunpack.c.l.b16 %v5061
    %v6660 = vunpack.c.h.b16 %v5061
    %v6661 = vunpack.c.l.b16 %v5062
    %v6662 = vunpack.c.h.b16 %v5062
    %v6663 = vunpack.c.l.b16 %v5063
    %v6664 = vunpack.c.h.b16 %v5063
    %v6665 = vunpack.c.l.b16 %v5064
    %v6666 = vunpack.c.h.b16 %v5064
    %v6667 = vunpack.c.l.b16 %v5065
    %v6668 = vunpack.c.h.b16 %v5065
    %v6669 = vunpack.c.l.b16 %v5066
    %v6670 = vunpack.c.h.b16 %v5066
    %v6671 = vunpack.c.l.b16 %v5067
    %v6672 = vunpack.c.h.b16 %v5067
    %v6673 = vunpack.c.l.b16 %v5068
    %v6674 = vunpack.c.h.b16 %v5068
    %v6675 = vunpack.c.l.b16 %v5069
    %v6676 = vunpack.c.h.b16 %v5069
    %v6677 = vunpack.c.l.b16 %v5070
    %v6678 = vunpack.c.h.b16 %v5070
    %v6679 = vunpack.c.l.b16 %v5071
    %v6680 = vunpack.c.h.b16 %v5071
    %v6681 = vunpack.c.l.b16 %v5072
    %v6682 = vunpack.c.h.b16 %v5072
    %v6683 = vunpack.c.l.b16 %v5073
    %v6684 = vunpack.c.h.b16 %v5073
    %v6685 = vunpack.c.l.b16 %v5074
    %v6686 = vunpack.c.h.b16 %v5074
    %v6687 = vunpack.c.l.b16 %v5075
    %v6688 = vunpack.c.h.b16 %v5075
    %v6689 = vunpack.c.l.b16 %v5076
    %v6690 = vunpack.c.h.b16 %v5076
    %v6691 = vunpack.c.l.b16 %v5077
    %v6692 = vunpack.c.h.b16 %v5077
    %v6693 = vunpack.c.l.b16 %v5078
    %v6694 = vunpack.c.h.b16 %v5078
    %v6695 = vunpack.c.l.b16 %v5079
    %v6696 = vunpack.c.h.b16 %v5079
    %v6697 = vunpack.c.l.b16 %v5080
    %v6698 = vunpack.c.h.b16 %v5080
    %v6699 = vunpack.c.l.b16 %v5081
    %v6700 = vunpack.c.h.b16 %v5081
    %v6701 = vunpack.c.l.b16 %v5082
    %v6702 = vunpack.c.h.b16 %v5082
    %v6703 = vunpack.c.l.b16 %v5083
    %v6704 = vunpack.c.h.b16 %v5083
    %v6705 = vunpack.c.l.b16 %v5084
    %v6706 = vunpack.c.h.b16 %v5084
    %v6707 = vunpack.c.l.b16 %v5085
    %v6708 = vunpack.c.h.b16 %v5085
    %v6709 = vunpack.c.l.b16 %v5086
    %v6710 = vunpack.c.h.b16 %v5086
    %v6711 = vunpack.c.l.b16 %v5087
    %v6712 = vunpack.c.h.b16 %v5087
    %v6713 = vunpack.c.l.b16 %v5088
    %v6714 = vunpack.c.h.b16 %v5088
    %v6715 = vunpack.c.l.b16 %v5089
    %v6716 = vunpack.c.h.b16 %v5089
    %v6717 = vunpack.c.l.b16 %v5090
    %v6718 = vunpack.c.h.b16 %v5090
    %v6719 = vunpack.c.l.b16 %v5091
    %v6720 = vunpack.c.h.b16 %v5091
    %v6721 = vunpack.c.l.b16 %v5092
    %v6722 = vunpack.c.h.b16 %v5092
    %v6723 = vunpack.c.l.b16 %v5093
    %v6724 = vunpack.c.h.b16 %v5093
    %v6725 = vunpack.c.l.b16 %v5094
    %v6726 = vunpack.c.h.b16 %v5094
    %v6727 = vunpack.c.l.b16 %v5095
    %v6728 = vunpack.c.h.b16 %v5095
    %v6729 = vunpack.c.l.b16 %v5096
    %v6730 = vunpack.c.h.b16 %v5096
    %v6731 = vunpack.c.l.b16 %v5097
    %v6732 = vunpack.c.h.b16 %v5097
    %v6733 = vunpack.c.l.b16 %v5098
    %v6734 = vunpack.c.h.b16 %v5098
    %v6735 = vunpack.c.l.b16 %v5099
    %v6736 = vunpack.c.h.b16 %v5099
    %v6737 = vunpack.c.l.b16 %v5100
    %v6738 = vunpack.c.h.b16 %v5100
    %v6739 = vunpack.c.l.b16 %v5101
    %v6740 = vunpack.c.h.b16 %v5101
    %v6741 = vunpack.c.l.b16 %v5102
    %v6742 = vunpack.c.h.b16 %v5102
    %v6743 = vunpack.c.l.b16 %v5103
    %v6744 = vunpack.c.h.b16 %v5103
    %v6745 = vunpack.c.l.b16 %v5104
    %v6746 = vunpack.c.h.b16 %v5104
    %v6747 = vunpack.c.l.b16 %v5105
    %v6748 = vunpack.c.h.b16 %v5105
    %v6749 = vunpack.c.l.b16 %v5106
    %v6750 = vunpack.c.h.b16 %v5106
    %v6751 = vunpack.c.l.b16 %v5107
    %v6752 = vunpack.c.h.b16 %v5107
    %v6753 = vunpack.c.l.b16 %v5108
    %v6754 = vunpack.c.h.b16 %v5108
    %v6755 = vunpack.c.l.b16 %v5109
    %v6756 = vunpack.c.h.b16 %v5109
    %v6757 = vunpack.c.l.b16 %v5110
    %v6758 = vunpack.c.h.b16 %v5110
    %v6759 = vunpack.c.l.b16 %v5111
    %v6760 = vunpack.c.h.b16 %v5111
    %v6761 = vunpack.c.l.b16 %v5112
    %v6762 = vunpack.c.h.b16 %v5112
    %v6763 = vunpack.c.l.b16 %v5113
    %v6764 = vunpack.c.h.b16 %v5113
    %v6765 = vunpack.c.l.b16 %v5114
    %v6766 = vunpack.c.h.b16 %v5114
    %v6767 = vunpack.c.l.b16 %v5115
    %v6768 = vunpack.c.h.b16 %v5115
    %v6769 = vunpack.c.l.b16 %v5116
    %v6770 = vunpack.c.h.b16 %v5116
    %v6771 = vunpack.c.l.b16 %v5117
    %v6772 = vunpack.c.h.b16 %v5117
    %v6773 = vunpack.c.l.b16 %v5118
    %v6774 = vunpack.c.h.b16 %v5118
    %v6775 = vunpack.c.l.b16 %v5119
    %v6776 = vunpack.c.h.b16 %v5119
    %v6777 = vunpack.c.l.b16 %v5120
    %v6778 = vunpack.c.h.b16 %v5120
    %v6779 = vunpack.c.l.b16 %v5121
    %v6780 = vunpack.c.h.b16 %v5121
    %v6781 = vunpack.c.l.b16 %v5122
    %v6782 = vunpack.c.h.b16 %v5122
    %v6783 = vunpack.c.l.b16 %v5123
    %v6784 = vunpack.c.h.b16 %v5123
    %v6785 = vunpack.c.l.b16 %v5124
    %v6786 = vunpack.c.h.b16 %v5124
    %v6787 = vunpack.c.l.b16 %v5125
    %v6788 = vunpack.c.h.b16 %v5125
    %v6789 = vunpack.c.l.b16 %v5126
    %v6790 = vunpack.c.h.b16 %v5126
    %v6791 = vunpack.c.l.b16 %v5127
    %v6792 = vunpack.c.h.b16 %v5127
    %v6793 = vunpack.c.l.b16 %v5128
    %v6794 = vunpack.c.h.b16 %v5128
    %v6795 = vunpack.c.l.b16 %v5129
    %v6796 = vunpack.c.h.b16 %v5129
    %v6797 = vunpack.c.l.b16 %v5130
    %v6798 = vunpack.c.h.b16 %v5130
    %v6799 = vunpack.c.l.b16 %v5131
    %v6800 = vunpack.c.h.b16 %v5131
    %v6801 = vunpack.c.l.b16 %v5132
    %v6802 = vunpack.c.h.b16 %v5132
    %v6803 = vunpack.c.l.b16 %v5133
    %v6804 = vunpack.c.h.b16 %v5133
    %v6805 = vunpack.c.l.b16 %v5134
    %v6806 = vunpack.c.h.b16 %v5134
    %v6807 = vunpack.c.l.b16 %v5135
    %v6808 = vunpack.c.h.b16 %v5135
    %v6809 = vunpack.c.l.b16 %v5136
    %v6810 = vunpack.c.h.b16 %v5136
    %v6811 = vunpack.c.l.b16 %v5137
    %v6812 = vunpack.c.h.b16 %v5137
    %v6813 = vunpack.c.l.b16 %v5138
    %v6814 = vunpack.c.h.b16 %v5138
    %v6815 = vunpack.c.l.b16 %v5139
    %v6816 = vunpack.c.h.b16 %v5139
    %v6817 = vunpack.c.l.b16 %v5140
    %v6818 = vunpack.c.h.b16 %v5140
    %v6819 = vunpack.c.l.b16 %v5141
    %v6820 = vunpack.c.h.b16 %v5141
    %v6821 = vunpack.c.l.b16 %v5142
    %v6822 = vunpack.c.h.b16 %v5142
    %v6823 = vunpack.c.l.b16 %v5143
    %v6824 = vunpack.c.h.b16 %v5143
    %v6825 = vunpack.c.l.b16 %v5144
    %v6826 = vunpack.c.h.b16 %v5144
    %v6827 = vunpack.c.l.b16 %v5145
    %v6828 = vunpack.c.h.b16 %v5145
    %v6829 = vunpack.c.l.b16 %v5146
    %v6830 = vunpack.c.h.b16 %v5146
    %v6831 = vunpack.c.l.b16 %v5147
    %v6832 = vunpack.c.h.b16 %v5147
    %v6833 = vunpack.c.l.b16 %v5148
    %v6834 = vunpack.c.h.b16 %v5148
    %v6835 = vunpack.c.l.b16 %v5149
    %v6836 = vunpack.c.h.b16 %v5149
    %v6837 = vunpack.c.l.b16 %v5150
    %v6838 = vunpack.c.h.b16 %v5150
    %v6839 = vunpack.c.l.b16 %v5151
    %v6840 = vunpack.c.h.b16 %v5151
    %v6841 = vunpack.c.l.b16 %v5152
    %v6842 = vunpack.c.h.b16 %v5152
    %v6843 = vunpack.c.l.b16 %v5153
    %v6844 = vunpack.c.h.b16 %v5153
    %v6845 = vunpack.c.l.b16 %v5154
    %v6846 = vunpack.c.h.b16 %v5154
    %v6847 = vunpack.c.l.b16 %v5155
    %v6848 = vunpack.c.h.b16 %v5155
    %v6849 = vunpack.c.l.b16 %v5156
    %v6850 = vunpack.c.h.b16 %v5156
    %v6851 = vunpack.c.l.b16 %v5157
    %v6852 = vunpack.c.h.b16 %v5157
    %v6853 = vunpack.c.l.b16 %v5158
    %v6854 = vunpack.c.h.b16 %v5158
    %v6855 = vunpack.c.l.b16 %v5159
    %v6856 = vunpack.c.h.b16 %v5159
    %v6857 = vunpack.c.l.b16 %v5160
    %v6858 = vunpack.c.h.b16 %v5160
    %v6859 = vunpack.c.l.b16 %v5161
    %v6860 = vunpack.c.h.b16 %v5161
    %v6861 = vunpack.c.l.b16 %v5162
    %v6862 = vunpack.c.h.b16 %v5162
    %v6863 = vunpack.c.l.b16 %v5163
    %v6864 = vunpack.c.h.b16 %v5163
    %v6865 = vunpack.c.l.b16 %v5164
    %v6866 = vunpack.c.h.b16 %v5164
    %v6867 = vunpack.c.l.b16 %v5165
    %v6868 = vunpack.c.h.b16 %v5165
    %v6869 = vunpack.c.l.b16 %v5166
    %v6870 = vunpack.c.h.b16 %v5166
    %v6871 = vunpack.c.l.b16 %v5167
    %v6872 = vunpack.c.h.b16 %v5167
    %v6873 = vunpack.c.l.b16 %v5168
    %v6874 = vunpack.c.h.b16 %v5168
    %v6875 = vunpack.c.l.b16 %v5169
    %v6876 = vunpack.c.h.b16 %v5169
    %v6877 = vunpack.c.l.b16 %v5170
    %v6878 = vunpack.c.h.b16 %v5170
    %v6879 = vunpack.c.l.b16 %v5171
    %v6880 = vunpack.c.h.b16 %v5171
    %v6881 = vunpack.c.l.b16 %v5172
    %v6882 = vunpack.c.h.b16 %v5172
    %v6883 = vunpack.c.l.b16 %v5173
    %v6884 = vunpack.c.h.b16 %v5173
    %v6885 = vunpack.c.l.b16 %v5174
    %v6886 = vunpack.c.h.b16 %v5174
    %v6887 = vunpack.c.l.b16 %v5175
    %v6888 = vunpack.c.h.b16 %v5175
    %v6889 = vunpack.c.l.b16 %v5176
    %v6890 = vunpack.c.h.b16 %v5176
    %v6891 = vunpack.c.l.b16 %v5177
    %v6892 = vunpack.c.h.b16 %v5177
    %v6893 = vunpack.c.l.b16 %v5178
    %v6894 = vunpack.c.h.b16 %v5178
    %v6895 = vunpack.c.l.b16 %v5179
    %v6896 = vunpack.c.h.b16 %v5179
    %v6897 = vunpack.c.l.b16 %v5180
    %v6898 = vunpack.c.h.b16 %v5180
    %v6899 = vunpack.c.l.b16 %v5181
    %v6900 = vunpack.c.h.b16 %v5181
    %v6901 = vunpack.c.l.b16 %v5182
    %v6902 = vunpack.c.h.b16 %v5182
    %v6903 = vunpack.c.l.b16 %v5183
    %v6904 = vunpack.c.h.b16 %v5183
    %v6905 = vunpack.c.l.b16 %v5184
    %v6906 = vunpack.c.h.b16 %v5184
    %v6907 = vunpack.c.l.b16 %v5185
    %v6908 = vunpack.c.h.b16 %v5185
    %v6909 = vunpack.c.l.b16 %v5186
    %v6910 = vunpack.c.h.b16 %v5186
    %v6911 = vunpack.c.l.b16 %v5187
    %v6912 = vunpack.c.h.b16 %v5187
    %v6913 = vunpack.c.l.b16 %v5188
    %v6914 = vunpack.c.h.b16 %v5188
    %v6915 = vunpack.c.l.b16 %v5189
    %v6916 = vunpack.c.h.b16 %v5189
    %v6917 = vunpack.c.l.b16 %v5190
    %v6918 = vunpack.c.h.b16 %v5190
    %v6919 = vunpack.c.l.b16 %v5191
    %v6920 = vunpack.c.h.b16 %v5191
    %v6921 = vunpack.c.l.b16 %v5192
    %v6922 = vunpack.c.h.b16 %v5192
    %v6923 = vunpack.c.l.b16 %v5193
    %v6924 = vunpack.c.h.b16 %v5193
    %v6925 = vunpack.c.l.b16 %v5194
    %v6926 = vunpack.c.h.b16 %v5194
    %v6927 = vunpack.c.l.b16 %v5195
    %v6928 = vunpack.c.h.b16 %v5195
    %v6929 = vunpack.c.l.b16 %v5196
    %v6930 = vunpack.c.h.b16 %v5196
    %v6931 = vunpack.c.l.b16 %v5197
    %v6932 = vunpack.c.h.b16 %v5197
    %v6933 = vunpack.c.l.b16 %v5198
    %v6934 = vunpack.c.h.b16 %v5198
    %v6935 = vunpack.c.l.b16 %v5199
    %v6936 = vunpack.c.h.b16 %v5199
    %v6937 = vunpack.c.l.b16 %v5200
    %v6938 = vunpack.c.h.b16 %v5200
    %v6939 = vunpack.c.l.b16 %v5201
    %v6940 = vunpack.c.h.b16 %v5201
    %v6941 = vunpack.c.l.b16 %v5202
    %v6942 = vunpack.c.h.b16 %v5202
    %v6943 = vunpack.c.l.b16 %v5203
    %v6944 = vunpack.c.h.b16 %v5203
    %v6945 = vunpack.c.l.b16 %v5204
    %v6946 = vunpack.c.h.b16 %v5204
    %v6947 = vunpack.c.l.b16 %v5205
    %v6948 = vunpack.c.h.b16 %v5205
    %v6949 = vunpack.c.l.b16 %v5206
    %v6950 = vunpack.c.h.b16 %v5206
    %v6951 = vunpack.c.l.b16 %v5207
    %v6952 = vunpack.c.h.b16 %v5207
    %v6953 = vunpack.c.l.b16 %v5208
    %v6954 = vunpack.c.h.b16 %v5208
    %v6955 = vunpack.c.l.b16 %v5209
    %v6956 = vunpack.c.h.b16 %v5209
    %v6957 = vunpack.c.l.b16 %v5210
    %v6958 = vunpack.c.h.b16 %v5210
    %v6959 = vunpack.c.l.b16 %v5211
    %v6960 = vunpack.c.h.b16 %v5211
    %v6961 = vunpack.c.l.b16 %v5212
    %v6962 = vunpack.c.h.b16 %v5212
    %v6963 = vunpack.c.l.b16 %v5213
    %v6964 = vunpack.c.h.b16 %v5213
    %v6965 = vunpack.c.l.b16 %v5214
    %v6966 = vunpack.c.h.b16 %v5214
    %v6967 = vunpack.c.l.b16 %v5215
    %v6968 = vunpack.c.h.b16 %v5215
    %v6969 = vunpack.c.l.b16 %v5216
    %v6970 = vunpack.c.h.b16 %v5216
    %v6971 = vunpack.c.l.b16 %v5217
    %v6972 = vunpack.c.h.b16 %v5217
    %v6973 = vunpack.c.l.b16 %v5218
    %v6974 = vunpack.c.h.b16 %v5218
    %v6975 = vunpack.c.l.b16 %v5219
    %v6976 = vunpack.c.h.b16 %v5219
    %v6977 = vunpack.c.l.b16 %v5220
    %v6978 = vunpack.c.h.b16 %v5220
    %v6979 = vunpack.c.l.b16 %v5221
    %v6980 = vunpack.c.h.b16 %v5221
    %v6981 = vunpack.c.l.b16 %v5222
    %v6982 = vunpack.c.h.b16 %v5222
    %v6983 = vunpack.c.l.b16 %v5223
    %v6984 = vunpack.c.h.b16 %v5223
    %v6985 = vunpack.c.l.b16 %v5224
    %v6986 = vunpack.c.h.b16 %v5224
    %v6987 = vunpack.c.l.b16 %v5225
    %v6988 = vunpack.c.h.b16 %v5225
    %v6989 = vunpack.c.l.b16 %v5226
    %v6990 = vunpack.c.h.b16 %v5226
    %v6991 = vunpack.c.l.b16 %v5227
    %v6992 = vunpack.c.h.b16 %v5227
    %v6993 = vunpack.c.l.b16 %v5228
    %v6994 = vunpack.c.h.b16 %v5228
    %v6995 = vunpack.c.l.b16 %v5229
    %v6996 = vunpack.c.h.b16 %v5229
    %v6997 = vunpack.c.l.b16 %v5230
    %v6998 = vunpack.c.h.b16 %v5230
    %v6999 = vunpack.c.l.b16 %v5231
    %v7000 = vunpack.c.h.b16 %v5231
    %v7001 = vunpack.c.l.b16 %v5232
    %v7002 = vunpack.c.h.b16 %v5232
    %v7003 = vunpack.c.l.b16 %v5233
    %v7004 = vunpack.c.h.b16 %v5233
    %v7005 = vunpack.c.l.b16 %v5234
    %v7006 = vunpack.c.h.b16 %v5234
    %v7007 = vunpack.c.l.b16 %v5235
    %v7008 = vunpack.c.h.b16 %v5235
    %v7009 = vunpack.c.l.b16 %v5236
    %v7010 = vunpack.c.h.b16 %v5236
    %v7011 = vunpack.c.l.b16 %v5237
    %v7012 = vunpack.c.h.b16 %v5237
    %v7013 = vunpack.c.l.b16 %v5238
    %v7014 = vunpack.c.h.b16 %v5238
    %v7015 = vunpack.c.l.b16 %v5239
    %v7016 = vunpack.c.h.b16 %v5239
    %v7017 = vunpack.c.l.b16 %v5240
    %v7018 = vunpack.c.h.b16 %v5240
    %v7019 = vunpack.c.l.b16 %v5241
    %v7020 = vunpack.c.h.b16 %v5241
    %v7021 = vunpack.c.l.b16 %v5242
    %v7022 = vunpack.c.h.b16 %v5242
    %v7023 = vunpack.c.l.b16 %v5243
    %v7024 = vunpack.c.h.b16 %v5243
    %v7025 = vunpack.c.l.b16 %v5244
    %v7026 = vunpack.c.h.b16 %v5244
    %v7027 = vunpack.c.l.b16 %v5245
    %v7028 = vunpack.c.h.b16 %v5245
    %v7029 = vunpack.c.l.b16 %v5246
    %v7030 = vunpack.c.h.b16 %v5246
    %v7031 = vunpack.c.l.b16 %v5247
    %v7032 = vunpack.c.h.b16 %v5247
    %v7033 = vunpack.c.l.b16 %v5248
    %v7034 = vunpack.c.h.b16 %v5248
    %v7035 = vunpack.c.l.b16 %v5249
    %v7036 = vunpack.c.h.b16 %v5249
    %v7037 = vunpack.c.l.b16 %v5250
    %v7038 = vunpack.c.h.b16 %v5250
    %v7039 = vunpack.c.l.b16 %v5251
    %v7040 = vunpack.c.h.b16 %v5251
    %v7041 = vunpack.c.l.b16 %v5252
    %v7042 = vunpack.c.h.b16 %v5252
    %v7043 = vunpack.c.l.b16 %v5253
    %v7044 = vunpack.c.h.b16 %v5253
    %v7045 = vunpack.c.l.b16 %v5254
    %v7046 = vunpack.c.h.b16 %v5254
    %v7047 = vunpack.c.l.b16 %v5255
    %v7048 = vunpack.c.h.b16 %v5255
    %v7049 = vunpack.c.l.b16 %v5256
    %v7050 = vunpack.c.h.b16 %v5256
    %v7051 = vunpack.c.l.b16 %v5257
    %v7052 = vunpack.c.h.b16 %v5257
    %v7053 = vunpack.c.l.b16 %v5258
    %v7054 = vunpack.c.h.b16 %v5258
    %v7055 = vunpack.c.l.b16 %v5259
    %v7056 = vunpack.c.h.b16 %v5259
    %v7057 = vunpack.c.l.b16 %v5260
    %v7058 = vunpack.c.h.b16 %v5260
    %v7059 = vunpack.c.l.b16 %v5261
    %v7060 = vunpack.c.h.b16 %v5261
    %v7061 = vunpack.c.l.b16 %v5262
    %v7062 = vunpack.c.h.b16 %v5262
    %v7063 = vunpack.c.l.b16 %v5263
    %v7064 = vunpack.c.h.b16 %v5263
    %v7065 = vunpack.c.l.b16 %v5264
    %v7066 = vunpack.c.h.b16 %v5264
    %v7067 = vunpack.c.l.b16 %v5265
    %v7068 = vunpack.c.h.b16 %v5265
    %v7069 = vunpack.c.l.b16 %v5266
    %v7070 = vunpack.c.h.b16 %v5266
    %v7071 = vunpack.c.l.b16 %v5267
    %v7072 = vunpack.c.h.b16 %v5267
    %v7073 = vunpack.c.l.b16 %v5268
    %v7074 = vunpack.c.h.b16 %v5268
    %v7075 = vunpack.c.l.b16 %v5269
    %v7076 = vunpack.c.h.b16 %v5269
    %v7077 = vunpack.c.l.b16 %v5270
    %v7078 = vunpack.c.h.b16 %v5270
    %v7079 = vunpack.c.l.b16 %v5271
    %v7080 = vunpack.c.h.b16 %v5271
    %v7081 = vunpack.c.l.b16 %v5272
    %v7082 = vunpack.c.h.b16 %v5272
    %v7083 = vunpack.c.l.b16 %v5273
    %v7084 = vunpack.c.h.b16 %v5273
    %v7085 = vunpack.c.l.b16 %v5274
    %v7086 = vunpack.c.h.b16 %v5274
    %v7087 = vunpack.c.l.b16 %v5275
    %v7088 = vunpack.c.h.b16 %v5275
    %v7089 = vunpack.c.l.b16 %v5276
    %v7090 = vunpack.c.h.b16 %v5276
    %v7091 = vunpack.c.l.b16 %v5277
    %v7092 = vunpack.c.h.b16 %v5277
    %v7093 = vunpack.c.l.b16 %v5278
    %v7094 = vunpack.c.h.b16 %v5278
    %v7095 = vunpack.c.l.b16 %v5279
    %v7096 = vunpack.c.h.b16 %v5279
    %v7097 = vunpack.c.l.b16 %v5280
    %v7098 = vunpack.c.h.b16 %v5280
    %v7099 = vunpack.c.l.b16 %v5281
    %v7100 = vunpack.c.h.b16 %v5281
    %v7101 = vunpack.c.l.b16 %v5282
    %v7102 = vunpack.c.h.b16 %v5282
    %v7103 = vunpack.c.l.b16 %v5283
    %v7104 = vunpack.c.h.b16 %v5283
    %v7105 = vunpack.c.l.b16 %v5284
    %v7106 = vunpack.c.h.b16 %v5284
    %v7107 = vunpack.c.l.b16 %v5285
    %v7108 = vunpack.c.h.b16 %v5285
    %v7109 = vunpack.c.l.b16 %v5286
    %v7110 = vunpack.c.h.b16 %v5286
    %v7111 = vunpack.c.l.b16 %v5287
    %v7112 = vunpack.c.h.b16 %v5287
    %v7113 = vunpack.c.l.b16 %v5288
    %v7114 = vunpack.c.h.b16 %v5288
    %v7115 = vunpack.c.l.b16 %v5289
    %v7116 = vunpack.c.h.b16 %v5289
    %v7117 = vunpack.c.l.b16 %v5290
    %v7118 = vunpack.c.h.b16 %v5290
    %v7119 = vunpack.c.l.b16 %v5291
    %v7120 = vunpack.c.h.b16 %v5291
    %v7121 = vunpack.c.l.b16 %v5292
    %v7122 = vunpack.c.h.b16 %v5292
    %v7123 = vunpack.c.l.b16 %v5293
    %v7124 = vunpack.c.h.b16 %v5293
    %v7125 = vunpack.c.l.b16 %v5294
    %v7126 = vunpack.c.h.b16 %v5294
    %v7127 = vunpack.c.l.b16 %v5295
    %v7128 = vunpack.c.h.b16 %v5295
    %v7129 = vunpack.c.l.b16 %v5296
    %v7130 = vunpack.c.h.b16 %v5296
    %v7131 = vunpack.c.l.b16 %v5297
    %v7132 = vunpack.c.h.b16 %v5297
    %v7133 = vunpack.c.l.b16 %v5298
    %v7134 = vunpack.c.h.b16 %v5298
    %v7135 = vunpack.c.l.b16 %v5299
    %v7136 = vunpack.c.h.b16 %v5299
    %v7137 = vunpack.c.l.b16 %v5300
    %v7138 = vunpack.c.h.b16 %v5300
    %v7139 = vunpack.c.l.b16 %v5301
    %v7140 = vunpack.c.h.b16 %v5301
    %v7141 = vunpack.c.l.b16 %v5302
    %v7142 = vunpack.c.h.b16 %v5302
    %v7143 = vunpack.c.l.b16 %v5303
    %v7144 = vunpack.c.h.b16 %v5303
    %v7145 = vunpack.c.l.b16 %v5304
    %v7146 = vunpack.c.h.b16 %v5304
    %v7147 = vunpack.c.l.b16 %v5305
    %v7148 = vunpack.c.h.b16 %v5305
    %v7149 = vunpack.c.l.b16 %v5306
    %v7150 = vunpack.c.h.b16 %v5306
    %v7151 = vunpack.c.l.b16 %v5307
    %v7152 = vunpack.c.h.b16 %v5307
    %v7153 = vunpack.c.l.b16 %v5308
    %v7154 = vunpack.c.h.b16 %v5308
    %v7155 = vunpack.c.l.b16 %v5309
    %v7156 = vunpack.c.h.b16 %v5309
    %v7157 = vunpack.c.l.b16 %v5310
    %v7158 = vunpack.c.h.b16 %v5310
    %v7159 = vunpack.c.l.b16 %v5311
    %v7160 = vunpack.c.h.b16 %v5311
    %v7161 = vunpack.c.l.b16 %v5312
    %v7162 = vunpack.c.h.b16 %v5312
    %v7163 = vunpack.c.l.b16 %v5313
    %v7164 = vunpack.c.h.b16 %v5313
    %v7165 = vunpack.c.l.b16 %v5314
    %v7166 = vunpack.c.h.b16 %v5314
    %v7167 = vunpack.c.l.b16 %v5315
    %v7168 = vunpack.c.h.b16 %v5315
    %v7169 = vunpack.c.l.b16 %v5316
    %v7170 = vunpack.c.h.b16 %v5316
    %v7171 = vunpack.c.l.b16 %v5317
    %v7172 = vunpack.c.h.b16 %v5317
    %v7173 = vunpack.c.l.b16 %v5318
    %v7174 = vunpack.c.h.b16 %v5318
    %v7175 = vunpack.c.l.b16 %v5319
    %v7176 = vunpack.c.h.b16 %v5319
    %v7177 = vunpack.c.l.b16 %v5320
    %v7178 = vunpack.c.h.b16 %v5320
    %v7179 = vunpack.c.l.b16 %v5321
    %v7180 = vunpack.c.h.b16 %v5321
    %v7181 = vunpack.c.l.b16 %v5322
    %v7182 = vunpack.c.h.b16 %v5322
    %v7183 = vunpack.c.l.b16 %v5323
    %v7184 = vunpack.c.h.b16 %v5323
    %v7185 = vunpack.c.l.b16 %v5324
    %v7186 = vunpack.c.h.b16 %v5324
    %v7187 = vunpack.c.l.b16 %v5325
    %v7188 = vunpack.c.h.b16 %v5325
    %v7189 = vunpack.c.l.b16 %v5326
    %v7190 = vunpack.c.h.b16 %v5326
    %v7191 = vunpack.c.l.b16 %v5327
    %v7192 = vunpack.c.h.b16 %v5327
    %v7193 = vunpack.c.l.b16 %v5328
    %v7194 = vunpack.c.h.b16 %v5328
    %v7195 = vunpack.c.l.b16 %v5329
    %v7196 = vunpack.c.h.b16 %v5329
    %v7197 = vunpack.c.l.b16 %v5330
    %v7198 = vunpack.c.h.b16 %v5330
    %v7199 = vunpack.c.l.b16 %v5331
    %v7200 = vunpack.c.h.b16 %v5331
    %v7201 = vunpack.c.l.b16 %v5332
    %v7202 = vunpack.c.h.b16 %v5332
    %v7203 = vunpack.c.l.b16 %v5333
    %v7204 = vunpack.c.h.b16 %v5333
    %v7205 = vunpack.c.l.b16 %v5334
    %v7206 = vunpack.c.h.b16 %v5334
    %v7207 = vunpack.c.l.b16 %v5335
    %v7208 = vunpack.c.h.b16 %v5335
    %v7209 = vunpack.c.l.b16 %v5336
    %v7210 = vunpack.c.h.b16 %v5336
    %v7211 = vunpack.c.l.b16 %v5337
    %v7212 = vunpack.c.h.b16 %v5337
    %v7213 = vunpack.c.l.b16 %v5338
    %v7214 = vunpack.c.h.b16 %v5338
    %v7215 = vunpack.c.l.b16 %v5339
    %v7216 = vunpack.c.h.b16 %v5339
    %v7217 = vunpack.c.l.b16 %v5340
    %v7218 = vunpack.c.h.b16 %v5340
    %v7219 = vunpack.c.l.b16 %v5341
    %v7220 = vunpack.c.h.b16 %v5341
    %v7221 = vunpack.c.l.b16 %v5342
    %v7222 = vunpack.c.h.b16 %v5342
    %v7223 = vunpack.c.l.b16 %v5343
    %v7224 = vunpack.c.h.b16 %v5343
    %v7225 = vunpack.c.l.b16 %v5344
    %v7226 = vunpack.c.h.b16 %v5344
    %v7227 = vunpack.c.l.b16 %v5345
    %v7228 = vunpack.c.h.b16 %v5345
    %v7229 = vunpack.c.l.b16 %v5346
    %v7230 = vunpack.c.h.b16 %v5346
    %v7231 = vunpack.c.l.b16 %v5347
    %v7232 = vunpack.c.h.b16 %v5347
    %v7233 = vunpack.c.l.b16 %v5348
    %v7234 = vunpack.c.h.b16 %v5348
    %v7235 = vunpack.c.l.b16 %v5349
    %v7236 = vunpack.c.h.b16 %v5349
    %v7237 = vunpack.c.l.b16 %v5350
    %v7238 = vunpack.c.h.b16 %v5350
    %v7239 = vunpack.c.l.b16 %v5351
    %v7240 = vunpack.c.h.b16 %v5351
    %v7241 = vunpack.c.l.b16 %v5352
    %v7242 = vunpack.c.h.b16 %v5352
    %v7243 = vunpack.c.l.b16 %v5353
    %v7244 = vunpack.c.h.b16 %v5353
    %v7245 = vunpack.c.l.b16 %v5354
    %v7246 = vunpack.c.h.b16 %v5354
    %v7247 = vunpack.c.l.b16 %v5355
    %v7248 = vunpack.c.h.b16 %v5355
    %v7249 = vunpack.c.l.b16 %v5356
    %v7250 = vunpack.c.h.b16 %v5356
    %v7251 = vunpack.c.l.b16 %v5357
    %v7252 = vunpack.c.h.b16 %v5357
    %v7253 = vunpack.c.l.b16 %v5358
    %v7254 = vunpack.c.h.b16 %v5358
    %v7255 = vunpack.c.l.b16 %v5359
    %v7256 = vunpack.c.h.b16 %v5359
    %v7257 = vunpack.c.l.b16 %v5360
    %v7258 = vunpack.c.h.b16 %v5360
    %v7259 = vunpack.c.l.b16 %v5361
    %v7260 = vunpack.c.h.b16 %v5361
    %v7261 = vunpack.c.l.b16 %v5362
    %v7262 = vunpack.c.h.b16 %v5362
    %v7263 = vunpack.c.l.b16 %v5363
    %v7264 = vunpack.c.h.b16 %v5363
    %v7265 = vunpack.c.l.b16 %v5364
    %v7266 = vunpack.c.h.b16 %v5364
    %v7267 = vunpack.c.l.b16 %v5365
    %v7268 = vunpack.c.h.b16 %v5365
    %v7269 = vunpack.c.l.b16 %v5366
    %v7270 = vunpack.c.h.b16 %v5366
    %v7271 = vunpack.c.l.b16 %v5367
    %v7272 = vunpack.c.h.b16 %v5367
    %v7273 = vunpack.c.l.b16 %v5368
    %v7274 = vunpack.c.h.b16 %v5368
    %v7275 = vunpack.c.l.b16 %v5369
    %v7276 = vunpack.c.h.b16 %v5369
    %v7277 = vunpack.c.l.b16 %v5370
    %v7278 = vunpack.c.h.b16 %v5370
    %v7279 = vunpack.c.l.b16 %v5371
    %v7280 = vunpack.c.h.b16 %v5371
    %v7281 = vunpack.c.l.b16 %v5372
    %v7282 = vunpack.c.h.b16 %v5372
    %v7283 = vunpack.c.l.b16 %v5373
    %v7284 = vunpack.c.h.b16 %v5373
    %v7285 = vunpack.c.l.b16 %v5374
    %v7286 = vunpack.c.h.b16 %v5374
    %v7287 = vunpack.c.l.b16 %v5375
    %v7288 = vunpack.c.h.b16 %v5375
    %v7289 = vunpack.c.l.b16 %v5376
    %v7290 = vunpack.c.h.b16 %v5376
    %v7291 = vunpack.c.l.b16 %v5377
    %v7292 = vunpack.c.h.b16 %v5377
    %v7293 = vunpack.c.l.b16 %v5378
    %v7294 = vunpack.c.h.b16 %v5378
    %v7295 = vunpack.c.l.b16 %v5379
    %v7296 = vunpack.c.h.b16 %v5379
    %v7297 = vunpack.c.l.b16 %v5380
    %v7298 = vunpack.c.h.b16 %v5380
    %v7299 = vunpack.c.l.b16 %v5381
    %v7300 = vunpack.c.h.b16 %v5381
    %v7301 = vunpack.c.l.b16 %v5382
    %v7302 = vunpack.c.h.b16 %v5382
    %v7303 = vunpack.c.l.b16 %v5383
    %v7304 = vunpack.c.h.b16 %v5383
    %v7305 = vunpack.c.l.b16 %v5384
    %v7306 = vunpack.c.h.b16 %v5384
    %v7307 = vunpack.c.l.b16 %v5385
    %v7308 = vunpack.c.h.b16 %v5385
    %v7309 = vunpack.c.l.b16 %v5386
    %v7310 = vunpack.c.h.b16 %v5386
    %v7311 = vunpack.c.l.b16 %v5387
    %v7312 = vunpack.c.h.b16 %v5387
    %v7313 = vunpack.c.l.b16 %v5388
    %v7314 = vunpack.c.h.b16 %v5388
    %v7315 = vunpack.c.l.b16 %v5389
    %v7316 = vunpack.c.h.b16 %v5389
    %v7317 = vunpack.c.l.b16 %v5390
    %v7318 = vunpack.c.h.b16 %v5390
    %v7319 = vunpack.c.l.b16 %v5391
    %v7320 = vunpack.c.h.b16 %v5391
    %v7321 = vunpack.c.l.b16 %v5392
    %v7322 = vunpack.c.h.b16 %v5392
    %v7323 = vunpack.c.l.b16 %v5393
    %v7324 = vunpack.c.h.b16 %v5393
    %v7325 = vunpack.c.l.b16 %v5394
    %v7326 = vunpack.c.h.b16 %v5394
    %v7327 = vunpack.c.l.b16 %v5395
    %v7328 = vunpack.c.h.b16 %v5395
    %v7329 = vunpack.c.l.b16 %v5396
    %v7330 = vunpack.c.h.b16 %v5396
    %v7331 = vunpack.c.l.b16 %v5397
    %v7332 = vunpack.c.h.b16 %v5397
    %v7333 = vunpack.c.l.b16 %v5398
    %v7334 = vunpack.c.h.b16 %v5398
    %v7335 = vunpack.c.l.b16 %v5399
    %v7336 = vunpack.c.h.b16 %v5399
    %v7337 = vunpack.c.l.b16 %v5400
    %v7338 = vunpack.c.h.b16 %v5400
    %v7339 = vunpack.c.l.b16 %v5401
    %v7340 = vunpack.c.h.b16 %v5401
    %v7341 = vunpack.c.l.b16 %v5402
    %v7342 = vunpack.c.h.b16 %v5402
    %v7343 = vunpack.c.l.b16 %v5403
    %v7344 = vunpack.c.h.b16 %v5403
    %v7345 = vunpack.c.l.b16 %v5404
    %v7346 = vunpack.c.h.b16 %v5404
    %v7347 = vunpack.c.l.b16 %v5405
    %v7348 = vunpack.c.h.b16 %v5405
    %v7349 = vunpack.c.l.b16 %v5406
    %v7350 = vunpack.c.h.b16 %v5406
    %v7351 = vunpack.c.l.b16 %v5407
    %v7352 = vunpack.c.h.b16 %v5407
    %v7353 = vunpack.c.l.b16 %v5408
    %v7354 = vunpack.c.h.b16 %v5408
    %v7355 = vunpack.c.l.b16 %v5409
    %v7356 = vunpack.c.h.b16 %v5409
    %v7357 = vunpack.c.l.b16 %v5410
    %v7358 = vunpack.c.h.b16 %v5410
    %v7359 = vunpack.c.l.b16 %v5411
    %v7360 = vunpack.c.h.b16 %v5411
    %v7361 = vunpack.c.l.b16 %v5412
    %v7362 = vunpack.c.h.b16 %v5412
    %v7363 = vunpack.c.l.b16 %v5413
    %v7364 = vunpack.c.h.b16 %v5413
    %v7365 = vunpack.c.l.b16 %v5414
    %v7366 = vunpack.c.h.b16 %v5414
    %v7367 = vunpack.c.l.b16 %v5415
    %v7368 = vunpack.c.h.b16 %v5415
    %v7369 = vunpack.c.l.b16 %v5416
    %v7370 = vunpack.c.h.b16 %v5416
    %v7371 = vunpack.c.l.b16 %v5417
    %v7372 = vunpack.c.h.b16 %v5417
    %v7373 = vunpack.c.l.b16 %v5418
    %v7374 = vunpack.c.h.b16 %v5418
    %v7375 = vunpack.c.l.b16 %v5419
    %v7376 = vunpack.c.h.b16 %v5419
    %v7377 = vunpack.c.l.b16 %v5420
    %v7378 = vunpack.c.h.b16 %v5420
    %v7379 = vunpack.c.l.b16 %v5421
    %v7380 = vunpack.c.h.b16 %v5421
    %v7381 = vunpack.c.l.b16 %v5422
    %v7382 = vunpack.c.h.b16 %v5422
    %v7383 = vunpack.c.l.b16 %v5423
    %v7384 = vunpack.c.h.b16 %v5423
    %v7385 = vunpack.c.l.b16 %v5424
    %v7386 = vunpack.c.h.b16 %v5424
    %v7387 = vunpack.c.l.b16 %v5425
    %v7388 = vunpack.c.h.b16 %v5425
    %v7389 = vunpack.c.l.b16 %v5426
    %v7390 = vunpack.c.h.b16 %v5426
    %v7391 = vunpack.c.l.b16 %v5427
    %v7392 = vunpack.c.h.b16 %v5427
    %v7393 = vunpack.c.l.b16 %v5428
    %v7394 = vunpack.c.h.b16 %v5428
    %v7395 = vunpack.c.l.b16 %v5429
    %v7396 = vunpack.c.h.b16 %v5429
    %v7397 = vunpack.c.l.b16 %v5430
    %v7398 = vunpack.c.h.b16 %v5430
    %v7399 = vunpack.c.l.b16 %v5431
    %v7400 = vunpack.c.h.b16 %v5431
    %v7401 = vunpack.c.l.b16 %v5432
    %v7402 = vunpack.c.h.b16 %v5432
    %v7403 = vunpack.c.l.b16 %v5433
    %v7404 = vunpack.c.h.b16 %v5433
    %v7405 = vunpack.c.l.b16 %v5434
    %v7406 = vunpack.c.h.b16 %v5434
    %v7407 = vunpack.c.l.b16 %v5435
    %v7408 = vunpack.c.h.b16 %v5435
    %v7409 = vunpack.c.l.b16 %v5436
    %v7410 = vunpack.c.h.b16 %v5436
    %v7411 = vunpack.c.l.b16 %v5437
    %v7412 = vunpack.c.h.b16 %v5437
    %v7413 = vunpack.c.l.b16 %v5438
    %v7414 = vunpack.c.h.b16 %v5438
    %v7415 = vunpack.c.l.b16 %v5439
    %v7416 = vunpack.c.h.b16 %v5439
    %v7417 = vunpack.c.l.b16 %v5440
    %v7418 = vunpack.c.h.b16 %v5440
    %v7419 = vunpack.c.l.b16 %v5441
    %v7420 = vunpack.c.h.b16 %v5441
    %v7421 = vunpack.c.l.b16 %v5442
    %v7422 = vunpack.c.h.b16 %v5442
    %v7423 = vunpack.c.l.b16 %v5443
    %v7424 = vunpack.c.h.b16 %v5443
    %v7425 = vunpack.c.l.b16 %v5444
    %v7426 = vunpack.c.h.b16 %v5444
    %v7427 = vunpack.c.l.b16 %v5445
    %v7428 = vunpack.c.h.b16 %v5445
    %v7429 = vunpack.c.l.b16 %v5446
    %v7430 = vunpack.c.h.b16 %v5446
    %v7431 = vunpack.c.l.b16 %v5447
    %v7432 = vunpack.c.h.b16 %v5447
    %v7433 = vunpack.c.l.b16 %v5448
    %v7434 = vunpack.c.h.b16 %v5448
    %v7435 = vunpack.c.l.b16 %v5449
    %v7436 = vunpack.c.h.b16 %v5449
    %v7437 = vunpack.c.l.b16 %v5450
    %v7438 = vunpack.c.h.b16 %v5450
    %v7439 = vunpack.c.l.b16 %v5451
    %v7440 = vunpack.c.h.b16 %v5451
    %v7441 = vunpack.c.l.b16 %v5452
    %v7442 = vunpack.c.h.b16 %v5452
    %v7443 = vunpack.c.l.b16 %v5453
    %v7444 = vunpack.c.h.b16 %v5453
    %v7445 = vunpack.c.l.b16 %v5454
    %v7446 = vunpack.c.h.b16 %v5454
    %v7447 = vunpack.c.l.b16 %v5455
    %v7448 = vunpack.c.h.b16 %v5455
    %v7449 = vunpack.c.l.b16 %v5456
    %v7450 = vunpack.c.h.b16 %v5456
    %v7451 = vunpack.c.l.b16 %v5457
    %v7452 = vunpack.c.h.b16 %v5457
    %v7453 = vunpack.c.l.b16 %v5458
    %v7454 = vunpack.c.h.b16 %v5458
    %v7455 = vunpack.c.l.b16 %v5459
    %v7456 = vunpack.c.h.b16 %v5459
    %v7457 = vunpack.c.l.b16 %v5460
    %v7458 = vunpack.c.h.b16 %v5460
    %v7459 = vunpack.c.l.b16 %v5461
    %v7460 = vunpack.c.h.b16 %v5461
    %v7461 = vunpack.c.l.b16 %v5462
    %v7462 = vunpack.c.h.b16 %v5462
    %v7463 = vunpack.c.l.b16 %v5463
    %v7464 = vunpack.c.h.b16 %v5463
    %v7465 = vunpack.c.l.b16 %v5464
    %v7466 = vunpack.c.h.b16 %v5464
    %v7467 = vunpack.c.l.b16 %v5465
    %v7468 = vunpack.c.h.b16 %v5465
    %v7469 = vunpack.c.l.b16 %v5466
    %v7470 = vunpack.c.h.b16 %v5466
    %v7471 = vunpack.c.l.b16 %v5467
    %v7472 = vunpack.c.h.b16 %v5467
    %v7473 = vunpack.c.l.b16 %v5468
    %v7474 = vunpack.c.h.b16 %v5468
    %v7475 = vunpack.c.l.b16 %v5469
    %v7476 = vunpack.c.h.b16 %v5469
    %v7477 = vunpack.c.l.b16 %v5470
    %v7478 = vunpack.c.h.b16 %v5470
    %v7479 = vunpack.c.l.b16 %v5471
    %v7480 = vunpack.c.h.b16 %v5471
    %v7481 = vunpack.c.l.b16 %v5472
    %v7482 = vunpack.c.h.b16 %v5472
    %v7483 = vunpack.c.l.b16 %v5473
    %v7484 = vunpack.c.h.b16 %v5473
    %v7485 = vunpack.c.l.b16 %v5474
    %v7486 = vunpack.c.h.b16 %v5474
    %v7487 = vunpack.c.l.b16 %v5475
    %v7488 = vunpack.c.h.b16 %v5475
    %v7489 = vunpack.c.l.b16 %v5476
    %v7490 = vunpack.c.h.b16 %v5476
    %v7491 = vunpack.c.l.b16 %v5477
    %v7492 = vunpack.c.h.b16 %v5477
    %v7493 = vunpack.c.l.b16 %v5478
    %v7494 = vunpack.c.h.b16 %v5478
    %v7495 = vunpack.c.l.b16 %v5479
    %v7496 = vunpack.c.h.b16 %v5479
    %v7497 = vunpack.c.l.b16 %v5480
    %v7498 = vunpack.c.h.b16 %v5480
    %v7499 = vunpack.c.l.b16 %v5481
    %v7500 = vunpack.c.h.b16 %v5481
    %v7501 = vunpack.c.l.b16 %v5482
    %v7502 = vunpack.c.h.b16 %v5482
    %v7503 = vunpack.c.l.b16 %v5483
    %v7504 = vunpack.c.h.b16 %v5483
    %v7505 = vunpack.c.l.b16 %v5484
    %v7506 = vunpack.c.h.b16 %v5484
    %v7507 = vunpack.c.l.b16 %v5485
    %v7508 = vunpack.c.h.b16 %v5485
    %v7509 = vunpack.c.l.b16 %v5486
    %v7510 = vunpack.c.h.b16 %v5486
    %v7511 = vunpack.c.l.b16 %v5487
    %v7512 = vunpack.c.h.b16 %v5487
    %v7513 = vunpack.c.l.b16 %v5488
    %v7514 = vunpack.c.h.b16 %v5488
    %v7515 = vunpack.c.l.b16 %v5489
    %v7516 = vunpack.c.h.b16 %v5489
    %v7517 = vunpack.c.l.b16 %v5490
    %v7518 = vunpack.c.h.b16 %v5490
    %v7519 = vunpack.c.l.b16 %v5491
    %v7520 = vunpack.c.h.b16 %v5491
    %v7521 = vunpack.c.l.b16 %v5492
    %v7522 = vunpack.c.h.b16 %v5492
    %v7523 = vunpack.c.l.b16 %v5493
    %v7524 = vunpack.c.h.b16 %v5493
    %v7525 = vunpack.c.l.b16 %v5494
    %v7526 = vunpack.c.h.b16 %v5494
    %v7527 = vunpack.c.l.b16 %v5495
    %v7528 = vunpack.c.h.b16 %v5495
    %v7529 = vunpack.c.l.b16 %v5496
    %v7530 = vunpack.c.h.b16 %v5496
    %v7531 = vunpack.c.l.b16 %v5497
    %v7532 = vunpack.c.h.b16 %v5497
    %v7533 = vunpack.c.l.b16 %v5498
    %v7534 = vunpack.c.h.b16 %v5498
    %v7535 = vunpack.c.l.b16 %v5499
    %v7536 = vunpack.c.h.b16 %v5499
    %v7537 = vunpack.c.l.b16 %v5500
    %v7538 = vunpack.c.h.b16 %v5500
    %v7539 = vunpack.c.l.b16 %v5501
    %v7540 = vunpack.c.h.b16 %v5501
    %v7541 = vunpack.c.l.b16 %v5502
    %v7542 = vunpack.c.h.b16 %v5502
    %v7543 = vunpack.c.l.b16 %v5503
    %v7544 = vunpack.c.h.b16 %v5503
    %v7545 = vunpack.c.l.b16 %v5504
    %v7546 = vunpack.c.h.b16 %v5504
    %v7547 = vunpack.c.l.b16 %v5505
    %v7548 = vunpack.c.h.b16 %v5505
    %v7549 = vunpack.c.l.b16 %v5506
    %v7550 = vunpack.c.h.b16 %v5506
    %v7551 = vunpack.c.l.b16 %v5507
    %v7552 = vunpack.c.h.b16 %v5507
    %v7553 = vunpack.c.l.b16 %v5508
    %v7554 = vunpack.c.h.b16 %v5508
    %v7555 = vunpack.c.l.b16 %v5509
    %v7556 = vunpack.c.h.b16 %v5509
    %v7557 = vunpack.c.l.b16 %v5510
    %v7558 = vunpack.c.h.b16 %v5510
    %v7559 = vunpack.c.l.b16 %v5511
    %v7560 = vunpack.c.h.b16 %v5511
    %v7561 = vunpack.c.l.b16 %v5512
    %v7562 = vunpack.c.h.b16 %v5512
    %v7563 = vunpack.c.l.b16 %v5513
    %v7564 = vunpack.c.h.b16 %v5513
    %v7565 = vunpack.c.l.b16 %v5514
    %v7566 = vunpack.c.h.b16 %v5514
    %v7567 = vunpack.c.l.b16 %v5515
    %v7568 = vunpack.c.h.b16 %v5515
    %v7569 = vunpack.c.l.b16 %v5516
    %v7570 = vunpack.c.h.b16 %v5516
    %v7571 = vunpack.c.l.b16 %v5517
    %v7572 = vunpack.c.h.b16 %v5517
    %v7573 = vunpack.c.l.b16 %v5518
    %v7574 = vunpack.c.h.b16 %v5518
    %v7575 = vunpack.c.l.b16 %v5519
    %v7576 = vunpack.c.h.b16 %v5519
    %v7577 = vunpack.c.l.b16 %v5520
    %v7578 = vunpack.c.h.b16 %v5520
    %v7579 = vunpack.c.l.b16 %v5521
    %v7580 = vunpack.c.h.b16 %v5521
    %v7581 = vunpack.c.l.b16 %v5522
    %v7582 = vunpack.c.h.b16 %v5522
    %v7583 = vunpack.c.l.b16 %v5523
    %v7584 = vunpack.c.h.b16 %v5523
    %v7585 = vunpack.c.l.b16 %v5524
    %v7586 = vunpack.c.h.b16 %v5524
    %v7587 = vunpack.c.l.b16 %v5525
    %v7588 = vunpack.c.h.b16 %v5525
    %v7589 = vunpack.c.l.b16 %v5526
    %v7590 = vunpack.c.h.b16 %v5526
    %v7591 = vunpack.c.l.b16 %v5527
    %v7592 = vunpack.c.h.b16 %v5527
    %v7593 = vunpack.c.l.b16 %v5528
    %v7594 = vunpack.c.h.b16 %v5528
    %v7595 = vunpack.c.l.b16 %v5529
    %v7596 = vunpack.c.h.b16 %v5529
    %v7597 = vunpack.c.l.b16 %v5530
    %v7598 = vunpack.c.h.b16 %v5530
    %v7599 = vunpack.c.l.b16 %v5531
    %v7600 = vunpack.c.h.b16 %v5531
    %v7601 = vunpack.c.l.b16 %v5532
    %v7602 = vunpack.c.h.b16 %v5532
    %v7603 = vunpack.c.l.b16 %v5533
    %v7604 = vunpack.c.h.b16 %v5533
    %v7605 = vunpack.c.l.b16 %v5534
    %v7606 = vunpack.c.h.b16 %v5534
    %v7607 = vunpack.c.l.b16 %v5535
    %v7608 = vunpack.c.h.b16 %v5535
    %v7609 = vunpack.c.l.b16 %v5536
    %v7610 = vunpack.c.h.b16 %v5536
    %v7611 = vunpack.c.l.b16 %v5537
    %v7612 = vunpack.c.h.b16 %v5537
    %v7613 = vunpack.c.l.b16 %v5538
    %v7614 = vunpack.c.h.b16 %v5538
    %v7615 = vunpack.c.l.b16 %v5539
    %v7616 = vunpack.c.h.b16 %v5539
    %v7617 = vunpack.c.l.b16 %v5540
    %v7618 = vunpack.c.h.b16 %v5540
    %v7619 = vunpack.c.l.b16 %v5541
    %v7620 = vunpack.c.h.b16 %v5541
    %v7621 = vunpack.c.l.b16 %v5542
    %v7622 = vunpack.c.h.b16 %v5542
    %v7623 = vunpack.c.l.b16 %v5543
    %v7624 = vunpack.c.h.b16 %v5543
    %v7625 = vunpack.c.l.b16 %v5544
    %v7626 = vunpack.c.h.b16 %v5544
    %v7627 = vunpack.c.l.b16 %v5545
    %v7628 = vunpack.c.h.b16 %v5545
    %v7629 = vunpack.c.l.b16 %v5546
    %v7630 = vunpack.c.h.b16 %v5546
    %v7631 = vunpack.c.l.b16 %v5547
    %v7632 = vunpack.c.h.b16 %v5547
    %v7633 = vunpack.c.l.b16 %v5548
    %v7634 = vunpack.c.h.b16 %v5548
    %v7635 = vunpack.c.l.b16 %v5549
    %v7636 = vunpack.c.h.b16 %v5549
    %v7637 = vunpack.c.l.b16 %v5550
    %v7638 = vunpack.c.h.b16 %v5550
    %v7639 = vunpack.c.l.b16 %v5551
    %v7640 = vunpack.c.h.b16 %v5551
    %v7641 = vunpack.c.l.b16 %v5552
    %v7642 = vunpack.c.h.b16 %v5552
    %v7643 = vunpack.c.l.b16 %v5553
    %v7644 = vunpack.c.h.b16 %v5553
    %v7645 = vunpack.c.l.b16 %v5554
    %v7646 = vunpack.c.h.b16 %v5554
    %v7647 = vunpack.c.l.b16 %v5555
    %v7648 = vunpack.c.h.b16 %v5555
    %v7649 = vunpack.c.l.b16 %v5556
    %v7650 = vunpack.c.h.b16 %v5556
    %v7651 = vunpack.c.l.b16 %v5557
    %v7652 = vunpack.c.h.b16 %v5557
    %v7653 = vunpack.c.l.b16 %v5558
    %v7654 = vunpack.c.h.b16 %v5558
    %v7655 = vunpack.c.l.b16 %v5559
    %v7656 = vunpack.c.h.b16 %v5559
    %v7657 = vunpack.c.l.b16 %v5560
    %v7658 = vunpack.c.h.b16 %v5560
    %v7659 = vunpack.c.l.b16 %v5561
    %v7660 = vunpack.c.h.b16 %v5561
    %v7661 = vunpack.c.l.b16 %v5562
    %v7662 = vunpack.c.h.b16 %v5562
    %v7663 = vunpack.c.l.b16 %v5563
    %v7664 = vunpack.c.h.b16 %v5563
    %v7665 = vunpack.c.l.b16 %v5564
    %v7666 = vunpack.c.h.b16 %v5564
    %v7667 = vunpack.c.l.b16 %v5565
    %v7668 = vunpack.c.h.b16 %v5565
    %v7669 = vunpack.c.l.b16 %v5566
    %v7670 = vunpack.c.h.b16 %v5566
    %v7671 = vunpack.c.l.b16 %v5567
    %v7672 = vunpack.c.h.b16 %v5567
    %v7673 = vunpack.c.l.b16 %v5568
    %v7674 = vunpack.c.h.b16 %v5568
    %v7675 = vunpack.c.l.b16 %v5569
    %v7676 = vunpack.c.h.b16 %v5569
    %v7677 = vunpack.c.l.b16 %v5570
    %v7678 = vunpack.c.h.b16 %v5570
    %v7679 = vunpack.c.l.b16 %v5571
    %v7680 = vunpack.c.h.b16 %v5571
    %v7681 = vunpack.c.l.b16 %v5572
    %v7682 = vunpack.c.h.b16 %v5572
    %v7683 = vunpack.c.l.b16 %v5573
    %v7684 = vunpack.c.h.b16 %v5573
    %v7685 = vunpack.c.l.b16 %v5574
    %v7686 = vunpack.c.h.b16 %v5574
    %v7687 = vunpack.c.l.b16 %v5575
    %v7688 = vunpack.c.h.b16 %v5575
    %v7689 = vunpack.c.l.b16 %v5576
    %v7690 = vunpack.c.h.b16 %v5576
    %v7691 = vunpack.c.l.b16 %v5577
    %v7692 = vunpack.c.h.b16 %v5577
    %v7693 = vunpack.c.l.b16 %v5578
    %v7694 = vunpack.c.h.b16 %v5578
    %v7695 = vunpack.c.l.b16 %v5579
    %v7696 = vunpack.c.h.b16 %v5579
    %v7697 = vunpack.c.l.b16 %v5580
    %v7698 = vunpack.c.h.b16 %v5580
    %v7699 = vunpack.c.l.b16 %v5581
    %v7700 = vunpack.c.h.b16 %v5581
    %v7701 = vunpack.c.l.b16 %v5582
    %v7702 = vunpack.c.h.b16 %v5582
    %v7703 = vunpack.c.l.b16 %v5583
    %v7704 = vunpack.c.h.b16 %v5583
    %v7705 = vunpack.c.l.b16 %v5584
    %v7706 = vunpack.c.h.b16 %v5584
    %v7707 = vunpack.c.l.b16 %v5585
    %v7708 = vunpack.c.h.b16 %v5585
    %v7709 = vunpack.c.l.b16 %v5586
    %v7710 = vunpack.c.h.b16 %v5586
    %v7711 = vunpack.c.l.b16 %v5587
    %v7712 = vunpack.c.h.b16 %v5587
    %v7713 = vunpack.c.l.b16 %v5588
    %v7714 = vunpack.c.h.b16 %v5588
    %v7715 = vunpack.c.l.b16 %v5589
    %v7716 = vunpack.c.h.b16 %v5589
    %v7717 = vunpack.c.l.b16 %v5590
    %v7718 = vunpack.c.h.b16 %v5590
    %v7719 = vunpack.c.l.b16 %v5591
    %v7720 = vunpack.c.h.b16 %v5591
    %v7721 = vunpack.c.l.b16 %v5592
    %v7722 = vunpack.c.h.b16 %v5592
    %v7723 = vunpack.c.l.b16 %v5593
    %v7724 = vunpack.c.h.b16 %v5593
    %v7725 = vunpack.c.l.b16 %v5594
    %v7726 = vunpack.c.h.b16 %v5594
    %v7727 = vunpack.c.l.b16 %v5595
    %v7728 = vunpack.c.h.b16 %v5595
    %v7729 = vunpack.c.l.b16 %v5596
    %v7730 = vunpack.c.h.b16 %v5596
    %v7731 = vunpack.c.l.b16 %v5597
    %v7732 = vunpack.c.h.b16 %v5597
    %v7733 = vunpack.c.l.b16 %v5598
    %v7734 = vunpack.c.h.b16 %v5598
    %v7735 = vunpack.c.l.b16 %v5599
    %v7736 = vunpack.c.h.b16 %v5599
    %v7737 = vunpack.c.l.b16 %v5600
    %v7738 = vunpack.c.h.b16 %v5600
    %v7739 = vunpack.c.l.b16 %v5601
    %v7740 = vunpack.c.h.b16 %v5601
    %v7741 = vunpack.c.l.b16 %v5602
    %v7742 = vunpack.c.h.b16 %v5602
    %v7743 = vunpack.c.l.b16 %v5603
    %v7744 = vunpack.c.h.b16 %v5603
    %v7745 = vunpack.c.l.b16 %v5604
    %v7746 = vunpack.c.h.b16 %v5604
    %v7747 = vunpack.c.l.b16 %v5605
    %v7748 = vunpack.c.h.b16 %v5605
    %v7749 = vunpack.c.l.b16 %v5606
    %v7750 = vunpack.c.h.b16 %v5606
    %v7751 = vunpack.c.l.b16 %v5607
    %v7752 = vunpack.c.h.b16 %v5607
    %v7753 = vunpack.c.l.b16 %v5608
    %v7754 = vunpack.c.h.b16 %v5608
    %v7755 = vunpack.c.l.b16 %v5609
    %v7756 = vunpack.c.h.b16 %v5609
    %v7757 = vunpack.c.l.b16 %v5610
    %v7758 = vunpack.c.h.b16 %v5610
    %v7759 = vunpack.c.l.b16 %v5611
    %v7760 = vunpack.c.h.b16 %v5611
    %v7761 = vunpack.c.l.b16 %v5612
    %v7762 = vunpack.c.h.b16 %v5612
    %v7763 = vunpack.c.l.b16 %v5613
    %v7764 = vunpack.c.h.b16 %v5613
    %v7765 = vunpack.c.l.b16 %v5614
    %v7766 = vunpack.c.h.b16 %v5614
    %v7767 = vunpack.c.l.b16 %v5615
    %v7768 = vunpack.c.h.b16 %v5615
    %v7769 = vunpack.c.l.b16 %v5616
    %v7770 = vunpack.c.h.b16 %v5616
    %v7771 = vunpack.c.l.b16 %v5617
    %v7772 = vunpack.c.h.b16 %v5617
    %v7773 = vunpack.c.l.b16 %v5618
    %v7774 = vunpack.c.h.b16 %v5618
    %v7775 = vunpack.c.l.b16 %v5619
    %v7776 = vunpack.c.h.b16 %v5619
    %v7777 = vunpack.c.l.b16 %v5620
    %v7778 = vunpack.c.h.b16 %v5620
    %v7779 = vunpack.c.l.b16 %v5621
    %v7780 = vunpack.c.h.b16 %v5621
    %v7781 = vunpack.c.l.b16 %v5622
    %v7782 = vunpack.c.h.b16 %v5622
    %v7783 = vunpack.c.l.b16 %v5623
    %v7784 = vunpack.c.h.b16 %v5623
    %v7785 = vunpack.c.l.b16 %v5624
    %v7786 = vunpack.c.h.b16 %v5624
    %v7787 = vunpack.c.l.b16 %v5625
    %v7788 = vunpack.c.h.b16 %v5625
    %v7789 = vunpack.c.l.b16 %v5626
    %v7790 = vunpack.c.h.b16 %v5626
    %v7791 = vunpack.c.l.b16 %v5627
    %v7792 = vunpack.c.h.b16 %v5627
    %v7793 = vunpack.c.l.b16 %v5628
    %v7794 = vunpack.c.h.b16 %v5628
    %v7795 = vunpack.c.l.b16 %v5629
    %v7796 = vunpack.c.h.b16 %v5629
    %v7797 = vunpack.c.l.b16 %v5630
    %v7798 = vunpack.c.h.b16 %v5630
    %v7799 = vunpack.c.l.b16 %v5631
    %v7800 = vunpack.c.h.b16 %v5631
    %v7801 = vunpack.c.l.b16 %v5632
    %v7802 = vunpack.c.h.b16 %v5632
    %v7803 = vunpack.c.l.b16 %v5633
    %v7804 = vunpack.c.h.b16 %v5633
    %v7805 = vunpack.c.l.b16 %v5634
    %v7806 = vunpack.c.h.b16 %v5634
    %v7807 = vunpack.c.l.b16 %v5635
    %v7808 = vunpack.c.h.b16 %v5635
    %v7809 = vunpack.c.l.b16 %v5636
    %v7810 = vunpack.c.h.b16 %v5636
    %v7811 = vunpack.c.l.b16 %v5637
    %v7812 = vunpack.c.h.b16 %v5637
    %v7813 = vunpack.c.l.b16 %v5638
    %v7814 = vunpack.c.h.b16 %v5638
    %v7815 = vunpack.c.l.b16 %v5639
    %v7816 = vunpack.c.h.b16 %v5639
    %v7817 = vunpack.c.l.b16 %v5640
    %v7818 = vunpack.c.h.b16 %v5640
    %v7819 = vunpack.c.l.b16 %v5641
    %v7820 = vunpack.c.h.b16 %v5641
    %v7821 = vunpack.c.l.b16 %v5642
    %v7822 = vunpack.c.h.b16 %v5642
    %v7823 = vunpack.c.l.b16 %v5643
    %v7824 = vunpack.c.h.b16 %v5643
    %v7825 = vunpack.c.l.b16 %v5644
    %v7826 = vunpack.c.h.b16 %v5644
    %v7827 = vunpack.c.l.b16 %v5645
    %v7828 = vunpack.c.h.b16 %v5645
    %v7829 = vunpack.c.l.b16 %v5646
    %v7830 = vunpack.c.h.b16 %v5646
    %v7831 = vunpack.c.l.b16 %v5647
    %v7832 = vunpack.c.h.b16 %v5647
    %v7833 = vunpack.c.l.b16 %v5648
    %v7834 = vunpack.c.h.b16 %v5648
    %v7835 = vunpack.c.l.b16 %v5649
    %v7836 = vunpack.c.h.b16 %v5649
    %v7837 = vunpack.c.l.b16 %v5650
    %v7838 = vunpack.c.h.b16 %v5650
    %v7839 = vunpack.c.l.b16 %v5651
    %v7840 = vunpack.c.h.b16 %v5651
    %v7841 = vunpack.c.l.b16 %v5652
    %v7842 = vunpack.c.h.b16 %v5652
    %v7843 = vunpack.c.l.b16 %v5653
    %v7844 = vunpack.c.h.b16 %v5653
    %v7845 = vunpack.c.l.b16 %v5654
    %v7846 = vunpack.c.h.b16 %v5654
    %v7847 = vunpack.c.l.b16 %v5655
    %v7848 = vunpack.c.h.b16 %v5655
    %v7849 = vunpack.c.l.b16 %v5656
    %v7850 = vunpack.c.h.b16 %v5656
    %v7851 = vunpack.c.l.b16 %v5657
    %v7852 = vunpack.c.h.b16 %v5657
    %v7853 = vunpack.c.l.b16 %v5658
    %v7854 = vunpack.c.h.b16 %v5658
    %v7855 = vunpack.c.l.b16 %v5659
    %v7856 = vunpack.c.h.b16 %v5659
    %v7857 = vunpack.c.l.b16 %v5660
    %v7858 = vunpack.c.h.b16 %v5660
    %v7859 = vunpack.c.l.b16 %v5661
    %v7860 = vunpack.c.h.b16 %v5661
    %v7861 = vunpack.c.l.b16 %v5662
    %v7862 = vunpack.c.h.b16 %v5662
    %v7863 = vunpack.c.l.b16 %v5663
    %v7864 = vunpack.c.h.b16 %v5663
    %v7865 = vunpack.c.l.b16 %v5664
    %v7866 = vunpack.c.h.b16 %v5664
    %v7867 = vunpack.c.l.b16 %v5665
    %v7868 = vunpack.c.h.b16 %v5665
    %v7869 = vunpack.c.l.b16 %v5666
    %v7870 = vunpack.c.h.b16 %v5666
    %v7871 = vunpack.c.l.b16 %v5667
    %v7872 = vunpack.c.h.b16 %v5667
    %v7873 = vunpack.c.l.b16 %v5668
    %v7874 = vunpack.c.h.b16 %v5668
    %v7875 = vunpack.c.l.b16 %v5669
    %v7876 = vunpack.c.h.b16 %v5669
    %v7877 = vunpack.c.l.b16 %v5670
    %v7878 = vunpack.c.h.b16 %v5670
    %v7879 = vunpack.c.l.b16 %v5671
    %v7880 = vunpack.c.h.b16 %v5671
    %v7881 = vunpack.c.l.b16 %v5672
    %v7882 = vunpack.c.h.b16 %v5672
    %v7883 = vunpack.c.l.b16 %v5673
    %v7884 = vunpack.c.h.b16 %v5673
    %v7885 = vunpack.c.l.b16 %v5674
    %v7886 = vunpack.c.h.b16 %v5674
    %v7887 = vunpack.c.l.b16 %v5675
    %v7888 = vunpack.c.h.b16 %v5675
    %v7889 = vunpack.c.l.b16 %v5676
    %v7890 = vunpack.c.h.b16 %v5676
    %v7891 = vunpack.c.l.b16 %v5677
    %v7892 = vunpack.c.h.b16 %v5677
    %v7893 = vunpack.c.l.b16 %v5678
    %v7894 = vunpack.c.h.b16 %v5678
    %v7895 = vunpack.c.l.b16 %v5679
    %v7896 = vunpack.c.h.b16 %v5679
    %v7897 = vunpack.c.l.b16 %v5680
    %v7898 = vunpack.c.h.b16 %v5680
    %v7899 = vunpack.c.l.b16 %v5681
    %v7900 = vunpack.c.h.b16 %v5681
    %v7901 = vunpack.c.l.b16 %v5682
    %v7902 = vunpack.c.h.b16 %v5682
    %v7903 = vunpack.c.l.b16 %v5683
    %v7904 = vunpack.c.h.b16 %v5683
    %v7905 = vunpack.c.l.b16 %v5684
    %v7906 = vunpack.c.h.b16 %v5684
    %v7907 = vunpack.c.l.b16 %v5685
    %v7908 = vunpack.c.h.b16 %v5685
    %v7909 = vunpack.c.l.b16 %v5686
    %v7910 = vunpack.c.h.b16 %v5686
    %v7911 = vunpack.c.l.b16 %v5687
    %v7912 = vunpack.c.h.b16 %v5687
    %v7913 = vunpack.c.l.b16 %v5688
    %v7914 = vunpack.c.h.b16 %v5688
    %v7915 = vunpack.c.l.b16 %v5689
    %v7916 = vunpack.c.h.b16 %v5689
    %v7917 = vunpack.c.l.b16 %v5690
    %v7918 = vunpack.c.h.b16 %v5690
    %v7919 = vunpack.c.l.b16 %v5691
    %v7920 = vunpack.c.h.b16 %v5691
    %v7921 = vunpack.c.l.b16 %v5692
    %v7922 = vunpack.c.h.b16 %v5692
    %v7923 = vunpack.c.l.b16 %v5693
    %v7924 = vunpack.c.h.b16 %v5693
    %v7925 = vunpack.c.l.b16 %v5694
    %v7926 = vunpack.c.h.b16 %v5694
    %v7927 = vunpack.c.l.b16 %v5695
    %v7928 = vunpack.c.h.b16 %v5695
    %v7929 = vunpack.c.l.b16 %v5696
    %v7930 = vunpack.c.h.b16 %v5696
    %v7931 = vunpack.c.l.b16 %v5697
    %v7932 = vunpack.c.h.b16 %v5697
    %v7933 = vunpack.c.l.b16 %v5698
    %v7934 = vunpack.c.h.b16 %v5698
    %v7935 = vunpack.c.l.b16 %v5699
    %v7936 = vunpack.c.h.b16 %v5699
    %v7937 = vunpack.c.l.b16 %v5700
    %v7938 = vunpack.c.h.b16 %v5700
    %v7939 = vunpack.c.l.b16 %v5701
    %v7940 = vunpack.c.h.b16 %v5701
    %v7941 = vunpack.c.l.b16 %v5702
    %v7942 = vunpack.c.h.b16 %v5702
    %v7943 = vunpack.c.l.b16 %v5703
    %v7944 = vunpack.c.h.b16 %v5703
    %v7945 = vunpack.c.l.b16 %v5704
    %v7946 = vunpack.c.h.b16 %v5704
    %v7947 = vunpack.c.l.b16 %v5705
    %v7948 = vunpack.c.h.b16 %v5705
    %v7949 = vunpack.c.l.b16 %v5706
    %v7950 = vunpack.c.h.b16 %v5706
    %v7951 = vunpack.c.l.b16 %v5707
    %v7952 = vunpack.c.h.b16 %v5707
    %v7953 = vunpack.c.l.b16 %v5708
    %v7954 = vunpack.c.h.b16 %v5708
    %v7955 = vunpack.c.l.b16 %v5709
    %v7956 = vunpack.c.h.b16 %v5709
    %v7957 = vunpack.c.l.b16 %v5710
    %v7958 = vunpack.c.h.b16 %v5710
    %v7959 = vunpack.c.l.b16 %v5711
    %v7960 = vunpack.c.h.b16 %v5711
    %v7961 = vunpack.c.l.b16 %v5712
    %v7962 = vunpack.c.h.b16 %v5712
    %v7963 = vunpack.c.l.b16 %v5713
    %v7964 = vunpack.c.h.b16 %v5713
    %v7965 = vunpack.c.l.b16 %v5714
    %v7966 = vunpack.c.h.b16 %v5714
    %v7967 = vunpack.c.l.b16 %v5715
    %v7968 = vunpack.c.h.b16 %v5715
    %v7969 = vunpack.c.l.b16 %v5716
    %v7970 = vunpack.c.h.b16 %v5716
    %v7971 = vunpack.c.l.b16 %v5717
    %v7972 = vunpack.c.h.b16 %v5717
    %v7973 = vunpack.c.l.b16 %v5718
    %v7974 = vunpack.c.h.b16 %v5718
    %v7975 = vunpack.c.l.b16 %v5719
    %v7976 = vunpack.c.h.b16 %v5719
    %v7977 = vunpack.c.l.b16 %v5720
    %v7978 = vunpack.c.h.b16 %v5720
    %v7979 = vunpack.c.l.b16 %v5721
    %v7980 = vunpack.c.h.b16 %v5721
    %v7981 = vunpack.c.l.b16 %v5722
    %v7982 = vunpack.c.h.b16 %v5722
    %v7983 = vunpack.c.l.b16 %v5723
    %v7984 = vunpack.c.h.b16 %v5723
    %v7985 = vunpack.c.l.b16 %v5724
    %v7986 = vunpack.c.h.b16 %v5724
    %v7987 = vunpack.c.l.b16 %v5725
    %v7988 = vunpack.c.h.b16 %v5725
    %v7989 = vunpack.c.l.b16 %v5726
    %v7990 = vunpack.c.h.b16 %v5726
    %v7991 = vunpack.c.l.b16 %v5727
    %v7992 = vunpack.c.h.b16 %v5727
    %v7993 = vunpack.c.l.b16 %v5728
    %v7994 = vunpack.c.h.b16 %v5728
    %v7995 = vunpack.c.l.b16 %v5729
    %v7996 = vunpack.c.h.b16 %v5729
    %v7997 = vunpack.c.l.b16 %v5730
    %v7998 = vunpack.c.h.b16 %v5730
    %v7999 = vunpack.c.l.b16 %v5731
    %v8000 = vunpack.c.h.b16 %v5731
    %v8001 = vunpack.c.l.b16 %v5732
    %v8002 = vunpack.c.h.b16 %v5732
    %v8003 = vunpack.c.l.b16 %v5733
    %v8004 = vunpack.c.h.b16 %v5733
    %v8005 = vunpack.c.l.b16 %v5734
    %v8006 = vunpack.c.h.b16 %v5734
    %v8007 = vunpack.c.l.b16 %v5735
    %v8008 = vunpack.c.h.b16 %v5735
    %v8009 = vunpack.c.l.b16 %v5736
    %v8010 = vunpack.c.h.b16 %v5736
    %v8011 = vunpack.c.l.b16 %v5737
    %v8012 = vunpack.c.h.b16 %v5737
    %v8013 = vunpack.c.l.b16 %v5738
    %v8014 = vunpack.c.h.b16 %v5738
    %v8015 = vunpack.c.l.b16 %v5739
    %v8016 = vunpack.c.h.b16 %v5739
    %v8017 = vunpack.c.l.b16 %v5740
    %v8018 = vunpack.c.h.b16 %v5740
    %v8019 = vunpack.c.l.b16 %v5741
    %v8020 = vunpack.c.h.b16 %v5741
    %v8021 = vunpack.c.l.b16 %v5742
    %v8022 = vunpack.c.h.b16 %v5742
    %v8023 = vunpack.c.l.b16 %v5743
    %v8024 = vunpack.c.h.b16 %v5743
    %v8025 = vunpack.c.l.b16 %v5744
    %v8026 = vunpack.c.h.b16 %v5744
    %v8027 = vunpack.c.l.b16 %v5745
    %v8028 = vunpack.c.h.b16 %v5745
    %v8029 = vunpack.c.l.b16 %v5746
    %v8030 = vunpack.c.h.b16 %v5746
    %v8031 = vunpack.c.l.b16 %v5747
    %v8032 = vunpack.c.h.b16 %v5747
    %v8033 = vunpack.c.l.b16 %v5748
    %v8034 = vunpack.c.h.b16 %v5748
    %v8035 = vunpack.c.l.b16 %v5749
    %v8036 = vunpack.c.h.b16 %v5749
    %v8037 = vunpack.c.l.b16 %v5750
    %v8038 = vunpack.c.h.b16 %v5750
    %v8039 = vunpack.c.l.b16 %v5751
    %v8040 = vunpack.c.h.b16 %v5751
    %v8041 = vunpack.c.l.b16 %v5752
    %v8042 = vunpack.c.h.b16 %v5752
    %v8043 = vunpack.c.l.b16 %v5753
    %v8044 = vunpack.c.h.b16 %v5753
    %v8045 = vunpack.c.l.b16 %v5754
    %v8046 = vunpack.c.h.b16 %v5754
    %v8047 = vunpack.c.l.b16 %v5755
    %v8048 = vunpack.c.h.b16 %v5755
    %v8049 = vunpack.c.l.b16 %v5756
    %v8050 = vunpack.c.h.b16 %v5756
    %v8051 = vunpack.c.l.b16 %v5757
    %v8052 = vunpack.c.h.b16 %v5757
    %v8053 = vunpack.c.l.b16 %v5758
    %v8054 = vunpack.c.h.b16 %v5758
    %v8055 = vunpack.c.l.b16 %v5759
    %v8056 = vunpack.c.h.b16 %v5759
    %v8057 = vunpack.c.l.b16 %v5760
    %v8058 = vunpack.c.h.b16 %v5760
    %v8059 = vunpack.c.l.b16 %v5761
    %v8060 = vunpack.c.h.b16 %v5761
    %v8061 = vunpack.c.l.b16 %v5762
    %v8062 = vunpack.c.h.b16 %v5762
    %v8063 = vunpack.c.l.b16 %v5763
    %v8064 = vunpack.c.h.b16 %v5763
    %v8065 = vunpack.c.l.b16 %v5764
    %v8066 = vunpack.c.h.b16 %v5764
    %v8067 = vunpack.c.l.b16 %v5765
    %v8068 = vunpack.c.h.b16 %v5765
    %v8069 = vunpack.c.l.b16 %v5766
    %v8070 = vunpack.c.h.b16 %v5766
    %v8071 = vunpack.c.l.b16 %v5767
    %v8072 = vunpack.c.h.b16 %v5767
    %v8073 = vunpack.c.l.b16 %v5768
    %v8074 = vunpack.c.h.b16 %v5768
    %v8075 = vunpack.c.l.b16 %v5769
    %v8076 = vunpack.c.h.b16 %v5769
    %v8077 = vunpack.c.l.b16 %v5770
    %v8078 = vunpack.c.h.b16 %v5770
    %v8079 = vunpack.c.l.b16 %v5771
    %v8080 = vunpack.c.h.b16 %v5771
    %v8081 = vunpack.c.l.b16 %v5772
    %v8082 = vunpack.c.h.b16 %v5772
    %v8083 = vunpack.c.l.b16 %v5773
    %v8084 = vunpack.c.h.b16 %v5773
    %v8085 = vunpack.c.l.b16 %v5774
    %v8086 = vunpack.c.h.b16 %v5774
    %v8087 = vunpack.c.l.b16 %v5775
    %v8088 = vunpack.c.h.b16 %v5775
    %v8089 = vunpack.c.l.b16 %v5776
    %v8090 = vunpack.c.h.b16 %v5776
    %v8091 = vunpack.c.l.b16 %v5777
    %v8092 = vunpack.c.h.b16 %v5777
    %v8093 = vunpack.c.l.b16 %v5778
    %v8094 = vunpack.c.h.b16 %v5778
    %v8095 = vunpack.c.l.b16 %v5779
    %v8096 = vunpack.c.h.b16 %v5779
    %v8097 = vunpack.c.l.b16 %v5780
    %v8098 = vunpack.c.h.b16 %v5780
    %v8099 = vunpack.c.l.b16 %v5781
    %v8100 = vunpack.c.h.b16 %v5781
    %v8101 = vunpack.c.l.b16 %v5782
    %v8102 = vunpack.c.h.b16 %v5782
    %v8103 = vunpack.c.l.b16 %v5783
    %v8104 = vunpack.c.h.b16 %v5783
    %v8105 = vunpack.c.l.b16 %v5784
    %v8106 = vunpack.c.h.b16 %v5784
    %v8107 = vpack.c.b16 %v6579, %v6571
    %v8108 = vpack.c.b16 %v6580, %v6572
    %v8109 = vpack.c.b16 %v6581, %v6573
    %v8110 = vpack.c.b16 %v6582, %v6574
    %v8111 = vpack.c.b16 %v6583, %v6575
    %v8112 = vpack.c.b16 %v6584, %v6576
    %v8113 = vpack.c.b16 %v6585, %v6577
    %v8114 = vpack.c.b16 %v6586, %v6578
    %v8115 = vpack.c.b16 %v6595, %v6587
    %v8116 = vpack.c.b16 %v6596, %v6588
    %v8117 = vpack.c.b16 %v6597, %v6589
    %v8118 = vpack.c.b16 %v6598, %v6590
    %v8119 = vpack.c.b16 %v6599, %v6591
    %v8120 = vpack.c.b16 %v6600, %v6592
    %v8121 = vpack.c.b16 %v6601, %v6593
    %v8122 = vpack.c.b16 %v6602, %v6594
    %v8123 = vpack.c.b16 %v6611, %v6603
    %v8124 = vpack.c.b16 %v6612, %v6604
    %v8125 = vpack.c.b16 %v6613, %v6605
    %v8126 = vpack.c.b16 %v6614, %v6606
    %v8127 = vpack.c.b16 %v6615, %v6607
    %v8128 = vpack.c.b16 %v6616, %v6608
    %v8129 = vpack.c.b16 %v6617, %v6609
    %v8130 = vpack.c.b16 %v6618, %v6610
    %v8131 = vpack.c.b16 %v6627, %v6619
    %v8132 = vpack.c.b16 %v6628, %v6620
    %v8133 = vpack.c.b16 %v6629, %v6621
    %v8134 = vpack.c.b16 %v6630, %v6622
    %v8135 = vpack.c.b16 %v6631, %v6623
    %v8136 = vpack.c.b16 %v6632, %v6624
    %v8137 = vpack.c.b16 %v6633, %v6625
    %v8138 = vpack.c.b16 %v6634, %v6626
    %v8139 = vpack.c.b16 %v6643, %v6635
    %v8140 = vpack.c.b16 %v6644, %v6636
    %v8141 = vpack.c.b16 %v6645, %v6637
    %v8142 = vpack.c.b16 %v6646, %v6638
    %v8143 = vpack.c.b16 %v6647, %v6639
    %v8144 = vpack.c.b16 %v6648, %v6640
    %v8145 = vpack.c.b16 %v6649, %v6641
    %v8146 = vpack.c.b16 %v6650, %v6642
    %v8147 = vpack.c.b16 %v6659, %v6651
    %v8148 = vpack.c.b16 %v6660, %v6652
    %v8149 = vpack.c.b16 %v6661, %v6653
    %v8150 = vpack.c.b16 %v6662, %v6654
    %v8151 = vpack.c.b16 %v6663, %v6655
    %v8152 = vpack.c.b16 %v6664, %v6656
    %v8153 = vpack.c.b16 %v6665, %v6657
    %v8154 = vpack.c.b16 %v6666, %v6658
    %v8155 = vpack.c.b16 %v6675, %v6667
    %v8156 = vpack.c.b16 %v6676, %v6668
    %v8157 = vpack.c.b16 %v6677, %v6669
    %v8158 = vpack.c.b16 %v6678, %v6670
    %v8159 = vpack.c.b16 %v6679, %v6671
    %v8160 = vpack.c.b16 %v6680, %v6672
    %v8161 = vpack.c.b16 %v6681, %v6673
    %v8162 = vpack.c.b16 %v6682, %v6674
    %v8163 = vpack.c.b16 %v6691, %v6683
    %v8164 = vpack.c.b16 %v6692, %v6684
    %v8165 = vpack.c.b16 %v6693, %v6685
    %v8166 = vpack.c.b16 %v6694, %v6686
    %v8167 = vpack.c.b16 %v6695, %v6687
    %v8168 = vpack.c.b16 %v6696, %v6688
    %v8169 = vpack.c.b16 %v6697, %v6689
    %v8170 = vpack.c.b16 %v6698, %v6690
    %v8171 = vpack.c.b16 %v6707, %v6699
    %v8172 = vpack.c.b16 %v6708, %v6700
    %v8173 = vpack.c.b16 %v6709, %v6701
    %v8174 = vpack.c.b16 %v6710, %v6702
    %v8175 = vpack.c.b16 %v6711, %v6703
    %v8176 = vpack.c.b16 %v6712, %v6704
    %v8177 = vpack.c.b16 %v6713, %v6705
    %v8178 = vpack.c.b16 %v6714, %v6706
    %v8179 = vpack.c.b16 %v6723, %v6715
    %v8180 = vpack.c.b16 %v6724, %v6716
    %v8181 = vpack.c.b16 %v6725, %v6717
    %v8182 = vpack.c.b16 %v6726, %v6718
    %v8183 = vpack.c.b16 %v6727, %v6719
    %v8184 = vpack.c.b16 %v6728, %v6720
    %v8185 = vpack.c.b16 %v6729, %v6721
    %v8186 = vpack.c.b16 %v6730, %v6722
    %v8187 = vpack.c.b16 %v6739, %v6731
    %v8188 = vpack.c.b16 %v6740, %v6732
    %v8189 = vpack.c.b16 %v6741, %v6733
    %v8190 = vpack.c.b16 %v6742, %v6734
    %v8191 = vpack.c.b16 %v6743, %v6735
    %v8192 = vpack.c.b16 %v6744, %v6736
    %v8193 = vpack.c.b16 %v6745, %v6737
    %v8194 = vpack.c.b16 %v6746, %v6738
    %v8195 = vpack.c.b16 %v6755, %v6747
    %v8196 = vpack.c.b16 %v6756, %v6748
    %v8197 = vpack.c.b16 %v6757, %v6749
    %v8198 = vpack.c.b16 %v6758, %v6750
    %v8199 = vpack.c.b16 %v6759, %v6751
    %v8200 = vpack.c.b16 %v6760, %v6752
    %v8201 = vpack.c.b16 %v6761, %v6753
    %v8202 = vpack.c.b16 %v6762, %v6754
    %v8203 = vpack.c.b16 %v6771, %v6763
    %v8204 = vpack.c.b16 %v6772, %v6764
    %v8205 = vpack.c.b16 %v6773, %v6765
    %v8206 = vpack.c.b16 %v6774, %v6766
    %v8207 = vpack.c.b16 %v6775, %v6767
    %v8208 = vpack.c.b16 %v6776, %v6768
    %v8209 = vpack.c.b16 %v6777, %v6769
    %v8210 = vpack.c.b16 %v6778, %v6770
    %v8211 = vpack.c.b16 %v6787, %v6779
    %v8212 = vpack.c.b16 %v6788, %v6780
    %v8213 = vpack.c.b16 %v6789, %v6781
    %v8214 = vpack.c.b16 %v6790, %v6782
    %v8215 = vpack.c.b16 %v6791, %v6783
    %v8216 = vpack.c.b16 %v6792, %v6784
    %v8217 = vpack.c.b16 %v6793, %v6785
    %v8218 = vpack.c.b16 %v6794, %v6786
    %v8219 = vpack.c.b16 %v6803, %v6795
    %v8220 = vpack.c.b16 %v6804, %v6796
    %v8221 = vpack.c.b16 %v6805, %v6797
    %v8222 = vpack.c.b16 %v6806, %v6798
    %v8223 = vpack.c.b16 %v6807, %v6799
    %v8224 = vpack.c.b16 %v6808, %v6800
    %v8225 = vpack.c.b16 %v6809, %v6801
    %v8226 = vpack.c.b16 %v6810, %v6802
    %v8227 = vpack.c.b16 %v6819, %v6811
    %v8228 = vpack.c.b16 %v6820, %v6812
    %v8229 = vpack.c.b16 %v6821, %v6813
    %v8230 = vpack.c.b16 %v6822, %v6814
    %v8231 = vpack.c.b16 %v6823, %v6815
    %v8232 = vpack.c.b16 %v6824, %v6816
    %v8233 = vpack.c.b16 %v6825, %v6817
    %v8234 = vpack.c.b16 %v6826, %v6818
    %v8235 = vpack.c.b16 %v6835, %v6827
    %v8236 = vpack.c.b16 %v6836, %v6828
    %v8237 = vpack.c.b16 %v6837, %v6829
    %v8238 = vpack.c.b16 %v6838, %v6830
    %v8239 = vpack.c.b16 %v6839, %v6831
    %v8240 = vpack.c.b16 %v6840, %v6832
    %v8241 = vpack.c.b16 %v6841, %v6833
    %v8242 = vpack.c.b16 %v6842, %v6834
    %v8243 = vpack.c.b16 %v6851, %v6843
    %v8244 = vpack.c.b16 %v6852, %v6844
    %v8245 = vpack.c.b16 %v6853, %v6845
    %v8246 = vpack.c.b16 %v6854, %v6846
    %v8247 = vpack.c.b16 %v6855, %v6847
    %v8248 = vpack.c.b16 %v6856, %v6848
    %v8249 = vpack.c.b16 %v6857, %v6849
    %v8250 = vpack.c.b16 %v6858, %v6850
    %v8251 = vpack.c.b16 %v6867, %v6859
    %v8252 = vpack.c.b16 %v6868, %v6860
    %v8253 = vpack.c.b16 %v6869, %v6861
    %v8254 = vpack.c.b16 %v6870, %v6862
    %v8255 = vpack.c.b16 %v6871, %v6863
    %v8256 = vpack.c.b16 %v6872, %v6864
    %v8257 = vpack.c.b16 %v6873, %v6865
    %v8258 = vpack.c.b16 %v6874, %v6866
    %v8259 = vpack.c.b16 %v6883, %v6875
    %v8260 = vpack.c.b16 %v6884, %v6876
    %v8261 = vpack.c.b16 %v6885, %v6877
    %v8262 = vpack.c.b16 %v6886, %v6878
    %v8263 = vpack.c.b16 %v6887, %v6879
    %v8264 = vpack.c.b16 %v6888, %v6880
    %v8265 = vpack.c.b16 %v6889, %v6881
    %v8266 = vpack.c.b16 %v6890, %v6882
    %v8267 = vpack.c.b16 %v6899, %v6891
    %v8268 = vpack.c.b16 %v6900, %v6892
    %v8269 = vpack.c.b16 %v6901, %v6893
    %v8270 = vpack.c.b16 %v6902, %v6894
    %v8271 = vpack.c.b16 %v6903, %v6895
    %v8272 = vpack.c.b16 %v6904, %v6896
    %v8273 = vpack.c.b16 %v6905, %v6897
    %v8274 = vpack.c.b16 %v6906, %v6898
    %v8275 = vpack.c.b16 %v6915, %v6907
    %v8276 = vpack.c.b16 %v6916, %v6908
    %v8277 = vpack.c.b16 %v6917, %v6909
    %v8278 = vpack.c.b16 %v6918, %v6910
    %v8279 = vpack.c.b16 %v6919, %v6911
    %v8280 = vpack.c.b16 %v6920, %v6912
    %v8281 = vpack.c.b16 %v6921, %v6913
    %v8282 = vpack.c.b16 %v6922, %v6914
    %v8283 = vpack.c.b16 %v6931, %v6923
    %v8284 = vpack.c.b16 %v6932, %v6924
    %v8285 = vpack.c.b16 %v6933, %v6925
    %v8286 = vpack.c.b16 %v6934, %v6926
    %v8287 = vpack.c.b16 %v6935, %v6927
    %v8288 = vpack.c.b16 %v6936, %v6928
    %v8289 = vpack.c.b16 %v6937, %v6929
    %v8290 = vpack.c.b16 %v6938, %v6930
    %v8291 = vpack.c.b16 %v6947, %v6939
    %v8292 = vpack.c.b16 %v6948, %v6940
    %v8293 = vpack.c.b16 %v6949, %v6941
    %v8294 = vpack.c.b16 %v6950, %v6942
    %v8295 = vpack.c.b16 %v6951, %v6943
    %v8296 = vpack.c.b16 %v6952, %v6944
    %v8297 = vpack.c.b16 %v6953, %v6945
    %v8298 = vpack.c.b16 %v6954, %v6946
    %v8299 = vpack.c.b16 %v6963, %v6955
    %v8300 = vpack.c.b16 %v6964, %v6956
    %v8301 = vpack.c.b16 %v6965, %v6957
    %v8302 = vpack.c.b16 %v6966, %v6958
    %v8303 = vpack.c.b16 %v6967, %v6959
    %v8304 = vpack.c.b16 %v6968, %v6960
    %v8305 = vpack.c.b16 %v6969, %v6961
    %v8306 = vpack.c.b16 %v6970, %v6962
    %v8307 = vpack.c.b16 %v6979, %v6971
    %v8308 = vpack.c.b16 %v6980, %v6972
    %v8309 = vpack.c.b16 %v6981, %v6973
    %v8310 = vpack.c.b16 %v6982, %v6974
    %v8311 = vpack.c.b16 %v6983, %v6975
    %v8312 = vpack.c.b16 %v6984, %v6976
    %v8313 = vpack.c.b16 %v6985, %v6977
    %v8314 = vpack.c.b16 %v6986, %v6978
    %v8315 = vpack.c.b16 %v6995, %v6987
    %v8316 = vpack.c.b16 %v6996, %v6988
    %v8317 = vpack.c.b16 %v6997, %v6989
    %v8318 = vpack.c.b16 %v6998, %v6990
    %v8319 = vpack.c.b16 %v6999, %v6991
    %v8320 = vpack.c.b16 %v7000, %v6992
    %v8321 = vpack.c.b16 %v7001, %v6993
    %v8322 = vpack.c.b16 %v7002, %v6994
    %v8323 = vpack.c.b16 %v7011, %v7003
    %v8324 = vpack.c.b16 %v7012, %v7004
    %v8325 = vpack.c.b16 %v7013, %v7005
    %v8326 = vpack.c.b16 %v7014, %v7006
    %v8327 = vpack.c.b16 %v7015, %v7007
    %v8328 = vpack.c.b16 %v7016, %v7008
    %v8329 = vpack.c.b16 %v7017, %v7009
    %v8330 = vpack.c.b16 %v7018, %v7010
    %v8331 = vpack.c.b16 %v7027, %v7019
    %v8332 = vpack.c.b16 %v7028, %v7020
    %v8333 = vpack.c.b16 %v7029, %v7021
    %v8334 = vpack.c.b16 %v7030, %v7022
    %v8335 = vpack.c.b16 %v7031, %v7023
    %v8336 = vpack.c.b16 %v7032, %v7024
    %v8337 = vpack.c.b16 %v7033, %v7025
    %v8338 = vpack.c.b16 %v7034, %v7026
    %v8339 = vpack.c.b16 %v7043, %v7035
    %v8340 = vpack.c.b16 %v7044, %v7036
    %v8341 = vpack.c.b16 %v7045, %v7037
    %v8342 = vpack.c.b16 %v7046, %v7038
    %v8343 = vpack.c.b16 %v7047, %v7039
    %v8344 = vpack.c.b16 %v7048, %v7040
    %v8345 = vpack.c.b16 %v7049, %v7041
    %v8346 = vpack.c.b16 %v7050, %v7042
    %v8347 = vpack.c.b16 %v7059, %v7051
    %v8348 = vpack.c.b16 %v7060, %v7052
    %v8349 = vpack.c.b16 %v7061, %v7053
    %v8350 = vpack.c.b16 %v7062, %v7054
    %v8351 = vpack.c.b16 %v7063, %v7055
    %v8352 = vpack.c.b16 %v7064, %v7056
    %v8353 = vpack.c.b16 %v7065, %v7057
    %v8354 = vpack.c.b16 %v7066, %v7058
    %v8355 = vpack.c.b16 %v7075, %v7067
    %v8356 = vpack.c.b16 %v7076, %v7068
    %v8357 = vpack.c.b16 %v7077, %v7069
    %v8358 = vpack.c.b16 %v7078, %v7070
    %v8359 = vpack.c.b16 %v7079, %v7071
    %v8360 = vpack.c.b16 %v7080, %v7072
    %v8361 = vpack.c.b16 %v7081, %v7073
    %v8362 = vpack.c.b16 %v7082, %v7074
    %v8363 = vpack.c.b16 %v7091, %v7083
    %v8364 = vpack.c.b16 %v7092, %v7084
    %v8365 = vpack.c.b16 %v7093, %v7085
    %v8366 = vpack.c.b16 %v7094, %v7086
    %v8367 = vpack.c.b16 %v7095, %v7087
    %v8368 = vpack.c.b16 %v7096, %v7088
    %v8369 = vpack.c.b16 %v7097, %v7089
    %v8370 = vpack.c.b16 %v7098, %v7090
    %v8371 = vpack.c.b16 %v7107, %v7099
    %v8372 = vpack.c.b16 %v7108, %v7100
    %v8373 = vpack.c.b16 %v7109, %v7101
    %v8374 = vpack.c.b16 %v7110, %v7102
    %v8375 = vpack.c.b16 %v7111, %v7103
    %v8376 = vpack.c.b16 %v7112, %v7104
    %v8377 = vpack.c.b16 %v7113, %v7105
    %v8378 = vpack.c.b16 %v7114, %v7106
    %v8379 = vpack.c.b16 %v7123, %v7115
    %v8380 = vpack.c.b16 %v7124, %v7116
    %v8381 = vpack.c.b16 %v7125, %v7117
    %v8382 = vpack.c.b16 %v7126, %v7118
    %v8383 = vpack.c.b16 %v7127, %v7119
    %v8384 = vpack.c.b16 %v7128, %v7120
    %v8385 = vpack.c.b16 %v7129, %v7121
    %v8386 = vpack.c.b16 %v7130, %v7122
    %v8387 = vpack.c.b16 %v7139, %v7131
    %v8388 = vpack.c.b16 %v7140, %v7132
    %v8389 = vpack.c.b16 %v7141, %v7133
    %v8390 = vpack.c.b16 %v7142, %v7134
    %v8391 = vpack.c.b16 %v7143, %v7135
    %v8392 = vpack.c.b16 %v7144, %v7136
    %v8393 = vpack.c.b16 %v7145, %v7137
    %v8394 = vpack.c.b16 %v7146, %v7138
    %v8395 = vpack.c.b16 %v7155, %v7147
    %v8396 = vpack.c.b16 %v7156, %v7148
    %v8397 = vpack.c.b16 %v7157, %v7149
    %v8398 = vpack.c.b16 %v7158, %v7150
    %v8399 = vpack.c.b16 %v7159, %v7151
    %v8400 = vpack.c.b16 %v7160, %v7152
    %v8401 = vpack.c.b16 %v7161, %v7153
    %v8402 = vpack.c.b16 %v7162, %v7154
    %v8403 = vpack.c.b16 %v7171, %v7163
    %v8404 = vpack.c.b16 %v7172, %v7164
    %v8405 = vpack.c.b16 %v7173, %v7165
    %v8406 = vpack.c.b16 %v7174, %v7166
    %v8407 = vpack.c.b16 %v7175, %v7167
    %v8408 = vpack.c.b16 %v7176, %v7168
    %v8409 = vpack.c.b16 %v7177, %v7169
    %v8410 = vpack.c.b16 %v7178, %v7170
    %v8411 = vpack.c.b16 %v7187, %v7179
    %v8412 = vpack.c.b16 %v7188, %v7180
    %v8413 = vpack.c.b16 %v7189, %v7181
    %v8414 = vpack.c.b16 %v7190, %v7182
    %v8415 = vpack.c.b16 %v7191, %v7183
    %v8416 = vpack.c.b16 %v7192, %v7184
    %v8417 = vpack.c.b16 %v7193, %v7185
    %v8418 = vpack.c.b16 %v7194, %v7186
    %v8419 = vpack.c.b16 %v7203, %v7195
    %v8420 = vpack.c.b16 %v7204, %v7196
    %v8421 = vpack.c.b16 %v7205, %v7197
    %v8422 = vpack.c.b16 %v7206, %v7198
    %v8423 = vpack.c.b16 %v7207, %v7199
    %v8424 = vpack.c.b16 %v7208, %v7200
    %v8425 = vpack.c.b16 %v7209, %v7201
    %v8426 = vpack.c.b16 %v7210, %v7202
    %v8427 = vpack.c.b16 %v7219, %v7211
    %v8428 = vpack.c.b16 %v7220, %v7212
    %v8429 = vpack.c.b16 %v7221, %v7213
    %v8430 = vpack.c.b16 %v7222, %v7214
    %v8431 = vpack.c.b16 %v7223, %v7215
    %v8432 = vpack.c.b16 %v7224, %v7216
    %v8433 = vpack.c.b16 %v7225, %v7217
    %v8434 = vpack.c.b16 %v7226, %v7218
    %v8435 = vpack.c.b16 %v7235, %v7227
    %v8436 = vpack.c.b16 %v7236, %v7228
    %v8437 = vpack.c.b16 %v7237, %v7229
    %v8438 = vpack.c.b16 %v7238, %v7230
    %v8439 = vpack.c.b16 %v7239, %v7231
    %v8440 = vpack.c.b16 %v7240, %v7232
    %v8441 = vpack.c.b16 %v7241, %v7233
    %v8442 = vpack.c.b16 %v7242, %v7234
    %v8443 = vpack.c.b16 %v7251, %v7243
    %v8444 = vpack.c.b16 %v7252, %v7244
    %v8445 = vpack.c.b16 %v7253, %v7245
    %v8446 = vpack.c.b16 %v7254, %v7246
    %v8447 = vpack.c.b16 %v7255, %v7247
    %v8448 = vpack.c.b16 %v7256, %v7248
    %v8449 = vpack.c.b16 %v7257, %v7249
    %v8450 = vpack.c.b16 %v7258, %v7250
    %v8451 = vpack.c.b16 %v7267, %v7259
    %v8452 = vpack.c.b16 %v7268, %v7260
    %v8453 = vpack.c.b16 %v7269, %v7261
    %v8454 = vpack.c.b16 %v7270, %v7262
    %v8455 = vpack.c.b16 %v7271, %v7263
    %v8456 = vpack.c.b16 %v7272, %v7264
    %v8457 = vpack.c.b16 %v7273, %v7265
    %v8458 = vpack.c.b16 %v7274, %v7266
    %v8459 = vpack.c.b16 %v7283, %v7275
    %v8460 = vpack.c.b16 %v7284, %v7276
    %v8461 = vpack.c.b16 %v7285, %v7277
    %v8462 = vpack.c.b16 %v7286, %v7278
    %v8463 = vpack.c.b16 %v7287, %v7279
    %v8464 = vpack.c.b16 %v7288, %v7280
    %v8465 = vpack.c.b16 %v7289, %v7281
    %v8466 = vpack.c.b16 %v7290, %v7282
    %v8467 = vpack.c.b16 %v7299, %v7291
    %v8468 = vpack.c.b16 %v7300, %v7292
    %v8469 = vpack.c.b16 %v7301, %v7293
    %v8470 = vpack.c.b16 %v7302, %v7294
    %v8471 = vpack.c.b16 %v7303, %v7295
    %v8472 = vpack.c.b16 %v7304, %v7296
    %v8473 = vpack.c.b16 %v7305, %v7297
    %v8474 = vpack.c.b16 %v7306, %v7298
    %v8475 = vpack.c.b16 %v7315, %v7307
    %v8476 = vpack.c.b16 %v7316, %v7308
    %v8477 = vpack.c.b16 %v7317, %v7309
    %v8478 = vpack.c.b16 %v7318, %v7310
    %v8479 = vpack.c.b16 %v7319, %v7311
    %v8480 = vpack.c.b16 %v7320, %v7312
    %v8481 = vpack.c.b16 %v7321, %v7313
    %v8482 = vpack.c.b16 %v7322, %v7314
    %v8483 = vpack.c.b16 %v7331, %v7323
    %v8484 = vpack.c.b16 %v7332, %v7324
    %v8485 = vpack.c.b16 %v7333, %v7325
    %v8486 = vpack.c.b16 %v7334, %v7326
    %v8487 = vpack.c.b16 %v7335, %v7327
    %v8488 = vpack.c.b16 %v7336, %v7328
    %v8489 = vpack.c.b16 %v7337, %v7329
    %v8490 = vpack.c.b16 %v7338, %v7330
    %v8491 = vpack.c.b16 %v7347, %v7339
    %v8492 = vpack.c.b16 %v7348, %v7340
    %v8493 = vpack.c.b16 %v7349, %v7341
    %v8494 = vpack.c.b16 %v7350, %v7342
    %v8495 = vpack.c.b16 %v7351, %v7343
    %v8496 = vpack.c.b16 %v7352, %v7344
    %v8497 = vpack.c.b16 %v7353, %v7345
    %v8498 = vpack.c.b16 %v7354, %v7346
    %v8499 = vpack.c.b16 %v7363, %v7355
    %v8500 = vpack.c.b16 %v7364, %v7356
    %v8501 = vpack.c.b16 %v7365, %v7357
    %v8502 = vpack.c.b16 %v7366, %v7358
    %v8503 = vpack.c.b16 %v7367, %v7359
    %v8504 = vpack.c.b16 %v7368, %v7360
    %v8505 = vpack.c.b16 %v7369, %v7361
    %v8506 = vpack.c.b16 %v7370, %v7362
    %v8507 = vpack.c.b16 %v7379, %v7371
    %v8508 = vpack.c.b16 %v7380, %v7372
    %v8509 = vpack.c.b16 %v7381, %v7373
    %v8510 = vpack.c.b16 %v7382, %v7374
    %v8511 = vpack.c.b16 %v7383, %v7375
    %v8512 = vpack.c.b16 %v7384, %v7376
    %v8513 = vpack.c.b16 %v7385, %v7377
    %v8514 = vpack.c.b16 %v7386, %v7378
    %v8515 = vpack.c.b16 %v7395, %v7387
    %v8516 = vpack.c.b16 %v7396, %v7388
    %v8517 = vpack.c.b16 %v7397, %v7389
    %v8518 = vpack.c.b16 %v7398, %v7390
    %v8519 = vpack.c.b16 %v7399, %v7391
    %v8520 = vpack.c.b16 %v7400, %v7392
    %v8521 = vpack.c.b16 %v7401, %v7393
    %v8522 = vpack.c.b16 %v7402, %v7394
    %v8523 = vpack.c.b16 %v7411, %v7403
    %v8524 = vpack.c.b16 %v7412, %v7404
    %v8525 = vpack.c.b16 %v7413, %v7405
    %v8526 = vpack.c.b16 %v7414, %v7406
    %v8527 = vpack.c.b16 %v7415, %v7407
    %v8528 = vpack.c.b16 %v7416, %v7408
    %v8529 = vpack.c.b16 %v7417, %v7409
    %v8530 = vpack.c.b16 %v7418, %v7410
    %v8531 = vpack.c.b16 %v7427, %v7419
    %v8532 = vpack.c.b16 %v7428, %v7420
    %v8533 = vpack.c.b16 %v7429, %v7421
    %v8534 = vpack.c.b16 %v7430, %v7422
    %v8535 = vpack.c.b16 %v7431, %v7423
    %v8536 = vpack.c.b16 %v7432, %v7424
    %v8537 = vpack.c.b16 %v7433, %v7425
    %v8538 = vpack.c.b16 %v7434, %v7426
    %v8539 = vpack.c.b16 %v7443, %v7435
    %v8540 = vpack.c.b16 %v7444, %v7436
    %v8541 = vpack.c.b16 %v7445, %v7437
    %v8542 = vpack.c.b16 %v7446, %v7438
    %v8543 = vpack.c.b16 %v7447, %v7439
    %v8544 = vpack.c.b16 %v7448, %v7440
    %v8545 = vpack.c.b16 %v7449, %v7441
    %v8546 = vpack.c.b16 %v7450, %v7442
    %v8547 = vpack.c.b16 %v7459, %v7451
    %v8548 = vpack.c.b16 %v7460, %v7452
    %v8549 = vpack.c.b16 %v7461, %v7453
    %v8550 = vpack.c.b16 %v7462, %v7454
    %v8551 = vpack.c.b16 %v7463, %v7455
    %v8552 = vpack.c.b16 %v7464, %v7456
    %v8553 = vpack.c.b16 %v7465, %v7457
    %v8554 = vpack.c.b16 %v7466, %v7458
    %v8555 = vpack.c.b16 %v7475, %v7467
    %v8556 = vpack.c.b16 %v7476, %v7468
    %v8557 = vpack.c.b16 %v7477, %v7469
    %v8558 = vpack.c.b16 %v7478, %v7470
    %v8559 = vpack.c.b16 %v7479, %v7471
    %v8560 = vpack.c.b16 %v7480, %v7472
    %v8561 = vpack.c.b16 %v7481, %v7473
    %v8562 = vpack.c.b16 %v7482, %v7474
    %v8563 = vpack.c.b16 %v7491, %v7483
    %v8564 = vpack.c.b16 %v7492, %v7484
    %v8565 = vpack.c.b16 %v7493, %v7485
    %v8566 = vpack.c.b16 %v7494, %v7486
    %v8567 = vpack.c.b16 %v7495, %v7487
    %v8568 = vpack.c.b16 %v7496, %v7488
    %v8569 = vpack.c.b16 %v7497, %v7489
    %v8570 = vpack.c.b16 %v7498, %v7490
    %v8571 = vpack.c.b16 %v7507, %v7499
    %v8572 = vpack.c.b16 %v7508, %v7500
    %v8573 = vpack.c.b16 %v7509, %v7501
    %v8574 = vpack.c.b16 %v7510, %v7502
    %v8575 = vpack.c.b16 %v7511, %v7503
    %v8576 = vpack.c.b16 %v7512, %v7504
    %v8577 = vpack.c.b16 %v7513, %v7505
    %v8578 = vpack.c.b16 %v7514, %v7506
    %v8579 = vpack.c.b16 %v7523, %v7515
    %v8580 = vpack.c.b16 %v7524, %v7516
    %v8581 = vpack.c.b16 %v7525, %v7517
    %v8582 = vpack.c.b16 %v7526, %v7518
    %v8583 = vpack.c.b16 %v7527, %v7519
    %v8584 = vpack.c.b16 %v7528, %v7520
    %v8585 = vpack.c.b16 %v7529, %v7521
    %v8586 = vpack.c.b16 %v7530, %v7522
    %v8587 = vpack.c.b16 %v7539, %v7531
    %v8588 = vpack.c.b16 %v7540, %v7532
    %v8589 = vpack.c.b16 %v7541, %v7533
    %v8590 = vpack.c.b16 %v7542, %v7534
    %v8591 = vpack.c.b16 %v7543, %v7535
    %v8592 = vpack.c.b16 %v7544, %v7536
    %v8593 = vpack.c.b16 %v7545, %v7537
    %v8594 = vpack.c.b16 %v7546, %v7538
    %v8595 = vpack.c.b16 %v7555, %v7547
    %v8596 = vpack.c.b16 %v7556, %v7548
    %v8597 = vpack.c.b16 %v7557, %v7549
    %v8598 = vpack.c.b16 %v7558, %v7550
    %v8599 = vpack.c.b16 %v7559, %v7551
    %v8600 = vpack.c.b16 %v7560, %v7552
    %v8601 = vpack.c.b16 %v7561, %v7553
    %v8602 = vpack.c.b16 %v7562, %v7554
    %v8603 = vpack.c.b16 %v7571, %v7563
    %v8604 = vpack.c.b16 %v7572, %v7564
    %v8605 = vpack.c.b16 %v7573, %v7565
    %v8606 = vpack.c.b16 %v7574, %v7566
    %v8607 = vpack.c.b16 %v7575, %v7567
    %v8608 = vpack.c.b16 %v7576, %v7568
    %v8609 = vpack.c.b16 %v7577, %v7569
    %v8610 = vpack.c.b16 %v7578, %v7570
    %v8611 = vpack.c.b16 %v7587, %v7579
    %v8612 = vpack.c.b16 %v7588, %v7580
    %v8613 = vpack.c.b16 %v7589, %v7581
    %v8614 = vpack.c.b16 %v7590, %v7582
    %v8615 = vpack.c.b16 %v7591, %v7583
    %v8616 = vpack.c.b16 %v7592, %v7584
    %v8617 = vpack.c.b16 %v7593, %v7585
    %v8618 = vpack.c.b16 %v7594, %v7586
    %v8619 = vpack.c.b16 %v7603, %v7595
    %v8620 = vpack.c.b16 %v7604, %v7596
    %v8621 = vpack.c.b16 %v7605, %v7597
    %v8622 = vpack.c.b16 %v7606, %v7598
    %v8623 = vpack.c.b16 %v7607, %v7599
    %v8624 = vpack.c.b16 %v7608, %v7600
    %v8625 = vpack.c.b16 %v7609, %v7601
    %v8626 = vpack.c.b16 %v7610, %v7602
    %v8627 = vpack.c.b16 %v7619, %v7611
    %v8628 = vpack.c.b16 %v7620, %v7612
    %v8629 = vpack.c.b16 %v7621, %v7613
    %v8630 = vpack.c.b16 %v7622, %v7614
    %v8631 = vpack.c.b16 %v7623, %v7615
    %v8632 = vpack.c.b16 %v7624, %v7616
    %v8633 = vpack.c.b16 %v7625, %v7617
    %v8634 = vpack.c.b16 %v7626, %v7618
    %v8635 = vpack.c.b16 %v7635, %v7627
    %v8636 = vpack.c.b16 %v7636, %v7628
    %v8637 = vpack.c.b16 %v7637, %v7629
    %v8638 = vpack.c.b16 %v7638, %v7630
    %v8639 = vpack.c.b16 %v7639, %v7631
    %v8640 = vpack.c.b16 %v7640, %v7632
    %v8641 = vpack.c.b16 %v7641, %v7633
    %v8642 = vpack.c.b16 %v7642, %v7634
    %v8643 = vpack.c.b16 %v7651, %v7643
    %v8644 = vpack.c.b16 %v7652, %v7644
    %v8645 = vpack.c.b16 %v7653, %v7645
    %v8646 = vpack.c.b16 %v7654, %v7646
    %v8647 = vpack.c.b16 %v7655, %v7647
    %v8648 = vpack.c.b16 %v7656, %v7648
    %v8649 = vpack.c.b16 %v7657, %v7649
    %v8650 = vpack.c.b16 %v7658, %v7650
    %v8651 = vpack.c.b16 %v7667, %v7659
    %v8652 = vpack.c.b16 %v7668, %v7660
    %v8653 = vpack.c.b16 %v7669, %v7661
    %v8654 = vpack.c.b16 %v7670, %v7662
    %v8655 = vpack.c.b16 %v7671, %v7663
    %v8656 = vpack.c.b16 %v7672, %v7664
    %v8657 = vpack.c.b16 %v7673, %v7665
    %v8658 = vpack.c.b16 %v7674, %v7666
    %v8659 = vpack.c.b16 %v7683, %v7675
    %v8660 = vpack.c.b16 %v7684, %v7676
    %v8661 = vpack.c.b16 %v7685, %v7677
    %v8662 = vpack.c.b16 %v7686, %v7678
    %v8663 = vpack.c.b16 %v7687, %v7679
    %v8664 = vpack.c.b16 %v7688, %v7680
    %v8665 = vpack.c.b16 %v7689, %v7681
    %v8666 = vpack.c.b16 %v7690, %v7682
    %v8667 = vpack.c.b16 %v7699, %v7691
    %v8668 = vpack.c.b16 %v7700, %v7692
    %v8669 = vpack.c.b16 %v7701, %v7693
    %v8670 = vpack.c.b16 %v7702, %v7694
    %v8671 = vpack.c.b16 %v7703, %v7695
    %v8672 = vpack.c.b16 %v7704, %v7696
    %v8673 = vpack.c.b16 %v7705, %v7697
    %v8674 = vpack.c.b16 %v7706, %v7698
    %v8675 = vpack.c.b16 %v7715, %v7707
    %v8676 = vpack.c.b16 %v7716, %v7708
    %v8677 = vpack.c.b16 %v7717, %v7709
    %v8678 = vpack.c.b16 %v7718, %v7710
    %v8679 = vpack.c.b16 %v7719, %v7711
    %v8680 = vpack.c.b16 %v7720, %v7712
    %v8681 = vpack.c.b16 %v7721, %v7713
    %v8682 = vpack.c.b16 %v7722, %v7714
    %v8683 = vpack.c.b16 %v7731, %v7723
    %v8684 = vpack.c.b16 %v7732, %v7724
    %v8685 = vpack.c.b16 %v7733, %v7725
    %v8686 = vpack.c.b16 %v7734, %v7726
    %v8687 = vpack.c.b16 %v7735, %v7727
    %v8688 = vpack.c.b16 %v7736, %v7728
    %v8689 = vpack.c.b16 %v7737, %v7729
    %v8690 = vpack.c.b16 %v7738, %v7730
    %v8691 = vpack.c.b16 %v7747, %v7739
    %v8692 = vpack.c.b16 %v7748, %v7740
    %v8693 = vpack.c.b16 %v7749, %v7741
    %v8694 = vpack.c.b16 %v7750, %v7742
    %v8695 = vpack.c.b16 %v7751, %v7743
    %v8696 = vpack.c.b16 %v7752, %v7744
    %v8697 = vpack.c.b16 %v7753, %v7745
    %v8698 = vpack.c.b16 %v7754, %v7746
    %v8699 = vpack.c.b16 %v7763, %v7755
    %v8700 = vpack.c.b16 %v7764, %v7756
    %v8701 = vpack.c.b16 %v7765, %v7757
    %v8702 = vpack.c.b16 %v7766, %v7758
    %v8703 = vpack.c.b16 %v7767, %v7759
    %v8704 = vpack.c.b16 %v7768, %v7760
    %v8705 = vpack.c.b16 %v7769, %v7761
    %v8706 = vpack.c.b16 %v7770, %v7762
    %v8707 = vpack.c.b16 %v7779, %v7771
    %v8708 = vpack.c.b16 %v7780, %v7772
    %v8709 = vpack.c.b16 %v7781, %v7773
    %v8710 = vpack.c.b16 %v7782, %v7774
    %v8711 = vpack.c.b16 %v7783, %v7775
    %v8712 = vpack.c.b16 %v7784, %v7776
    %v8713 = vpack.c.b16 %v7785, %v7777
    %v8714 = vpack.c.b16 %v7786, %v7778
    %v8715 = vpack.c.b16 %v7795, %v7787
    %v8716 = vpack.c.b16 %v7796, %v7788
    %v8717 = vpack.c.b16 %v7797, %v7789
    %v8718 = vpack.c.b16 %v7798, %v7790
    %v8719 = vpack.c.b16 %v7799, %v7791
    %v8720 = vpack.c.b16 %v7800, %v7792
    %v8721 = vpack.c.b16 %v7801, %v7793
    %v8722 = vpack.c.b16 %v7802, %v7794
    %v8723 = vpack.c.b16 %v7811, %v7803
    %v8724 = vpack.c.b16 %v7812, %v7804
    %v8725 = vpack.c.b16 %v7813, %v7805
    %v8726 = vpack.c.b16 %v7814, %v7806
    %v8727 = vpack.c.b16 %v7815, %v7807
    %v8728 = vpack.c.b16 %v7816, %v7808
    %v8729 = vpack.c.b16 %v7817, %v7809
    %v8730 = vpack.c.b16 %v7818, %v7810
    %v8731 = vpack.c.b16 %v7827, %v7819
    %v8732 = vpack.c.b16 %v7828, %v7820
    %v8733 = vpack.c.b16 %v7829, %v7821
    %v8734 = vpack.c.b16 %v7830, %v7822
    %v8735 = vpack.c.b16 %v7831, %v7823
    %v8736 = vpack.c.b16 %v7832, %v7824
    %v8737 = vpack.c.b16 %v7833, %v7825
    %v8738 = vpack.c.b16 %v7834, %v7826
    %v8739 = vpack.c.b16 %v7843, %v7835
    %v8740 = vpack.c.b16 %v7844, %v7836
    %v8741 = vpack.c.b16 %v7845, %v7837
    %v8742 = vpack.c.b16 %v7846, %v7838
    %v8743 = vpack.c.b16 %v7847, %v7839
    %v8744 = vpack.c.b16 %v7848, %v7840
    %v8745 = vpack.c.b16 %v7849, %v7841
    %v8746 = vpack.c.b16 %v7850, %v7842
    %v8747 = vpack.c.b16 %v7859, %v7851
    %v8748 = vpack.c.b16 %v7860, %v7852
    %v8749 = vpack.c.b16 %v7861, %v7853
    %v8750 = vpack.c.b16 %v7862, %v7854
    %v8751 = vpack.c.b16 %v7863, %v7855
    %v8752 = vpack.c.b16 %v7864, %v7856
    %v8753 = vpack.c.b16 %v7865, %v7857
    %v8754 = vpack.c.b16 %v7866, %v7858
    %v8755 = vpack.c.b16 %v7875, %v7867
    %v8756 = vpack.c.b16 %v7876, %v7868
    %v8757 = vpack.c.b16 %v7877, %v7869
    %v8758 = vpack.c.b16 %v7878, %v7870
    %v8759 = vpack.c.b16 %v7879, %v7871
    %v8760 = vpack.c.b16 %v7880, %v7872
    %v8761 = vpack.c.b16 %v7881, %v7873
    %v8762 = vpack.c.b16 %v7882, %v7874
    %v8763 = vpack.c.b16 %v7891, %v7883
    %v8764 = vpack.c.b16 %v7892, %v7884
    %v8765 = vpack.c.b16 %v7893, %v7885
    %v8766 = vpack.c.b16 %v7894, %v7886
    %v8767 = vpack.c.b16 %v7895, %v7887
    %v8768 = vpack.c.b16 %v7896, %v7888
    %v8769 = vpack.c.b16 %v7897, %v7889
    %v8770 = vpack.c.b16 %v7898, %v7890
    %v8771 = vpack.c.b16 %v7907, %v7899
    %v8772 = vpack.c.b16 %v7908, %v7900
    %v8773 = vpack.c.b16 %v7909, %v7901
    %v8774 = vpack.c.b16 %v7910, %v7902
    %v8775 = vpack.c.b16 %v7911, %v7903
    %v8776 = vpack.c.b16 %v7912, %v7904
    %v8777 = vpack.c.b16 %v7913, %v7905
    %v8778 = vpack.c.b16 %v7914, %v7906
    %v8779 = vpack.c.b16 %v7923, %v7915
    %v8780 = vpack.c.b16 %v7924, %v7916
    %v8781 = vpack.c.b16 %v7925, %v7917
    %v8782 = vpack.c.b16 %v7926, %v7918
    %v8783 = vpack.c.b16 %v7927, %v7919
    %v8784 = vpack.c.b16 %v7928, %v7920
    %v8785 = vpack.c.b16 %v7929, %v7921
    %v8786 = vpack.c.b16 %v7930, %v7922
    %v8787 = vpack.c.b16 %v7939, %v7931
    %v8788 = vpack.c.b16 %v7940, %v7932
    %v8789 = vpack.c.b16 %v7941, %v7933
    %v8790 = vpack.c.b16 %v7942, %v7934
    %v8791 = vpack.c.b16 %v7943, %v7935
    %v8792 = vpack.c.b16 %v7944, %v7936
    %v8793 = vpack.c.b16 %v7945, %v7937
    %v8794 = vpack.c.b16 %v7946, %v7938
    %v8795 = vpack.c.b16 %v7955, %v7947
    %v8796 = vpack.c.b16 %v7956, %v7948
    %v8797 = vpack.c.b16 %v7957, %v7949
    %v8798 = vpack.c.b16 %v7958, %v7950
    %v8799 = vpack.c.b16 %v7959, %v7951
    %v8800 = vpack.c.b16 %v7960, %v7952
    %v8801 = vpack.c.b16 %v7961, %v7953
    %v8802 = vpack.c.b16 %v7962, %v7954
    %v8803 = vpack.c.b16 %v7971, %v7963
    %v8804 = vpack.c.b16 %v7972, %v7964
    %v8805 = vpack.c.b16 %v7973, %v7965
    %v8806 = vpack.c.b16 %v7974, %v7966
    %v8807 = vpack.c.b16 %v7975, %v7967
    %v8808 = vpack.c.b16 %v7976, %v7968
    %v8809 = vpack.c.b16 %v7977, %v7969
    %v8810 = vpack.c.b16 %v7978, %v7970
    %v8811 = vpack.c.b16 %v7987, %v7979
    %v8812 = vpack.c.b16 %v7988, %v7980
    %v8813 = vpack.c.b16 %v7989, %v7981
    %v8814 = vpack.c.b16 %v7990, %v7982
    %v8815 = vpack.c.b16 %v7991, %v7983
    %v8816 = vpack.c.b16 %v7992, %v7984
    %v8817 = vpack.c.b16 %v7993, %v7985
    %v8818 = vpack.c.b16 %v7994, %v7986
    %v8819 = vpack.c.b16 %v8003, %v7995
    %v8820 = vpack.c.b16 %v8004, %v7996
    %v8821 = vpack.c.b16 %v8005, %v7997
    %v8822 = vpack.c.b16 %v8006, %v7998
    %v8823 = vpack.c.b16 %v8007, %v7999
    %v8824 = vpack.c.b16 %v8008, %v8000
    %v8825 = vpack.c.b16 %v8009, %v8001
    %v8826 = vpack.c.b16 %v8010, %v8002
    %v8827 = vpack.c.b16 %v8019, %v8011
    %v8828 = vpack.c.b16 %v8020, %v8012
    %v8829 = vpack.c.b16 %v8021, %v8013
    %v8830 = vpack.c.b16 %v8022, %v8014
    %v8831 = vpack.c.b16 %v8023, %v8015
    %v8832 = vpack.c.b16 %v8024, %v8016
    %v8833 = vpack.c.b16 %v8025, %v8017
    %v8834 = vpack.c.b16 %v8026, %v8018
    %v8835 = vpack.c.b16 %v8035, %v8027
    %v8836 = vpack.c.b16 %v8036, %v8028
    %v8837 = vpack.c.b16 %v8037, %v8029
    %v8838 = vpack.c.b16 %v8038, %v8030
    %v8839 = vpack.c.b16 %v8039, %v8031
    %v8840 = vpack.c.b16 %v8040, %v8032
    %v8841 = vpack.c.b16 %v8041, %v8033
    %v8842 = vpack.c.b16 %v8042, %v8034
    %v8843 = vpack.c.b16 %v8051, %v8043
    %v8844 = vpack.c.b16 %v8052, %v8044
    %v8845 = vpack.c.b16 %v8053, %v8045
    %v8846 = vpack.c.b16 %v8054, %v8046
    %v8847 = vpack.c.b16 %v8055, %v8047
    %v8848 = vpack.c.b16 %v8056, %v8048
    %v8849 = vpack.c.b16 %v8057, %v8049
    %v8850 = vpack.c.b16 %v8058, %v8050
    %v8851 = vpack.c.b16 %v8067, %v8059
    %v8852 = vpack.c.b16 %v8068, %v8060
    %v8853 = vpack.c.b16 %v8069, %v8061
    %v8854 = vpack.c.b16 %v8070, %v8062
    %v8855 = vpack.c.b16 %v8071, %v8063
    %v8856 = vpack.c.b16 %v8072, %v8064
    %v8857 = vpack.c.b16 %v8073, %v8065
    %v8858 = vpack.c.b16 %v8074, %v8066
    %v8859 = vpack.c.b16 %v8083, %v8075
    %v8860 = vpack.c.b16 %v8084, %v8076
    %v8861 = vpack.c.b16 %v8085, %v8077
    %v8862 = vpack.c.b16 %v8086, %v8078
    %v8863 = vpack.c.b16 %v8087, %v8079
    %v8864 = vpack.c.b16 %v8088, %v8080
    %v8865 = vpack.c.b16 %v8089, %v8081
    %v8866 = vpack.c.b16 %v8090, %v8082
    %v8867 = vpack.c.b16 %v8099, %v8091
    %v8868 = vpack.c.b16 %v8100, %v8092
    %v8869 = vpack.c.b16 %v8101, %v8093
    %v8870 = vpack.c.b16 %v8102, %v8094
    %v8871 = vpack.c.b16 %v8103, %v8095
    %v8872 = vpack.c.b16 %v8104, %v8096
    %v8873 = vpack.c.b16 %v8105, %v8097
    %v8874 = vpack.c.b16 %v8106, %v8098
    %9643 = vmatpush.bf16.msra.mxu0 %v8163
    %9644 = vmatpush.bf16.msra.mxu0 %v8155
    %9645 = vmatpush.bf16.msra.mxu0 %v8147
    %9646 = vmatpush.bf16.msra.mxu0 %v8139
    %9647 = vmatpush.bf16.msra.mxu0 %v8131
    %9648 = vmatpush.bf16.msra.mxu0 %v8123
    %9649 = vmatpush.bf16.msra.mxu0 %v8115
    %9650 = vmatpush.bf16.msra.mxu0 %v8107
    %9651 = vmatmul.bf16.gmra.mxu0 %v5001
    %v9652 = vpop.f32.mrf.mxu0
    %v9653 = vadd.f32 %v5787, %v9652
    %v9654 = vpop.f32.mrf.mxu0
    %v9655 = vadd.f32 %v5787, %v9654
    %9656 = vmatmul.bf16.gmra.mxu0 %v5009
    %v9657 = vpop.f32.mrf.mxu0
    %v9658 = vadd.f32 %v5787, %v9657
    %v9659 = vpop.f32.mrf.mxu0
    %v9660 = vadd.f32 %v5787, %v9659
    %9661 = vdwg.mxu0
    %9662 = vmatpush.bf16.msra.mxu0 %v8227
    %9663 = vmatpush.bf16.msra.mxu0 %v8219
    %9664 = vmatpush.bf16.msra.mxu0 %v8211
    %9665 = vmatpush.bf16.msra.mxu0 %v8203
    %9666 = vmatpush.bf16.msra.mxu0 %v8195
    %9667 = vmatpush.bf16.msra.mxu0 %v8187
    %9668 = vmatpush.bf16.msra.mxu0 %v8179
    %9669 = vmatpush.bf16.msra.mxu0 %v8171
    %9670 = vmatmul.bf16.gmra.mxu0 %v5002
    %v9671 = vpop.f32.mrf.mxu0
    %v9672 = vadd.f32 %v9653, %v9671
    %v9673 = vpop.f32.mrf.mxu0
    %v9674 = vadd.f32 %v9655, %v9673
    %9675 = vmatmul.bf16.gmra.mxu0 %v5010
    %v9676 = vpop.f32.mrf.mxu0
    %v9677 = vadd.f32 %v9658, %v9676
    %v9678 = vpop.f32.mrf.mxu0
    %v9679 = vadd.f32 %v9660, %v9678
    %9680 = vdwg.mxu0
    %9681 = vmatpush.bf16.msra.mxu0 %v8291
    %9682 = vmatpush.bf16.msra.mxu0 %v8283
    %9683 = vmatpush.bf16.msra.mxu0 %v8275
    %9684 = vmatpush.bf16.msra.mxu0 %v8267
    %9685 = vmatpush.bf16.msra.mxu0 %v8259
    %9686 = vmatpush.bf16.msra.mxu0 %v8251
    %9687 = vmatpush.bf16.msra.mxu0 %v8243
    %9688 = vmatpush.bf16.msra.mxu0 %v8235
    %9689 = vmatmul.bf16.gmra.mxu0 %v5003
    %v9690 = vpop.f32.mrf.mxu0
    %v9691 = vadd.f32 %v9672, %v9690
    %v9692 = vpop.f32.mrf.mxu0
    %v9693 = vadd.f32 %v9674, %v9692
    %9694 = vmatmul.bf16.gmra.mxu0 %v5011
    %v9695 = vpop.f32.mrf.mxu0
    %v9696 = vadd.f32 %v9677, %v9695
    %v9697 = vpop.f32.mrf.mxu0
    %v9698 = vadd.f32 %v9679, %v9697
    %9699 = vdwg.mxu0
    %9700 = vmatpush.bf16.msra.mxu0 %v8355
    %9701 = vmatpush.bf16.msra.mxu0 %v8347
    %9702 = vmatpush.bf16.msra.mxu0 %v8339
    %9703 = vmatpush.bf16.msra.mxu0 %v8331
    %9704 = vmatpush.bf16.msra.mxu0 %v8323
    %9705 = vmatpush.bf16.msra.mxu0 %v8315
    %9706 = vmatpush.bf16.msra.mxu0 %v8307
    %9707 = vmatpush.bf16.msra.mxu0 %v8299
    %9708 = vmatmul.bf16.gmra.mxu0 %v5004
    %v9709 = vpop.f32.mrf.mxu0
    %v9710 = vadd.f32 %v9691, %v9709
    %v9711 = vpop.f32.mrf.mxu0
    %v9712 = vadd.f32 %v9693, %v9711
    %9713 = vmatmul.bf16.gmra.mxu0 %v5012
    %v9714 = vpop.f32.mrf.mxu0
    %v9715 = vadd.f32 %v9696, %v9714
    %v9716 = vpop.f32.mrf.mxu0
    %v9717 = vadd.f32 %v9698, %v9716
    %9718 = vdwg.mxu0
    %9719 = vmatpush.bf16.msra.mxu0 %v8419
    %9720 = vmatpush.bf16.msra.mxu0 %v8411
    %9721 = vmatpush.bf16.msra.mxu0 %v8403
    %9722 = vmatpush.bf16.msra.mxu0 %v8395
    %9723 = vmatpush.bf16.msra.mxu0 %v8387
    %9724 = vmatpush.bf16.msra.mxu0 %v8379
    %9725 = vmatpush.bf16.msra.mxu0 %v8371
    %9726 = vmatpush.bf16.msra.mxu0 %v8363
    %9727 = vmatmul.bf16.gmra.mxu0 %v4557
    %v9728 = vpop.f32.mrf.mxu0
    %v9729 = vadd.f32 %v9710, %v9728
    %v9730 = vpop.f32.mrf.mxu0
    %v9731 = vadd.f32 %v9712, %v9730
    %9732 = vmatmul.bf16.gmra.mxu0 %v4561
    %v9733 = vpop.f32.mrf.mxu0
    %v9734 = vadd.f32 %v9715, %v9733
    %v9735 = vpop.f32.mrf.mxu0
    %v9736 = vadd.f32 %v9717, %v9735
    %9737 = vdwg.mxu0
    %9738 = vmatpush.bf16.msra.mxu0 %v8483
    %9739 = vmatpush.bf16.msra.mxu0 %v8475
    %9740 = vmatpush.bf16.msra.mxu0 %v8467
    %9741 = vmatpush.bf16.msra.mxu0 %v8459
    %9742 = vmatpush.bf16.msra.mxu0 %v8451
    %9743 = vmatpush.bf16.msra.mxu0 %v8443
    %9744 = vmatpush.bf16.msra.mxu0 %v8435
    %9745 = vmatpush.bf16.msra.mxu0 %v8427
    %9746 = vmatmul.bf16.gmra.mxu0 %v4558
    %v9747 = vpop.f32.mrf.mxu0
    %v9748 = vadd.f32 %v9729, %v9747
    %v9749 = vpop.f32.mrf.mxu0
    %v9750 = vadd.f32 %v9731, %v9749
    %9751 = vmatmul.bf16.gmra.mxu0 %v4562
    %v9752 = vpop.f32.mrf.mxu0
    %v9753 = vadd.f32 %v9734, %v9752
    %v9754 = vpop.f32.mrf.mxu0
    %v9755 = vadd.f32 %v9736, %v9754
    %9756 = vdwg.mxu0
    %9757 = vmatpush.bf16.msra.mxu0 %v8547
    %9758 = vmatpush.bf16.msra.mxu0 %v8539
    %9759 = vmatpush.bf16.msra.mxu0 %v8531
    %9760 = vmatpush.bf16.msra.mxu0 %v8523
    %9761 = vmatpush.bf16.msra.mxu0 %v8515
    %9762 = vmatpush.bf16.msra.mxu0 %v8507
    %9763 = vmatpush.bf16.msra.mxu0 %v8499
    %9764 = vmatpush.bf16.msra.mxu0 %v8491
    %9765 = vmatmul.bf16.gmra.mxu0 %v4559
    %v9766 = vpop.f32.mrf.mxu0
    %v9767 = vadd.f32 %v9748, %v9766
    %v9768 = vpop.f32.mrf.mxu0
    %v9769 = vadd.f32 %v9750, %v9768
    %9770 = vmatmul.bf16.gmra.mxu0 %v4563
    %v9771 = vpop.f32.mrf.mxu0
    %v9772 = vadd.f32 %v9753, %v9771
    %v9773 = vpop.f32.mrf.mxu0
    %v9774 = vadd.f32 %v9755, %v9773
    %9775 = vdwg.mxu0
    %9776 = vmatpush.bf16.msra.mxu0 %v8611
    %9777 = vmatpush.bf16.msra.mxu0 %v8603
    %9778 = vmatpush.bf16.msra.mxu0 %v8595
    %9779 = vmatpush.bf16.msra.mxu0 %v8587
    %9780 = vmatpush.bf16.msra.mxu0 %v8579
    %9781 = vmatpush.bf16.msra.mxu0 %v8571
    %9782 = vmatpush.bf16.msra.mxu0 %v8563
    %9783 = vmatpush.bf16.msra.mxu0 %v8555
    %9784 = vmatmul.bf16.gmra.mxu0 %v4560
    %v9785 = vpop.f32.mrf.mxu0
    %v9786 = vadd.f32 %v9767, %v9785
    %v9787 = vpop.f32.mrf.mxu0
    %v9788 = vadd.f32 %v9769, %v9787
    %9789 = vmatmul.bf16.gmra.mxu0 %v4564
    %v9790 = vpop.f32.mrf.mxu0
    %v9791 = vadd.f32 %v9772, %v9790
    %v9792 = vpop.f32.mrf.mxu0
    %v9793 = vadd.f32 %v9774, %v9792
    %9794 = vdwg.mxu0
    %9795 = vmatpush.bf16.msra.mxu0 %v8675
    %9796 = vmatpush.bf16.msra.mxu0 %v8667
    %9797 = vmatpush.bf16.msra.mxu0 %v8659
    %9798 = vmatpush.bf16.msra.mxu0 %v8651
    %9799 = vmatpush.bf16.msra.mxu0 %v8643
    %9800 = vmatpush.bf16.msra.mxu0 %v8635
    %9801 = vmatpush.bf16.msra.mxu0 %v8627
    %9802 = vmatpush.bf16.msra.mxu0 %v8619
    %9803 = vmatmul.bf16.gmra.mxu0 %v5005
    %v9804 = vpop.f32.mrf.mxu0
    %v9805 = vadd.f32 %v9786, %v9804
    %v9806 = vpop.f32.mrf.mxu0
    %v9807 = vadd.f32 %v9788, %v9806
    %9808 = vmatmul.bf16.gmra.mxu0 %v5013
    %v9809 = vpop.f32.mrf.mxu0
    %v9810 = vadd.f32 %v9791, %v9809
    %v9811 = vpop.f32.mrf.mxu0
    %v9812 = vadd.f32 %v9793, %v9811
    %9813 = vdwg.mxu0
    %9814 = vmatpush.bf16.msra.mxu0 %v8739
    %9815 = vmatpush.bf16.msra.mxu0 %v8731
    %9816 = vmatpush.bf16.msra.mxu0 %v8723
    %9817 = vmatpush.bf16.msra.mxu0 %v8715
    %9818 = vmatpush.bf16.msra.mxu0 %v8707
    %9819 = vmatpush.bf16.msra.mxu0 %v8699
    %9820 = vmatpush.bf16.msra.mxu0 %v8691
    %9821 = vmatpush.bf16.msra.mxu0 %v8683
    %9822 = vmatmul.bf16.gmra.mxu0 %v5006
    %v9823 = vpop.f32.mrf.mxu0
    %v9824 = vadd.f32 %v9805, %v9823
    %v9825 = vpop.f32.mrf.mxu0
    %v9826 = vadd.f32 %v9807, %v9825
    %9827 = vmatmul.bf16.gmra.mxu0 %v5014
    %v9828 = vpop.f32.mrf.mxu0
    %v9829 = vadd.f32 %v9810, %v9828
    %v9830 = vpop.f32.mrf.mxu0
    %v9831 = vadd.f32 %v9812, %v9830
    %9832 = vdwg.mxu0
    %9833 = vmatpush.bf16.msra.mxu0 %v8803
    %9834 = vmatpush.bf16.msra.mxu0 %v8795
    %9835 = vmatpush.bf16.msra.mxu0 %v8787
    %9836 = vmatpush.bf16.msra.mxu0 %v8779
    %9837 = vmatpush.bf16.msra.mxu0 %v8771
    %9838 = vmatpush.bf16.msra.mxu0 %v8763
    %9839 = vmatpush.bf16.msra.mxu0 %v8755
    %9840 = vmatpush.bf16.msra.mxu0 %v8747
    %9841 = vmatmul.bf16.gmra.mxu0 %v5007
    %v9842 = vpop.f32.mrf.mxu0
    %v9843 = vadd.f32 %v9824, %v9842
    %v9844 = vpop.f32.mrf.mxu0
    %v9845 = vadd.f32 %v9826, %v9844
    %9846 = vmatmul.bf16.gmra.mxu0 %v5015
    %v9847 = vpop.f32.mrf.mxu0
    %v9848 = vadd.f32 %v9829, %v9847
    %v9849 = vpop.f32.mrf.mxu0
    %v9850 = vadd.f32 %v9831, %v9849
    %9851 = vdwg.mxu0
    %9852 = vmatpush.bf16.msra.mxu0 %v8867
    %9853 = vmatpush.bf16.msra.mxu0 %v8859
    %9854 = vmatpush.bf16.msra.mxu0 %v8851
    %9855 = vmatpush.bf16.msra.mxu0 %v8843
    %9856 = vmatpush.bf16.msra.mxu0 %v8835
    %9857 = vmatpush.bf16.msra.mxu0 %v8827
    %9858 = vmatpush.bf16.msra.mxu0 %v8819
    %9859 = vmatpush.bf16.msra.mxu0 %v8811
    %9860 = vmatmul.bf16.gmra.mxu0 %v5008
    %v9861 = vpop.f32.mrf.mxu0
    %v9862 = vadd.f32 %v9843, %v9861
    %v9863 = vpop.f32.mrf.mxu0
    %v9864 = vadd.f32 %v9845, %v9863
    %9865 = vmatmul.bf16.gmra.mxu0 %v5016
    %v9866 = vpop.f32.mrf.mxu0
    %v9867 = vadd.f32 %v9848, %v9866
    %v9868 = vpop.f32.mrf.mxu0
    %v9869 = vadd.f32 %v9850, %v9868
    %9870 = vdwg.mxu0
    %9871 = vmatpush.bf16.msra.mxu0 %v8164
    %9872 = vmatpush.bf16.msra.mxu0 %v8156
    %9873 = vmatpush.bf16.msra.mxu0 %v8148
    %9874 = vmatpush.bf16.msra.mxu0 %v8140
    %9875 = vmatpush.bf16.msra.mxu0 %v8132
    %9876 = vmatpush.bf16.msra.mxu0 %v8124
    %9877 = vmatpush.bf16.msra.mxu0 %v8116
    %9878 = vmatpush.bf16.msra.mxu0 %v8108
    %9879 = vmatmul.bf16.gmra.mxu0 %v5001
    %v9880 = vpop.f32.mrf.mxu0
    %v9881 = vadd.f32 %v5788, %v9880
    %v9882 = vpop.f32.mrf.mxu0
    %v9883 = vadd.f32 %v5788, %v9882
    %9884 = vmatmul.bf16.gmra.mxu0 %v5009
    %v9885 = vpop.f32.mrf.mxu0
    %v9886 = vadd.f32 %v5788, %v9885
    %v9887 = vpop.f32.mrf.mxu0
    %v9888 = vadd.f32 %v5788, %v9887
    %9889 = vdwg.mxu0
    %9890 = vmatpush.bf16.msra.mxu0 %v8228
    %9891 = vmatpush.bf16.msra.mxu0 %v8220
    %9892 = vmatpush.bf16.msra.mxu0 %v8212
    %9893 = vmatpush.bf16.msra.mxu0 %v8204
    %9894 = vmatpush.bf16.msra.mxu0 %v8196
    %9895 = vmatpush.bf16.msra.mxu0 %v8188
    %9896 = vmatpush.bf16.msra.mxu0 %v8180
    %9897 = vmatpush.bf16.msra.mxu0 %v8172
    %9898 = vmatmul.bf16.gmra.mxu0 %v5002
    %v9899 = vpop.f32.mrf.mxu0
    %v9900 = vadd.f32 %v9881, %v9899
    %v9901 = vpop.f32.mrf.mxu0
    %v9902 = vadd.f32 %v9883, %v9901
    %9903 = vmatmul.bf16.gmra.mxu0 %v5010
    %v9904 = vpop.f32.mrf.mxu0
    %v9905 = vadd.f32 %v9886, %v9904
    %v9906 = vpop.f32.mrf.mxu0
    %v9907 = vadd.f32 %v9888, %v9906
    %9908 = vdwg.mxu0
    %9909 = vmatpush.bf16.msra.mxu0 %v8292
    %9910 = vmatpush.bf16.msra.mxu0 %v8284
    %9911 = vmatpush.bf16.msra.mxu0 %v8276
    %9912 = vmatpush.bf16.msra.mxu0 %v8268
    %9913 = vmatpush.bf16.msra.mxu0 %v8260
    %9914 = vmatpush.bf16.msra.mxu0 %v8252
    %9915 = vmatpush.bf16.msra.mxu0 %v8244
    %9916 = vmatpush.bf16.msra.mxu0 %v8236
    %9917 = vmatmul.bf16.gmra.mxu0 %v5003
    %v9918 = vpop.f32.mrf.mxu0
    %v9919 = vadd.f32 %v9900, %v9918
    %v9920 = vpop.f32.mrf.mxu0
    %v9921 = vadd.f32 %v9902, %v9920
    %9922 = vmatmul.bf16.gmra.mxu0 %v5011
    %v9923 = vpop.f32.mrf.mxu0
    %v9924 = vadd.f32 %v9905, %v9923
    %v9925 = vpop.f32.mrf.mxu0
    %v9926 = vadd.f32 %v9907, %v9925
    %9927 = vdwg.mxu0
    %9928 = vmatpush.bf16.msra.mxu0 %v8356
    %9929 = vmatpush.bf16.msra.mxu0 %v8348
    %9930 = vmatpush.bf16.msra.mxu0 %v8340
    %9931 = vmatpush.bf16.msra.mxu0 %v8332
    %9932 = vmatpush.bf16.msra.mxu0 %v8324
    %9933 = vmatpush.bf16.msra.mxu0 %v8316
    %9934 = vmatpush.bf16.msra.mxu0 %v8308
    %9935 = vmatpush.bf16.msra.mxu0 %v8300
    %9936 = vmatmul.bf16.gmra.mxu0 %v5004
    %v9937 = vpop.f32.mrf.mxu0
    %v9938 = vadd.f32 %v9919, %v9937
    %v9939 = vpop.f32.mrf.mxu0
    %v9940 = vadd.f32 %v9921, %v9939
    %9941 = vmatmul.bf16.gmra.mxu0 %v5012
    %v9942 = vpop.f32.mrf.mxu0
    %v9943 = vadd.f32 %v9924, %v9942
    %v9944 = vpop.f32.mrf.mxu0
    %v9945 = vadd.f32 %v9926, %v9944
    %9946 = vdwg.mxu0
    %9947 = vmatpush.bf16.msra.mxu0 %v8420
    %9948 = vmatpush.bf16.msra.mxu0 %v8412
    %9949 = vmatpush.bf16.msra.mxu0 %v8404
    %9950 = vmatpush.bf16.msra.mxu0 %v8396
    %9951 = vmatpush.bf16.msra.mxu0 %v8388
    %9952 = vmatpush.bf16.msra.mxu0 %v8380
    %9953 = vmatpush.bf16.msra.mxu0 %v8372
    %9954 = vmatpush.bf16.msra.mxu0 %v8364
    %9955 = vmatmul.bf16.gmra.mxu0 %v4557
    %v9956 = vpop.f32.mrf.mxu0
    %v9957 = vadd.f32 %v9938, %v9956
    %v9958 = vpop.f32.mrf.mxu0
    %v9959 = vadd.f32 %v9940, %v9958
    %9960 = vmatmul.bf16.gmra.mxu0 %v4561
    %v9961 = vpop.f32.mrf.mxu0
    %v9962 = vadd.f32 %v9943, %v9961
    %v9963 = vpop.f32.mrf.mxu0
    %v9964 = vadd.f32 %v9945, %v9963
    %9965 = vdwg.mxu0
    %9966 = vmatpush.bf16.msra.mxu0 %v8484
    %9967 = vmatpush.bf16.msra.mxu0 %v8476
    %9968 = vmatpush.bf16.msra.mxu0 %v8468
    %9969 = vmatpush.bf16.msra.mxu0 %v8460
    %9970 = vmatpush.bf16.msra.mxu0 %v8452
    %9971 = vmatpush.bf16.msra.mxu0 %v8444
    %9972 = vmatpush.bf16.msra.mxu0 %v8436
    %9973 = vmatpush.bf16.msra.mxu0 %v8428
    %9974 = vmatmul.bf16.gmra.mxu0 %v4558
    %v9975 = vpop.f32.mrf.mxu0
    %v9976 = vadd.f32 %v9957, %v9975
    %v9977 = vpop.f32.mrf.mxu0
    %v9978 = vadd.f32 %v9959, %v9977
    %9979 = vmatmul.bf16.gmra.mxu0 %v4562
    %v9980 = vpop.f32.mrf.mxu0
    %v9981 = vadd.f32 %v9962, %v9980
    %v9982 = vpop.f32.mrf.mxu0
    %v9983 = vadd.f32 %v9964, %v9982
    %9984 = vdwg.mxu0
    %9985 = vmatpush.bf16.msra.mxu0 %v8548
    %9986 = vmatpush.bf16.msra.mxu0 %v8540
    %9987 = vmatpush.bf16.msra.mxu0 %v8532
    %9988 = vmatpush.bf16.msra.mxu0 %v8524
    %9989 = vmatpush.bf16.msra.mxu0 %v8516
    %9990 = vmatpush.bf16.msra.mxu0 %v8508
    %9991 = vmatpush.bf16.msra.mxu0 %v8500
    %9992 = vmatpush.bf16.msra.mxu0 %v8492
    %9993 = vmatmul.bf16.gmra.mxu0 %v4559
    %v9994 = vpop.f32.mrf.mxu0
    %v9995 = vadd.f32 %v9976, %v9994
    %v9996 = vpop.f32.mrf.mxu0
    %v9997 = vadd.f32 %v9978, %v9996
    %9998 = vmatmul.bf16.gmra.mxu0 %v4563
    %v9999 = vpop.f32.mrf.mxu0
    %v10000 = vadd.f32 %v9981, %v9999
    %v10001 = vpop.f32.mrf.mxu0
    %v10002 = vadd.f32 %v9983, %v10001
    %10003 = vdwg.mxu0
    %10004 = vmatpush.bf16.msra.mxu0 %v8612
    %10005 = vmatpush.bf16.msra.mxu0 %v8604
    %10006 = vmatpush.bf16.msra.mxu0 %v8596
    %10007 = vmatpush.bf16.msra.mxu0 %v8588
    %10008 = vmatpush.bf16.msra.mxu0 %v8580
    %10009 = vmatpush.bf16.msra.mxu0 %v8572
    %10010 = vmatpush.bf16.msra.mxu0 %v8564
    %10011 = vmatpush.bf16.msra.mxu0 %v8556
    %10012 = vmatmul.bf16.gmra.mxu0 %v4560
    %v10013 = vpop.f32.mrf.mxu0
    %v10014 = vadd.f32 %v9995, %v10013
    %v10015 = vpop.f32.mrf.mxu0
    %v10016 = vadd.f32 %v9997, %v10015
    %10017 = vmatmul.bf16.gmra.mxu0 %v4564
    %v10018 = vpop.f32.mrf.mxu0
    %v10019 = vadd.f32 %v10000, %v10018
    %v10020 = vpop.f32.mrf.mxu0
    %v10021 = vadd.f32 %v10002, %v10020
    %10022 = vdwg.mxu0
    %10023 = vmatpush.bf16.msra.mxu0 %v8676
    %10024 = vmatpush.bf16.msra.mxu0 %v8668
    %10025 = vmatpush.bf16.msra.mxu0 %v8660
    %10026 = vmatpush.bf16.msra.mxu0 %v8652
    %10027 = vmatpush.bf16.msra.mxu0 %v8644
    %10028 = vmatpush.bf16.msra.mxu0 %v8636
    %10029 = vmatpush.bf16.msra.mxu0 %v8628
    %10030 = vmatpush.bf16.msra.mxu0 %v8620
    %10031 = vmatmul.bf16.gmra.mxu0 %v5005
    %v10032 = vpop.f32.mrf.mxu0
    %v10033 = vadd.f32 %v10014, %v10032
    %v10034 = vpop.f32.mrf.mxu0
    %v10035 = vadd.f32 %v10016, %v10034
    %10036 = vmatmul.bf16.gmra.mxu0 %v5013
    %v10037 = vpop.f32.mrf.mxu0
    %v10038 = vadd.f32 %v10019, %v10037
    %v10039 = vpop.f32.mrf.mxu0
    %v10040 = vadd.f32 %v10021, %v10039
    %10041 = vdwg.mxu0
    %10042 = vmatpush.bf16.msra.mxu0 %v8740
    %10043 = vmatpush.bf16.msra.mxu0 %v8732
    %10044 = vmatpush.bf16.msra.mxu0 %v8724
    %10045 = vmatpush.bf16.msra.mxu0 %v8716
    %10046 = vmatpush.bf16.msra.mxu0 %v8708
    %10047 = vmatpush.bf16.msra.mxu0 %v8700
    %10048 = vmatpush.bf16.msra.mxu0 %v8692
    %10049 = vmatpush.bf16.msra.mxu0 %v8684
    %10050 = vmatmul.bf16.gmra.mxu0 %v5006
    %v10051 = vpop.f32.mrf.mxu0
    %v10052 = vadd.f32 %v10033, %v10051
    %v10053 = vpop.f32.mrf.mxu0
    %v10054 = vadd.f32 %v10035, %v10053
    %10055 = vmatmul.bf16.gmra.mxu0 %v5014
    %v10056 = vpop.f32.mrf.mxu0
    %v10057 = vadd.f32 %v10038, %v10056
    %v10058 = vpop.f32.mrf.mxu0
    %v10059 = vadd.f32 %v10040, %v10058
    %10060 = vdwg.mxu0
    %10061 = vmatpush.bf16.msra.mxu0 %v8804
    %10062 = vmatpush.bf16.msra.mxu0 %v8796
    %10063 = vmatpush.bf16.msra.mxu0 %v8788
    %10064 = vmatpush.bf16.msra.mxu0 %v8780
    %10065 = vmatpush.bf16.msra.mxu0 %v8772
    %10066 = vmatpush.bf16.msra.mxu0 %v8764
    %10067 = vmatpush.bf16.msra.mxu0 %v8756
    %10068 = vmatpush.bf16.msra.mxu0 %v8748
    %10069 = vmatmul.bf16.gmra.mxu0 %v5007
    %v10070 = vpop.f32.mrf.mxu0
    %v10071 = vadd.f32 %v10052, %v10070
    %v10072 = vpop.f32.mrf.mxu0
    %v10073 = vadd.f32 %v10054, %v10072
    %10074 = vmatmul.bf16.gmra.mxu0 %v5015
    %v10075 = vpop.f32.mrf.mxu0
    %v10076 = vadd.f32 %v10057, %v10075
    %v10077 = vpop.f32.mrf.mxu0
    %v10078 = vadd.f32 %v10059, %v10077
    %10079 = vdwg.mxu0
    %10080 = vmatpush.bf16.msra.mxu0 %v8868
    %10081 = vmatpush.bf16.msra.mxu0 %v8860
    %10082 = vmatpush.bf16.msra.mxu0 %v8852
    %10083 = vmatpush.bf16.msra.mxu0 %v8844
    %10084 = vmatpush.bf16.msra.mxu0 %v8836
    %10085 = vmatpush.bf16.msra.mxu0 %v8828
    %10086 = vmatpush.bf16.msra.mxu0 %v8820
    %10087 = vmatpush.bf16.msra.mxu0 %v8812
    %10088 = vmatmul.bf16.gmra.mxu0 %v5008
    %v10089 = vpop.f32.mrf.mxu0
    %v10090 = vadd.f32 %v10071, %v10089
    %v10091 = vpop.f32.mrf.mxu0
    %v10092 = vadd.f32 %v10073, %v10091
    %10093 = vmatmul.bf16.gmra.mxu0 %v5016
    %v10094 = vpop.f32.mrf.mxu0
    %v10095 = vadd.f32 %v10076, %v10094
    %v10096 = vpop.f32.mrf.mxu0
    %v10097 = vadd.f32 %v10078, %v10096
    %10098 = vdwg.mxu0
    %10099 = vmatpush.bf16.msra.mxu0 %v8165
    %10100 = vmatpush.bf16.msra.mxu0 %v8157
    %10101 = vmatpush.bf16.msra.mxu0 %v8149
    %10102 = vmatpush.bf16.msra.mxu0 %v8141
    %10103 = vmatpush.bf16.msra.mxu0 %v8133
    %10104 = vmatpush.bf16.msra.mxu0 %v8125
    %10105 = vmatpush.bf16.msra.mxu0 %v8117
    %10106 = vmatpush.bf16.msra.mxu0 %v8109
    %10107 = vmatmul.bf16.gmra.mxu0 %v5001
    %v10108 = vpop.f32.mrf.mxu0
    %v10109 = vadd.f32 %v5789, %v10108
    %v10110 = vpop.f32.mrf.mxu0
    %v10111 = vadd.f32 %v5789, %v10110
    %10112 = vmatmul.bf16.gmra.mxu0 %v5009
    %v10113 = vpop.f32.mrf.mxu0
    %v10114 = vadd.f32 %v5789, %v10113
    %v10115 = vpop.f32.mrf.mxu0
    %v10116 = vadd.f32 %v5789, %v10115
    %10117 = vdwg.mxu0
    %10118 = vmatpush.bf16.msra.mxu0 %v8229
    %10119 = vmatpush.bf16.msra.mxu0 %v8221
    %10120 = vmatpush.bf16.msra.mxu0 %v8213
    %10121 = vmatpush.bf16.msra.mxu0 %v8205
    %10122 = vmatpush.bf16.msra.mxu0 %v8197
    %10123 = vmatpush.bf16.msra.mxu0 %v8189
    %10124 = vmatpush.bf16.msra.mxu0 %v8181
    %10125 = vmatpush.bf16.msra.mxu0 %v8173
    %10126 = vmatmul.bf16.gmra.mxu0 %v5002
    %v10127 = vpop.f32.mrf.mxu0
    %v10128 = vadd.f32 %v10109, %v10127
    %v10129 = vpop.f32.mrf.mxu0
    %v10130 = vadd.f32 %v10111, %v10129
    %10131 = vmatmul.bf16.gmra.mxu0 %v5010
    %v10132 = vpop.f32.mrf.mxu0
    %v10133 = vadd.f32 %v10114, %v10132
    %v10134 = vpop.f32.mrf.mxu0
    %v10135 = vadd.f32 %v10116, %v10134
    %10136 = vdwg.mxu0
    %10137 = vmatpush.bf16.msra.mxu0 %v8293
    %10138 = vmatpush.bf16.msra.mxu0 %v8285
    %10139 = vmatpush.bf16.msra.mxu0 %v8277
    %10140 = vmatpush.bf16.msra.mxu0 %v8269
    %10141 = vmatpush.bf16.msra.mxu0 %v8261
    %10142 = vmatpush.bf16.msra.mxu0 %v8253
    %10143 = vmatpush.bf16.msra.mxu0 %v8245
    %10144 = vmatpush.bf16.msra.mxu0 %v8237
    %10145 = vmatmul.bf16.gmra.mxu0 %v5003
    %v10146 = vpop.f32.mrf.mxu0
    %v10147 = vadd.f32 %v10128, %v10146
    %v10148 = vpop.f32.mrf.mxu0
    %v10149 = vadd.f32 %v10130, %v10148
    %10150 = vmatmul.bf16.gmra.mxu0 %v5011
    %v10151 = vpop.f32.mrf.mxu0
    %v10152 = vadd.f32 %v10133, %v10151
    %v10153 = vpop.f32.mrf.mxu0
    %v10154 = vadd.f32 %v10135, %v10153
    %10155 = vdwg.mxu0
    %10156 = vmatpush.bf16.msra.mxu0 %v8357
    %10157 = vmatpush.bf16.msra.mxu0 %v8349
    %10158 = vmatpush.bf16.msra.mxu0 %v8341
    %10159 = vmatpush.bf16.msra.mxu0 %v8333
    %10160 = vmatpush.bf16.msra.mxu0 %v8325
    %10161 = vmatpush.bf16.msra.mxu0 %v8317
    %10162 = vmatpush.bf16.msra.mxu0 %v8309
    %10163 = vmatpush.bf16.msra.mxu0 %v8301
    %10164 = vmatmul.bf16.gmra.mxu0 %v5004
    %v10165 = vpop.f32.mrf.mxu0
    %v10166 = vadd.f32 %v10147, %v10165
    %v10167 = vpop.f32.mrf.mxu0
    %v10168 = vadd.f32 %v10149, %v10167
    %10169 = vmatmul.bf16.gmra.mxu0 %v5012
    %v10170 = vpop.f32.mrf.mxu0
    %v10171 = vadd.f32 %v10152, %v10170
    %v10172 = vpop.f32.mrf.mxu0
    %v10173 = vadd.f32 %v10154, %v10172
    %10174 = vdwg.mxu0
    %10175 = vmatpush.bf16.msra.mxu0 %v8421
    %10176 = vmatpush.bf16.msra.mxu0 %v8413
    %10177 = vmatpush.bf16.msra.mxu0 %v8405
    %10178 = vmatpush.bf16.msra.mxu0 %v8397
    %10179 = vmatpush.bf16.msra.mxu0 %v8389
    %10180 = vmatpush.bf16.msra.mxu0 %v8381
    %10181 = vmatpush.bf16.msra.mxu0 %v8373
    %10182 = vmatpush.bf16.msra.mxu0 %v8365
    %10183 = vmatmul.bf16.gmra.mxu0 %v4557
    %v10184 = vpop.f32.mrf.mxu0
    %v10185 = vadd.f32 %v10166, %v10184
    %v10186 = vpop.f32.mrf.mxu0
    %v10187 = vadd.f32 %v10168, %v10186
    %10188 = vmatmul.bf16.gmra.mxu0 %v4561
    %v10189 = vpop.f32.mrf.mxu0
    %v10190 = vadd.f32 %v10171, %v10189
    %v10191 = vpop.f32.mrf.mxu0
    %v10192 = vadd.f32 %v10173, %v10191
    %10193 = vdwg.mxu0
    %10194 = vmatpush.bf16.msra.mxu0 %v8485
    %10195 = vmatpush.bf16.msra.mxu0 %v8477
    %10196 = vmatpush.bf16.msra.mxu0 %v8469
    %10197 = vmatpush.bf16.msra.mxu0 %v8461
    %10198 = vmatpush.bf16.msra.mxu0 %v8453
    %10199 = vmatpush.bf16.msra.mxu0 %v8445
    %10200 = vmatpush.bf16.msra.mxu0 %v8437
    %10201 = vmatpush.bf16.msra.mxu0 %v8429
    %10202 = vmatmul.bf16.gmra.mxu0 %v4558
    %v10203 = vpop.f32.mrf.mxu0
    %v10204 = vadd.f32 %v10185, %v10203
    %v10205 = vpop.f32.mrf.mxu0
    %v10206 = vadd.f32 %v10187, %v10205
    %10207 = vmatmul.bf16.gmra.mxu0 %v4562
    %v10208 = vpop.f32.mrf.mxu0
    %v10209 = vadd.f32 %v10190, %v10208
    %v10210 = vpop.f32.mrf.mxu0
    %v10211 = vadd.f32 %v10192, %v10210
    %10212 = vdwg.mxu0
    %10213 = vmatpush.bf16.msra.mxu0 %v8549
    %10214 = vmatpush.bf16.msra.mxu0 %v8541
    %10215 = vmatpush.bf16.msra.mxu0 %v8533
    %10216 = vmatpush.bf16.msra.mxu0 %v8525
    %10217 = vmatpush.bf16.msra.mxu0 %v8517
    %10218 = vmatpush.bf16.msra.mxu0 %v8509
    %10219 = vmatpush.bf16.msra.mxu0 %v8501
    %10220 = vmatpush.bf16.msra.mxu0 %v8493
    %10221 = vmatmul.bf16.gmra.mxu0 %v4559
    %v10222 = vpop.f32.mrf.mxu0
    %v10223 = vadd.f32 %v10204, %v10222
    %v10224 = vpop.f32.mrf.mxu0
    %v10225 = vadd.f32 %v10206, %v10224
    %10226 = vmatmul.bf16.gmra.mxu0 %v4563
    %v10227 = vpop.f32.mrf.mxu0
    %v10228 = vadd.f32 %v10209, %v10227
    %v10229 = vpop.f32.mrf.mxu0
    %v10230 = vadd.f32 %v10211, %v10229
    %10231 = vdwg.mxu0
    %10232 = vmatpush.bf16.msra.mxu0 %v8613
    %10233 = vmatpush.bf16.msra.mxu0 %v8605
    %10234 = vmatpush.bf16.msra.mxu0 %v8597
    %10235 = vmatpush.bf16.msra.mxu0 %v8589
    %10236 = vmatpush.bf16.msra.mxu0 %v8581
    %10237 = vmatpush.bf16.msra.mxu0 %v8573
    %10238 = vmatpush.bf16.msra.mxu0 %v8565
    %10239 = vmatpush.bf16.msra.mxu0 %v8557
    %10240 = vmatmul.bf16.gmra.mxu0 %v4560
    %v10241 = vpop.f32.mrf.mxu0
    %v10242 = vadd.f32 %v10223, %v10241
    %v10243 = vpop.f32.mrf.mxu0
    %v10244 = vadd.f32 %v10225, %v10243
    %10245 = vmatmul.bf16.gmra.mxu0 %v4564
    %v10246 = vpop.f32.mrf.mxu0
    %v10247 = vadd.f32 %v10228, %v10246
    %v10248 = vpop.f32.mrf.mxu0
    %v10249 = vadd.f32 %v10230, %v10248
    %10250 = vdwg.mxu0
    %10251 = vmatpush.bf16.msra.mxu0 %v8677
    %10252 = vmatpush.bf16.msra.mxu0 %v8669
    %10253 = vmatpush.bf16.msra.mxu0 %v8661
    %10254 = vmatpush.bf16.msra.mxu0 %v8653
    %10255 = vmatpush.bf16.msra.mxu0 %v8645
    %10256 = vmatpush.bf16.msra.mxu0 %v8637
    %10257 = vmatpush.bf16.msra.mxu0 %v8629
    %10258 = vmatpush.bf16.msra.mxu0 %v8621
    %10259 = vmatmul.bf16.gmra.mxu0 %v5005
    %v10260 = vpop.f32.mrf.mxu0
    %v10261 = vadd.f32 %v10242, %v10260
    %v10262 = vpop.f32.mrf.mxu0
    %v10263 = vadd.f32 %v10244, %v10262
    %10264 = vmatmul.bf16.gmra.mxu0 %v5013
    %v10265 = vpop.f32.mrf.mxu0
    %v10266 = vadd.f32 %v10247, %v10265
    %v10267 = vpop.f32.mrf.mxu0
    %v10268 = vadd.f32 %v10249, %v10267
    %10269 = vdwg.mxu0
    %10270 = vmatpush.bf16.msra.mxu0 %v8741
    %10271 = vmatpush.bf16.msra.mxu0 %v8733
    %10272 = vmatpush.bf16.msra.mxu0 %v8725
    %10273 = vmatpush.bf16.msra.mxu0 %v8717
    %10274 = vmatpush.bf16.msra.mxu0 %v8709
    %10275 = vmatpush.bf16.msra.mxu0 %v8701
    %10276 = vmatpush.bf16.msra.mxu0 %v8693
    %10277 = vmatpush.bf16.msra.mxu0 %v8685
    %10278 = vmatmul.bf16.gmra.mxu0 %v5006
    %v10279 = vpop.f32.mrf.mxu0
    %v10280 = vadd.f32 %v10261, %v10279
    %v10281 = vpop.f32.mrf.mxu0
    %v10282 = vadd.f32 %v10263, %v10281
    %10283 = vmatmul.bf16.gmra.mxu0 %v5014
    %v10284 = vpop.f32.mrf.mxu0
    %v10285 = vadd.f32 %v10266, %v10284
    %v10286 = vpop.f32.mrf.mxu0
    %v10287 = vadd.f32 %v10268, %v10286
    %10288 = vdwg.mxu0
    %10289 = vmatpush.bf16.msra.mxu0 %v8805
    %10290 = vmatpush.bf16.msra.mxu0 %v8797
    %10291 = vmatpush.bf16.msra.mxu0 %v8789
    %10292 = vmatpush.bf16.msra.mxu0 %v8781
    %10293 = vmatpush.bf16.msra.mxu0 %v8773
    %10294 = vmatpush.bf16.msra.mxu0 %v8765
    %10295 = vmatpush.bf16.msra.mxu0 %v8757
    %10296 = vmatpush.bf16.msra.mxu0 %v8749
    %10297 = vmatmul.bf16.gmra.mxu0 %v5007
    %v10298 = vpop.f32.mrf.mxu0
    %v10299 = vadd.f32 %v10280, %v10298
    %v10300 = vpop.f32.mrf.mxu0
    %v10301 = vadd.f32 %v10282, %v10300
    %10302 = vmatmul.bf16.gmra.mxu0 %v5015
    %v10303 = vpop.f32.mrf.mxu0
    %v10304 = vadd.f32 %v10285, %v10303
    %v10305 = vpop.f32.mrf.mxu0
    %v10306 = vadd.f32 %v10287, %v10305
    %10307 = vdwg.mxu0
    %10308 = vmatpush.bf16.msra.mxu0 %v8869
    %10309 = vmatpush.bf16.msra.mxu0 %v8861
    %10310 = vmatpush.bf16.msra.mxu0 %v8853
    %10311 = vmatpush.bf16.msra.mxu0 %v8845
    %10312 = vmatpush.bf16.msra.mxu0 %v8837
    %10313 = vmatpush.bf16.msra.mxu0 %v8829
    %10314 = vmatpush.bf16.msra.mxu0 %v8821
    %10315 = vmatpush.bf16.msra.mxu0 %v8813
    %10316 = vmatmul.bf16.gmra.mxu0 %v5008
    %v10317 = vpop.f32.mrf.mxu0
    %v10318 = vadd.f32 %v10299, %v10317
    %v10319 = vpop.f32.mrf.mxu0
    %v10320 = vadd.f32 %v10301, %v10319
    %10321 = vmatmul.bf16.gmra.mxu0 %v5016
    %v10322 = vpop.f32.mrf.mxu0
    %v10323 = vadd.f32 %v10304, %v10322
    %v10324 = vpop.f32.mrf.mxu0
    %v10325 = vadd.f32 %v10306, %v10324
    %10326 = vdwg.mxu0
    %10327 = vmatpush.bf16.msra.mxu0 %v8166
    %10328 = vmatpush.bf16.msra.mxu0 %v8158
    %10329 = vmatpush.bf16.msra.mxu0 %v8150
    %10330 = vmatpush.bf16.msra.mxu0 %v8142
    %10331 = vmatpush.bf16.msra.mxu0 %v8134
    %10332 = vmatpush.bf16.msra.mxu0 %v8126
    %10333 = vmatpush.bf16.msra.mxu0 %v8118
    %10334 = vmatpush.bf16.msra.mxu0 %v8110
    %10335 = vmatmul.bf16.gmra.mxu0 %v5001
    %v10336 = vpop.f32.mrf.mxu0
    %v10337 = vadd.f32 %v5790, %v10336
    %v10338 = vpop.f32.mrf.mxu0
    %v10339 = vadd.f32 %v5790, %v10338
    %10340 = vmatmul.bf16.gmra.mxu0 %v5009
    %v10341 = vpop.f32.mrf.mxu0
    %v10342 = vadd.f32 %v5790, %v10341
    %v10343 = vpop.f32.mrf.mxu0
    %v10344 = vadd.f32 %v5790, %v10343
    %10345 = vdwg.mxu0
    %10346 = vmatpush.bf16.msra.mxu0 %v8230
    %10347 = vmatpush.bf16.msra.mxu0 %v8222
    %10348 = vmatpush.bf16.msra.mxu0 %v8214
    %10349 = vmatpush.bf16.msra.mxu0 %v8206
    %10350 = vmatpush.bf16.msra.mxu0 %v8198
    %10351 = vmatpush.bf16.msra.mxu0 %v8190
    %10352 = vmatpush.bf16.msra.mxu0 %v8182
    %10353 = vmatpush.bf16.msra.mxu0 %v8174
    %10354 = vmatmul.bf16.gmra.mxu0 %v5002
    %v10355 = vpop.f32.mrf.mxu0
    %v10356 = vadd.f32 %v10337, %v10355
    %v10357 = vpop.f32.mrf.mxu0
    %v10358 = vadd.f32 %v10339, %v10357
    %10359 = vmatmul.bf16.gmra.mxu0 %v5010
    %v10360 = vpop.f32.mrf.mxu0
    %v10361 = vadd.f32 %v10342, %v10360
    %v10362 = vpop.f32.mrf.mxu0
    %v10363 = vadd.f32 %v10344, %v10362
    %10364 = vdwg.mxu0
    %10365 = vmatpush.bf16.msra.mxu0 %v8294
    %10366 = vmatpush.bf16.msra.mxu0 %v8286
    %10367 = vmatpush.bf16.msra.mxu0 %v8278
    %10368 = vmatpush.bf16.msra.mxu0 %v8270
    %10369 = vmatpush.bf16.msra.mxu0 %v8262
    %10370 = vmatpush.bf16.msra.mxu0 %v8254
    %10371 = vmatpush.bf16.msra.mxu0 %v8246
    %10372 = vmatpush.bf16.msra.mxu0 %v8238
    %10373 = vmatmul.bf16.gmra.mxu0 %v5003
    %v10374 = vpop.f32.mrf.mxu0
    %v10375 = vadd.f32 %v10356, %v10374
    %v10376 = vpop.f32.mrf.mxu0
    %v10377 = vadd.f32 %v10358, %v10376
    %10378 = vmatmul.bf16.gmra.mxu0 %v5011
    %v10379 = vpop.f32.mrf.mxu0
    %v10380 = vadd.f32 %v10361, %v10379
    %v10381 = vpop.f32.mrf.mxu0
    %v10382 = vadd.f32 %v10363, %v10381
    %10383 = vdwg.mxu0
    %10384 = vmatpush.bf16.msra.mxu0 %v8358
    %10385 = vmatpush.bf16.msra.mxu0 %v8350
    %10386 = vmatpush.bf16.msra.mxu0 %v8342
    %10387 = vmatpush.bf16.msra.mxu0 %v8334
    %10388 = vmatpush.bf16.msra.mxu0 %v8326
    %10389 = vmatpush.bf16.msra.mxu0 %v8318
    %10390 = vmatpush.bf16.msra.mxu0 %v8310
    %10391 = vmatpush.bf16.msra.mxu0 %v8302
    %10392 = vmatmul.bf16.gmra.mxu0 %v5004
    %v10393 = vpop.f32.mrf.mxu0
    %v10394 = vadd.f32 %v10375, %v10393
    %v10395 = vpop.f32.mrf.mxu0
    %v10396 = vadd.f32 %v10377, %v10395
    %10397 = vmatmul.bf16.gmra.mxu0 %v5012
    %v10398 = vpop.f32.mrf.mxu0
    %v10399 = vadd.f32 %v10380, %v10398
    %v10400 = vpop.f32.mrf.mxu0
    %v10401 = vadd.f32 %v10382, %v10400
    %10402 = vdwg.mxu0
    %10403 = vmatpush.bf16.msra.mxu0 %v8422
    %10404 = vmatpush.bf16.msra.mxu0 %v8414
    %10405 = vmatpush.bf16.msra.mxu0 %v8406
    %10406 = vmatpush.bf16.msra.mxu0 %v8398
    %10407 = vmatpush.bf16.msra.mxu0 %v8390
    %10408 = vmatpush.bf16.msra.mxu0 %v8382
    %10409 = vmatpush.bf16.msra.mxu0 %v8374
    %10410 = vmatpush.bf16.msra.mxu0 %v8366
    %10411 = vmatmul.bf16.gmra.mxu0 %v4557
    %v10412 = vpop.f32.mrf.mxu0
    %v10413 = vadd.f32 %v10394, %v10412
    %v10414 = vpop.f32.mrf.mxu0
    %v10415 = vadd.f32 %v10396, %v10414
    %10416 = vmatmul.bf16.gmra.mxu0 %v4561
    %v10417 = vpop.f32.mrf.mxu0
    %v10418 = vadd.f32 %v10399, %v10417
    %v10419 = vpop.f32.mrf.mxu0
    %v10420 = vadd.f32 %v10401, %v10419
    %10421 = vdwg.mxu0
    %10422 = vmatpush.bf16.msra.mxu0 %v8486
    %10423 = vmatpush.bf16.msra.mxu0 %v8478
    %10424 = vmatpush.bf16.msra.mxu0 %v8470
    %10425 = vmatpush.bf16.msra.mxu0 %v8462
    %10426 = vmatpush.bf16.msra.mxu0 %v8454
    %10427 = vmatpush.bf16.msra.mxu0 %v8446
    %10428 = vmatpush.bf16.msra.mxu0 %v8438
    %10429 = vmatpush.bf16.msra.mxu0 %v8430
    %10430 = vmatmul.bf16.gmra.mxu0 %v4558
    %v10431 = vpop.f32.mrf.mxu0
    %v10432 = vadd.f32 %v10413, %v10431
    %v10433 = vpop.f32.mrf.mxu0
    %v10434 = vadd.f32 %v10415, %v10433
    %10435 = vmatmul.bf16.gmra.mxu0 %v4562
    %v10436 = vpop.f32.mrf.mxu0
    %v10437 = vadd.f32 %v10418, %v10436
    %v10438 = vpop.f32.mrf.mxu0
    %v10439 = vadd.f32 %v10420, %v10438
    %10440 = vdwg.mxu0
    %10441 = vmatpush.bf16.msra.mxu0 %v8550
    %10442 = vmatpush.bf16.msra.mxu0 %v8542
    %10443 = vmatpush.bf16.msra.mxu0 %v8534
    %10444 = vmatpush.bf16.msra.mxu0 %v8526
    %10445 = vmatpush.bf16.msra.mxu0 %v8518
    %10446 = vmatpush.bf16.msra.mxu0 %v8510
    %10447 = vmatpush.bf16.msra.mxu0 %v8502
    %10448 = vmatpush.bf16.msra.mxu0 %v8494
    %10449 = vmatmul.bf16.gmra.mxu0 %v4559
    %v10450 = vpop.f32.mrf.mxu0
    %v10451 = vadd.f32 %v10432, %v10450
    %v10452 = vpop.f32.mrf.mxu0
    %v10453 = vadd.f32 %v10434, %v10452
    %10454 = vmatmul.bf16.gmra.mxu0 %v4563
    %v10455 = vpop.f32.mrf.mxu0
    %v10456 = vadd.f32 %v10437, %v10455
    %v10457 = vpop.f32.mrf.mxu0
    %v10458 = vadd.f32 %v10439, %v10457
    %10459 = vdwg.mxu0
    %10460 = vmatpush.bf16.msra.mxu0 %v8614
    %10461 = vmatpush.bf16.msra.mxu0 %v8606
    %10462 = vmatpush.bf16.msra.mxu0 %v8598
    %10463 = vmatpush.bf16.msra.mxu0 %v8590
    %10464 = vmatpush.bf16.msra.mxu0 %v8582
    %10465 = vmatpush.bf16.msra.mxu0 %v8574
    %10466 = vmatpush.bf16.msra.mxu0 %v8566
    %10467 = vmatpush.bf16.msra.mxu0 %v8558
    %10468 = vmatmul.bf16.gmra.mxu0 %v4560
    %v10469 = vpop.f32.mrf.mxu0
    %v10470 = vadd.f32 %v10451, %v10469
    %v10471 = vpop.f32.mrf.mxu0
    %v10472 = vadd.f32 %v10453, %v10471
    %10473 = vmatmul.bf16.gmra.mxu0 %v4564
    %v10474 = vpop.f32.mrf.mxu0
    %v10475 = vadd.f32 %v10456, %v10474
    %v10476 = vpop.f32.mrf.mxu0
    %v10477 = vadd.f32 %v10458, %v10476
    %10478 = vdwg.mxu0
    %10479 = vmatpush.bf16.msra.mxu0 %v8678
    %10480 = vmatpush.bf16.msra.mxu0 %v8670
    %10481 = vmatpush.bf16.msra.mxu0 %v8662
    %10482 = vmatpush.bf16.msra.mxu0 %v8654
    %10483 = vmatpush.bf16.msra.mxu0 %v8646
    %10484 = vmatpush.bf16.msra.mxu0 %v8638
    %10485 = vmatpush.bf16.msra.mxu0 %v8630
    %10486 = vmatpush.bf16.msra.mxu0 %v8622
    %10487 = vmatmul.bf16.gmra.mxu0 %v5005
    %v10488 = vpop.f32.mrf.mxu0
    %v10489 = vadd.f32 %v10470, %v10488
    %v10490 = vpop.f32.mrf.mxu0
    %v10491 = vadd.f32 %v10472, %v10490
    %10492 = vmatmul.bf16.gmra.mxu0 %v5013
    %v10493 = vpop.f32.mrf.mxu0
    %v10494 = vadd.f32 %v10475, %v10493
    %v10495 = vpop.f32.mrf.mxu0
    %v10496 = vadd.f32 %v10477, %v10495
    %10497 = vdwg.mxu0
    %10498 = vmatpush.bf16.msra.mxu0 %v8742
    %10499 = vmatpush.bf16.msra.mxu0 %v8734
    %10500 = vmatpush.bf16.msra.mxu0 %v8726
    %10501 = vmatpush.bf16.msra.mxu0 %v8718
    %10502 = vmatpush.bf16.msra.mxu0 %v8710
    %10503 = vmatpush.bf16.msra.mxu0 %v8702
    %10504 = vmatpush.bf16.msra.mxu0 %v8694
    %10505 = vmatpush.bf16.msra.mxu0 %v8686
    %10506 = vmatmul.bf16.gmra.mxu0 %v5006
    %v10507 = vpop.f32.mrf.mxu0
    %v10508 = vadd.f32 %v10489, %v10507
    %v10509 = vpop.f32.mrf.mxu0
    %v10510 = vadd.f32 %v10491, %v10509
    %10511 = vmatmul.bf16.gmra.mxu0 %v5014
    %v10512 = vpop.f32.mrf.mxu0
    %v10513 = vadd.f32 %v10494, %v10512
    %v10514 = vpop.f32.mrf.mxu0
    %v10515 = vadd.f32 %v10496, %v10514
    %10516 = vdwg.mxu0
    %10517 = vmatpush.bf16.msra.mxu0 %v8806
    %10518 = vmatpush.bf16.msra.mxu0 %v8798
    %10519 = vmatpush.bf16.msra.mxu0 %v8790
    %10520 = vmatpush.bf16.msra.mxu0 %v8782
    %10521 = vmatpush.bf16.msra.mxu0 %v8774
    %10522 = vmatpush.bf16.msra.mxu0 %v8766
    %10523 = vmatpush.bf16.msra.mxu0 %v8758
    %10524 = vmatpush.bf16.msra.mxu0 %v8750
    %10525 = vmatmul.bf16.gmra.mxu0 %v5007
    %v10526 = vpop.f32.mrf.mxu0
    %v10527 = vadd.f32 %v10508, %v10526
    %v10528 = vpop.f32.mrf.mxu0
    %v10529 = vadd.f32 %v10510, %v10528
    %10530 = vmatmul.bf16.gmra.mxu0 %v5015
    %v10531 = vpop.f32.mrf.mxu0
    %v10532 = vadd.f32 %v10513, %v10531
    %v10533 = vpop.f32.mrf.mxu0
    %v10534 = vadd.f32 %v10515, %v10533
    %10535 = vdwg.mxu0
    %10536 = vmatpush.bf16.msra.mxu0 %v8870
    %10537 = vmatpush.bf16.msra.mxu0 %v8862
    %10538 = vmatpush.bf16.msra.mxu0 %v8854
    %10539 = vmatpush.bf16.msra.mxu0 %v8846
    %10540 = vmatpush.bf16.msra.mxu0 %v8838
    %10541 = vmatpush.bf16.msra.mxu0 %v8830
    %10542 = vmatpush.bf16.msra.mxu0 %v8822
    %10543 = vmatpush.bf16.msra.mxu0 %v8814
    %10544 = vmatmul.bf16.gmra.mxu0 %v5008
    %v10545 = vpop.f32.mrf.mxu0
    %v10546 = vadd.f32 %v10527, %v10545
    %v10547 = vpop.f32.mrf.mxu0
    %v10548 = vadd.f32 %v10529, %v10547
    %10549 = vmatmul.bf16.gmra.mxu0 %v5016
    %v10550 = vpop.f32.mrf.mxu0
    %v10551 = vadd.f32 %v10532, %v10550
    %v10552 = vpop.f32.mrf.mxu0
    %v10553 = vadd.f32 %v10534, %v10552
    %10554 = vdwg.mxu0
    %10555 = vmatpush.bf16.msra.mxu0 %v8167
    %10556 = vmatpush.bf16.msra.mxu0 %v8159
    %10557 = vmatpush.bf16.msra.mxu0 %v8151
    %10558 = vmatpush.bf16.msra.mxu0 %v8143
    %10559 = vmatpush.bf16.msra.mxu0 %v8135
    %10560 = vmatpush.bf16.msra.mxu0 %v8127
    %10561 = vmatpush.bf16.msra.mxu0 %v8119
    %10562 = vmatpush.bf16.msra.mxu0 %v8111
    %10563 = vmatmul.bf16.gmra.mxu0 %v5001
    %v10564 = vpop.f32.mrf.mxu0
    %v10565 = vadd.f32 %v5791, %v10564
    %v10566 = vpop.f32.mrf.mxu0
    %v10567 = vadd.f32 %v5791, %v10566
    %10568 = vmatmul.bf16.gmra.mxu0 %v5009
    %v10569 = vpop.f32.mrf.mxu0
    %v10570 = vadd.f32 %v5791, %v10569
    %v10571 = vpop.f32.mrf.mxu0
    %v10572 = vadd.f32 %v5791, %v10571
    %10573 = vdwg.mxu0
    %10574 = vmatpush.bf16.msra.mxu0 %v8231
    %10575 = vmatpush.bf16.msra.mxu0 %v8223
    %10576 = vmatpush.bf16.msra.mxu0 %v8215
    %10577 = vmatpush.bf16.msra.mxu0 %v8207
    %10578 = vmatpush.bf16.msra.mxu0 %v8199
    %10579 = vmatpush.bf16.msra.mxu0 %v8191
    %10580 = vmatpush.bf16.msra.mxu0 %v8183
    %10581 = vmatpush.bf16.msra.mxu0 %v8175
    %10582 = vmatmul.bf16.gmra.mxu0 %v5002
    %v10583 = vpop.f32.mrf.mxu0
    %v10584 = vadd.f32 %v10565, %v10583
    %v10585 = vpop.f32.mrf.mxu0
    %v10586 = vadd.f32 %v10567, %v10585
    %10587 = vmatmul.bf16.gmra.mxu0 %v5010
    %v10588 = vpop.f32.mrf.mxu0
    %v10589 = vadd.f32 %v10570, %v10588
    %v10590 = vpop.f32.mrf.mxu0
    %v10591 = vadd.f32 %v10572, %v10590
    %10592 = vdwg.mxu0
    %10593 = vmatpush.bf16.msra.mxu0 %v8295
    %10594 = vmatpush.bf16.msra.mxu0 %v8287
    %10595 = vmatpush.bf16.msra.mxu0 %v8279
    %10596 = vmatpush.bf16.msra.mxu0 %v8271
    %10597 = vmatpush.bf16.msra.mxu0 %v8263
    %10598 = vmatpush.bf16.msra.mxu0 %v8255
    %10599 = vmatpush.bf16.msra.mxu0 %v8247
    %10600 = vmatpush.bf16.msra.mxu0 %v8239
    %10601 = vmatmul.bf16.gmra.mxu0 %v5003
    %v10602 = vpop.f32.mrf.mxu0
    %v10603 = vadd.f32 %v10584, %v10602
    %v10604 = vpop.f32.mrf.mxu0
    %v10605 = vadd.f32 %v10586, %v10604
    %10606 = vmatmul.bf16.gmra.mxu0 %v5011
    %v10607 = vpop.f32.mrf.mxu0
    %v10608 = vadd.f32 %v10589, %v10607
    %v10609 = vpop.f32.mrf.mxu0
    %v10610 = vadd.f32 %v10591, %v10609
    %10611 = vdwg.mxu0
    %10612 = vmatpush.bf16.msra.mxu0 %v8359
    %10613 = vmatpush.bf16.msra.mxu0 %v8351
    %10614 = vmatpush.bf16.msra.mxu0 %v8343
    %10615 = vmatpush.bf16.msra.mxu0 %v8335
    %10616 = vmatpush.bf16.msra.mxu0 %v8327
    %10617 = vmatpush.bf16.msra.mxu0 %v8319
    %10618 = vmatpush.bf16.msra.mxu0 %v8311
    %10619 = vmatpush.bf16.msra.mxu0 %v8303
    %10620 = vmatmul.bf16.gmra.mxu0 %v5004
    %v10621 = vpop.f32.mrf.mxu0
    %v10622 = vadd.f32 %v10603, %v10621
    %v10623 = vpop.f32.mrf.mxu0
    %v10624 = vadd.f32 %v10605, %v10623
    %10625 = vmatmul.bf16.gmra.mxu0 %v5012
    %v10626 = vpop.f32.mrf.mxu0
    %v10627 = vadd.f32 %v10608, %v10626
    %v10628 = vpop.f32.mrf.mxu0
    %v10629 = vadd.f32 %v10610, %v10628
    %10630 = vdwg.mxu0
    %10631 = vmatpush.bf16.msra.mxu0 %v8423
    %10632 = vmatpush.bf16.msra.mxu0 %v8415
    %10633 = vmatpush.bf16.msra.mxu0 %v8407
    %10634 = vmatpush.bf16.msra.mxu0 %v8399
    %10635 = vmatpush.bf16.msra.mxu0 %v8391
    %10636 = vmatpush.bf16.msra.mxu0 %v8383
    %10637 = vmatpush.bf16.msra.mxu0 %v8375
    %10638 = vmatpush.bf16.msra.mxu0 %v8367
    %10639 = vmatmul.bf16.gmra.mxu0 %v4557
    %v10640 = vpop.f32.mrf.mxu0
    %v10641 = vadd.f32 %v10622, %v10640
    %v10642 = vpop.f32.mrf.mxu0
    %v10643 = vadd.f32 %v10624, %v10642
    %10644 = vmatmul.bf16.gmra.mxu0 %v4561
    %v10645 = vpop.f32.mrf.mxu0
    %v10646 = vadd.f32 %v10627, %v10645
    %v10647 = vpop.f32.mrf.mxu0
    %v10648 = vadd.f32 %v10629, %v10647
    %10649 = vdwg.mxu0
    %10650 = vmatpush.bf16.msra.mxu0 %v8487
    %10651 = vmatpush.bf16.msra.mxu0 %v8479
    %10652 = vmatpush.bf16.msra.mxu0 %v8471
    %10653 = vmatpush.bf16.msra.mxu0 %v8463
    %10654 = vmatpush.bf16.msra.mxu0 %v8455
    %10655 = vmatpush.bf16.msra.mxu0 %v8447
    %10656 = vmatpush.bf16.msra.mxu0 %v8439
    %10657 = vmatpush.bf16.msra.mxu0 %v8431
    %10658 = vmatmul.bf16.gmra.mxu0 %v4558
    %v10659 = vpop.f32.mrf.mxu0
    %v10660 = vadd.f32 %v10641, %v10659
    %v10661 = vpop.f32.mrf.mxu0
    %v10662 = vadd.f32 %v10643, %v10661
    %10663 = vmatmul.bf16.gmra.mxu0 %v4562
    %v10664 = vpop.f32.mrf.mxu0
    %v10665 = vadd.f32 %v10646, %v10664
    %v10666 = vpop.f32.mrf.mxu0
    %v10667 = vadd.f32 %v10648, %v10666
    %10668 = vdwg.mxu0
    %10669 = vmatpush.bf16.msra.mxu0 %v8551
    %10670 = vmatpush.bf16.msra.mxu0 %v8543
    %10671 = vmatpush.bf16.msra.mxu0 %v8535
    %10672 = vmatpush.bf16.msra.mxu0 %v8527
    %10673 = vmatpush.bf16.msra.mxu0 %v8519
    %10674 = vmatpush.bf16.msra.mxu0 %v8511
    %10675 = vmatpush.bf16.msra.mxu0 %v8503
    %10676 = vmatpush.bf16.msra.mxu0 %v8495
    %10677 = vmatmul.bf16.gmra.mxu0 %v4559
    %v10678 = vpop.f32.mrf.mxu0
    %v10679 = vadd.f32 %v10660, %v10678
    %v10680 = vpop.f32.mrf.mxu0
    %v10681 = vadd.f32 %v10662, %v10680
    %10682 = vmatmul.bf16.gmra.mxu0 %v4563
    %v10683 = vpop.f32.mrf.mxu0
    %v10684 = vadd.f32 %v10665, %v10683
    %v10685 = vpop.f32.mrf.mxu0
    %v10686 = vadd.f32 %v10667, %v10685
    %10687 = vdwg.mxu0
    %10688 = vmatpush.bf16.msra.mxu0 %v8615
    %10689 = vmatpush.bf16.msra.mxu0 %v8607
    %10690 = vmatpush.bf16.msra.mxu0 %v8599
    %10691 = vmatpush.bf16.msra.mxu0 %v8591
    %10692 = vmatpush.bf16.msra.mxu0 %v8583
    %10693 = vmatpush.bf16.msra.mxu0 %v8575
    %10694 = vmatpush.bf16.msra.mxu0 %v8567
    %10695 = vmatpush.bf16.msra.mxu0 %v8559
    %10696 = vmatmul.bf16.gmra.mxu0 %v4560
    %v10697 = vpop.f32.mrf.mxu0
    %v10698 = vadd.f32 %v10679, %v10697
    %v10699 = vpop.f32.mrf.mxu0
    %v10700 = vadd.f32 %v10681, %v10699
    %10701 = vmatmul.bf16.gmra.mxu0 %v4564
    %v10702 = vpop.f32.mrf.mxu0
    %v10703 = vadd.f32 %v10684, %v10702
    %v10704 = vpop.f32.mrf.mxu0
    %v10705 = vadd.f32 %v10686, %v10704
    %10706 = vdwg.mxu0
    %10707 = vmatpush.bf16.msra.mxu0 %v8679
    %10708 = vmatpush.bf16.msra.mxu0 %v8671
    %10709 = vmatpush.bf16.msra.mxu0 %v8663
    %10710 = vmatpush.bf16.msra.mxu0 %v8655
    %10711 = vmatpush.bf16.msra.mxu0 %v8647
    %10712 = vmatpush.bf16.msra.mxu0 %v8639
    %10713 = vmatpush.bf16.msra.mxu0 %v8631
    %10714 = vmatpush.bf16.msra.mxu0 %v8623
    %10715 = vmatmul.bf16.gmra.mxu0 %v5005
    %v10716 = vpop.f32.mrf.mxu0
    %v10717 = vadd.f32 %v10698, %v10716
    %v10718 = vpop.f32.mrf.mxu0
    %v10719 = vadd.f32 %v10700, %v10718
    %10720 = vmatmul.bf16.gmra.mxu0 %v5013
    %v10721 = vpop.f32.mrf.mxu0
    %v10722 = vadd.f32 %v10703, %v10721
    %v10723 = vpop.f32.mrf.mxu0
    %v10724 = vadd.f32 %v10705, %v10723
    %10725 = vdwg.mxu0
    %10726 = vmatpush.bf16.msra.mxu0 %v8743
    %10727 = vmatpush.bf16.msra.mxu0 %v8735
    %10728 = vmatpush.bf16.msra.mxu0 %v8727
    %10729 = vmatpush.bf16.msra.mxu0 %v8719
    %10730 = vmatpush.bf16.msra.mxu0 %v8711
    %10731 = vmatpush.bf16.msra.mxu0 %v8703
    %10732 = vmatpush.bf16.msra.mxu0 %v8695
    %10733 = vmatpush.bf16.msra.mxu0 %v8687
    %10734 = vmatmul.bf16.gmra.mxu0 %v5006
    %v10735 = vpop.f32.mrf.mxu0
    %v10736 = vadd.f32 %v10717, %v10735
    %v10737 = vpop.f32.mrf.mxu0
    %v10738 = vadd.f32 %v10719, %v10737
    %10739 = vmatmul.bf16.gmra.mxu0 %v5014
    %v10740 = vpop.f32.mrf.mxu0
    %v10741 = vadd.f32 %v10722, %v10740
    %v10742 = vpop.f32.mrf.mxu0
    %v10743 = vadd.f32 %v10724, %v10742
    %10744 = vdwg.mxu0
    %10745 = vmatpush.bf16.msra.mxu0 %v8807
    %10746 = vmatpush.bf16.msra.mxu0 %v8799
    %10747 = vmatpush.bf16.msra.mxu0 %v8791
    %10748 = vmatpush.bf16.msra.mxu0 %v8783
    %10749 = vmatpush.bf16.msra.mxu0 %v8775
    %10750 = vmatpush.bf16.msra.mxu0 %v8767
    %10751 = vmatpush.bf16.msra.mxu0 %v8759
    %10752 = vmatpush.bf16.msra.mxu0 %v8751
    %10753 = vmatmul.bf16.gmra.mxu0 %v5007
    %v10754 = vpop.f32.mrf.mxu0
    %v10755 = vadd.f32 %v10736, %v10754
    %v10756 = vpop.f32.mrf.mxu0
    %v10757 = vadd.f32 %v10738, %v10756
    %10758 = vmatmul.bf16.gmra.mxu0 %v5015
    %v10759 = vpop.f32.mrf.mxu0
    %v10760 = vadd.f32 %v10741, %v10759
    %v10761 = vpop.f32.mrf.mxu0
    %v10762 = vadd.f32 %v10743, %v10761
    %10763 = vdwg.mxu0
    %10764 = vmatpush.bf16.msra.mxu0 %v8871
    %10765 = vmatpush.bf16.msra.mxu0 %v8863
    %10766 = vmatpush.bf16.msra.mxu0 %v8855
    %10767 = vmatpush.bf16.msra.mxu0 %v8847
    %10768 = vmatpush.bf16.msra.mxu0 %v8839
    %10769 = vmatpush.bf16.msra.mxu0 %v8831
    %10770 = vmatpush.bf16.msra.mxu0 %v8823
    %10771 = vmatpush.bf16.msra.mxu0 %v8815
    %10772 = vmatmul.bf16.gmra.mxu0 %v5008
    %v10773 = vpop.f32.mrf.mxu0
    %v10774 = vadd.f32 %v10755, %v10773
    %v10775 = vpop.f32.mrf.mxu0
    %v10776 = vadd.f32 %v10757, %v10775
    %10777 = vmatmul.bf16.gmra.mxu0 %v5016
    %v10778 = vpop.f32.mrf.mxu0
    %v10779 = vadd.f32 %v10760, %v10778
    %v10780 = vpop.f32.mrf.mxu0
    %v10781 = vadd.f32 %v10762, %v10780
    %10782 = vdwg.mxu0
    %10783 = vmatpush.bf16.msra.mxu0 %v8168
    %10784 = vmatpush.bf16.msra.mxu0 %v8160
    %10785 = vmatpush.bf16.msra.mxu0 %v8152
    %10786 = vmatpush.bf16.msra.mxu0 %v8144
    %10787 = vmatpush.bf16.msra.mxu0 %v8136
    %10788 = vmatpush.bf16.msra.mxu0 %v8128
    %10789 = vmatpush.bf16.msra.mxu0 %v8120
    %10790 = vmatpush.bf16.msra.mxu0 %v8112
    %10791 = vmatmul.bf16.gmra.mxu0 %v5001
    %v10792 = vpop.f32.mrf.mxu0
    %v10793 = vadd.f32 %v5792, %v10792
    %v10794 = vpop.f32.mrf.mxu0
    %v10795 = vadd.f32 %v5792, %v10794
    %10796 = vmatmul.bf16.gmra.mxu0 %v5009
    %v10797 = vpop.f32.mrf.mxu0
    %v10798 = vadd.f32 %v5792, %v10797
    %v10799 = vpop.f32.mrf.mxu0
    %v10800 = vadd.f32 %v5792, %v10799
    %10801 = vdwg.mxu0
    %10802 = vmatpush.bf16.msra.mxu0 %v8232
    %10803 = vmatpush.bf16.msra.mxu0 %v8224
    %10804 = vmatpush.bf16.msra.mxu0 %v8216
    %10805 = vmatpush.bf16.msra.mxu0 %v8208
    %10806 = vmatpush.bf16.msra.mxu0 %v8200
    %10807 = vmatpush.bf16.msra.mxu0 %v8192
    %10808 = vmatpush.bf16.msra.mxu0 %v8184
    %10809 = vmatpush.bf16.msra.mxu0 %v8176
    %10810 = vmatmul.bf16.gmra.mxu0 %v5002
    %v10811 = vpop.f32.mrf.mxu0
    %v10812 = vadd.f32 %v10793, %v10811
    %v10813 = vpop.f32.mrf.mxu0
    %v10814 = vadd.f32 %v10795, %v10813
    %10815 = vmatmul.bf16.gmra.mxu0 %v5010
    %v10816 = vpop.f32.mrf.mxu0
    %v10817 = vadd.f32 %v10798, %v10816
    %v10818 = vpop.f32.mrf.mxu0
    %v10819 = vadd.f32 %v10800, %v10818
    %10820 = vdwg.mxu0
    %10821 = vmatpush.bf16.msra.mxu0 %v8296
    %10822 = vmatpush.bf16.msra.mxu0 %v8288
    %10823 = vmatpush.bf16.msra.mxu0 %v8280
    %10824 = vmatpush.bf16.msra.mxu0 %v8272
    %10825 = vmatpush.bf16.msra.mxu0 %v8264
    %10826 = vmatpush.bf16.msra.mxu0 %v8256
    %10827 = vmatpush.bf16.msra.mxu0 %v8248
    %10828 = vmatpush.bf16.msra.mxu0 %v8240
    %10829 = vmatmul.bf16.gmra.mxu0 %v5003
    %v10830 = vpop.f32.mrf.mxu0
    %v10831 = vadd.f32 %v10812, %v10830
    %v10832 = vpop.f32.mrf.mxu0
    %v10833 = vadd.f32 %v10814, %v10832
    %10834 = vmatmul.bf16.gmra.mxu0 %v5011
    %v10835 = vpop.f32.mrf.mxu0
    %v10836 = vadd.f32 %v10817, %v10835
    %v10837 = vpop.f32.mrf.mxu0
    %v10838 = vadd.f32 %v10819, %v10837
    %10839 = vdwg.mxu0
    %10840 = vmatpush.bf16.msra.mxu0 %v8360
    %10841 = vmatpush.bf16.msra.mxu0 %v8352
    %10842 = vmatpush.bf16.msra.mxu0 %v8344
    %10843 = vmatpush.bf16.msra.mxu0 %v8336
    %10844 = vmatpush.bf16.msra.mxu0 %v8328
    %10845 = vmatpush.bf16.msra.mxu0 %v8320
    %10846 = vmatpush.bf16.msra.mxu0 %v8312
    %10847 = vmatpush.bf16.msra.mxu0 %v8304
    %10848 = vmatmul.bf16.gmra.mxu0 %v5004
    %v10849 = vpop.f32.mrf.mxu0
    %v10850 = vadd.f32 %v10831, %v10849
    %v10851 = vpop.f32.mrf.mxu0
    %v10852 = vadd.f32 %v10833, %v10851
    %10853 = vmatmul.bf16.gmra.mxu0 %v5012
    %v10854 = vpop.f32.mrf.mxu0
    %v10855 = vadd.f32 %v10836, %v10854
    %v10856 = vpop.f32.mrf.mxu0
    %v10857 = vadd.f32 %v10838, %v10856
    %10858 = vdwg.mxu0
    %10859 = vmatpush.bf16.msra.mxu0 %v8424
    %10860 = vmatpush.bf16.msra.mxu0 %v8416
    %10861 = vmatpush.bf16.msra.mxu0 %v8408
    %10862 = vmatpush.bf16.msra.mxu0 %v8400
    %10863 = vmatpush.bf16.msra.mxu0 %v8392
    %10864 = vmatpush.bf16.msra.mxu0 %v8384
    %10865 = vmatpush.bf16.msra.mxu0 %v8376
    %10866 = vmatpush.bf16.msra.mxu0 %v8368
    %10867 = vmatmul.bf16.gmra.mxu0 %v4557
    %v10868 = vpop.f32.mrf.mxu0
    %v10869 = vadd.f32 %v10850, %v10868
    %v10870 = vpop.f32.mrf.mxu0
    %v10871 = vadd.f32 %v10852, %v10870
    %10872 = vmatmul.bf16.gmra.mxu0 %v4561
    %v10873 = vpop.f32.mrf.mxu0
    %v10874 = vadd.f32 %v10855, %v10873
    %v10875 = vpop.f32.mrf.mxu0
    %v10876 = vadd.f32 %v10857, %v10875
    %10877 = vdwg.mxu0
    %10878 = vmatpush.bf16.msra.mxu0 %v8488
    %10879 = vmatpush.bf16.msra.mxu0 %v8480
    %10880 = vmatpush.bf16.msra.mxu0 %v8472
    %10881 = vmatpush.bf16.msra.mxu0 %v8464
    %10882 = vmatpush.bf16.msra.mxu0 %v8456
    %10883 = vmatpush.bf16.msra.mxu0 %v8448
    %10884 = vmatpush.bf16.msra.mxu0 %v8440
    %10885 = vmatpush.bf16.msra.mxu0 %v8432
    %10886 = vmatmul.bf16.gmra.mxu0 %v4558
    %v10887 = vpop.f32.mrf.mxu0
    %v10888 = vadd.f32 %v10869, %v10887
    %v10889 = vpop.f32.mrf.mxu0
    %v10890 = vadd.f32 %v10871, %v10889
    %10891 = vmatmul.bf16.gmra.mxu0 %v4562
    %v10892 = vpop.f32.mrf.mxu0
    %v10893 = vadd.f32 %v10874, %v10892
    %v10894 = vpop.f32.mrf.mxu0
    %v10895 = vadd.f32 %v10876, %v10894
    %10896 = vdwg.mxu0
    %10897 = vmatpush.bf16.msra.mxu0 %v8552
    %10898 = vmatpush.bf16.msra.mxu0 %v8544
    %10899 = vmatpush.bf16.msra.mxu0 %v8536
    %10900 = vmatpush.bf16.msra.mxu0 %v8528
    %10901 = vmatpush.bf16.msra.mxu0 %v8520
    %10902 = vmatpush.bf16.msra.mxu0 %v8512
    %10903 = vmatpush.bf16.msra.mxu0 %v8504
    %10904 = vmatpush.bf16.msra.mxu0 %v8496
    %10905 = vmatmul.bf16.gmra.mxu0 %v4559
    %v10906 = vpop.f32.mrf.mxu0
    %v10907 = vadd.f32 %v10888, %v10906
    %v10908 = vpop.f32.mrf.mxu0
    %v10909 = vadd.f32 %v10890, %v10908
    %10910 = vmatmul.bf16.gmra.mxu0 %v4563
    %v10911 = vpop.f32.mrf.mxu0
    %v10912 = vadd.f32 %v10893, %v10911
    %v10913 = vpop.f32.mrf.mxu0
    %v10914 = vadd.f32 %v10895, %v10913
    %10915 = vdwg.mxu0
    %10916 = vmatpush.bf16.msra.mxu0 %v8616
    %10917 = vmatpush.bf16.msra.mxu0 %v8608
    %10918 = vmatpush.bf16.msra.mxu0 %v8600
    %10919 = vmatpush.bf16.msra.mxu0 %v8592
    %10920 = vmatpush.bf16.msra.mxu0 %v8584
    %10921 = vmatpush.bf16.msra.mxu0 %v8576
    %10922 = vmatpush.bf16.msra.mxu0 %v8568
    %10923 = vmatpush.bf16.msra.mxu0 %v8560
    %10924 = vmatmul.bf16.gmra.mxu0 %v4560
    %v10925 = vpop.f32.mrf.mxu0
    %v10926 = vadd.f32 %v10907, %v10925
    %v10927 = vpop.f32.mrf.mxu0
    %v10928 = vadd.f32 %v10909, %v10927
    %10929 = vmatmul.bf16.gmra.mxu0 %v4564
    %v10930 = vpop.f32.mrf.mxu0
    %v10931 = vadd.f32 %v10912, %v10930
    %v10932 = vpop.f32.mrf.mxu0
    %v10933 = vadd.f32 %v10914, %v10932
    %10934 = vdwg.mxu0
    %10935 = vmatpush.bf16.msra.mxu0 %v8680
    %10936 = vmatpush.bf16.msra.mxu0 %v8672
    %10937 = vmatpush.bf16.msra.mxu0 %v8664
    %10938 = vmatpush.bf16.msra.mxu0 %v8656
    %10939 = vmatpush.bf16.msra.mxu0 %v8648
    %10940 = vmatpush.bf16.msra.mxu0 %v8640
    %10941 = vmatpush.bf16.msra.mxu0 %v8632
    %10942 = vmatpush.bf16.msra.mxu0 %v8624
    %10943 = vmatmul.bf16.gmra.mxu0 %v5005
    %v10944 = vpop.f32.mrf.mxu0
    %v10945 = vadd.f32 %v10926, %v10944
    %v10946 = vpop.f32.mrf.mxu0
    %v10947 = vadd.f32 %v10928, %v10946
    %10948 = vmatmul.bf16.gmra.mxu0 %v5013
    %v10949 = vpop.f32.mrf.mxu0
    %v10950 = vadd.f32 %v10931, %v10949
    %v10951 = vpop.f32.mrf.mxu0
    %v10952 = vadd.f32 %v10933, %v10951
    %10953 = vdwg.mxu0
    %10954 = vmatpush.bf16.msra.mxu0 %v8744
    %10955 = vmatpush.bf16.msra.mxu0 %v8736
    %10956 = vmatpush.bf16.msra.mxu0 %v8728
    %10957 = vmatpush.bf16.msra.mxu0 %v8720
    %10958 = vmatpush.bf16.msra.mxu0 %v8712
    %10959 = vmatpush.bf16.msra.mxu0 %v8704
    %10960 = vmatpush.bf16.msra.mxu0 %v8696
    %10961 = vmatpush.bf16.msra.mxu0 %v8688
    %10962 = vmatmul.bf16.gmra.mxu0 %v5006
    %v10963 = vpop.f32.mrf.mxu0
    %v10964 = vadd.f32 %v10945, %v10963
    %v10965 = vpop.f32.mrf.mxu0
    %v10966 = vadd.f32 %v10947, %v10965
    %10967 = vmatmul.bf16.gmra.mxu0 %v5014
    %v10968 = vpop.f32.mrf.mxu0
    %v10969 = vadd.f32 %v10950, %v10968
    %v10970 = vpop.f32.mrf.mxu0
    %v10971 = vadd.f32 %v10952, %v10970
    %10972 = vdwg.mxu0
    %10973 = vmatpush.bf16.msra.mxu0 %v8808
    %10974 = vmatpush.bf16.msra.mxu0 %v8800
    %10975 = vmatpush.bf16.msra.mxu0 %v8792
    %10976 = vmatpush.bf16.msra.mxu0 %v8784
    %10977 = vmatpush.bf16.msra.mxu0 %v8776
    %10978 = vmatpush.bf16.msra.mxu0 %v8768
    %10979 = vmatpush.bf16.msra.mxu0 %v8760
    %10980 = vmatpush.bf16.msra.mxu0 %v8752
    %10981 = vmatmul.bf16.gmra.mxu0 %v5007
    %v10982 = vpop.f32.mrf.mxu0
    %v10983 = vadd.f32 %v10964, %v10982
    %v10984 = vpop.f32.mrf.mxu0
    %v10985 = vadd.f32 %v10966, %v10984
    %10986 = vmatmul.bf16.gmra.mxu0 %v5015
    %v10987 = vpop.f32.mrf.mxu0
    %v10988 = vadd.f32 %v10969, %v10987
    %v10989 = vpop.f32.mrf.mxu0
    %v10990 = vadd.f32 %v10971, %v10989
    %10991 = vdwg.mxu0
    %10992 = vmatpush.bf16.msra.mxu0 %v8872
    %10993 = vmatpush.bf16.msra.mxu0 %v8864
    %10994 = vmatpush.bf16.msra.mxu0 %v8856
    %10995 = vmatpush.bf16.msra.mxu0 %v8848
    %10996 = vmatpush.bf16.msra.mxu0 %v8840
    %10997 = vmatpush.bf16.msra.mxu0 %v8832
    %10998 = vmatpush.bf16.msra.mxu0 %v8824
    %10999 = vmatpush.bf16.msra.mxu0 %v8816
    %11000 = vmatmul.bf16.gmra.mxu0 %v5008
    %v11001 = vpop.f32.mrf.mxu0
    %v11002 = vadd.f32 %v10983, %v11001
    %v11003 = vpop.f32.mrf.mxu0
    %v11004 = vadd.f32 %v10985, %v11003
    %11005 = vmatmul.bf16.gmra.mxu0 %v5016
    %v11006 = vpop.f32.mrf.mxu0
    %v11007 = vadd.f32 %v10988, %v11006
    %v11008 = vpop.f32.mrf.mxu0
    %v11009 = vadd.f32 %v10990, %v11008
    %11010 = vdwg.mxu0
    %11011 = vmatpush.bf16.msra.mxu0 %v8169
    %11012 = vmatpush.bf16.msra.mxu0 %v8161
    %11013 = vmatpush.bf16.msra.mxu0 %v8153
    %11014 = vmatpush.bf16.msra.mxu0 %v8145
    %11015 = vmatpush.bf16.msra.mxu0 %v8137
    %11016 = vmatpush.bf16.msra.mxu0 %v8129
    %11017 = vmatpush.bf16.msra.mxu0 %v8121
    %11018 = vmatpush.bf16.msra.mxu0 %v8113
    %11019 = vmatmul.bf16.gmra.mxu0 %v5001
    %v11020 = vpop.f32.mrf.mxu0
    %v11021 = vadd.f32 %v5793, %v11020
    %v11022 = vpop.f32.mrf.mxu0
    %v11023 = vadd.f32 %v5793, %v11022
    %11024 = vmatmul.bf16.gmra.mxu0 %v5009
    %v11025 = vpop.f32.mrf.mxu0
    %v11026 = vadd.f32 %v5793, %v11025
    %v11027 = vpop.f32.mrf.mxu0
    %v11028 = vadd.f32 %v5793, %v11027
    %11029 = vdwg.mxu0
    %11030 = vmatpush.bf16.msra.mxu0 %v8233
    %11031 = vmatpush.bf16.msra.mxu0 %v8225
    %11032 = vmatpush.bf16.msra.mxu0 %v8217
    %11033 = vmatpush.bf16.msra.mxu0 %v8209
    %11034 = vmatpush.bf16.msra.mxu0 %v8201
    %11035 = vmatpush.bf16.msra.mxu0 %v8193
    %11036 = vmatpush.bf16.msra.mxu0 %v8185
    %11037 = vmatpush.bf16.msra.mxu0 %v8177
    %11038 = vmatmul.bf16.gmra.mxu0 %v5002
    %v11039 = vpop.f32.mrf.mxu0
    %v11040 = vadd.f32 %v11021, %v11039
    %v11041 = vpop.f32.mrf.mxu0
    %v11042 = vadd.f32 %v11023, %v11041
    %11043 = vmatmul.bf16.gmra.mxu0 %v5010
    %v11044 = vpop.f32.mrf.mxu0
    %v11045 = vadd.f32 %v11026, %v11044
    %v11046 = vpop.f32.mrf.mxu0
    %v11047 = vadd.f32 %v11028, %v11046
    %11048 = vdwg.mxu0
    %11049 = vmatpush.bf16.msra.mxu0 %v8297
    %11050 = vmatpush.bf16.msra.mxu0 %v8289
    %11051 = vmatpush.bf16.msra.mxu0 %v8281
    %11052 = vmatpush.bf16.msra.mxu0 %v8273
    %11053 = vmatpush.bf16.msra.mxu0 %v8265
    %11054 = vmatpush.bf16.msra.mxu0 %v8257
    %11055 = vmatpush.bf16.msra.mxu0 %v8249
    %11056 = vmatpush.bf16.msra.mxu0 %v8241
    %11057 = vmatmul.bf16.gmra.mxu0 %v5003
    %v11058 = vpop.f32.mrf.mxu0
    %v11059 = vadd.f32 %v11040, %v11058
    %v11060 = vpop.f32.mrf.mxu0
    %v11061 = vadd.f32 %v11042, %v11060
    %11062 = vmatmul.bf16.gmra.mxu0 %v5011
    %v11063 = vpop.f32.mrf.mxu0
    %v11064 = vadd.f32 %v11045, %v11063
    %v11065 = vpop.f32.mrf.mxu0
    %v11066 = vadd.f32 %v11047, %v11065
    %11067 = vdwg.mxu0
    %11068 = vmatpush.bf16.msra.mxu0 %v8361
    %11069 = vmatpush.bf16.msra.mxu0 %v8353
    %11070 = vmatpush.bf16.msra.mxu0 %v8345
    %11071 = vmatpush.bf16.msra.mxu0 %v8337
    %11072 = vmatpush.bf16.msra.mxu0 %v8329
    %11073 = vmatpush.bf16.msra.mxu0 %v8321
    %11074 = vmatpush.bf16.msra.mxu0 %v8313
    %11075 = vmatpush.bf16.msra.mxu0 %v8305
    %11076 = vmatmul.bf16.gmra.mxu0 %v5004
    %v11077 = vpop.f32.mrf.mxu0
    %v11078 = vadd.f32 %v11059, %v11077
    %v11079 = vpop.f32.mrf.mxu0
    %v11080 = vadd.f32 %v11061, %v11079
    %11081 = vmatmul.bf16.gmra.mxu0 %v5012
    %v11082 = vpop.f32.mrf.mxu0
    %v11083 = vadd.f32 %v11064, %v11082
    %v11084 = vpop.f32.mrf.mxu0
    %v11085 = vadd.f32 %v11066, %v11084
    %11086 = vdwg.mxu0
    %11087 = vmatpush.bf16.msra.mxu0 %v8425
    %11088 = vmatpush.bf16.msra.mxu0 %v8417
    %11089 = vmatpush.bf16.msra.mxu0 %v8409
    %11090 = vmatpush.bf16.msra.mxu0 %v8401
    %11091 = vmatpush.bf16.msra.mxu0 %v8393
    %11092 = vmatpush.bf16.msra.mxu0 %v8385
    %11093 = vmatpush.bf16.msra.mxu0 %v8377
    %11094 = vmatpush.bf16.msra.mxu0 %v8369
    %11095 = vmatmul.bf16.gmra.mxu0 %v4557
    %v11096 = vpop.f32.mrf.mxu0
    %v11097 = vadd.f32 %v11078, %v11096
    %v11098 = vpop.f32.mrf.mxu0
    %v11099 = vadd.f32 %v11080, %v11098
    %11100 = vmatmul.bf16.gmra.mxu0 %v4561
    %v11101 = vpop.f32.mrf.mxu0
    %v11102 = vadd.f32 %v11083, %v11101
    %v11103 = vpop.f32.mrf.mxu0
    %v11104 = vadd.f32 %v11085, %v11103
    %11105 = vdwg.mxu0
    %11106 = vmatpush.bf16.msra.mxu0 %v8489
    %11107 = vmatpush.bf16.msra.mxu0 %v8481
    %11108 = vmatpush.bf16.msra.mxu0 %v8473
    %11109 = vmatpush.bf16.msra.mxu0 %v8465
    %11110 = vmatpush.bf16.msra.mxu0 %v8457
    %11111 = vmatpush.bf16.msra.mxu0 %v8449
    %11112 = vmatpush.bf16.msra.mxu0 %v8441
    %11113 = vmatpush.bf16.msra.mxu0 %v8433
    %11114 = vmatmul.bf16.gmra.mxu0 %v4558
    %v11115 = vpop.f32.mrf.mxu0
    %v11116 = vadd.f32 %v11097, %v11115
    %v11117 = vpop.f32.mrf.mxu0
    %v11118 = vadd.f32 %v11099, %v11117
    %11119 = vmatmul.bf16.gmra.mxu0 %v4562
    %v11120 = vpop.f32.mrf.mxu0
    %v11121 = vadd.f32 %v11102, %v11120
    %v11122 = vpop.f32.mrf.mxu0
    %v11123 = vadd.f32 %v11104, %v11122
    %11124 = vdwg.mxu0
    %11125 = vmatpush.bf16.msra.mxu0 %v8553
    %11126 = vmatpush.bf16.msra.mxu0 %v8545
    %11127 = vmatpush.bf16.msra.mxu0 %v8537
    %11128 = vmatpush.bf16.msra.mxu0 %v8529
    %11129 = vmatpush.bf16.msra.mxu0 %v8521
    %11130 = vmatpush.bf16.msra.mxu0 %v8513
    %11131 = vmatpush.bf16.msra.mxu0 %v8505
    %11132 = vmatpush.bf16.msra.mxu0 %v8497
    %11133 = vmatmul.bf16.gmra.mxu0 %v4559
    %v11134 = vpop.f32.mrf.mxu0
    %v11135 = vadd.f32 %v11116, %v11134
    %v11136 = vpop.f32.mrf.mxu0
    %v11137 = vadd.f32 %v11118, %v11136
    %11138 = vmatmul.bf16.gmra.mxu0 %v4563
    %v11139 = vpop.f32.mrf.mxu0
    %v11140 = vadd.f32 %v11121, %v11139
    %v11141 = vpop.f32.mrf.mxu0
    %v11142 = vadd.f32 %v11123, %v11141
    %11143 = vdwg.mxu0
    %11144 = vmatpush.bf16.msra.mxu0 %v8617
    %11145 = vmatpush.bf16.msra.mxu0 %v8609
    %11146 = vmatpush.bf16.msra.mxu0 %v8601
    %11147 = vmatpush.bf16.msra.mxu0 %v8593
    %11148 = vmatpush.bf16.msra.mxu0 %v8585
    %11149 = vmatpush.bf16.msra.mxu0 %v8577
    %11150 = vmatpush.bf16.msra.mxu0 %v8569
    %11151 = vmatpush.bf16.msra.mxu0 %v8561
    %11152 = vmatmul.bf16.gmra.mxu0 %v4560
    %v11153 = vpop.f32.mrf.mxu0
    %v11154 = vadd.f32 %v11135, %v11153
    %v11155 = vpop.f32.mrf.mxu0
    %v11156 = vadd.f32 %v11137, %v11155
    %11157 = vmatmul.bf16.gmra.mxu0 %v4564
    %v11158 = vpop.f32.mrf.mxu0
    %v11159 = vadd.f32 %v11140, %v11158
    %v11160 = vpop.f32.mrf.mxu0
    %v11161 = vadd.f32 %v11142, %v11160
    %11162 = vdwg.mxu0
    %11163 = vmatpush.bf16.msra.mxu0 %v8681
    %11164 = vmatpush.bf16.msra.mxu0 %v8673
    %11165 = vmatpush.bf16.msra.mxu0 %v8665
    %11166 = vmatpush.bf16.msra.mxu0 %v8657
    %11167 = vmatpush.bf16.msra.mxu0 %v8649
    %11168 = vmatpush.bf16.msra.mxu0 %v8641
    %11169 = vmatpush.bf16.msra.mxu0 %v8633
    %11170 = vmatpush.bf16.msra.mxu0 %v8625
    %11171 = vmatmul.bf16.gmra.mxu0 %v5005
    %v11172 = vpop.f32.mrf.mxu0
    %v11173 = vadd.f32 %v11154, %v11172
    %v11174 = vpop.f32.mrf.mxu0
    %v11175 = vadd.f32 %v11156, %v11174
    %11176 = vmatmul.bf16.gmra.mxu0 %v5013
    %v11177 = vpop.f32.mrf.mxu0
    %v11178 = vadd.f32 %v11159, %v11177
    %v11179 = vpop.f32.mrf.mxu0
    %v11180 = vadd.f32 %v11161, %v11179
    %11181 = vdwg.mxu0
    %11182 = vmatpush.bf16.msra.mxu0 %v8745
    %11183 = vmatpush.bf16.msra.mxu0 %v8737
    %11184 = vmatpush.bf16.msra.mxu0 %v8729
    %11185 = vmatpush.bf16.msra.mxu0 %v8721
    %11186 = vmatpush.bf16.msra.mxu0 %v8713
    %11187 = vmatpush.bf16.msra.mxu0 %v8705
    %11188 = vmatpush.bf16.msra.mxu0 %v8697
    %11189 = vmatpush.bf16.msra.mxu0 %v8689
    %11190 = vmatmul.bf16.gmra.mxu0 %v5006
    %v11191 = vpop.f32.mrf.mxu0
    %v11192 = vadd.f32 %v11173, %v11191
    %v11193 = vpop.f32.mrf.mxu0
    %v11194 = vadd.f32 %v11175, %v11193
    %11195 = vmatmul.bf16.gmra.mxu0 %v5014
    %v11196 = vpop.f32.mrf.mxu0
    %v11197 = vadd.f32 %v11178, %v11196
    %v11198 = vpop.f32.mrf.mxu0
    %v11199 = vadd.f32 %v11180, %v11198
    %11200 = vdwg.mxu0
    %11201 = vmatpush.bf16.msra.mxu0 %v8809
    %11202 = vmatpush.bf16.msra.mxu0 %v8801
    %11203 = vmatpush.bf16.msra.mxu0 %v8793
    %11204 = vmatpush.bf16.msra.mxu0 %v8785
    %11205 = vmatpush.bf16.msra.mxu0 %v8777
    %11206 = vmatpush.bf16.msra.mxu0 %v8769
    %11207 = vmatpush.bf16.msra.mxu0 %v8761
    %11208 = vmatpush.bf16.msra.mxu0 %v8753
    %11209 = vmatmul.bf16.gmra.mxu0 %v5007
    %v11210 = vpop.f32.mrf.mxu0
    %v11211 = vadd.f32 %v11192, %v11210
    %v11212 = vpop.f32.mrf.mxu0
    %v11213 = vadd.f32 %v11194, %v11212
    %11214 = vmatmul.bf16.gmra.mxu0 %v5015
    %v11215 = vpop.f32.mrf.mxu0
    %v11216 = vadd.f32 %v11197, %v11215
    %v11217 = vpop.f32.mrf.mxu0
    %v11218 = vadd.f32 %v11199, %v11217
    %11219 = vdwg.mxu0
    %11220 = vmatpush.bf16.msra.mxu0 %v8873
    %11221 = vmatpush.bf16.msra.mxu0 %v8865
    %11222 = vmatpush.bf16.msra.mxu0 %v8857
    %11223 = vmatpush.bf16.msra.mxu0 %v8849
    %11224 = vmatpush.bf16.msra.mxu0 %v8841
    %11225 = vmatpush.bf16.msra.mxu0 %v8833
    %11226 = vmatpush.bf16.msra.mxu0 %v8825
    %11227 = vmatpush.bf16.msra.mxu0 %v8817
    %11228 = vmatmul.bf16.gmra.mxu0 %v5008
    %v11229 = vpop.f32.mrf.mxu0
    %v11230 = vadd.f32 %v11211, %v11229
    %v11231 = vpop.f32.mrf.mxu0
    %v11232 = vadd.f32 %v11213, %v11231
    %11233 = vmatmul.bf16.gmra.mxu0 %v5016
    %v11234 = vpop.f32.mrf.mxu0
    %v11235 = vadd.f32 %v11216, %v11234
    %v11236 = vpop.f32.mrf.mxu0
    %v11237 = vadd.f32 %v11218, %v11236
    %11238 = vdwg.mxu0
    %11239 = vmatpush.bf16.msra.mxu0 %v8170
    %11240 = vmatpush.bf16.msra.mxu0 %v8162
    %11241 = vmatpush.bf16.msra.mxu0 %v8154
    %11242 = vmatpush.bf16.msra.mxu0 %v8146
    %11243 = vmatpush.bf16.msra.mxu0 %v8138
    %11244 = vmatpush.bf16.msra.mxu0 %v8130
    %11245 = vmatpush.bf16.msra.mxu0 %v8122
    %11246 = vmatpush.bf16.msra.mxu0 %v8114
    %11247 = vmatmul.bf16.gmra.mxu0 %v5001
    %v11248 = vpop.f32.mrf.mxu0
    %v11249 = vadd.f32 %v5794, %v11248
    %v11250 = vpop.f32.mrf.mxu0
    %v11251 = vadd.f32 %v5794, %v11250
    %11252 = vmatmul.bf16.gmra.mxu0 %v5009
    %v11253 = vpop.f32.mrf.mxu0
    %v11254 = vadd.f32 %v5794, %v11253
    %v11255 = vpop.f32.mrf.mxu0
    %v11256 = vadd.f32 %v5794, %v11255
    %11257 = vdwg.mxu0
    %11258 = vmatpush.bf16.msra.mxu0 %v8234
    %11259 = vmatpush.bf16.msra.mxu0 %v8226
    %11260 = vmatpush.bf16.msra.mxu0 %v8218
    %11261 = vmatpush.bf16.msra.mxu0 %v8210
    %11262 = vmatpush.bf16.msra.mxu0 %v8202
    %11263 = vmatpush.bf16.msra.mxu0 %v8194
    %11264 = vmatpush.bf16.msra.mxu0 %v8186
    %11265 = vmatpush.bf16.msra.mxu0 %v8178
    %11266 = vmatmul.bf16.gmra.mxu0 %v5002
    %v11267 = vpop.f32.mrf.mxu0
    %v11268 = vadd.f32 %v11249, %v11267
    %v11269 = vpop.f32.mrf.mxu0
    %v11270 = vadd.f32 %v11251, %v11269
    %11271 = vmatmul.bf16.gmra.mxu0 %v5010
    %v11272 = vpop.f32.mrf.mxu0
    %v11273 = vadd.f32 %v11254, %v11272
    %v11274 = vpop.f32.mrf.mxu0
    %v11275 = vadd.f32 %v11256, %v11274
    %11276 = vdwg.mxu0
    %11277 = vmatpush.bf16.msra.mxu0 %v8298
    %11278 = vmatpush.bf16.msra.mxu0 %v8290
    %11279 = vmatpush.bf16.msra.mxu0 %v8282
    %11280 = vmatpush.bf16.msra.mxu0 %v8274
    %11281 = vmatpush.bf16.msra.mxu0 %v8266
    %11282 = vmatpush.bf16.msra.mxu0 %v8258
    %11283 = vmatpush.bf16.msra.mxu0 %v8250
    %11284 = vmatpush.bf16.msra.mxu0 %v8242
    %11285 = vmatmul.bf16.gmra.mxu0 %v5003
    %v11286 = vpop.f32.mrf.mxu0
    %v11287 = vadd.f32 %v11268, %v11286
    %v11288 = vpop.f32.mrf.mxu0
    %v11289 = vadd.f32 %v11270, %v11288
    %11290 = vmatmul.bf16.gmra.mxu0 %v5011
    %v11291 = vpop.f32.mrf.mxu0
    %v11292 = vadd.f32 %v11273, %v11291
    %v11293 = vpop.f32.mrf.mxu0
    %v11294 = vadd.f32 %v11275, %v11293
    %11295 = vdwg.mxu0
    %11296 = vmatpush.bf16.msra.mxu0 %v8362
    %11297 = vmatpush.bf16.msra.mxu0 %v8354
    %11298 = vmatpush.bf16.msra.mxu0 %v8346
    %11299 = vmatpush.bf16.msra.mxu0 %v8338
    %11300 = vmatpush.bf16.msra.mxu0 %v8330
    %11301 = vmatpush.bf16.msra.mxu0 %v8322
    %11302 = vmatpush.bf16.msra.mxu0 %v8314
    %11303 = vmatpush.bf16.msra.mxu0 %v8306
    %11304 = vmatmul.bf16.gmra.mxu0 %v5004
    %v11305 = vpop.f32.mrf.mxu0
    %v11306 = vadd.f32 %v11287, %v11305
    %v11307 = vpop.f32.mrf.mxu0
    %v11308 = vadd.f32 %v11289, %v11307
    %11309 = vmatmul.bf16.gmra.mxu0 %v5012
    %v11310 = vpop.f32.mrf.mxu0
    %v11311 = vadd.f32 %v11292, %v11310
    %v11312 = vpop.f32.mrf.mxu0
    %v11313 = vadd.f32 %v11294, %v11312
    %11314 = vdwg.mxu0
    %11315 = vmatpush.bf16.msra.mxu0 %v8426
    %11316 = vmatpush.bf16.msra.mxu0 %v8418
    %11317 = vmatpush.bf16.msra.mxu0 %v8410
    %11318 = vmatpush.bf16.msra.mxu0 %v8402
    %11319 = vmatpush.bf16.msra.mxu0 %v8394
    %11320 = vmatpush.bf16.msra.mxu0 %v8386
    %11321 = vmatpush.bf16.msra.mxu0 %v8378
    %11322 = vmatpush.bf16.msra.mxu0 %v8370
    %11323 = vmatmul.bf16.gmra.mxu0 %v4557
    %v11324 = vpop.f32.mrf.mxu0
    %v11325 = vadd.f32 %v11306, %v11324
    %v11326 = vpop.f32.mrf.mxu0
    %v11327 = vadd.f32 %v11308, %v11326
    %11328 = vmatmul.bf16.gmra.mxu0 %v4561
    %v11329 = vpop.f32.mrf.mxu0
    %v11330 = vadd.f32 %v11311, %v11329
    %v11331 = vpop.f32.mrf.mxu0
    %v11332 = vadd.f32 %v11313, %v11331
    %11333 = vdwg.mxu0
    %11334 = vmatpush.bf16.msra.mxu0 %v8490
    %11335 = vmatpush.bf16.msra.mxu0 %v8482
    %11336 = vmatpush.bf16.msra.mxu0 %v8474
    %11337 = vmatpush.bf16.msra.mxu0 %v8466
    %11338 = vmatpush.bf16.msra.mxu0 %v8458
    %11339 = vmatpush.bf16.msra.mxu0 %v8450
    %11340 = vmatpush.bf16.msra.mxu0 %v8442
    %11341 = vmatpush.bf16.msra.mxu0 %v8434
    %11342 = vmatmul.bf16.gmra.mxu0 %v4558
    %v11343 = vpop.f32.mrf.mxu0
    %v11344 = vadd.f32 %v11325, %v11343
    %v11345 = vpop.f32.mrf.mxu0
    %v11346 = vadd.f32 %v11327, %v11345
    %11347 = vmatmul.bf16.gmra.mxu0 %v4562
    %v11348 = vpop.f32.mrf.mxu0
    %v11349 = vadd.f32 %v11330, %v11348
    %v11350 = vpop.f32.mrf.mxu0
    %v11351 = vadd.f32 %v11332, %v11350
    %11352 = vdwg.mxu0
    %11353 = vmatpush.bf16.msra.mxu0 %v8554
    %11354 = vmatpush.bf16.msra.mxu0 %v8546
    %11355 = vmatpush.bf16.msra.mxu0 %v8538
    %11356 = vmatpush.bf16.msra.mxu0 %v8530
    %11357 = vmatpush.bf16.msra.mxu0 %v8522
    %11358 = vmatpush.bf16.msra.mxu0 %v8514
    %11359 = vmatpush.bf16.msra.mxu0 %v8506
    %11360 = vmatpush.bf16.msra.mxu0 %v8498
    %11361 = vmatmul.bf16.gmra.mxu0 %v4559
    %v11362 = vpop.f32.mrf.mxu0
    %v11363 = vadd.f32 %v11344, %v11362
    %v11364 = vpop.f32.mrf.mxu0
    %v11365 = vadd.f32 %v11346, %v11364
    %11366 = vmatmul.bf16.gmra.mxu0 %v4563
    %v11367 = vpop.f32.mrf.mxu0
    %v11368 = vadd.f32 %v11349, %v11367
    %v11369 = vpop.f32.mrf.mxu0
    %v11370 = vadd.f32 %v11351, %v11369
    %11371 = vdwg.mxu0
    %11372 = vmatpush.bf16.msra.mxu0 %v8618
    %11373 = vmatpush.bf16.msra.mxu0 %v8610
    %11374 = vmatpush.bf16.msra.mxu0 %v8602
    %11375 = vmatpush.bf16.msra.mxu0 %v8594
    %11376 = vmatpush.bf16.msra.mxu0 %v8586
    %11377 = vmatpush.bf16.msra.mxu0 %v8578
    %11378 = vmatpush.bf16.msra.mxu0 %v8570
    %11379 = vmatpush.bf16.msra.mxu0 %v8562
    %11380 = vmatmul.bf16.gmra.mxu0 %v4560
    %v11381 = vpop.f32.mrf.mxu0
    %v11382 = vadd.f32 %v11363, %v11381
    %v11383 = vpop.f32.mrf.mxu0
    %v11384 = vadd.f32 %v11365, %v11383
    %11385 = vmatmul.bf16.gmra.mxu0 %v4564
    %v11386 = vpop.f32.mrf.mxu0
    %v11387 = vadd.f32 %v11368, %v11386
    %v11388 = vpop.f32.mrf.mxu0
    %v11389 = vadd.f32 %v11370, %v11388
    %11390 = vdwg.mxu0
    %11391 = vmatpush.bf16.msra.mxu0 %v8682
    %11392 = vmatpush.bf16.msra.mxu0 %v8674
    %11393 = vmatpush.bf16.msra.mxu0 %v8666
    %11394 = vmatpush.bf16.msra.mxu0 %v8658
    %11395 = vmatpush.bf16.msra.mxu0 %v8650
    %11396 = vmatpush.bf16.msra.mxu0 %v8642
    %11397 = vmatpush.bf16.msra.mxu0 %v8634
    %11398 = vmatpush.bf16.msra.mxu0 %v8626
    %11399 = vmatmul.bf16.gmra.mxu0 %v5005
    %v11400 = vpop.f32.mrf.mxu0
    %v11401 = vadd.f32 %v11382, %v11400
    %v11402 = vpop.f32.mrf.mxu0
    %v11403 = vadd.f32 %v11384, %v11402
    %11404 = vmatmul.bf16.gmra.mxu0 %v5013
    %v11405 = vpop.f32.mrf.mxu0
    %v11406 = vadd.f32 %v11387, %v11405
    %v11407 = vpop.f32.mrf.mxu0
    %v11408 = vadd.f32 %v11389, %v11407
    %11409 = vdwg.mxu0
    %11410 = vmatpush.bf16.msra.mxu0 %v8746
    %11411 = vmatpush.bf16.msra.mxu0 %v8738
    %11412 = vmatpush.bf16.msra.mxu0 %v8730
    %11413 = vmatpush.bf16.msra.mxu0 %v8722
    %11414 = vmatpush.bf16.msra.mxu0 %v8714
    %11415 = vmatpush.bf16.msra.mxu0 %v8706
    %11416 = vmatpush.bf16.msra.mxu0 %v8698
    %11417 = vmatpush.bf16.msra.mxu0 %v8690
    %11418 = vmatmul.bf16.gmra.mxu0 %v5006
    %v11419 = vpop.f32.mrf.mxu0
    %v11420 = vadd.f32 %v11401, %v11419
    %v11421 = vpop.f32.mrf.mxu0
    %v11422 = vadd.f32 %v11403, %v11421
    %11423 = vmatmul.bf16.gmra.mxu0 %v5014
    %v11424 = vpop.f32.mrf.mxu0
    %v11425 = vadd.f32 %v11406, %v11424
    %v11426 = vpop.f32.mrf.mxu0
    %v11427 = vadd.f32 %v11408, %v11426
    %11428 = vdwg.mxu0
    %11429 = vmatpush.bf16.msra.mxu0 %v8810
    %11430 = vmatpush.bf16.msra.mxu0 %v8802
    %11431 = vmatpush.bf16.msra.mxu0 %v8794
    %11432 = vmatpush.bf16.msra.mxu0 %v8786
    %11433 = vmatpush.bf16.msra.mxu0 %v8778
    %11434 = vmatpush.bf16.msra.mxu0 %v8770
    %11435 = vmatpush.bf16.msra.mxu0 %v8762
    %11436 = vmatpush.bf16.msra.mxu0 %v8754
    %11437 = vmatmul.bf16.gmra.mxu0 %v5007
    %v11438 = vpop.f32.mrf.mxu0
    %v11439 = vadd.f32 %v11420, %v11438
    %v11440 = vpop.f32.mrf.mxu0
    %v11441 = vadd.f32 %v11422, %v11440
    %11442 = vmatmul.bf16.gmra.mxu0 %v5015
    %v11443 = vpop.f32.mrf.mxu0
    %v11444 = vadd.f32 %v11425, %v11443
    %v11445 = vpop.f32.mrf.mxu0
    %v11446 = vadd.f32 %v11427, %v11445
    %11447 = vdwg.mxu0
    %11448 = vmatpush.bf16.msra.mxu0 %v8874
    %11449 = vmatpush.bf16.msra.mxu0 %v8866
    %11450 = vmatpush.bf16.msra.mxu0 %v8858
    %11451 = vmatpush.bf16.msra.mxu0 %v8850
    %11452 = vmatpush.bf16.msra.mxu0 %v8842
    %11453 = vmatpush.bf16.msra.mxu0 %v8834
    %11454 = vmatpush.bf16.msra.mxu0 %v8826
    %11455 = vmatpush.bf16.msra.mxu0 %v8818
    %11456 = vmatmul.bf16.gmra.mxu0 %v5008
    %v11457 = vpop.f32.mrf.mxu0
    %v11458 = vadd.f32 %v11439, %v11457
    %v11459 = vpop.f32.mrf.mxu0
    %v11460 = vadd.f32 %v11441, %v11459
    %11461 = vmatmul.bf16.gmra.mxu0 %v5016
    %v11462 = vpop.f32.mrf.mxu0
    %v11463 = vadd.f32 %v11444, %v11462
    %v11464 = vpop.f32.mrf.mxu0
    %v11465 = vadd.f32 %v11446, %v11464
    %11466 = vdwg.mxu0
    %v11467 = vmax.f32 %v9862, 0.0
    %v11468 = vmax.f32 %v10090, 0.0
    %v11469 = vmax.f32 %v10318, 0.0
    %v11470 = vmax.f32 %v10546, 0.0
    %v11471 = vmax.f32 %v10774, 0.0
    %v11472 = vmax.f32 %v11002, 0.0
    %v11473 = vmax.f32 %v11230, 0.0
    %v11474 = vmax.f32 %v11458, 0.0
    %v11475 = vmax.f32 %v9864, 0.0
    %v11476 = vmax.f32 %v10092, 0.0
    %v11477 = vmax.f32 %v10320, 0.0
    %v11478 = vmax.f32 %v10548, 0.0
    %v11479 = vmax.f32 %v10776, 0.0
    %v11480 = vmax.f32 %v11004, 0.0
    %v11481 = vmax.f32 %v11232, 0.0
    %v11482 = vmax.f32 %v11460, 0.0
    %v11483 = vmax.f32 %v9867, 0.0
    %v11484 = vmax.f32 %v10095, 0.0
    %v11485 = vmax.f32 %v10323, 0.0
    %v11486 = vmax.f32 %v10551, 0.0
    %v11487 = vmax.f32 %v10779, 0.0
    %v11488 = vmax.f32 %v11007, 0.0
    %v11489 = vmax.f32 %v11235, 0.0
    %v11490 = vmax.f32 %v11463, 0.0
    %v11491 = vmax.f32 %v9869, 0.0
    %v11492 = vmax.f32 %v10097, 0.0
    %v11493 = vmax.f32 %v10325, 0.0
    %v11494 = vmax.f32 %v10553, 0.0
    %v11495 = vmax.f32 %v10781, 0.0
    %v11496 = vmax.f32 %v11009, 0.0
    %v11497 = vmax.f32 %v11237, 0.0
    %v11498 = vmax.f32 %v11465, 0.0
    %v11499 = vld [vmem:[#allocation45] sm:$0xff]
    %v11501 = vperm.slane %v11499, 0
    %v11502 = vperm.slane %v11499, 1
    %v11503 = vperm.slane %v11499, 2
    %v11504 = vperm.slane %v11499, 3
    %v11505 = vperm.slane %v11499, 4
    %v11506 = vperm.slane %v11499, 5
    %v11507 = vperm.slane %v11499, 6
    %v11508 = vperm.slane %v11499, 7
    %v11517 = vmul.f32 %v11467, %v11501
    %v11518 = vmul.f32 %v11468, %v11502
    %v11519 = vmul.f32 %v11469, %v11503
    %v11520 = vmul.f32 %v11470, %v11504
    %v11521 = vmul.f32 %v11471, %v11505
    %v11522 = vmul.f32 %v11472, %v11506
    %v11523 = vmul.f32 %v11473, %v11507
    %v11524 = vmul.f32 %v11474, %v11508
    %v11525 = vmul.f32 %v11475, %v11501
    %v11526 = vmul.f32 %v11476, %v11502
    %v11527 = vmul.f32 %v11477, %v11503
    %v11528 = vmul.f32 %v11478, %v11504
    %v11529 = vmul.f32 %v11479, %v11505
    %v11530 = vmul.f32 %v11480, %v11506
    %v11531 = vmul.f32 %v11481, %v11507
    %v11532 = vmul.f32 %v11482, %v11508
    %v11533 = vmul.f32 %v11483, %v11501
    %v11534 = vmul.f32 %v11484, %v11502
    %v11535 = vmul.f32 %v11485, %v11503
    %v11536 = vmul.f32 %v11486, %v11504
    %v11537 = vmul.f32 %v11487, %v11505
    %v11538 = vmul.f32 %v11488, %v11506
    %v11539 = vmul.f32 %v11489, %v11507
    %v11540 = vmul.f32 %v11490, %v11508
    %v11541 = vmul.f32 %v11491, %v11501
    %v11542 = vmul.f32 %v11492, %v11502
    %v11543 = vmul.f32 %v11493, %v11503
    %v11544 = vmul.f32 %v11494, %v11504
    %v11545 = vmul.f32 %v11495, %v11505
    %v11546 = vmul.f32 %v11496, %v11506
    %v11547 = vmul.f32 %v11497, %v11507
    %v11548 = vmul.f32 %v11498, %v11508
    %v11549 = vld [vmem:[#allocation46] sm:$0xff]
    %v11551 = vperm.slane %v11549, 0
    %v11552 = vperm.slane %v11549, 1
    %v11553 = vperm.slane %v11549, 2
    %v11554 = vperm.slane %v11549, 3
    %v11555 = vperm.slane %v11549, 4
    %v11556 = vperm.slane %v11549, 5
    %v11557 = vperm.slane %v11549, 6
    %v11558 = vperm.slane %v11549, 7
    %v11567 = vadd.f32 %v11517, %v11551
    %v11568 = vadd.f32 %v11518, %v11552
    %v11569 = vadd.f32 %v11519, %v11553
    %v11570 = vadd.f32 %v11520, %v11554
    %v11571 = vadd.f32 %v11521, %v11555
    %v11572 = vadd.f32 %v11522, %v11556
    %v11573 = vadd.f32 %v11523, %v11557
    %v11574 = vadd.f32 %v11524, %v11558
    %v11575 = vadd.f32 %v11525, %v11551
    %v11576 = vadd.f32 %v11526, %v11552
    %v11577 = vadd.f32 %v11527, %v11553
    %v11578 = vadd.f32 %v11528, %v11554
    %v11579 = vadd.f32 %v11529, %v11555
    %v11580 = vadd.f32 %v11530, %v11556
    %v11581 = vadd.f32 %v11531, %v11557
    %v11582 = vadd.f32 %v11532, %v11558
    %v11583 = vadd.f32 %v11533, %v11551
    %v11584 = vadd.f32 %v11534, %v11552
    %v11585 = vadd.f32 %v11535, %v11553
    %v11586 = vadd.f32 %v11536, %v11554
    %v11587 = vadd.f32 %v11537, %v11555
    %v11588 = vadd.f32 %v11538, %v11556
    %v11589 = vadd.f32 %v11539, %v11557
    %v11590 = vadd.f32 %v11540, %v11558
    %v11591 = vadd.f32 %v11541, %v11551
    %v11592 = vadd.f32 %v11542, %v11552
    %v11593 = vadd.f32 %v11543, %v11553
    %v11594 = vadd.f32 %v11544, %v11554
    %v11595 = vadd.f32 %v11545, %v11555
    %v11596 = vadd.f32 %v11546, %v11556
    %v11597 = vadd.f32 %v11547, %v11557
    %v11598 = vadd.f32 %v11548, %v11558
    %v11599 = vpack.c.bf16 %v11575, %v11567
    %v11600 = vpack.c.bf16 %v11576, %v11568
    %v11601 = vpack.c.bf16 %v11577, %v11569
    %v11602 = vpack.c.bf16 %v11578, %v11570
    %v11603 = vpack.c.bf16 %v11579, %v11571
    %v11604 = vpack.c.bf16 %v11580, %v11572
    %v11605 = vpack.c.bf16 %v11581, %v11573
    %v11606 = vpack.c.bf16 %v11582, %v11574
    %v11607 = vpack.c.bf16 %v11591, %v11583
    %v11608 = vpack.c.bf16 %v11592, %v11584
    %v11609 = vpack.c.bf16 %v11593, %v11585
    %v11610 = vpack.c.bf16 %v11594, %v11586
    %v11611 = vpack.c.bf16 %v11595, %v11587
    %v11612 = vpack.c.bf16 %v11596, %v11588
    %v11613 = vpack.c.bf16 %v11597, %v11589
    %v11614 = vpack.c.bf16 %v11598, %v11590
    %v11615 = vld [vmem:[#allocation48] sm:$0xf]
    %v11616 = vld [vmem:[#allocation48 + $0x4] sm:$0xf]
    %v11617 = vld [vmem:[#allocation48 + $0x8] sm:$0xf]
    %v11618 = vld [vmem:[#allocation48 + $0xc] sm:$0xf]
    %v11619 = vld [vmem:[#allocation48 + $0x10] sm:$0xf]
    %v11620 = vld [vmem:[#allocation48 + $0x14] sm:$0xf]
    %v11621 = vld [vmem:[#allocation48 + $0x18] sm:$0xf]
    %v11622 = vld [vmem:[#allocation48 + $0x1c] sm:$0xf]
    %v11623 = vld [vmem:[#allocation48 + $0x20] sm:$0xf]
    %v11624 = vld [vmem:[#allocation48 + $0x24] sm:$0xf]
    %v11625 = vld [vmem:[#allocation48 + $0x28] sm:$0xf]
    %v11626 = vld [vmem:[#allocation48 + $0x2c] sm:$0xf]
    %v11627 = vld [vmem:[#allocation48 + $0x30] sm:$0xf]
    %v11628 = vld [vmem:[#allocation48 + $0x34] sm:$0xf]
    %v11629 = vld [vmem:[#allocation48 + $0x38] sm:$0xf]
    %v11630 = vld [vmem:[#allocation48 + $0x3c] sm:$0xf]
    %v11631 = vld [vmem:[#allocation48 + $0x40] sm:$0xf]
    %v11632 = vld [vmem:[#allocation48 + $0x44] sm:$0xf]
    %v11633 = vld [vmem:[#allocation48 + $0x48] sm:$0xf]
    %v11634 = vld [vmem:[#allocation48 + $0x4c] sm:$0xf]
    %v11635 = vld [vmem:[#allocation48 + $0x50] sm:$0xf]
    %v11636 = vld [vmem:[#allocation48 + $0x54] sm:$0xf]
    %v11637 = vld [vmem:[#allocation48 + $0x58] sm:$0xf]
    %v11638 = vld [vmem:[#allocation48 + $0x5c] sm:$0xf]
    %v11639 = vld [vmem:[#allocation48 + $0x60] sm:$0xf]
    %v11640 = vld [vmem:[#allocation48 + $0x64] sm:$0xf]
    %v11641 = vld [vmem:[#allocation48 + $0x68] sm:$0xf]
    %v11642 = vld [vmem:[#allocation48 + $0x6c] sm:$0xf]
    %v11643 = vld [vmem:[#allocation48 + $0x70] sm:$0xf]
    %v11644 = vld [vmem:[#allocation48 + $0x74] sm:$0xf]
    %v11645 = vld [vmem:[#allocation48 + $0x78] sm:$0xf]
    %v11646 = vld [vmem:[#allocation48 + $0x7c] sm:$0xf]
    %v11647 = vld [vmem:[#allocation48 + $0x80] sm:$0xf]
    %v11648 = vld [vmem:[#allocation48 + $0x84] sm:$0xf]
    %v11649 = vld [vmem:[#allocation48 + $0x88] sm:$0xf]
    %v11650 = vld [vmem:[#allocation48 + $0x8c] sm:$0xf]
    %v11651 = vld [vmem:[#allocation48 + $0x90] sm:$0xf]
    %v11652 = vld [vmem:[#allocation48 + $0x94] sm:$0xf]
    %v11653 = vld [vmem:[#allocation48 + $0x98] sm:$0xf]
    %v11654 = vld [vmem:[#allocation48 + $0x9c] sm:$0xf]
    %v11655 = vld [vmem:[#allocation48 + $0xa0] sm:$0xf]
    %v11656 = vld [vmem:[#allocation48 + $0xa4] sm:$0xf]
    %v11657 = vld [vmem:[#allocation48 + $0xa8] sm:$0xf]
    %v11658 = vld [vmem:[#allocation48 + $0xac] sm:$0xf]
    %v11659 = vld [vmem:[#allocation48 + $0xb0] sm:$0xf]
    %v11660 = vld [vmem:[#allocation48 + $0xb4] sm:$0xf]
    %v11661 = vld [vmem:[#allocation48 + $0xb8] sm:$0xf]
    %v11662 = vld [vmem:[#allocation48 + $0xbc] sm:$0xf]
    %v11663 = vld [vmem:[#allocation48 + $0xc0] sm:$0xf]
    %v11664 = vld [vmem:[#allocation48 + $0xc4] sm:$0xf]
    %v11665 = vld [vmem:[#allocation48 + $0xc8] sm:$0xf]
    %v11666 = vld [vmem:[#allocation48 + $0xcc] sm:$0xf]
    %v11667 = vld [vmem:[#allocation48 + $0xd0] sm:$0xf]
    %v11668 = vld [vmem:[#allocation48 + $0xd4] sm:$0xf]
    %v11669 = vld [vmem:[#allocation48 + $0xd8] sm:$0xf]
    %v11670 = vld [vmem:[#allocation48 + $0xdc] sm:$0xf]
    %v11671 = vld [vmem:[#allocation48 + $0xe0] sm:$0xf]
    %v11672 = vld [vmem:[#allocation48 + $0xe4] sm:$0xf]
    %v11673 = vld [vmem:[#allocation48 + $0xe8] sm:$0xf]
    %v11674 = vld [vmem:[#allocation48 + $0xec] sm:$0xf]
    %v11675 = vld [vmem:[#allocation48 + $0xf0] sm:$0xf]
    %v11676 = vld [vmem:[#allocation48 + $0xf4] sm:$0xf]
    %v11677 = vld [vmem:[#allocation48 + $0xf8] sm:$0xf]
    %v11678 = vld [vmem:[#allocation48 + $0xfc] sm:$0xf]
    %v11679 = vld [vmem:[#allocation48 + $0x100] sm:$0xf]
    %v11680 = vld [vmem:[#allocation48 + $0x104] sm:$0xf]
    %v11681 = vld [vmem:[#allocation48 + $0x108] sm:$0xf]
    %v11682 = vld [vmem:[#allocation48 + $0x10c] sm:$0xf]
    %v11683 = vld [vmem:[#allocation48 + $0x110] sm:$0xf]
    %v11684 = vld [vmem:[#allocation48 + $0x114] sm:$0xf]
    %v11685 = vld [vmem:[#allocation48 + $0x118] sm:$0xf]
    %v11686 = vld [vmem:[#allocation48 + $0x11c] sm:$0xf]
    %v11687 = vld [vmem:[#allocation48 + $0x120] sm:$0xf]
    %v11688 = vld [vmem:[#allocation48 + $0x124] sm:$0xf]
    %v11689 = vld [vmem:[#allocation48 + $0x128] sm:$0xf]
    %v11690 = vld [vmem:[#allocation48 + $0x12c] sm:$0xf]
    %v11691 = vld [vmem:[#allocation48 + $0x130] sm:$0xf]
    %v11692 = vld [vmem:[#allocation48 + $0x134] sm:$0xf]
    %v11693 = vld [vmem:[#allocation48 + $0x138] sm:$0xf]
    %v11694 = vld [vmem:[#allocation48 + $0x13c] sm:$0xf]
    %v11695 = vld [vmem:[#allocation48 + $0x140] sm:$0xf]
    %v11696 = vld [vmem:[#allocation48 + $0x144] sm:$0xf]
    %v11697 = vld [vmem:[#allocation48 + $0x148] sm:$0xf]
    %v11698 = vld [vmem:[#allocation48 + $0x14c] sm:$0xf]
    %v11699 = vld [vmem:[#allocation48 + $0x150] sm:$0xf]
    %v11700 = vld [vmem:[#allocation48 + $0x154] sm:$0xf]
    %v11701 = vld [vmem:[#allocation48 + $0x158] sm:$0xf]
    %v11702 = vld [vmem:[#allocation48 + $0x15c] sm:$0xf]
    %v11703 = vld [vmem:[#allocation48 + $0x160] sm:$0xf]
    %v11704 = vld [vmem:[#allocation48 + $0x164] sm:$0xf]
    %v11705 = vld [vmem:[#allocation48 + $0x168] sm:$0xf]
    %v11706 = vld [vmem:[#allocation48 + $0x16c] sm:$0xf]
    %v11707 = vld [vmem:[#allocation48 + $0x170] sm:$0xf]
    %v11708 = vld [vmem:[#allocation48 + $0x174] sm:$0xf]
    %v11709 = vld [vmem:[#allocation48 + $0x178] sm:$0xf]
    %v11710 = vld [vmem:[#allocation48 + $0x17c] sm:$0xf]
    %v11711 = vld [vmem:[#allocation48 + $0x180] sm:$0xf]
    %v11712 = vld [vmem:[#allocation48 + $0x184] sm:$0xf]
    %v11713 = vld [vmem:[#allocation48 + $0x188] sm:$0xf]
    %v11714 = vld [vmem:[#allocation48 + $0x18c] sm:$0xf]
    %v11715 = vld [vmem:[#allocation48 + $0x190] sm:$0xf]
    %v11716 = vld [vmem:[#allocation48 + $0x194] sm:$0xf]
    %v11717 = vld [vmem:[#allocation48 + $0x198] sm:$0xf]
    %v11718 = vld [vmem:[#allocation48 + $0x19c] sm:$0xf]
    %v11719 = vld [vmem:[#allocation48 + $0x1a0] sm:$0xf]
    %v11720 = vld [vmem:[#allocation48 + $0x1a4] sm:$0xf]
    %v11721 = vld [vmem:[#allocation48 + $0x1a8] sm:$0xf]
    %v11722 = vld [vmem:[#allocation48 + $0x1ac] sm:$0xf]
    %v11723 = vld [vmem:[#allocation48 + $0x1b0] sm:$0xf]
    %v11724 = vld [vmem:[#allocation48 + $0x1b4] sm:$0xf]
    %v11725 = vld [vmem:[#allocation48 + $0x1b8] sm:$0xf]
    %v11726 = vld [vmem:[#allocation48 + $0x1bc] sm:$0xf]
    %v11727 = vld [vmem:[#allocation48 + $0x1c0] sm:$0xf]
    %v11728 = vld [vmem:[#allocation48 + $0x1c4] sm:$0xf]
    %v11729 = vld [vmem:[#allocation48 + $0x1c8] sm:$0xf]
    %v11730 = vld [vmem:[#allocation48 + $0x1cc] sm:$0xf]
    %v11731 = vld [vmem:[#allocation48 + $0x1d0] sm:$0xf]
    %v11732 = vld [vmem:[#allocation48 + $0x1d4] sm:$0xf]
    %v11733 = vld [vmem:[#allocation48 + $0x1d8] sm:$0xf]
    %v11734 = vld [vmem:[#allocation48 + $0x1dc] sm:$0xf]
    %v11735 = vld [vmem:[#allocation48 + $0x1e0] sm:$0xf]
    %v11736 = vld [vmem:[#allocation48 + $0x1e4] sm:$0xf]
    %v11737 = vld [vmem:[#allocation48 + $0x1e8] sm:$0xf]
    %v11738 = vld [vmem:[#allocation48 + $0x1ec] sm:$0xf]
    %v11739 = vld [vmem:[#allocation48 + $0x1f0] sm:$0xf]
    %v11740 = vld [vmem:[#allocation48 + $0x1f4] sm:$0xf]
    %v11741 = vld [vmem:[#allocation48 + $0x1f8] sm:$0xf]
    %v11742 = vld [vmem:[#allocation48 + $0x1fc] sm:$0xf]
    %v11743 = vld [vmem:[#allocation49] sm:$0x1]
    %v11745 = vperm.slane %v11743, 0
    %v11875 = vunpack.c.l.b16 %v11615
    %v11876 = vunpack.c.l.b16 %v11616
    %v11877 = vunpack.c.l.b16 %v11617
    %v11878 = vunpack.c.l.b16 %v11618
    %v11879 = vunpack.c.l.b16 %v11619
    %v11880 = vunpack.c.l.b16 %v11620
    %v11881 = vunpack.c.l.b16 %v11621
    %v11882 = vunpack.c.l.b16 %v11622
    %v11883 = vunpack.c.l.b16 %v11623
    %v11884 = vunpack.c.l.b16 %v11624
    %v11885 = vunpack.c.l.b16 %v11625
    %v11886 = vunpack.c.l.b16 %v11626
    %v11887 = vunpack.c.l.b16 %v11627
    %v11888 = vunpack.c.l.b16 %v11628
    %v11889 = vunpack.c.l.b16 %v11629
    %v11890 = vunpack.c.l.b16 %v11630
    %v11891 = vunpack.c.l.b16 %v11631
    %v11892 = vunpack.c.l.b16 %v11632
    %v11893 = vunpack.c.l.b16 %v11633
    %v11894 = vunpack.c.l.b16 %v11634
    %v11895 = vunpack.c.l.b16 %v11635
    %v11896 = vunpack.c.l.b16 %v11636
    %v11897 = vunpack.c.l.b16 %v11637
    %v11898 = vunpack.c.l.b16 %v11638
    %v11899 = vunpack.c.l.b16 %v11639
    %v11900 = vunpack.c.l.b16 %v11640
    %v11901 = vunpack.c.l.b16 %v11641
    %v11902 = vunpack.c.l.b16 %v11642
    %v11903 = vunpack.c.l.b16 %v11643
    %v11904 = vunpack.c.l.b16 %v11644
    %v11905 = vunpack.c.l.b16 %v11645
    %v11906 = vunpack.c.l.b16 %v11646
    %v11907 = vunpack.c.l.b16 %v11647
    %v11908 = vunpack.c.l.b16 %v11648
    %v11909 = vunpack.c.l.b16 %v11649
    %v11910 = vunpack.c.l.b16 %v11650
    %v11911 = vunpack.c.l.b16 %v11651
    %v11912 = vunpack.c.l.b16 %v11652
    %v11913 = vunpack.c.l.b16 %v11653
    %v11914 = vunpack.c.l.b16 %v11654
    %v11915 = vunpack.c.l.b16 %v11655
    %v11916 = vunpack.c.l.b16 %v11656
    %v11917 = vunpack.c.l.b16 %v11657
    %v11918 = vunpack.c.l.b16 %v11658
    %v11919 = vunpack.c.l.b16 %v11659
    %v11920 = vunpack.c.l.b16 %v11660
    %v11921 = vunpack.c.l.b16 %v11661
    %v11922 = vunpack.c.l.b16 %v11662
    %v11923 = vunpack.c.l.b16 %v11663
    %v11924 = vunpack.c.l.b16 %v11664
    %v11925 = vunpack.c.l.b16 %v11665
    %v11926 = vunpack.c.l.b16 %v11666
    %v11927 = vunpack.c.l.b16 %v11667
    %v11928 = vunpack.c.l.b16 %v11668
    %v11929 = vunpack.c.l.b16 %v11669
    %v11930 = vunpack.c.l.b16 %v11670
    %v11931 = vunpack.c.l.b16 %v11671
    %v11932 = vunpack.c.l.b16 %v11672
    %v11933 = vunpack.c.l.b16 %v11673
    %v11934 = vunpack.c.l.b16 %v11674
    %v11935 = vunpack.c.l.b16 %v11675
    %v11936 = vunpack.c.l.b16 %v11676
    %v11937 = vunpack.c.l.b16 %v11677
    %v11938 = vunpack.c.l.b16 %v11678
    %v11939 = vunpack.c.l.b16 %v11679
    %v11940 = vunpack.c.l.b16 %v11680
    %v11941 = vunpack.c.l.b16 %v11681
    %v11942 = vunpack.c.l.b16 %v11682
    %v11943 = vunpack.c.l.b16 %v11683
    %v11944 = vunpack.c.l.b16 %v11684
    %v11945 = vunpack.c.l.b16 %v11685
    %v11946 = vunpack.c.l.b16 %v11686
    %v11947 = vunpack.c.l.b16 %v11687
    %v11948 = vunpack.c.l.b16 %v11688
    %v11949 = vunpack.c.l.b16 %v11689
    %v11950 = vunpack.c.l.b16 %v11690
    %v11951 = vunpack.c.l.b16 %v11691
    %v11952 = vunpack.c.l.b16 %v11692
    %v11953 = vunpack.c.l.b16 %v11693
    %v11954 = vunpack.c.l.b16 %v11694
    %v11955 = vunpack.c.l.b16 %v11695
    %v11956 = vunpack.c.l.b16 %v11696
    %v11957 = vunpack.c.l.b16 %v11697
    %v11958 = vunpack.c.l.b16 %v11698
    %v11959 = vunpack.c.l.b16 %v11699
    %v11960 = vunpack.c.l.b16 %v11700
    %v11961 = vunpack.c.l.b16 %v11701
    %v11962 = vunpack.c.l.b16 %v11702
    %v11963 = vunpack.c.l.b16 %v11703
    %v11964 = vunpack.c.l.b16 %v11704
    %v11965 = vunpack.c.l.b16 %v11705
    %v11966 = vunpack.c.l.b16 %v11706
    %v11967 = vunpack.c.l.b16 %v11707
    %v11968 = vunpack.c.l.b16 %v11708
    %v11969 = vunpack.c.l.b16 %v11709
    %v11970 = vunpack.c.l.b16 %v11710
    %v11971 = vunpack.c.l.b16 %v11711
    %v11972 = vunpack.c.l.b16 %v11712
    %v11973 = vunpack.c.l.b16 %v11713
    %v11974 = vunpack.c.l.b16 %v11714
    %v11975 = vunpack.c.l.b16 %v11715
    %v11976 = vunpack.c.l.b16 %v11716
    %v11977 = vunpack.c.l.b16 %v11717
    %v11978 = vunpack.c.l.b16 %v11718
    %v11979 = vunpack.c.l.b16 %v11719
    %v11980 = vunpack.c.l.b16 %v11720
    %v11981 = vunpack.c.l.b16 %v11721
    %v11982 = vunpack.c.l.b16 %v11722
    %v11983 = vunpack.c.l.b16 %v11723
    %v11984 = vunpack.c.l.b16 %v11724
    %v11985 = vunpack.c.l.b16 %v11725
    %v11986 = vunpack.c.l.b16 %v11726
    %v11987 = vunpack.c.l.b16 %v11727
    %v11988 = vunpack.c.l.b16 %v11728
    %v11989 = vunpack.c.l.b16 %v11729
    %v11990 = vunpack.c.l.b16 %v11730
    %v11991 = vunpack.c.l.b16 %v11731
    %v11992 = vunpack.c.l.b16 %v11732
    %v11993 = vunpack.c.l.b16 %v11733
    %v11994 = vunpack.c.l.b16 %v11734
    %v11995 = vunpack.c.l.b16 %v11735
    %v11996 = vunpack.c.l.b16 %v11736
    %v11997 = vunpack.c.l.b16 %v11737
    %v11998 = vunpack.c.l.b16 %v11738
    %v11999 = vunpack.c.l.b16 %v11739
    %v12000 = vunpack.c.l.b16 %v11740
    %v12001 = vunpack.c.l.b16 %v11741
    %v12002 = vunpack.c.l.b16 %v11742
    %v12003 = vpack.c.b16 %v11876, %v11875
    %v12004 = vpack.c.b16 %v11878, %v11877
    %v12005 = vpack.c.b16 %v11880, %v11879
    %v12006 = vpack.c.b16 %v11882, %v11881
    %v12007 = vpack.c.b16 %v11884, %v11883
    %v12008 = vpack.c.b16 %v11886, %v11885
    %v12009 = vpack.c.b16 %v11888, %v11887
    %v12010 = vpack.c.b16 %v11890, %v11889
    %v12011 = vpack.c.b16 %v11892, %v11891
    %v12012 = vpack.c.b16 %v11894, %v11893
    %v12013 = vpack.c.b16 %v11896, %v11895
    %v12014 = vpack.c.b16 %v11898, %v11897
    %v12015 = vpack.c.b16 %v11900, %v11899
    %v12016 = vpack.c.b16 %v11902, %v11901
    %v12017 = vpack.c.b16 %v11904, %v11903
    %v12018 = vpack.c.b16 %v11906, %v11905
    %v12019 = vpack.c.b16 %v11908, %v11907
    %v12020 = vpack.c.b16 %v11910, %v11909
    %v12021 = vpack.c.b16 %v11912, %v11911
    %v12022 = vpack.c.b16 %v11914, %v11913
    %v12023 = vpack.c.b16 %v11916, %v11915
    %v12024 = vpack.c.b16 %v11918, %v11917
    %v12025 = vpack.c.b16 %v11920, %v11919
    %v12026 = vpack.c.b16 %v11922, %v11921
    %v12027 = vpack.c.b16 %v11924, %v11923
    %v12028 = vpack.c.b16 %v11926, %v11925
    %v12029 = vpack.c.b16 %v11928, %v11927
    %v12030 = vpack.c.b16 %v11930, %v11929
    %v12031 = vpack.c.b16 %v11932, %v11931
    %v12032 = vpack.c.b16 %v11934, %v11933
    %v12033 = vpack.c.b16 %v11936, %v11935
    %v12034 = vpack.c.b16 %v11938, %v11937
    %v12035 = vpack.c.b16 %v11940, %v11939
    %v12036 = vpack.c.b16 %v11942, %v11941
    %v12037 = vpack.c.b16 %v11944, %v11943
    %v12038 = vpack.c.b16 %v11946, %v11945
    %v12039 = vpack.c.b16 %v11948, %v11947
    %v12040 = vpack.c.b16 %v11950, %v11949
    %v12041 = vpack.c.b16 %v11952, %v11951
    %v12042 = vpack.c.b16 %v11954, %v11953
    %v12043 = vpack.c.b16 %v11956, %v11955
    %v12044 = vpack.c.b16 %v11958, %v11957
    %v12045 = vpack.c.b16 %v11960, %v11959
    %v12046 = vpack.c.b16 %v11962, %v11961
    %v12047 = vpack.c.b16 %v11964, %v11963
    %v12048 = vpack.c.b16 %v11966, %v11965
    %v12049 = vpack.c.b16 %v11968, %v11967
    %v12050 = vpack.c.b16 %v11970, %v11969
    %v12051 = vpack.c.b16 %v11972, %v11971
    %v12052 = vpack.c.b16 %v11974, %v11973
    %v12053 = vpack.c.b16 %v11976, %v11975
    %v12054 = vpack.c.b16 %v11978, %v11977
    %v12055 = vpack.c.b16 %v11980, %v11979
    %v12056 = vpack.c.b16 %v11982, %v11981
    %v12057 = vpack.c.b16 %v11984, %v11983
    %v12058 = vpack.c.b16 %v11986, %v11985
    %v12059 = vpack.c.b16 %v11988, %v11987
    %v12060 = vpack.c.b16 %v11990, %v11989
    %v12061 = vpack.c.b16 %v11992, %v11991
    %v12062 = vpack.c.b16 %v11994, %v11993
    %v12063 = vpack.c.b16 %v11996, %v11995
    %v12064 = vpack.c.b16 %v11998, %v11997
    %v12065 = vpack.c.b16 %v12000, %v11999
    %v12066 = vpack.c.b16 %v12002, %v12001
    %12131 = vmatpush.bf16.msra.mxu0 %v12010
    %12132 = vmatpush.bf16.msra.mxu0 %v12009
    %12133 = vmatpush.bf16.msra.mxu0 %v12008
    %12134 = vmatpush.bf16.msra.mxu0 %v12007
    %12135 = vmatpush.bf16.msra.mxu0 %v12006
    %12136 = vmatpush.bf16.msra.mxu0 %v12005
    %12137 = vmatpush.bf16.msra.mxu0 %v12004
    %12138 = vmatpush.bf16.msra.mxu0 %v12003
    %12139 = vmatmul.bf16.gmra.mxu0 %v11599
    %v12140 = vpop.f32.mrf.mxu0
    %v12141 = vadd.f32 %v11745, %v12140
    %v12142 = vpop.f32.mrf.mxu0
    %v12143 = vadd.f32 %v11745, %v12142
    %12144 = vmatmul.bf16.gmra.mxu0 %v11607
    %v12145 = vpop.f32.mrf.mxu0
    %v12146 = vadd.f32 %v11745, %v12145
    %v12147 = vpop.f32.mrf.mxu0
    %v12148 = vadd.f32 %v11745, %v12147
    %12149 = vdwg.mxu0
    %12150 = vmatpush.bf16.msra.mxu0 %v12018
    %12151 = vmatpush.bf16.msra.mxu0 %v12017
    %12152 = vmatpush.bf16.msra.mxu0 %v12016
    %12153 = vmatpush.bf16.msra.mxu0 %v12015
    %12154 = vmatpush.bf16.msra.mxu0 %v12014
    %12155 = vmatpush.bf16.msra.mxu0 %v12013
    %12156 = vmatpush.bf16.msra.mxu0 %v12012
    %12157 = vmatpush.bf16.msra.mxu0 %v12011
    %12158 = vmatmul.bf16.gmra.mxu0 %v11600
    %v12159 = vpop.f32.mrf.mxu0
    %v12160 = vadd.f32 %v12141, %v12159
    %v12161 = vpop.f32.mrf.mxu0
    %v12162 = vadd.f32 %v12143, %v12161
    %12163 = vmatmul.bf16.gmra.mxu0 %v11608
    %v12164 = vpop.f32.mrf.mxu0
    %v12165 = vadd.f32 %v12146, %v12164
    %v12166 = vpop.f32.mrf.mxu0
    %v12167 = vadd.f32 %v12148, %v12166
    %12168 = vdwg.mxu0
    %12169 = vmatpush.bf16.msra.mxu0 %v12026
    %12170 = vmatpush.bf16.msra.mxu0 %v12025
    %12171 = vmatpush.bf16.msra.mxu0 %v12024
    %12172 = vmatpush.bf16.msra.mxu0 %v12023
    %12173 = vmatpush.bf16.msra.mxu0 %v12022
    %12174 = vmatpush.bf16.msra.mxu0 %v12021
    %12175 = vmatpush.bf16.msra.mxu0 %v12020
    %12176 = vmatpush.bf16.msra.mxu0 %v12019
    %12177 = vmatmul.bf16.gmra.mxu0 %v11601
    %v12178 = vpop.f32.mrf.mxu0
    %v12179 = vadd.f32 %v12160, %v12178
    %v12180 = vpop.f32.mrf.mxu0
    %v12181 = vadd.f32 %v12162, %v12180
    %12182 = vmatmul.bf16.gmra.mxu0 %v11609
    %v12183 = vpop.f32.mrf.mxu0
    %v12184 = vadd.f32 %v12165, %v12183
    %v12185 = vpop.f32.mrf.mxu0
    %v12186 = vadd.f32 %v12167, %v12185
    %12187 = vdwg.mxu0
    %12188 = vmatpush.bf16.msra.mxu0 %v12034
    %12189 = vmatpush.bf16.msra.mxu0 %v12033
    %12190 = vmatpush.bf16.msra.mxu0 %v12032
    %12191 = vmatpush.bf16.msra.mxu0 %v12031
    %12192 = vmatpush.bf16.msra.mxu0 %v12030
    %12193 = vmatpush.bf16.msra.mxu0 %v12029
    %12194 = vmatpush.bf16.msra.mxu0 %v12028
    %12195 = vmatpush.bf16.msra.mxu0 %v12027
    %12196 = vmatmul.bf16.gmra.mxu0 %v11602
    %v12197 = vpop.f32.mrf.mxu0
    %v12198 = vadd.f32 %v12179, %v12197
    %v12199 = vpop.f32.mrf.mxu0
    %v12200 = vadd.f32 %v12181, %v12199
    %12201 = vmatmul.bf16.gmra.mxu0 %v11610
    %v12202 = vpop.f32.mrf.mxu0
    %v12203 = vadd.f32 %v12184, %v12202
    %v12204 = vpop.f32.mrf.mxu0
    %v12205 = vadd.f32 %v12186, %v12204
    %12206 = vdwg.mxu0
    %12207 = vmatpush.bf16.msra.mxu0 %v12042
    %12208 = vmatpush.bf16.msra.mxu0 %v12041
    %12209 = vmatpush.bf16.msra.mxu0 %v12040
    %12210 = vmatpush.bf16.msra.mxu0 %v12039
    %12211 = vmatpush.bf16.msra.mxu0 %v12038
    %12212 = vmatpush.bf16.msra.mxu0 %v12037
    %12213 = vmatpush.bf16.msra.mxu0 %v12036
    %12214 = vmatpush.bf16.msra.mxu0 %v12035
    %12215 = vmatmul.bf16.gmra.mxu0 %v11603
    %v12216 = vpop.f32.mrf.mxu0
    %v12217 = vadd.f32 %v12198, %v12216
    %v12218 = vpop.f32.mrf.mxu0
    %v12219 = vadd.f32 %v12200, %v12218
    %12220 = vmatmul.bf16.gmra.mxu0 %v11611
    %v12221 = vpop.f32.mrf.mxu0
    %v12222 = vadd.f32 %v12203, %v12221
    %v12223 = vpop.f32.mrf.mxu0
    %v12224 = vadd.f32 %v12205, %v12223
    %12225 = vdwg.mxu0
    %12226 = vmatpush.bf16.msra.mxu0 %v12050
    %12227 = vmatpush.bf16.msra.mxu0 %v12049
    %12228 = vmatpush.bf16.msra.mxu0 %v12048
    %12229 = vmatpush.bf16.msra.mxu0 %v12047
    %12230 = vmatpush.bf16.msra.mxu0 %v12046
    %12231 = vmatpush.bf16.msra.mxu0 %v12045
    %12232 = vmatpush.bf16.msra.mxu0 %v12044
    %12233 = vmatpush.bf16.msra.mxu0 %v12043
    %12234 = vmatmul.bf16.gmra.mxu0 %v11604
    %v12235 = vpop.f32.mrf.mxu0
    %v12236 = vadd.f32 %v12217, %v12235
    %v12237 = vpop.f32.mrf.mxu0
    %v12238 = vadd.f32 %v12219, %v12237
    %12239 = vmatmul.bf16.gmra.mxu0 %v11612
    %v12240 = vpop.f32.mrf.mxu0
    %v12241 = vadd.f32 %v12222, %v12240
    %v12242 = vpop.f32.mrf.mxu0
    %v12243 = vadd.f32 %v12224, %v12242
    %12244 = vdwg.mxu0
    %12245 = vmatpush.bf16.msra.mxu0 %v12058
    %12246 = vmatpush.bf16.msra.mxu0 %v12057
    %12247 = vmatpush.bf16.msra.mxu0 %v12056
    %12248 = vmatpush.bf16.msra.mxu0 %v12055
    %12249 = vmatpush.bf16.msra.mxu0 %v12054
    %12250 = vmatpush.bf16.msra.mxu0 %v12053
    %12251 = vmatpush.bf16.msra.mxu0 %v12052
    %12252 = vmatpush.bf16.msra.mxu0 %v12051
    %12253 = vmatmul.bf16.gmra.mxu0 %v11605
    %v12254 = vpop.f32.mrf.mxu0
    %v12255 = vadd.f32 %v12236, %v12254
    %v12256 = vpop.f32.mrf.mxu0
    %v12257 = vadd.f32 %v12238, %v12256
    %12258 = vmatmul.bf16.gmra.mxu0 %v11613
    %v12259 = vpop.f32.mrf.mxu0
    %v12260 = vadd.f32 %v12241, %v12259
    %v12261 = vpop.f32.mrf.mxu0
    %v12262 = vadd.f32 %v12243, %v12261
    %12263 = vdwg.mxu0
    %12264 = vmatpush.bf16.msra.mxu0 %v12066
    %12265 = vmatpush.bf16.msra.mxu0 %v12065
    %12266 = vmatpush.bf16.msra.mxu0 %v12064
    %12267 = vmatpush.bf16.msra.mxu0 %v12063
    %12268 = vmatpush.bf16.msra.mxu0 %v12062
    %12269 = vmatpush.bf16.msra.mxu0 %v12061
    %12270 = vmatpush.bf16.msra.mxu0 %v12060
    %12271 = vmatpush.bf16.msra.mxu0 %v12059
    %12272 = vmatmul.bf16.gmra.mxu0 %v11606
    %v12273 = vpop.f32.mrf.mxu0
    %v12274 = vadd.f32 %v12255, %v12273
    %v12275 = vpop.f32.mrf.mxu0
    %v12276 = vadd.f32 %v12257, %v12275
    %12277 = vmatmul.bf16.gmra.mxu0 %v11614
    %v12278 = vpop.f32.mrf.mxu0
    %v12279 = vadd.f32 %v12260, %v12278
    %v12280 = vpop.f32.mrf.mxu0
    %v12281 = vadd.f32 %v12262, %v12280
    %12282 = vdwg.mxu0
    %12283 = vst [vmem:[%s69] sm:$0xff] %v12274
    %12284 = vst [vmem:[%s69 + $0x8] sm:$0xff] %v12276
    %12285 = vst [vmem:[%s69 + $0x10] sm:$0xff] %v12279
    %12286 = vst [vmem:[%s69 + $0x18] sm:$0xff] %v12281
    // Predicated region
    $region262: #{poly_penn_fcn_forward.1} parent=1 // pred_check
      _
    $region263: #{poly_penn_fcn_forward.1} parent=1 // pred_check_branch
      %12288 = sbr.rel (0) target = $region265
    $region264: #{poly_penn_fcn_forward.1} parent=1 // pred_region
      _
    $region265: #{poly_penn_fcn_forward.1} parent=1 // pred_fallthru
      _
    // Predicated region
    $region266: #{poly_penn_fcn_forward.1} parent=1 // pred_check
      _
    $region267: #{poly_penn_fcn_forward.1} parent=1 // pred_check_branch
      %12290 = sbr.rel (0) target = $region269
    $region268: #{poly_penn_fcn_forward.1} parent=1 // pred_region
      _
    $region269: #{poly_penn_fcn_forward.1} parent=1 // pred_fallthru
      _
    // Predicated region
    $region270: #{poly_penn_fcn_forward.1} parent=1 // pred_check
      _
    $region271: #{poly_penn_fcn_forward.1} parent=1 // pred_check_branch
      %12292 = sbr.rel (0) target = $region273
    $region272: #{poly_penn_fcn_forward.1} parent=1 // pred_region
      _
    $region273: #{poly_penn_fcn_forward.1} parent=1 // pred_fallthru
      _
    // Predicated region
    $region274: #{poly_penn_fcn_forward.1} parent=1 // pred_check
      _
    $region275: #{poly_penn_fcn_forward.1} parent=1 // pred_check_branch
      %12294 = sbr.rel (0) target = $region277
    $region276: #{poly_penn_fcn_forward.1} parent=1 // pred_region
      _
    $region277: #{poly_penn_fcn_forward.1} parent=1 // pred_fallthru
      _
    %12295 = vsyncpa [#allocation3], 1
    %12296 = vsyncpa [#allocation5], 1
    %12297 = vsyncpa [#allocation8], 1
    %12298 = vsyncpa [#allocation11], 1
    %12299 = vsyncpa [#allocation14], 1
    %12300 = vsyncpa [#allocation17], 1
    %12301 = vsyncpa [#allocation20], 1
    %12302 = vsyncpa [#allocation23], 1
    %12303 = vsyncpa [#allocation26], 1
    %12304 = vsyncpa [#allocation29], 1
    %12305 = vsyncpa [#allocation32], 1
    %12306 = vsyncpa [#allocation35], 1
    %12307 = vsyncpa [#allocation38], 1
    %12308 = vsyncpa [#allocation41], 1
    %12309 = vsyncpa [#allocation44], 1
    %12310 = vsyncpa [#allocation47], 1
    %12311 = vsyncpa [#allocation50], 1

</llo_original>
